<compile_context>
chip_gen: v7x
topology: tpu7x:2x2x1
jax: 0.10.0
libtpu: 0.0.40
codegen_flags: <defaults>
</compile_context>

<pallas_src>
import functools

import jax
import jax.numpy as jnp
from jax.experimental import pallas as pl
from jax.experimental.pallas import tpu as pltpu


def _round_up(x, m):
    return (x + m - 1) // m * m


# ----------------------------- in-kernel helpers -----------------------------
def _zero_border(pad_ref, H, W):
    """Zero only the 1-pixel halo of a (n, H+2, Wp, C) padded scratch."""
    n, _, Wp, C = pad_ref.shape
    row = jnp.zeros((n, 1, Wp, C), pad_ref.dtype)
    pad_ref[:, 0:1, :, :] = row
    pad_ref[:, H + 1:H + 2, :, :] = row
    col = jnp.zeros((n, H, 1, C), pad_ref.dtype)
    pad_ref[:, 1:H + 1, 0:1, :] = col
    pad_ref[:, 1:H + 1, W + 1:W + 2, :] = col


def _conv3x3(pad_ref, w_ref, b_ref, relu, H, W):
    """3x3 'same' conv as 9 per-tap accumulated MXU matmuls (f32 accumulation).

    pad_ref: (n, H+2, Wp, Cin) bf16 zero-halo feature map (Wp >= W+2, aligned)
    w_ref  : (9, Cin, Cout)    bf16 per-tap weights (tap order: dy-major, dx)
    b_ref  : (1, Cout)         f32  bias
    returns: (n*H*W, Cout)     f32
    """
    n = pad_ref.shape[0]
    cin = pad_ref.shape[-1]
    cout = w_ref.shape[-1]
    m = n * H * W
    acc = jnp.zeros((m, cout), jnp.float32)
    t = 0
    for dy in range(3):
        for dx in range(3):
            tap = pad_ref[:, dy:dy + H, dx:dx + W, :].reshape(m, cin)
            acc = acc + jnp.dot(tap, w_ref[t],
                                preferred_element_type=jnp.float32)
            t += 1
    acc = acc + b_ref[...]
    if relu:
        acc = jnp.maximum(acc, 0.0)
    return acc


def _fused_detector_kernel(x_ref, w1_ref, b1_ref, w2_ref, b2_ref,
                           wh_ref, bh_ref, out_ref,
                           pad1, pad2, pad3, *, H, W):
    """Fused backbone (2 convs + ReLU) + fused loc/cls head, ipg images/step."""
    n = x_ref.shape[0]

    # Halo-only zeroing; interiors are fully overwritten below.
    _zero_border(pad1, H, W)
    _zero_border(pad2, H, W)
    _zero_border(pad3, H, W)

    # backbone conv1 + ReLU
    pad1[:, 1:H + 1, 1:W + 1, :] = x_ref[...].astype(pad1.dtype)
    f1 = _conv3x3(pad1, w1_ref, b1_ref, True, H, W)

    # backbone conv2 + ReLU (intermediate stays in VMEM as bf16)
    pad2[:, 1:H + 1, 1:W + 1, :] = f1.reshape(n, H, W, -1).astype(pad2.dtype)
    f2 = _conv3x3(pad2, w2_ref, b2_ref, True, H, W)

    # fused (loc | cls) head, output channels padded to a lane-dense 128
    pad3[:, 1:H + 1, 1:W + 1, :] = f2.reshape(n, H, W, -1).astype(pad3.dtype)
    head = _conv3x3(pad3, wh_ref, bh_ref, False, H, W)

    out_ref[...] = head.reshape(n, H * W, -1).astype(out_ref.dtype)


# --------------------------- parameter creation ------------------------------
def init_params(key, c_in=3, c_mid=16, c_feat=32, num_anchors=4, num_classes=3):
    """Deterministic synthetic parameters (kaiming-ish scaling), HWIO layout."""
    ks = jax.random.split(key, 8)

    def conv_w(k, cin, cout):
        fan_in = 9 * cin
        return jax.random.normal(k, (3, 3, cin, cout), jnp.float32) * (
            2.0 / fan_in) ** 0.5

    def bias(k, cout):
        return jax.random.normal(k, (cout,), jnp.float32) * 0.1

    return {
        "bb1_w": conv_w(ks[0], c_in, c_mid), "bb1_b": bias(ks[1], c_mid),
        "bb2_w": conv_w(ks[2], c_mid, c_feat), "bb2_b": bias(ks[3], c_feat),
        "loc_w": conv_w(ks[4], c_feat, num_anchors * 4),
        "loc_b": bias(ks[5], num_anchors * 4),
        "cls_w": conv_w(ks[6], c_feat, num_anchors * num_classes),
        "cls_b": bias(ks[7], num_anchors * num_classes),
    }


# ------------------------------- forward -------------------------------------
def single_stage_detector_forward(params, images_nchw,
                                  num_anchors=4, num_classes=3):
    """images_nchw: (B, C, H, W) float32, like the PyTorch module."""
    x = jnp.transpose(images_nchw, (0, 2, 3, 1))            # NCHW -> NHWC
    B, H, W, Cin = x.shape
    C1 = params["bb1_w"].shape[-1]
    C2 = params["bb2_w"].shape[-1]
    n_loc = params["loc_w"].shape[-1]                        # A*4
    n_cls = params["cls_w"].shape[-1]                        # A*num_classes
    CH = n_loc + n_cls
    CHP = _round_up(max(CH, 128), 128)                       # lane-dense head

    # Per-tap (9, cin, cout) bf16 weights; fused head zero-padded to CHP lanes.
    w1 = params["bb1_w"].reshape(9, Cin, C1).astype(jnp.bfloat16)
    w2 = params["bb2_w"].reshape(9, C1, C2).astype(jnp.bfloat16)
    wh = jnp.concatenate([params["loc_w"], params["cls_w"]], axis=-1)
    wh = jnp.pad(wh.reshape(9, C2, CH),
                 ((0, 0), (0, 0), (0, CHP - CH))).astype(jnp.bfloat16)
    b1 = params["bb1_b"].reshape(1, C1).astype(jnp.float32)
    b2 = params["bb2_b"].reshape(1, C2).astype(jnp.float32)
    bh = jnp.pad(jnp.concatenate([params["loc_b"], params["cls_b"]]),
                 (0, CHP - CH)).reshape(1, CHP).astype(jnp.float32)

    # At most 2 fat "parallel" grid steps: two v7x TensorCores get one step
    # each; on single-TC v5e/v6e the extra step costs ~0.35us only.
    n_steps = 2 if (B >= 2 and B % 2 == 0) else 1
    ipg = B // n_steps

    Wp = _round_up(W + 2, 16)        # sublane-aligned row stride (bf16 packs x2)

    def _pb(shape, itemsize):        # rough lane/sublane-padded VMEM bytes
        d = list(shape)
        d[-1] = _round_up(d[-1], 128)
        if len(d) >= 2:
            d[-2] = _round_up(d[-2], 8)
        sz = itemsize
        for v in d:
            sz *= v
        return sz

    scratch_bytes = sum(_pb((ipg, H + 2, Wp, c), 2) for c in (Cin, C1, C2))
    io_bytes = 2 * (_pb((ipg, H, W, Cin), 4) + _pb((ipg, H * W, CHP), 4))
    w_bytes = 2 * (_pb((9, Cin, C1), 2) + _pb((9, C1, C2), 2)
                   + _pb((9, C2, CHP), 2) + _pb((1, C1), 4)
                   + _pb((1, C2), 4) + _pb((1, CHP), 4))
    vmem_limit = min(64 << 20,
                     max(32 << 20,
                         int(1.5 * (scratch_bytes + io_bytes + w_bytes))))

    kernel = functools.partial(_fused_detector_kernel, H=H, W=W)

    head = pl.pallas_call(
        kernel,
        out_shape=jax.ShapeDtypeStruct((B, H * W, CHP), jnp.float32),
        grid=(n_steps,),
        in_specs=[
            pl.BlockSpec((ipg, H, W, Cin), lambda i: (i, 0, 0, 0)),
            pl.BlockSpec((9, Cin, C1), lambda i: (0, 0, 0)),
            pl.BlockSpec((1, C1), lambda i: (0, 0)),
            pl.BlockSpec((9, C1, C2), lambda i: (0, 0, 0)),
            pl.BlockSpec((1, C2), lambda i: (0, 0)),
            pl.BlockSpec((9, C2, CHP), lambda i: (0, 0, 0)),
            pl.BlockSpec((1, CHP), lambda i: (0, 0)),
        ],
        out_specs=pl.BlockSpec((ipg, H * W, CHP), lambda i: (i, 0, 0)),
        scratch_shapes=[
            pltpu.VMEM((ipg, H + 2, Wp, Cin), jnp.bfloat16),
            pltpu.VMEM((ipg, H + 2, Wp, C1), jnp.bfloat16),
            pltpu.VMEM((ipg, H + 2, Wp, C2), jnp.bfloat16),
        ],
        compiler_params=pltpu.CompilerParams(
            dimension_semantics=("parallel",),
            vmem_limit_bytes=vmem_limit),
    )(x, w1, b1, w2, b2, wh, bh)

    # Split fused head and reshape exactly like permute(0,2,3,1).reshape(...).
    predicted_boxes = head[..., :n_loc].reshape(B, H * W * num_anchors, 4)
    predicted_scores = head[..., n_loc:CH].reshape(B, H * W * num_anchors,
                                                   num_classes)
    return predicted_boxes, predicted_scores


# --------------------------- pure-JAX reference -------------------------------
def _ref_forward(params, images_nchw, num_anchors, num_classes):
    x = jnp.transpose(images_nchw, (0, 2, 3, 1))
    dn = ("NHWC", "HWIO", "NHWC")

    def conv(inp, w, b, relu):
        y = jax.lax.conv_general_dilated(inp, w, (1, 1), "SAME",
                                         dimension_numbers=dn) + b
        return jnp.maximum(y, 0.0) if relu else y

    f = conv(x, params["bb1_w"], params["bb1_b"], True)
    f = conv(f, params["bb2_w"], params["bb2_b"], True)
    loc = conv(f, params["loc_w"], params["loc_b"], False)
    cls = conv(f, params["cls_w"], params["cls_b"], False)
    B, H, W, _ = x.shape
    return (loc.reshape(B, H * W * num_anchors, 4),
            cls.reshape(B, H * W * num_anchors, num_classes))


# -------------------------------- main ----------------------------------------
if __name__ == "__main__":
    key = jax.random.PRNGKey(0)
    k_img, k_par = jax.random.split(key)

    B, C, H, W = 2, 3, 16, 16
    num_anchors, num_classes = 4, 3

    images = jax.random.normal(k_img, (B, C, H, W), jnp.float32)
    params = init_params(k_par, c_in=C, num_anchors=num_anchors,
                         num_classes=num_classes)

    fwd = jax.jit(functools.partial(single_stage_detector_forward,
                                    num_anchors=num_anchors,
                                    num_classes=num_classes))
    boxes, scores = fwd(params, images)
    jax.block_until_ready((boxes, scores))

    assert boxes.shape == (B, H * W * num_anchors, 4)
    assert scores.shape == (B, H * W * num_anchors, num_classes)

    # bf16 MXU matmuls vs f32 reference -> allow small relative drift.
    rb, rs = _ref_forward(params, images, num_anchors, num_classes)

    def rel_err(a, b):
        return float(jnp.max(jnp.abs(a - b)) / (jnp.max(jnp.abs(b)) + 1e-6))

    assert rel_err(boxes, rb) < 0.05, rel_err(boxes, rb)
    assert rel_err(scores, rs) < 0.05, rel_err(scores, rs)
    print("KERNEL_OK")
</pallas_src>

<mosaic_0001>
module attributes {stable_mosaic.version = 11 : i64} {
  func.func @_fused_detector_kernel(%arg0: i32, %arg1: memref<1x16x16x3xf32, #tpu.memory_space<vmem>>, %arg2: memref<9x3x16xbf16, #tpu.memory_space<vmem>>, %arg3: memref<1x16xf32, #tpu.memory_space<vmem>>, %arg4: memref<9x16x32xbf16, #tpu.memory_space<vmem>>, %arg5: memref<1x32xf32, #tpu.memory_space<vmem>>, %arg6: memref<9x32x128xbf16, #tpu.memory_space<vmem>>, %arg7: memref<1x128xf32, #tpu.memory_space<vmem>>, %arg8: memref<1x256x128xf32, #tpu.memory_space<vmem>>, %arg9: memref<1x18x32x3xbf16, #tpu.memory_space<vmem>>, %arg10: memref<1x18x32x16xbf16, #tpu.memory_space<vmem>>, %arg11: memref<1x18x32x32xbf16, #tpu.memory_space<vmem>>) attributes {dimension_semantics = [#tpu.dimension_semantics<parallel>], iteration_bounds = array<i64: 2>, scalar_prefetch = 0 : i64, scratch_operands = 3 : i64, tpu.core_type = #tpu.core_type<tc>, window_params = [{transform_indices = @transform_0, window_bounds = array<i64: 1, 16, 16, 3>}, {pipeline_mode = #tpu.pipeline_mode<synchronous>, transform_indices = @transform_1, window_bounds = array<i64: 9, 3, 16>}, {pipeline_mode = #tpu.pipeline_mode<synchronous>, transform_indices = @transform_2, window_bounds = array<i64: 1, 16>}, {pipeline_mode = #tpu.pipeline_mode<synchronous>, transform_indices = @transform_3, window_bounds = array<i64: 9, 16, 32>}, {pipeline_mode = #tpu.pipeline_mode<synchronous>, transform_indices = @transform_4, window_bounds = array<i64: 1, 32>}, {pipeline_mode = #tpu.pipeline_mode<synchronous>, transform_indices = @transform_5, window_bounds = array<i64: 9, 32, 128>}, {pipeline_mode = #tpu.pipeline_mode<synchronous>, transform_indices = @transform_6, window_bounds = array<i64: 1, 128>}, {transform_indices = @transform_7, window_bounds = array<i64: 1, 256, 128>}]} {
    %cst = arith.constant 0.000000e+00 : bf16
    %0 = vector.broadcast %cst : bf16 to vector<1x1x32x3xbf16>
    %c0 = arith.constant 0 : index
    %c0_0 = arith.constant 0 : index
    %c0_1 = arith.constant 0 : index
    %c0_2 = arith.constant 0 : index
    %1 = vector.load %arg9[%c0, %c0_0, %c0_1, %c0_2] : memref<1x18x32x3xbf16, #tpu.memory_space<vmem>>, vector<1x1x32x3xbf16>
    tpu.vector_store %arg9[%c0, %c0_0, %c0_1, %c0_2], %0 {strides = array<i32>} : memref<1x18x32x3xbf16, #tpu.memory_space<vmem>>, vector<1x1x32x3xbf16>,
    %c0_3 = arith.constant 0 : index
    %c17 = arith.constant 17 : index
    %c0_4 = arith.constant 0 : index
    %c0_5 = arith.constant 0 : index
    %2 = vector.load %arg9[%c0_3, %c17, %c0_4, %c0_5] : memref<1x18x32x3xbf16, #tpu.memory_space<vmem>>, vector<1x1x32x3xbf16>
    tpu.vector_store %arg9[%c0_3, %c17, %c0_4, %c0_5], %0 {strides = array<i32>} : memref<1x18x32x3xbf16, #tpu.memory_space<vmem>>, vector<1x1x32x3xbf16>,
    %cst_6 = arith.constant 0.000000e+00 : bf16
    %3 = vector.broadcast %cst_6 : bf16 to vector<1x16x1x3xbf16>
    %c0_7 = arith.constant 0 : index
    %c1 = arith.constant 1 : index
    %c0_8 = arith.constant 0 : index
    %c0_9 = arith.constant 0 : index
    %4 = vector.load %arg9[%c0_7, %c1, %c0_8, %c0_9] : memref<1x18x32x3xbf16, #tpu.memory_space<vmem>>, vector<1x16x1x3xbf16>
    tpu.vector_store %arg9[%c0_7, %c1, %c0_8, %c0_9], %3 {strides = array<i32>} : memref<1x18x32x3xbf16, #tpu.memory_space<vmem>>, vector<1x16x1x3xbf16>,
    %c0_10 = arith.constant 0 : index
    %c1_11 = arith.constant 1 : index
    %c17_12 = arith.constant 17 : index
    %c0_13 = arith.constant 0 : index
    %5 = vector.load %arg9[%c0_10, %c1_11, %c17_12, %c0_13] : memref<1x18x32x3xbf16, #tpu.memory_space<vmem>>, vector<1x16x1x3xbf16>
    tpu.vector_store %arg9[%c0_10, %c1_11, %c17_12, %c0_13], %3 {strides = array<i32>} : memref<1x18x32x3xbf16, #tpu.memory_space<vmem>>, vector<1x16x1x3xbf16>,
    %cst_14 = arith.constant 0.000000e+00 : bf16
    %6 = vector.broadcast %cst_14 : bf16 to vector<1x1x32x16xbf16>
    %c0_15 = arith.constant 0 : index
    %c0_16 = arith.constant 0 : index
    %c0_17 = arith.constant 0 : index
    %c0_18 = arith.constant 0 : index
    %7 = vector.load %arg10[%c0_15, %c0_16, %c0_17, %c0_18] : memref<1x18x32x16xbf16, #tpu.memory_space<vmem>>, vector<1x1x32x16xbf16>
    tpu.vector_store %arg10[%c0_15, %c0_16, %c0_17, %c0_18], %6 {strides = array<i32>} : memref<1x18x32x16xbf16, #tpu.memory_space<vmem>>, vector<1x1x32x16xbf16>,
    %c0_19 = arith.constant 0 : index
    %c17_20 = arith.constant 17 : index
    %c0_21 = arith.constant 0 : index
    %c0_22 = arith.constant 0 : index
    %8 = vector.load %arg10[%c0_19, %c17_20, %c0_21, %c0_22] : memref<1x18x32x16xbf16, #tpu.memory_space<vmem>>, vector<1x1x32x16xbf16>
    tpu.vector_store %arg10[%c0_19, %c17_20, %c0_21, %c0_22], %6 {strides = array<i32>} : memref<1x18x32x16xbf16, #tpu.memory_space<vmem>>, vector<1x1x32x16xbf16>,
    %cst_23 = arith.constant 0.000000e+00 : bf16
    %9 = vector.broadcast %cst_23 : bf16 to vector<1x16x1x16xbf16>
    %c0_24 = arith.constant 0 : index
    %c1_25 = arith.constant 1 : index
    %c0_26 = arith.constant 0 : index
    %c0_27 = arith.constant 0 : index
    %10 = vector.load %arg10[%c0_24, %c1_25, %c0_26, %c0_27] : memref<1x18x32x16xbf16, #tpu.memory_space<vmem>>, vector<1x16x1x16xbf16>
    tpu.vector_store %arg10[%c0_24, %c1_25, %c0_26, %c0_27], %9 {strides = array<i32>} : memref<1x18x32x16xbf16, #tpu.memory_space<vmem>>, vector<1x16x1x16xbf16>,
    %c0_28 = arith.constant 0 : index
    %c1_29 = arith.constant 1 : index
    %c17_30 = arith.constant 17 : index
    %c0_31 = arith.constant 0 : index
    %11 = vector.load %arg10[%c0_28, %c1_29, %c17_30, %c0_31] : memref<1x18x32x16xbf16, #tpu.memory_space<vmem>>, vector<1x16x1x16xbf16>
    tpu.vector_store %arg10[%c0_28, %c1_29, %c17_30, %c0_31], %9 {strides = array<i32>} : memref<1x18x32x16xbf16, #tpu.memory_space<vmem>>, vector<1x16x1x16xbf16>,
    %cst_32 = arith.constant 0.000000e+00 : bf16
    %12 = vector.broadcast %cst_32 : bf16 to vector<1x1x32x32xbf16>
    %c0_33 = arith.constant 0 : index
    %c0_34 = arith.constant 0 : index
    %c0_35 = arith.constant 0 : index
    %c0_36 = arith.constant 0 : index
    %13 = vector.load %arg11[%c0_33, %c0_34, %c0_35, %c0_36] : memref<1x18x32x32xbf16, #tpu.memory_space<vmem>>, vector<1x1x32x32xbf16>
    tpu.vector_store %arg11[%c0_33, %c0_34, %c0_35, %c0_36], %12 {strides = array<i32>} : memref<1x18x32x32xbf16, #tpu.memory_space<vmem>>, vector<1x1x32x32xbf16>,
    %c0_37 = arith.constant 0 : index
    %c17_38 = arith.constant 17 : index
    %c0_39 = arith.constant 0 : index
    %c0_40 = arith.constant 0 : index
    %14 = vector.load %arg11[%c0_37, %c17_38, %c0_39, %c0_40] : memref<1x18x32x32xbf16, #tpu.memory_space<vmem>>, vector<1x1x32x32xbf16>
    tpu.vector_store %arg11[%c0_37, %c17_38, %c0_39, %c0_40], %12 {strides = array<i32>} : memref<1x18x32x32xbf16, #tpu.memory_space<vmem>>, vector<1x1x32x32xbf16>,
    %cst_41 = arith.constant 0.000000e+00 : bf16
    %15 = vector.broadcast %cst_41 : bf16 to vector<1x16x1x32xbf16>
    %c0_42 = arith.constant 0 : index
    %c1_43 = arith.constant 1 : index
    %c0_44 = arith.constant 0 : index
    %c0_45 = arith.constant 0 : index
    %16 = vector.load %arg11[%c0_42, %c1_43, %c0_44, %c0_45] : memref<1x18x32x32xbf16, #tpu.memory_space<vmem>>, vector<1x16x1x32xbf16>
    tpu.vector_store %arg11[%c0_42, %c1_43, %c0_44, %c0_45], %15 {strides = array<i32>} : memref<1x18x32x32xbf16, #tpu.memory_space<vmem>>, vector<1x16x1x32xbf16>,
    %c0_46 = arith.constant 0 : index
    %c1_47 = arith.constant 1 : index
    %c17_48 = arith.constant 17 : index
    %c0_49 = arith.constant 0 : index
    %17 = vector.load %arg11[%c0_46, %c1_47, %c17_48, %c0_49] : memref<1x18x32x32xbf16, #tpu.memory_space<vmem>>, vector<1x16x1x32xbf16>
    tpu.vector_store %arg11[%c0_46, %c1_47, %c17_48, %c0_49], %15 {strides = array<i32>} : memref<1x18x32x32xbf16, #tpu.memory_space<vmem>>, vector<1x16x1x32xbf16>,
    %c0_50 = arith.constant 0 : index
    %c0_51 = arith.constant 0 : index
    %c0_52 = arith.constant 0 : index
    %c0_53 = arith.constant 0 : index
    %18 = vector.load %arg1[%c0_50, %c0_51, %c0_52, %c0_53] : memref<1x16x16x3xf32, #tpu.memory_space<vmem>>, vector<1x16x16x3xf32>
    %19 = arith.truncf %18 : vector<1x16x16x3xf32> to vector<1x16x16x3xbf16>
    %c0_54 = arith.constant 0 : index
    %c1_55 = arith.constant 1 : index
    %c1_56 = arith.constant 1 : index
    %c0_57 = arith.constant 0 : index
    %20 = vector.load %arg9[%c0_54, %c1_55, %c1_56, %c0_57] : memref<1x18x32x3xbf16, #tpu.memory_space<vmem>>, vector<1x16x16x3xbf16>
    tpu.vector_store %arg9[%c0_54, %c1_55, %c1_56, %c0_57], %19 {strides = array<i32>} : memref<1x18x32x3xbf16, #tpu.memory_space<vmem>>, vector<1x16x16x3xbf16>,
    %cst_58 = arith.constant 0.000000e+00 : f32
    %21 = vector.broadcast %cst_58 : f32 to vector<256x16xf32>
    %c0_59 = arith.constant 0 : index
    %c0_60 = arith.constant 0 : index
    %c0_61 = arith.constant 0 : index
    %c0_62 = arith.constant 0 : index
    %22 = vector.load %arg9[%c0_59, %c0_60, %c0_61, %c0_62] : memref<1x18x32x3xbf16, #tpu.memory_space<vmem>>, vector<1x16x16x3xbf16>
    %23 = vector.shape_cast %22 : vector<1x16x16x3xbf16> to vector<256x3xbf16>
    %c0_63 = arith.constant 0 : index
    %c0_64 = arith.constant 0 : index
    %c0_65 = arith.constant 0 : index
    %24 = vector.load %arg2[%c0_63, %c0_64, %c0_65] : memref<9x3x16xbf16, #tpu.memory_space<vmem>>, vector<1x3x16xbf16>
    %25 = vector.shape_cast %24 : vector<1x3x16xbf16> to vector<3x16xbf16>
    %cst_66 = arith.constant dense<0.000000e+00> : vector<256x16xf32>
    %26 = tpu.matmul %23, %25, %cst_66 {dimension_numbers = #tpu.dot_dimension_numbers<[1], [0], [0], [1], [0, 0, 1, 1], [], []>} : vector<256x3xbf16>, vector<3x16xbf16>, vector<256x16xf32> -> vector<256x16xf32>
    %27 = arith.addf %21, %26 : vector<256x16xf32>
    %c0_67 = arith.constant 0 : index
    %c0_68 = arith.constant 0 : index
    %c1_69 = arith.constant 1 : index
    %c0_70 = arith.constant 0 : index
    %28 = vector.load %arg9[%c0_67, %c0_68, %c1_69, %c0_70] : memref<1x18x32x3xbf16, #tpu.memory_space<vmem>>, vector<1x16x16x3xbf16>
    %29 = vector.shape_cast %28 : vector<1x16x16x3xbf16> to vector<256x3xbf16>
    %c1_71 = arith.constant 1 : index
    %c0_72 = arith.constant 0 : index
    %c0_73 = arith.constant 0 : index
    %30 = vector.load %arg2[%c1_71, %c0_72, %c0_73] : memref<9x3x16xbf16, #tpu.memory_space<vmem>>, vector<1x3x16xbf16>
    %31 = vector.shape_cast %30 : vector<1x3x16xbf16> to vector<3x16xbf16>
    %cst_74 = arith.constant dense<0.000000e+00> : vector<256x16xf32>
    %32 = tpu.matmul %29, %31, %cst_74 {dimension_numbers = #tpu.dot_dimension_numbers<[1], [0], [0], [1], [0, 0, 1, 1], [], []>} : vector<256x3xbf16>, vector<3x16xbf16>, vector<256x16xf32> -> vector<256x16xf32>
    %33 = arith.addf %27, %32 : vector<256x16xf32>
    %c0_75 = arith.constant 0 : index
    %c0_76 = arith.constant 0 : index
    %c2 = arith.constant 2 : index
    %c0_77 = arith.constant 0 : index
    %34 = vector.load %arg9[%c0_75, %c0_76, %c2, %c0_77] : memref<1x18x32x3xbf16, #tpu.memory_space<vmem>>, vector<1x16x16x3xbf16>
    %35 = vector.shape_cast %34 : vector<1x16x16x3xbf16> to vector<256x3xbf16>
    %c2_78 = arith.constant 2 : index
    %c0_79 = arith.constant 0 : index
    %c0_80 = arith.constant 0 : index
    %36 = vector.load %arg2[%c2_78, %c0_79, %c0_80] : memref<9x3x16xbf16, #tpu.memory_space<vmem>>, vector<1x3x16xbf16>
    %37 = vector.shape_cast %36 : vector<1x3x16xbf16> to vector<3x16xbf16>
    %cst_81 = arith.constant dense<0.000000e+00> : vector<256x16xf32>
    %38 = tpu.matmul %35, %37, %cst_81 {dimension_numbers = #tpu.dot_dimension_numbers<[1], [0], [0], [1], [0, 0, 1, 1], [], []>} : vector<256x3xbf16>, vector<3x16xbf16>, vector<256x16xf32> -> vector<256x16xf32>
    %39 = arith.addf %33, %38 : vector<256x16xf32>
    %c0_82 = arith.constant 0 : index
    %c1_83 = arith.constant 1 : index
    %c0_84 = arith.constant 0 : index
    %c0_85 = arith.constant 0 : index
    %40 = vector.load %arg9[%c0_82, %c1_83, %c0_84, %c0_85] : memref<1x18x32x3xbf16, #tpu.memory_space<vmem>>, vector<1x16x16x3xbf16>
    %41 = vector.shape_cast %40 : vector<1x16x16x3xbf16> to vector<256x3xbf16>
    %c3 = arith.constant 3 : index
    %c0_86 = arith.constant 0 : index
    %c0_87 = arith.constant 0 : index
    %42 = vector.load %arg2[%c3, %c0_86, %c0_87] : memref<9x3x16xbf16, #tpu.memory_space<vmem>>, vector<1x3x16xbf16>
    %43 = vector.shape_cast %42 : vector<1x3x16xbf16> to vector<3x16xbf16>
    %cst_88 = arith.constant dense<0.000000e+00> : vector<256x16xf32>
    %44 = tpu.matmul %41, %43, %cst_88 {dimension_numbers = #tpu.dot_dimension_numbers<[1], [0], [0], [1], [0, 0, 1, 1], [], []>} : vector<256x3xbf16>, vector<3x16xbf16>, vector<256x16xf32> -> vector<256x16xf32>
    %45 = arith.addf %39, %44 : vector<256x16xf32>
    %c0_89 = arith.constant 0 : index
    %c1_90 = arith.constant 1 : index
    %c1_91 = arith.constant 1 : index
    %c0_92 = arith.constant 0 : index
    %46 = vector.load %arg9[%c0_89, %c1_90, %c1_91, %c0_92] : memref<1x18x32x3xbf16, #tpu.memory_space<vmem>>, vector<1x16x16x3xbf16>
    %47 = vector.shape_cast %46 : vector<1x16x16x3xbf16> to vector<256x3xbf16>
    %c4 = arith.constant 4 : index
    %c0_93 = arith.constant 0 : index
    %c0_94 = arith.constant 0 : index
    %48 = vector.load %arg2[%c4, %c0_93, %c0_94] : memref<9x3x16xbf16, #tpu.memory_space<vmem>>, vector<1x3x16xbf16>
    %49 = vector.shape_cast %48 : vector<1x3x16xbf16> to vector<3x16xbf16>
    %cst_95 = arith.constant dense<0.000000e+00> : vector<256x16xf32>
    %50 = tpu.matmul %47, %49, %cst_95 {dimension_numbers = #tpu.dot_dimension_numbers<[1], [0], [0], [1], [0, 0, 1, 1], [], []>} : vector<256x3xbf16>, vector<3x16xbf16>, vector<256x16xf32> -> vector<256x16xf32>
    %51 = arith.addf %45, %50 : vector<256x16xf32>
    %c0_96 = arith.constant 0 : index
    %c1_97 = arith.constant 1 : index
    %c2_98 = arith.constant 2 : index
    %c0_99 = arith.constant 0 : index
    %52 = vector.load %arg9[%c0_96, %c1_97, %c2_98, %c0_99] : memref<1x18x32x3xbf16, #tpu.memory_space<vmem>>, vector<1x16x16x3xbf16>
    %53 = vector.shape_cast %52 : vector<1x16x16x3xbf16> to vector<256x3xbf16>
    %c5 = arith.constant 5 : index
    %c0_100 = arith.constant 0 : index
    %c0_101 = arith.constant 0 : index
    %54 = vector.load %arg2[%c5, %c0_100, %c0_101] : memref<9x3x16xbf16, #tpu.memory_space<vmem>>, vector<1x3x16xbf16>
    %55 = vector.shape_cast %54 : vector<1x3x16xbf16> to vector<3x16xbf16>
    %cst_102 = arith.constant dense<0.000000e+00> : vector<256x16xf32>
    %56 = tpu.matmul %53, %55, %cst_102 {dimension_numbers = #tpu.dot_dimension_numbers<[1], [0], [0], [1], [0, 0, 1, 1], [], []>} : vector<256x3xbf16>, vector<3x16xbf16>, vector<256x16xf32> -> vector<256x16xf32>
    %57 = arith.addf %51, %56 : vector<256x16xf32>
    %c0_103 = arith.constant 0 : index
    %c2_104 = arith.constant 2 : index
    %c0_105 = arith.constant 0 : index
    %c0_106 = arith.constant 0 : index
    %58 = vector.load %arg9[%c0_103, %c2_104, %c0_105, %c0_106] : memref<1x18x32x3xbf16, #tpu.memory_space<vmem>>, vector<1x16x16x3xbf16>
    %59 = vector.shape_cast %58 : vector<1x16x16x3xbf16> to vector<256x3xbf16>
    %c6 = arith.constant 6 : index
    %c0_107 = arith.constant 0 : index
    %c0_108 = arith.constant 0 : index
    %60 = vector.load %arg2[%c6, %c0_107, %c0_108] : memref<9x3x16xbf16, #tpu.memory_space<vmem>>, vector<1x3x16xbf16>
    %61 = vector.shape_cast %60 : vector<1x3x16xbf16> to vector<3x16xbf16>
    %cst_109 = arith.constant dense<0.000000e+00> : vector<256x16xf32>
    %62 = tpu.matmul %59, %61, %cst_109 {dimension_numbers = #tpu.dot_dimension_numbers<[1], [0], [0], [1], [0, 0, 1, 1], [], []>} : vector<256x3xbf16>, vector<3x16xbf16>, vector<256x16xf32> -> vector<256x16xf32>
    %63 = arith.addf %57, %62 : vector<256x16xf32>
    %c0_110 = arith.constant 0 : index
    %c2_111 = arith.constant 2 : index
    %c1_112 = arith.constant 1 : index
    %c0_113 = arith.constant 0 : index
    %64 = vector.load %arg9[%c0_110, %c2_111, %c1_112, %c0_113] : memref<1x18x32x3xbf16, #tpu.memory_space<vmem>>, vector<1x16x16x3xbf16>
    %65 = vector.shape_cast %64 : vector<1x16x16x3xbf16> to vector<256x3xbf16>
    %c7 = arith.constant 7 : index
    %c0_114 = arith.constant 0 : index
    %c0_115 = arith.constant 0 : index
    %66 = vector.load %arg2[%c7, %c0_114, %c0_115] : memref<9x3x16xbf16, #tpu.memory_space<vmem>>, vector<1x3x16xbf16>
    %67 = vector.shape_cast %66 : vector<1x3x16xbf16> to vector<3x16xbf16>
    %cst_116 = arith.constant dense<0.000000e+00> : vector<256x16xf32>
    %68 = tpu.matmul %65, %67, %cst_116 {dimension_numbers = #tpu.dot_dimension_numbers<[1], [0], [0], [1], [0, 0, 1, 1], [], []>} : vector<256x3xbf16>, vector<3x16xbf16>, vector<256x16xf32> -> vector<256x16xf32>
    %69 = arith.addf %63, %68 : vector<256x16xf32>
    %c0_117 = arith.constant 0 : index
    %c2_118 = arith.constant 2 : index
    %c2_119 = arith.constant 2 : index
    %c0_120 = arith.constant 0 : index
    %70 = vector.load %arg9[%c0_117, %c2_118, %c2_119, %c0_120] : memref<1x18x32x3xbf16, #tpu.memory_space<vmem>>, vector<1x16x16x3xbf16>
    %71 = vector.shape_cast %70 : vector<1x16x16x3xbf16> to vector<256x3xbf16>
    %c8 = arith.constant 8 : index
    %c0_121 = arith.constant 0 : index
    %c0_122 = arith.constant 0 : index
    %72 = vector.load %arg2[%c8, %c0_121, %c0_122] : memref<9x3x16xbf16, #tpu.memory_space<vmem>>, vector<1x3x16xbf16>
    %73 = vector.shape_cast %72 : vector<1x3x16xbf16> to vector<3x16xbf16>
    %cst_123 = arith.constant dense<0.000000e+00> : vector<256x16xf32>
    %74 = tpu.matmul %71, %73, %cst_123 {dimension_numbers = #tpu.dot_dimension_numbers<[1], [0], [0], [1], [0, 0, 1, 1], [], []>} : vector<256x3xbf16>, vector<3x16xbf16>, vector<256x16xf32> -> vector<256x16xf32>
    %75 = arith.addf %69, %74 : vector<256x16xf32>
    %c0_124 = arith.constant 0 : index
    %c0_125 = arith.constant 0 : index
    %76 = vector.load %arg3[%c0_124, %c0_125] : memref<1x16xf32, #tpu.memory_space<vmem>>, vector<1x16xf32>
    %77 = vector.broadcast %76 : vector<1x16xf32> to vector<256x16xf32>
    %78 = arith.addf %75, %77 : vector<256x16xf32>
    %cst_126 = arith.constant 0.000000e+00 : f32
    %79 = vector.broadcast %cst_126 : f32 to vector<256x16xf32>
    %80 = arith.maximumf %78, %79 : vector<256x16xf32>
    %81 = vector.shape_cast %80 : vector<256x16xf32> to vector<1x16x16x16xf32>
    %82 = arith.truncf %81 : vector<1x16x16x16xf32> to vector<1x16x16x16xbf16>
    %c0_127 = arith.constant 0 : index
    %c1_128 = arith.constant 1 : index
    %c1_129 = arith.constant 1 : index
    %c0_130 = arith.constant 0 : index
    %83 = vector.load %arg10[%c0_127, %c1_128, %c1_129, %c0_130] : memref<1x18x32x16xbf16, #tpu.memory_space<vmem>>, vector<1x16x16x16xbf16>
    tpu.vector_store %arg10[%c0_127, %c1_128, %c1_129, %c0_130], %82 {strides = array<i32>} : memref<1x18x32x16xbf16, #tpu.memory_space<vmem>>, vector<1x16x16x16xbf16>,
    %cst_131 = arith.constant 0.000000e+00 : f32
    %84 = vector.broadcast %cst_131 : f32 to vector<256x32xf32>
    %c0_132 = arith.constant 0 : index
    %c0_133 = arith.constant 0 : index
    %c0_134 = arith.constant 0 : index
    %c0_135 = arith.constant 0 : index
    %85 = vector.load %arg10[%c0_132, %c0_133, %c0_134, %c0_135] : memref<1x18x32x16xbf16, #tpu.memory_space<vmem>>, vector<1x16x16x16xbf16>
    %86 = vector.shape_cast %85 : vector<1x16x16x16xbf16> to vector<256x16xbf16>
    %c0_136 = arith.constant 0 : index
    %c0_137 = arith.constant 0 : index
    %c0_138 = arith.constant 0 : index
    %87 = vector.load %arg4[%c0_136, %c0_137, %c0_138] : memref<9x16x32xbf16, #tpu.memory_space<vmem>>, vector<1x16x32xbf16>
    %88 = vector.shape_cast %87 : vector<1x16x32xbf16> to vector<16x32xbf16>
    %cst_139 = arith.constant dense<0.000000e+00> : vector<256x32xf32>
    %89 = tpu.matmul %86, %88, %cst_139 {dimension_numbers = #tpu.dot_dimension_numbers<[1], [0], [0], [1], [0, 0, 1, 1], [], []>} : vector<256x16xbf16>, vector<16x32xbf16>, vector<256x32xf32> -> vector<256x32xf32>
    %90 = arith.addf %84, %89 : vector<256x32xf32>
    %c0_140 = arith.constant 0 : index
    %c0_141 = arith.constant 0 : index
    %c1_142 = arith.constant 1 : index
    %c0_143 = arith.constant 0 : index
    %91 = vector.load %arg10[%c0_140, %c0_141, %c1_142, %c0_143] : memref<1x18x32x16xbf16, #tpu.memory_space<vmem>>, vector<1x16x16x16xbf16>
    %92 = vector.shape_cast %91 : vector<1x16x16x16xbf16> to vector<256x16xbf16>
    %c1_144 = arith.constant 1 : index
    %c0_145 = arith.constant 0 : index
    %c0_146 = arith.constant 0 : index
    %93 = vector.load %arg4[%c1_144, %c0_145, %c0_146] : memref<9x16x32xbf16, #tpu.memory_space<vmem>>, vector<1x16x32xbf16>
    %94 = vector.shape_cast %93 : vector<1x16x32xbf16> to vector<16x32xbf16>
    %cst_147 = arith.constant dense<0.000000e+00> : vector<256x32xf32>
    %95 = tpu.matmul %92, %94, %cst_147 {dimension_numbers = #tpu.dot_dimension_numbers<[1], [0], [0], [1], [0, 0, 1, 1], [], []>} : vector<256x16xbf16>, vector<16x32xbf16>, vector<256x32xf32> -> vector<256x32xf32>
    %96 = arith.addf %90, %95 : vector<256x32xf32>
    %c0_148 = arith.constant 0 : index
    %c0_149 = arith.constant 0 : index
    %c2_150 = arith.constant 2 : index
    %c0_151 = arith.constant 0 : index
    %97 = vector.load %arg10[%c0_148, %c0_149, %c2_150, %c0_151] : memref<1x18x32x16xbf16, #tpu.memory_space<vmem>>, vector<1x16x16x16xbf16>
    %98 = vector.shape_cast %97 : vector<1x16x16x16xbf16> to vector<256x16xbf16>
    %c2_152 = arith.constant 2 : index
    %c0_153 = arith.constant 0 : index
    %c0_154 = arith.constant 0 : index
    %99 = vector.load %arg4[%c2_152, %c0_153, %c0_154] : memref<9x16x32xbf16, #tpu.memory_space<vmem>>, vector<1x16x32xbf16>
    %100 = vector.shape_cast %99 : vector<1x16x32xbf16> to vector<16x32xbf16>
    %cst_155 = arith.constant dense<0.000000e+00> : vector<256x32xf32>
    %101 = tpu.matmul %98, %100, %cst_155 {dimension_numbers = #tpu.dot_dimension_numbers<[1], [0], [0], [1], [0, 0, 1, 1], [], []>} : vector<256x16xbf16>, vector<16x32xbf16>, vector<256x32xf32> -> vector<256x32xf32>
    %102 = arith.addf %96, %101 : vector<256x32xf32>
    %c0_156 = arith.constant 0 : index
    %c1_157 = arith.constant 1 : index
    %c0_158 = arith.constant 0 : index
    %c0_159 = arith.constant 0 : index
    %103 = vector.load %arg10[%c0_156, %c1_157, %c0_158, %c0_159] : memref<1x18x32x16xbf16, #tpu.memory_space<vmem>>, vector<1x16x16x16xbf16>
    %104 = vector.shape_cast %103 : vector<1x16x16x16xbf16> to vector<256x16xbf16>
    %c3_160 = arith.constant 3 : index
    %c0_161 = arith.constant 0 : index
    %c0_162 = arith.constant 0 : index
    %105 = vector.load %arg4[%c3_160, %c0_161, %c0_162] : memref<9x16x32xbf16, #tpu.memory_space<vmem>>, vector<1x16x32xbf16>
    %106 = vector.shape_cast %105 : vector<1x16x32xbf16> to vector<16x32xbf16>
    %cst_163 = arith.constant dense<0.000000e+00> : vector<256x32xf32>
    %107 = tpu.matmul %104, %106, %cst_163 {dimension_numbers = #tpu.dot_dimension_numbers<[1], [0], [0], [1], [0, 0, 1, 1], [], []>} : vector<256x16xbf16>, vector<16x32xbf16>, vector<256x32xf32> -> vector<256x32xf32>
    %108 = arith.addf %102, %107 : vector<256x32xf32>
    %c0_164 = arith.constant 0 : index
    %c1_165 = arith.constant 1 : index
    %c1_166 = arith.constant 1 : index
    %c0_167 = arith.constant 0 : index
    %109 = vector.load %arg10[%c0_164, %c1_165, %c1_166, %c0_167] : memref<1x18x32x16xbf16, #tpu.memory_space<vmem>>, vector<1x16x16x16xbf16>
    %110 = vector.shape_cast %109 : vector<1x16x16x16xbf16> to vector<256x16xbf16>
    %c4_168 = arith.constant 4 : index
    %c0_169 = arith.constant 0 : index
    %c0_170 = arith.constant 0 : index
    %111 = vector.load %arg4[%c4_168, %c0_169, %c0_170] : memref<9x16x32xbf16, #tpu.memory_space<vmem>>, vector<1x16x32xbf16>
    %112 = vector.shape_cast %111 : vector<1x16x32xbf16> to vector<16x32xbf16>
    %cst_171 = arith.constant dense<0.000000e+00> : vector<256x32xf32>
    %113 = tpu.matmul %110, %112, %cst_171 {dimension_numbers = #tpu.dot_dimension_numbers<[1], [0], [0], [1], [0, 0, 1, 1], [], []>} : vector<256x16xbf16>, vector<16x32xbf16>, vector<256x32xf32> -> vector<256x32xf32>
    %114 = arith.addf %108, %113 : vector<256x32xf32>
    %c0_172 = arith.constant 0 : index
    %c1_173 = arith.constant 1 : index
    %c2_174 = arith.constant 2 : index
    %c0_175 = arith.constant 0 : index
    %115 = vector.load %arg10[%c0_172, %c1_173, %c2_174, %c0_175] : memref<1x18x32x16xbf16, #tpu.memory_space<vmem>>, vector<1x16x16x16xbf16>
    %116 = vector.shape_cast %115 : vector<1x16x16x16xbf16> to vector<256x16xbf16>
    %c5_176 = arith.constant 5 : index
    %c0_177 = arith.constant 0 : index
    %c0_178 = arith.constant 0 : index
    %117 = vector.load %arg4[%c5_176, %c0_177, %c0_178] : memref<9x16x32xbf16, #tpu.memory_space<vmem>>, vector<1x16x32xbf16>
    %118 = vector.shape_cast %117 : vector<1x16x32xbf16> to vector<16x32xbf16>
    %cst_179 = arith.constant dense<0.000000e+00> : vector<256x32xf32>
    %119 = tpu.matmul %116, %118, %cst_179 {dimension_numbers = #tpu.dot_dimension_numbers<[1], [0], [0], [1], [0, 0, 1, 1], [], []>} : vector<256x16xbf16>, vector<16x32xbf16>, vector<256x32xf32> -> vector<256x32xf32>
    %120 = arith.addf %114, %119 : vector<256x32xf32>
    %c0_180 = arith.constant 0 : index
    %c2_181 = arith.constant 2 : index
    %c0_182 = arith.constant 0 : index
    %c0_183 = arith.constant 0 : index
    %121 = vector.load %arg10[%c0_180, %c2_181, %c0_182, %c0_183] : memref<1x18x32x16xbf16, #tpu.memory_space<vmem>>, vector<1x16x16x16xbf16>
    %122 = vector.shape_cast %121 : vector<1x16x16x16xbf16> to vector<256x16xbf16>
    %c6_184 = arith.constant 6 : index
    %c0_185 = arith.constant 0 : index
    %c0_186 = arith.constant 0 : index
    %123 = vector.load %arg4[%c6_184, %c0_185, %c0_186] : memref<9x16x32xbf16, #tpu.memory_space<vmem>>, vector<1x16x32xbf16>
    %124 = vector.shape_cast %123 : vector<1x16x32xbf16> to vector<16x32xbf16>
    %cst_187 = arith.constant dense<0.000000e+00> : vector<256x32xf32>
    %125 = tpu.matmul %122, %124, %cst_187 {dimension_numbers = #tpu.dot_dimension_numbers<[1], [0], [0], [1], [0, 0, 1, 1], [], []>} : vector<256x16xbf16>, vector<16x32xbf16>, vector<256x32xf32> -> vector<256x32xf32>
    %126 = arith.addf %120, %125 : vector<256x32xf32>
    %c0_188 = arith.constant 0 : index
    %c2_189 = arith.constant 2 : index
    %c1_190 = arith.constant 1 : index
    %c0_191 = arith.constant 0 : index
    %127 = vector.load %arg10[%c0_188, %c2_189, %c1_190, %c0_191] : memref<1x18x32x16xbf16, #tpu.memory_space<vmem>>, vector<1x16x16x16xbf16>
    %128 = vector.shape_cast %127 : vector<1x16x16x16xbf16> to vector<256x16xbf16>
    %c7_192 = arith.constant 7 : index
    %c0_193 = arith.constant 0 : index
    %c0_194 = arith.constant 0 : index
    %129 = vector.load %arg4[%c7_192, %c0_193, %c0_194] : memref<9x16x32xbf16, #tpu.memory_space<vmem>>, vector<1x16x32xbf16>
    %130 = vector.shape_cast %129 : vector<1x16x32xbf16> to vector<16x32xbf16>
    %cst_195 = arith.constant dense<0.000000e+00> : vector<256x32xf32>
    %131 = tpu.matmul %128, %130, %cst_195 {dimension_numbers = #tpu.dot_dimension_numbers<[1], [0], [0], [1], [0, 0, 1, 1], [], []>} : vector<256x16xbf16>, vector<16x32xbf16>, vector<256x32xf32> -> vector<256x32xf32>
    %132 = arith.addf %126, %131 : vector<256x32xf32>
    %c0_196 = arith.constant 0 : index
    %c2_197 = arith.constant 2 : index
    %c2_198 = arith.constant 2 : index
    %c0_199 = arith.constant 0 : index
    %133 = vector.load %arg10[%c0_196, %c2_197, %c2_198, %c0_199] : memref<1x18x32x16xbf16, #tpu.memory_space<vmem>>, vector<1x16x16x16xbf16>
    %134 = vector.shape_cast %133 : vector<1x16x16x16xbf16> to vector<256x16xbf16>
    %c8_200 = arith.constant 8 : index
    %c0_201 = arith.constant 0 : index
    %c0_202 = arith.constant 0 : index
    %135 = vector.load %arg4[%c8_200, %c0_201, %c0_202] : memref<9x16x32xbf16, #tpu.memory_space<vmem>>, vector<1x16x32xbf16>
    %136 = vector.shape_cast %135 : vector<1x16x32xbf16> to vector<16x32xbf16>
    %cst_203 = arith.constant dense<0.000000e+00> : vector<256x32xf32>
    %137 = tpu.matmul %134, %136, %cst_203 {dimension_numbers = #tpu.dot_dimension_numbers<[1], [0], [0], [1], [0, 0, 1, 1], [], []>} : vector<256x16xbf16>, vector<16x32xbf16>, vector<256x32xf32> -> vector<256x32xf32>
    %138 = arith.addf %132, %137 : vector<256x32xf32>
    %c0_204 = arith.constant 0 : index
    %c0_205 = arith.constant 0 : index
    %139 = vector.load %arg5[%c0_204, %c0_205] : memref<1x32xf32, #tpu.memory_space<vmem>>, vector<1x32xf32>
    %140 = vector.broadcast %139 : vector<1x32xf32> to vector<256x32xf32>
    %141 = arith.addf %138, %140 : vector<256x32xf32>
    %cst_206 = arith.constant 0.000000e+00 : f32
    %142 = vector.broadcast %cst_206 : f32 to vector<256x32xf32>
    %143 = arith.maximumf %141, %142 : vector<256x32xf32>
    %144 = vector.shape_cast %143 : vector<256x32xf32> to vector<1x16x16x32xf32>
    %145 = arith.truncf %144 : vector<1x16x16x32xf32> to vector<1x16x16x32xbf16>
    %c0_207 = arith.constant 0 : index
    %c1_208 = arith.constant 1 : index
    %c1_209 = arith.constant 1 : index
    %c0_210 = arith.constant 0 : index
    %146 = vector.load %arg11[%c0_207, %c1_208, %c1_209, %c0_210] : memref<1x18x32x32xbf16, #tpu.memory_space<vmem>>, vector<1x16x16x32xbf16>
    tpu.vector_store %arg11[%c0_207, %c1_208, %c1_209, %c0_210], %145 {strides = array<i32>} : memref<1x18x32x32xbf16, #tpu.memory_space<vmem>>, vector<1x16x16x32xbf16>,
    %cst_211 = arith.constant 0.000000e+00 : f32
    %147 = vector.broadcast %cst_211 : f32 to vector<256x128xf32>
    %c0_212 = arith.constant 0 : index
    %c0_213 = arith.constant 0 : index
    %c0_214 = arith.constant 0 : index
    %c0_215 = arith.constant 0 : index
    %148 = vector.load %arg11[%c0_212, %c0_213, %c0_214, %c0_215] : memref<1x18x32x32xbf16, #tpu.memory_space<vmem>>, vector<1x16x16x32xbf16>
    %149 = vector.shape_cast %148 : vector<1x16x16x32xbf16> to vector<256x32xbf16>
    %c0_216 = arith.constant 0 : index
    %c0_217 = arith.constant 0 : index
    %c0_218 = arith.constant 0 : index
    %150 = vector.load %arg6[%c0_216, %c0_217, %c0_218] : memref<9x32x128xbf16, #tpu.memory_space<vmem>>, vector<1x32x128xbf16>
    %151 = vector.shape_cast %150 : vector<1x32x128xbf16> to vector<32x128xbf16>
    %cst_219 = arith.constant dense<0.000000e+00> : vector<256x128xf32>
    %152 = tpu.matmul %149, %151, %cst_219 {dimension_numbers = #tpu.dot_dimension_numbers<[1], [0], [0], [1], [0, 0, 1, 1], [], []>} : vector<256x32xbf16>, vector<32x128xbf16>, vector<256x128xf32> -> vector<256x128xf32>
    %153 = arith.addf %147, %152 : vector<256x128xf32>
    %c0_220 = arith.constant 0 : index
    %c0_221 = arith.constant 0 : index
    %c1_222 = arith.constant 1 : index
    %c0_223 = arith.constant 0 : index
    %154 = vector.load %arg11[%c0_220, %c0_221, %c1_222, %c0_223] : memref<1x18x32x32xbf16, #tpu.memory_space<vmem>>, vector<1x16x16x32xbf16>
    %155 = vector.shape_cast %154 : vector<1x16x16x32xbf16> to vector<256x32xbf16>
    %c1_224 = arith.constant 1 : index
    %c0_225 = arith.constant 0 : index
    %c0_226 = arith.constant 0 : index
    %156 = vector.load %arg6[%c1_224, %c0_225, %c0_226] : memref<9x32x128xbf16, #tpu.memory_space<vmem>>, vector<1x32x128xbf16>
    %157 = vector.shape_cast %156 : vector<1x32x128xbf16> to vector<32x128xbf16>
    %cst_227 = arith.constant dense<0.000000e+00> : vector<256x128xf32>
    %158 = tpu.matmul %155, %157, %cst_227 {dimension_numbers = #tpu.dot_dimension_numbers<[1], [0], [0], [1], [0, 0, 1, 1], [], []>} : vector<256x32xbf16>, vector<32x128xbf16>, vector<256x128xf32> -> vector<256x128xf32>
    %159 = arith.addf %153, %158 : vector<256x128xf32>
    %c0_228 = arith.constant 0 : index
    %c0_229 = arith.constant 0 : index
    %c2_230 = arith.constant 2 : index
    %c0_231 = arith.constant 0 : index
    %160 = vector.load %arg11[%c0_228, %c0_229, %c2_230, %c0_231] : memref<1x18x32x32xbf16, #tpu.memory_space<vmem>>, vector<1x16x16x32xbf16>
    %161 = vector.shape_cast %160 : vector<1x16x16x32xbf16> to vector<256x32xbf16>
    %c2_232 = arith.constant 2 : index
    %c0_233 = arith.constant 0 : index
    %c0_234 = arith.constant 0 : index
    %162 = vector.load %arg6[%c2_232, %c0_233, %c0_234] : memref<9x32x128xbf16, #tpu.memory_space<vmem>>, vector<1x32x128xbf16>
    %163 = vector.shape_cast %162 : vector<1x32x128xbf16> to vector<32x128xbf16>
    %cst_235 = arith.constant dense<0.000000e+00> : vector<256x128xf32>
    %164 = tpu.matmul %161, %163, %cst_235 {dimension_numbers = #tpu.dot_dimension_numbers<[1], [0], [0], [1], [0, 0, 1, 1], [], []>} : vector<256x32xbf16>, vector<32x128xbf16>, vector<256x128xf32> -> vector<256x128xf32>
    %165 = arith.addf %159, %164 : vector<256x128xf32>
    %c0_236 = arith.constant 0 : index
    %c1_237 = arith.constant 1 : index
    %c0_238 = arith.constant 0 : index
    %c0_239 = arith.constant 0 : index
    %166 = vector.load %arg11[%c0_236, %c1_237, %c0_238, %c0_239] : memref<1x18x32x32xbf16, #tpu.memory_space<vmem>>, vector<1x16x16x32xbf16>
    %167 = vector.shape_cast %166 : vector<1x16x16x32xbf16> to vector<256x32xbf16>
    %c3_240 = arith.constant 3 : index
    %c0_241 = arith.constant 0 : index
    %c0_242 = arith.constant 0 : index
    %168 = vector.load %arg6[%c3_240, %c0_241, %c0_242] : memref<9x32x128xbf16, #tpu.memory_space<vmem>>, vector<1x32x128xbf16>
    %169 = vector.shape_cast %168 : vector<1x32x128xbf16> to vector<32x128xbf16>
    %cst_243 = arith.constant dense<0.000000e+00> : vector<256x128xf32>
    %170 = tpu.matmul %167, %169, %cst_243 {dimension_numbers = #tpu.dot_dimension_numbers<[1], [0], [0], [1], [0, 0, 1, 1], [], []>} : vector<256x32xbf16>, vector<32x128xbf16>, vector<256x128xf32> -> vector<256x128xf32>
    %171 = arith.addf %165, %170 : vector<256x128xf32>
    %c0_244 = arith.constant 0 : index
    %c1_245 = arith.constant 1 : index
    %c1_246 = arith.constant 1 : index
    %c0_247 = arith.constant 0 : index
    %172 = vector.load %arg11[%c0_244, %c1_245, %c1_246, %c0_247] : memref<1x18x32x32xbf16, #tpu.memory_space<vmem>>, vector<1x16x16x32xbf16>
    %173 = vector.shape_cast %172 : vector<1x16x16x32xbf16> to vector<256x32xbf16>
    %c4_248 = arith.constant 4 : index
    %c0_249 = arith.constant 0 : index
    %c0_250 = arith.constant 0 : index
    %174 = vector.load %arg6[%c4_248, %c0_249, %c0_250] : memref<9x32x128xbf16, #tpu.memory_space<vmem>>, vector<1x32x128xbf16>
    %175 = vector.shape_cast %174 : vector<1x32x128xbf16> to vector<32x128xbf16>
    %cst_251 = arith.constant dense<0.000000e+00> : vector<256x128xf32>
    %176 = tpu.matmul %173, %175, %cst_251 {dimension_numbers = #tpu.dot_dimension_numbers<[1], [0], [0], [1], [0, 0, 1, 1], [], []>} : vector<256x32xbf16>, vector<32x128xbf16>, vector<256x128xf32> -> vector<256x128xf32>
    %177 = arith.addf %171, %176 : vector<256x128xf32>
    %c0_252 = arith.constant 0 : index
    %c1_253 = arith.constant 1 : index
    %c2_254 = arith.constant 2 : index
    %c0_255 = arith.constant 0 : index
    %178 = vector.load %arg11[%c0_252, %c1_253, %c2_254, %c0_255] : memref<1x18x32x32xbf16, #tpu.memory_space<vmem>>, vector<1x16x16x32xbf16>
    %179 = vector.shape_cast %178 : vector<1x16x16x32xbf16> to vector<256x32xbf16>
    %c5_256 = arith.constant 5 : index
    %c0_257 = arith.constant 0 : index
    %c0_258 = arith.constant 0 : index
    %180 = vector.load %arg6[%c5_256, %c0_257, %c0_258] : memref<9x32x128xbf16, #tpu.memory_space<vmem>>, vector<1x32x128xbf16>
    %181 = vector.shape_cast %180 : vector<1x32x128xbf16> to vector<32x128xbf16>
    %cst_259 = arith.constant dense<0.000000e+00> : vector<256x128xf32>
    %182 = tpu.matmul %179, %181, %cst_259 {dimension_numbers = #tpu.dot_dimension_numbers<[1], [0], [0], [1], [0, 0, 1, 1], [], []>} : vector<256x32xbf16>, vector<32x128xbf16>, vector<256x128xf32> -> vector<256x128xf32>
    %183 = arith.addf %177, %182 : vector<256x128xf32>
    %c0_260 = arith.constant 0 : index
    %c2_261 = arith.constant 2 : index
    %c0_262 = arith.constant 0 : index
    %c0_263 = arith.constant 0 : index
    %184 = vector.load %arg11[%c0_260, %c2_261, %c0_262, %c0_263] : memref<1x18x32x32xbf16, #tpu.memory_space<vmem>>, vector<1x16x16x32xbf16>
    %185 = vector.shape_cast %184 : vector<1x16x16x32xbf16> to vector<256x32xbf16>
    %c6_264 = arith.constant 6 : index
    %c0_265 = arith.constant 0 : index
    %c0_266 = arith.constant 0 : index
    %186 = vector.load %arg6[%c6_264, %c0_265, %c0_266] : memref<9x32x128xbf16, #tpu.memory_space<vmem>>, vector<1x32x128xbf16>
    %187 = vector.shape_cast %186 : vector<1x32x128xbf16> to vector<32x128xbf16>
    %cst_267 = arith.constant dense<0.000000e+00> : vector<256x128xf32>
    %188 = tpu.matmul %185, %187, %cst_267 {dimension_numbers = #tpu.dot_dimension_numbers<[1], [0], [0], [1], [0, 0, 1, 1], [], []>} : vector<256x32xbf16>, vector<32x128xbf16>, vector<256x128xf32> -> vector<256x128xf32>
    %189 = arith.addf %183, %188 : vector<256x128xf32>
    %c0_268 = arith.constant 0 : index
    %c2_269 = arith.constant 2 : index
    %c1_270 = arith.constant 1 : index
    %c0_271 = arith.constant 0 : index
    %190 = vector.load %arg11[%c0_268, %c2_269, %c1_270, %c0_271] : memref<1x18x32x32xbf16, #tpu.memory_space<vmem>>, vector<1x16x16x32xbf16>
    %191 = vector.shape_cast %190 : vector<1x16x16x32xbf16> to vector<256x32xbf16>
    %c7_272 = arith.constant 7 : index
    %c0_273 = arith.constant 0 : index
    %c0_274 = arith.constant 0 : index
    %192 = vector.load %arg6[%c7_272, %c0_273, %c0_274] : memref<9x32x128xbf16, #tpu.memory_space<vmem>>, vector<1x32x128xbf16>
    %193 = vector.shape_cast %192 : vector<1x32x128xbf16> to vector<32x128xbf16>
    %cst_275 = arith.constant dense<0.000000e+00> : vector<256x128xf32>
    %194 = tpu.matmul %191, %193, %cst_275 {dimension_numbers = #tpu.dot_dimension_numbers<[1], [0], [0], [1], [0, 0, 1, 1], [], []>} : vector<256x32xbf16>, vector<32x128xbf16>, vector<256x128xf32> -> vector<256x128xf32>
    %195 = arith.addf %189, %194 : vector<256x128xf32>
    %c0_276 = arith.constant 0 : index
    %c2_277 = arith.constant 2 : index
    %c2_278 = arith.constant 2 : index
    %c0_279 = arith.constant 0 : index
    %196 = vector.load %arg11[%c0_276, %c2_277, %c2_278, %c0_279] : memref<1x18x32x32xbf16, #tpu.memory_space<vmem>>, vector<1x16x16x32xbf16>
    %197 = vector.shape_cast %196 : vector<1x16x16x32xbf16> to vector<256x32xbf16>
    %c8_280 = arith.constant 8 : index
    %c0_281 = arith.constant 0 : index
    %c0_282 = arith.constant 0 : index
    %198 = vector.load %arg6[%c8_280, %c0_281, %c0_282] : memref<9x32x128xbf16, #tpu.memory_space<vmem>>, vector<1x32x128xbf16>
    %199 = vector.shape_cast %198 : vector<1x32x128xbf16> to vector<32x128xbf16>
    %cst_283 = arith.constant dense<0.000000e+00> : vector<256x128xf32>
    %200 = tpu.matmul %197, %199, %cst_283 {dimension_numbers = #tpu.dot_dimension_numbers<[1], [0], [0], [1], [0, 0, 1, 1], [], []>} : vector<256x32xbf16>, vector<32x128xbf16>, vector<256x128xf32> -> vector<256x128xf32>
    %201 = arith.addf %195, %200 : vector<256x128xf32>
    %c0_284 = arith.constant 0 : index
    %c0_285 = arith.constant 0 : index
    %202 = vector.load %arg7[%c0_284, %c0_285] : memref<1x128xf32, #tpu.memory_space<vmem>>, vector<1x128xf32>
    %203 = vector.broadcast %202 : vector<1x128xf32> to vector<256x128xf32>
    %204 = arith.addf %201, %203 : vector<256x128xf32>
    %205 = vector.shape_cast %204 : vector<256x128xf32> to vector<1x256x128xf32>
    %c0_286 = arith.constant 0 : index
    %c0_287 = arith.constant 0 : index
    %c0_288 = arith.constant 0 : index
    %206 = vector.load %arg8[%c0_286, %c0_287, %c0_288] : memref<1x256x128xf32, #tpu.memory_space<vmem>>, vector<1x256x128xf32>
    tpu.vector_store %arg8[%c0_286, %c0_287, %c0_288], %205 {strides = array<i32>} : memref<1x256x128xf32, #tpu.memory_space<vmem>>, vector<1x256x128xf32>,
    return
  }
  func.func @transform_0(%arg0: i32) -> (i32, i32, i32, i32) {
    %c0_i32 = arith.constant 0 : i32
    %c0_i32_0 = arith.constant 0 : i32
    %c0_i32_1 = arith.constant 0 : i32
    %c0_i32_2 = arith.constant 0 : i32
    return %arg0, %c0_i32, %c0_i32_0, %c0_i32_1 : i32, i32, i32, i32
  }
  func.func @transform_1(%arg0: i32) -> (i32, i32, i32) {
    %c0_i32 = arith.constant 0 : i32
    %c0_i32_0 = arith.constant 0 : i32
    %c0_i32_1 = arith.constant 0 : i32
    %c0_i32_2 = arith.constant 0 : i32
    return %c0_i32, %c0_i32_0, %c0_i32_1 : i32, i32, i32
  }
  func.func @transform_2(%arg0: i32) -> (i32, i32) {
    %c0_i32 = arith.constant 0 : i32
    %c0_i32_0 = arith.constant 0 : i32
    %c0_i32_1 = arith.constant 0 : i32
    return %c0_i32, %c0_i32_0 : i32, i32
  }
  func.func @transform_3(%arg0: i32) -> (i32, i32, i32) {
    %c0_i32 = arith.constant 0 : i32
    %c0_i32_0 = arith.constant 0 : i32
    %c0_i32_1 = arith.constant 0 : i32
    %c0_i32_2 = arith.constant 0 : i32
    return %c0_i32, %c0_i32_0, %c0_i32_1 : i32, i32, i32
  }
  func.func @transform_4(%arg0: i32) -> (i32, i32) {
    %c0_i32 = arith.constant 0 : i32
    %c0_i32_0 = arith.constant 0 : i32
    %c0_i32_1 = arith.constant 0 : i32
    return %c0_i32, %c0_i32_0 : i32, i32
  }
  func.func @transform_5(%arg0: i32) -> (i32, i32, i32) {
    %c0_i32 = arith.constant 0 : i32
    %c0_i32_0 = arith.constant 0 : i32
    %c0_i32_1 = arith.constant 0 : i32
    %c0_i32_2 = arith.constant 0 : i32
    return %c0_i32, %c0_i32_0, %c0_i32_1 : i32, i32, i32
  }
  func.func @transform_6(%arg0: i32) -> (i32, i32) {
    %c0_i32 = arith.constant 0 : i32
    %c0_i32_0 = arith.constant 0 : i32
    %c0_i32_1 = arith.constant 0 : i32
    return %c0_i32, %c0_i32_0 : i32, i32
  }
  func.func @transform_7(%arg0: i32) -> (i32, i32, i32) {
    %c0_i32 = arith.constant 0 : i32
    %c0_i32_0 = arith.constant 0 : i32
    %c0_i32_1 = arith.constant 0 : i32
    return %arg0, %c0_i32, %c0_i32_0 : i32, i32, i32
  }
}

</mosaic_0001>

<llo_original>
// kernel: single_stage_detector_forward.1
$region0: #{single_stage_detector_forward.1}
  #allocation0 [shape = 'u32[]', space=smem, size = 0x4, offset = 0x4, fixed_abs, tag = 'smem constant byte address 0x4 - core index']
  #allocation1 [shape = 'u32[144,128]{1,0:T(1,128)}', space=vmem, size = 0x12000, scoped, tag = 'internal scratch']
  #allocation2 [shape = 'bf16[1,18,32,3]{3,2,1,0:T(16,128)(2,1)}', space=vmem, size = 0x24000, scoped, tag = 'scratch operand']
  #allocation3 [shape = 'bf16[1,18,32,16]{3,2,1,0:T(16,128)(2,1)}', space=vmem, size = 0x24000, scoped, tag = 'scratch operand']
  #allocation4 [shape = 'bf16[1,18,32,32]{3,2,1,0:T(16,128)(2,1)}', space=vmem, size = 0x24000, scoped, tag = 'scratch operand']
  %s0 = inlined_call_operand.vmem [shape: f32[2,16,16,3], index: 0, kind: input, shape index: {}]
  %s1 = inlined_call_operand.vmem [shape: bf16[9,3,16], index: 1, kind: input, shape index: {}]
  %s2 = inlined_call_operand.vmem [shape: f32[1,16], index: 2, kind: input, shape index: {}]
  %s3 = inlined_call_operand.vmem [shape: bf16[9,16,32], index: 3, kind: input, shape index: {}]
  %s4 = inlined_call_operand.vmem [shape: f32[1,32], index: 4, kind: input, shape index: {}]
  %s5 = inlined_call_operand.vmem [shape: bf16[9,32,128], index: 5, kind: input, shape index: {}]
  %s6 = inlined_call_operand.vmem [shape: f32[1,128], index: 6, kind: input, shape index: {}]
  %s7 = inlined_call_operand.vmem [shape: f32[2,256,128], index: 7, kind: output, shape index: {}]
  %s8 = sld [smem:[#allocation0]]
  $region61: #{single_stage_detector_forward.1} parent=0
    _
  %s10 = ssub.s32 1, %s8
  %s11 = scalar_select 0, %s10, %s8
  loop: start=0, step=1, limit=4
  $region2: #{single_stage_detector_forward.1} parent=0 // loop_pre_header
    _
  $region3: #{single_stage_detector_forward.1} parent=0 // loop_header
    %s13 = sphi 0, %s17
    %p14 = scmp.ge.s32.totalorder %s13, 4
    %s23 = sphi 0, %s25
    %s26 = sphi 0, %s23
    %s27 = sphi 0, %s26
    %s43 = sphi 0, %s27
    %s47 = sphi 0, %s47
    %s49 = sphi 0, %s47
    %s50 = sphi 0, %s49
    %s64 = sphi 0, %s50
    %s68 = sphi 0, %s68
    %s70 = sphi 0, %s68
    %s71 = sphi 0, %s70
    %s85 = sphi 0, %s71
    %s89 = sphi 0, %s89
    %s91 = sphi 0, %s89
    %s92 = sphi 0, %s91
    %s106 = sphi 0, %s92
    %s110 = sphi 0, %s110
    %s112 = sphi 0, %s110
    %s113 = sphi 0, %s112
    %s127 = sphi 0, %s113
    %s131 = sphi 0, %s131
    %s133 = sphi 0, %s131
    %s134 = sphi 0, %s133
    %s148 = sphi 0, %s134
    %s152 = sphi 0, %s152
    %s154 = sphi 0, %s152
    %s155 = sphi 0, %s154
    %s169 = sphi 0, %s155
    %s175 = sphi 0, %s177
    %s178 = sphi 0, %s175
    %s179 = sphi 0, %s178
    %s195 = sphi 0, %s179
  $region4: #{single_stage_detector_forward.1} parent=0 // loop_header_branch
    %16 = sbr.rel (%p14) target = $region8
  $region5: #{single_stage_detector_forward.1} parent=0 // loop_body
    %s18 = ssub.s32 %s13, 1
    %s19 = ssub.s32 %s13, 2
    %s20 = sadd.s32 %s13, 1
    %s21 = ssub.s32 %s13, %s20
    %p22 = scmp.eq.s32.totalorder %s21, 0
    %s24 = sadd.s32 %s23, 1
    %s25 = scalar_select %p22, %s23, %s24
    %p28 = pneg %p22
    %p29 = scmp.eq.s32.totalorder %s13, 1
    %p30 = por %p28, %p29
    %p31 = scmp.ne.s32.totalorder %s23, %s26
    %p32 = scmp.eq.s32.totalorder %s13, 0
    %p33 = por %p31, %p32
    %p34 = scmp.ne.s32.totalorder %s23, %s26
    %p35 = scmp.eq.s32.totalorder %s18, 1
    %p36 = por %p34, %p35
    %p37 = scmp.ne.s32.totalorder %s26, %s27
    %p38 = scmp.eq.s32.totalorder %s18, 0
    %p39 = por %p37, %p38
    %p40 = scmp.ne.s32.totalorder %s26, %s27
    %p41 = scmp.eq.s32.totalorder %s19, 1
    %p42 = por %p40, %p41
    %p44 = scmp.ne.s32.totalorder %s27, %s43
    %p45 = scmp.eq.s32.totalorder %s19, 0
    %p46 = por %p44, %p45
    %s48 = sadd.s32 %s47, 1
    %p51 = scmp.eq.s32.totalorder %s13, 1
    %p52 = scmp.ne.s32.totalorder %s47, %s49
    %p53 = scmp.eq.s32.totalorder %s13, 0
    %p54 = por %p52, %p53
    %p55 = scmp.ne.s32.totalorder %s47, %s49
    %p56 = scmp.eq.s32.totalorder %s18, 1
    %p57 = por %p55, %p56
    %p58 = scmp.ne.s32.totalorder %s49, %s50
    %p59 = scmp.eq.s32.totalorder %s18, 0
    %p60 = por %p58, %p59
    %p61 = scmp.ne.s32.totalorder %s49, %s50
    %p62 = scmp.eq.s32.totalorder %s19, 1
    %p63 = por %p61, %p62
    %p65 = scmp.ne.s32.totalorder %s50, %s64
    %p66 = scmp.eq.s32.totalorder %s19, 0
    %p67 = por %p65, %p66
    %s69 = sadd.s32 %s68, 1
    %p72 = scmp.eq.s32.totalorder %s13, 1
    %p73 = scmp.ne.s32.totalorder %s68, %s70
    %p74 = scmp.eq.s32.totalorder %s13, 0
    %p75 = por %p73, %p74
    %p76 = scmp.ne.s32.totalorder %s68, %s70
    %p77 = scmp.eq.s32.totalorder %s18, 1
    %p78 = por %p76, %p77
    %p79 = scmp.ne.s32.totalorder %s70, %s71
    %p80 = scmp.eq.s32.totalorder %s18, 0
    %p81 = por %p79, %p80
    %p82 = scmp.ne.s32.totalorder %s70, %s71
    %p83 = scmp.eq.s32.totalorder %s19, 1
    %p84 = por %p82, %p83
    %p86 = scmp.ne.s32.totalorder %s71, %s85
    %p87 = scmp.eq.s32.totalorder %s19, 0
    %p88 = por %p86, %p87
    %s90 = sadd.s32 %s89, 1
    %p93 = scmp.eq.s32.totalorder %s13, 1
    %p94 = scmp.ne.s32.totalorder %s89, %s91
    %p95 = scmp.eq.s32.totalorder %s13, 0
    %p96 = por %p94, %p95
    %p97 = scmp.ne.s32.totalorder %s89, %s91
    %p98 = scmp.eq.s32.totalorder %s18, 1
    %p99 = por %p97, %p98
    %p100 = scmp.ne.s32.totalorder %s91, %s92
    %p101 = scmp.eq.s32.totalorder %s18, 0
    %p102 = por %p100, %p101
    %p103 = scmp.ne.s32.totalorder %s91, %s92
    %p104 = scmp.eq.s32.totalorder %s19, 1
    %p105 = por %p103, %p104
    %p107 = scmp.ne.s32.totalorder %s92, %s106
    %p108 = scmp.eq.s32.totalorder %s19, 0
    %p109 = por %p107, %p108
    %s111 = sadd.s32 %s110, 1
    %p114 = scmp.eq.s32.totalorder %s13, 1
    %p115 = scmp.ne.s32.totalorder %s110, %s112
    %p116 = scmp.eq.s32.totalorder %s13, 0
    %p117 = por %p115, %p116
    %p118 = scmp.ne.s32.totalorder %s110, %s112
    %p119 = scmp.eq.s32.totalorder %s18, 1
    %p120 = por %p118, %p119
    %p121 = scmp.ne.s32.totalorder %s112, %s113
    %p122 = scmp.eq.s32.totalorder %s18, 0
    %p123 = por %p121, %p122
    %p124 = scmp.ne.s32.totalorder %s112, %s113
    %p125 = scmp.eq.s32.totalorder %s19, 1
    %p126 = por %p124, %p125
    %p128 = scmp.ne.s32.totalorder %s113, %s127
    %p129 = scmp.eq.s32.totalorder %s19, 0
    %p130 = por %p128, %p129
    %s132 = sadd.s32 %s131, 1
    %p135 = scmp.eq.s32.totalorder %s13, 1
    %p136 = scmp.ne.s32.totalorder %s131, %s133
    %p137 = scmp.eq.s32.totalorder %s13, 0
    %p138 = por %p136, %p137
    %p139 = scmp.ne.s32.totalorder %s131, %s133
    %p140 = scmp.eq.s32.totalorder %s18, 1
    %p141 = por %p139, %p140
    %p142 = scmp.ne.s32.totalorder %s133, %s134
    %p143 = scmp.eq.s32.totalorder %s18, 0
    %p144 = por %p142, %p143
    %p145 = scmp.ne.s32.totalorder %s133, %s134
    %p146 = scmp.eq.s32.totalorder %s19, 1
    %p147 = por %p145, %p146
    %p149 = scmp.ne.s32.totalorder %s134, %s148
    %p150 = scmp.eq.s32.totalorder %s19, 0
    %p151 = por %p149, %p150
    %s153 = sadd.s32 %s152, 1
    %p156 = scmp.eq.s32.totalorder %s13, 1
    %p157 = scmp.ne.s32.totalorder %s152, %s154
    %p158 = scmp.eq.s32.totalorder %s13, 0
    %p159 = por %p157, %p158
    %p160 = scmp.ne.s32.totalorder %s152, %s154
    %p161 = scmp.eq.s32.totalorder %s18, 1
    %p162 = por %p160, %p161
    %p163 = scmp.ne.s32.totalorder %s154, %s155
    %p164 = scmp.eq.s32.totalorder %s18, 0
    %p165 = por %p163, %p164
    %p166 = scmp.ne.s32.totalorder %s154, %s155
    %p167 = scmp.eq.s32.totalorder %s19, 1
    %p168 = por %p166, %p167
    %p170 = scmp.ne.s32.totalorder %s155, %s169
    %p171 = scmp.eq.s32.totalorder %s19, 0
    %p172 = por %p170, %p171
    %s173 = ssub.s32 %s13, %s20
    %p174 = scmp.eq.s32.totalorder %s173, 0
    %s176 = sadd.s32 %s175, 1
    %s177 = scalar_select %p174, %s175, %s176
    %p180 = pneg %p174
    %p181 = scmp.eq.s32.totalorder %s13, 1
    %p182 = por %p180, %p181
    %p183 = scmp.ne.s32.totalorder %s175, %s178
    %p184 = scmp.eq.s32.totalorder %s13, 0
    %p185 = por %p183, %p184
    %p186 = scmp.ne.s32.totalorder %s175, %s178
    %p187 = scmp.eq.s32.totalorder %s18, 1
    %p188 = por %p186, %p187
    %p189 = scmp.ne.s32.totalorder %s178, %s179
    %p190 = scmp.eq.s32.totalorder %s18, 0
    %p191 = por %p189, %p190
    %p192 = scmp.ne.s32.totalorder %s178, %s179
    %p193 = scmp.eq.s32.totalorder %s19, 1
    %p194 = por %p192, %p193
    %p196 = scmp.ne.s32.totalorder %s179, %s195
    %p197 = scmp.eq.s32.totalorder %s19, 0
    %p198 = por %p196, %p197
    %p199 = scmp.le.s32.totalorder 1, %s13
    %p200 = scmp.lt.s32.totalorder %s13, 3
    %p201 = pnand %p199, %p200
    %p202 = pneg %p201
    // Predicated region
    $region9: #{single_stage_detector_forward.1} parent=5 // pred_check
      _
    $region10: #{single_stage_detector_forward.1} parent=5 // pred_check_branch
      %204 = sbr.rel (%p201) target = $region12
    $region11: #{single_stage_detector_forward.1} parent=5 // pred_region
      %s205 = ssub.s32 %s13, 1
      // Predicated region
      $region13: #{single_stage_detector_forward.1} parent=11 // pred_check
        %p206 = pneg %p60
      $region14: #{single_stage_detector_forward.1} parent=11 // pred_check_branch
        %208 = sbr.rel (%p206) target = $region16
      $region15: #{single_stage_detector_forward.1} parent=11 // pred_region
        _
      $region16: #{single_stage_detector_forward.1} parent=11 // pred_fallthru
        _
      // Predicated region
      $region17: #{single_stage_detector_forward.1} parent=11 // pred_check
        %p209 = pneg %p81
      $region18: #{single_stage_detector_forward.1} parent=11 // pred_check_branch
        %211 = sbr.rel (%p209) target = $region20
      $region19: #{single_stage_detector_forward.1} parent=11 // pred_region
        _
      $region20: #{single_stage_detector_forward.1} parent=11 // pred_fallthru
        _
      // Predicated region
      $region21: #{single_stage_detector_forward.1} parent=11 // pred_check
        %p212 = pneg %p102
      $region22: #{single_stage_detector_forward.1} parent=11 // pred_check_branch
        %214 = sbr.rel (%p212) target = $region24
      $region23: #{single_stage_detector_forward.1} parent=11 // pred_region
        _
      $region24: #{single_stage_detector_forward.1} parent=11 // pred_fallthru
        _
      // Predicated region
      $region25: #{single_stage_detector_forward.1} parent=11 // pred_check
        %p215 = pneg %p123
      $region26: #{single_stage_detector_forward.1} parent=11 // pred_check_branch
        %217 = sbr.rel (%p215) target = $region28
      $region27: #{single_stage_detector_forward.1} parent=11 // pred_region
        _
      $region28: #{single_stage_detector_forward.1} parent=11 // pred_fallthru
        _
      // Predicated region
      $region29: #{single_stage_detector_forward.1} parent=11 // pred_check
        %p218 = pneg %p144
      $region30: #{single_stage_detector_forward.1} parent=11 // pred_check_branch
        %220 = sbr.rel (%p218) target = $region32
      $region31: #{single_stage_detector_forward.1} parent=11 // pred_region
        _
      $region32: #{single_stage_detector_forward.1} parent=11 // pred_fallthru
        _
      // Predicated region
      $region33: #{single_stage_detector_forward.1} parent=11 // pred_check
        %p221 = pneg %p165
      $region34: #{single_stage_detector_forward.1} parent=11 // pred_check_branch
        %223 = sbr.rel (%p221) target = $region36
      $region35: #{single_stage_detector_forward.1} parent=11 // pred_region
        _
      $region36: #{single_stage_detector_forward.1} parent=11 // pred_fallthru
        _
    $region12: #{single_stage_detector_forward.1} parent=5 // pred_fallthru
      _
    %p224 = scmp.lt.s32.totalorder %s13, 2
    // Predicated region
    $region37: #{single_stage_detector_forward.1} parent=5 // pred_check
      %p225 = pneg %p224
    $region38: #{single_stage_detector_forward.1} parent=5 // pred_check_branch
      %227 = sbr.rel (%p225) target = $region40
    $region39: #{single_stage_detector_forward.1} parent=5 // pred_region
      // Predicated region
      $region41: #{single_stage_detector_forward.1} parent=39 // pred_check
        %p228 = pneg %p33
      $region42: #{single_stage_detector_forward.1} parent=39 // pred_check_branch
        %230 = sbr.rel (%p228) target = $region44
      $region43: #{single_stage_detector_forward.1} parent=39 // pred_region
        %p231 = scmp.lt.s32.totalorder %s13, 1
        %s232 = scalar_select %p231, %s13, 1
        %s233 = smul.addr %s232, 32
        %s234 = smul.addr %s233, 8
        %s235 = scalar_lea.vmem %s0, %s234
      $region44: #{single_stage_detector_forward.1} parent=39 // pred_fallthru
        _
    $region40: #{single_stage_detector_forward.1} parent=5 // pred_fallthru
      _
    %p236 = scmp.le.s32.totalorder 1, %s13
    %p237 = scmp.lt.s32.totalorder %s13, 3
    %p238 = pnand %p236, %p237
    %p239 = pneg %p238
    // Predicated region
    $region45: #{single_stage_detector_forward.1} parent=5 // pred_check
      _
    $region46: #{single_stage_detector_forward.1} parent=5 // pred_check_branch
      %241 = sbr.rel (%p238) target = $region48
    $region47: #{single_stage_detector_forward.1} parent=5 // pred_region
      %s242 = ssub.s32 %s13, 1
      %p243 = scmp.lt.s32.totalorder %s18, 1
      %s244 = scalar_select %p243, %s18, 1
      %s245 = smul.addr %s244, 32
      %s246 = smul.addr %s245, 8
      %s247 = scalar_lea.vmem %s0, %s246
      %p248 = pneg %p39
      %p249 = pneg %p36
      %p250 = pneg %p60
      %p251 = pneg %p57
      %p252 = pneg %p81
      %p253 = pneg %p78
      %p254 = pneg %p102
      %p255 = pneg %p99
      %p256 = pneg %p123
      %p257 = pneg %p120
      %p258 = pneg %p144
      %p259 = pneg %p141
      %p260 = pneg %p165
      %p261 = pneg %p162
      %p262 = pneg %p191
      %p263 = pneg %p188
      %p264 = scmp.lt.s32.totalorder %s18, 1
      %s265 = scalar_select %p264, %s18, 1
      %s266 = smul.addr %s265, 32
      %s267 = smul.addr %s266, 8
      %s268 = scalar_lea.vmem %s7, %s267
      %p269 = scmp.lt.s32.totalorder %s18, 1
      %s270 = scalar_select %p269, %s18, 1
      %s271 = smul.addr %s270, 32
      %s272 = smul.addr %s271, 8
      %s273 = scalar_lea.vmem %s0, %s272
      %p274 = scmp.lt.s32.totalorder %s18, 1
      %s275 = scalar_select %p274, %s18, 1
      %s276 = smul.addr %s275, 32
      %s277 = smul.addr %s276, 8
      %s278 = scalar_lea.vmem %s7, %s277
      %vm280 = vcmask 23552
      %281 = vst.msk [vmem:[#allocation2] sm:$0xff] %vm280, 0
      %282 = vst.msk [vmem:[#allocation2 + $0x8] sm:$0xff] %vm280, 0
      %s283 = scalar_lea.vmem [#allocation2], 272
      %284 = vst.msk [vmem:[%s283] sm:$0xff] %vm280, 0
      %285 = vst.msk [vmem:[%s283 + $0x8] sm:$0xff] %vm280, 0
      %s286 = scalar_lea.vmem [#allocation2], 16
      %vm287 = vcmask 16384
      %vm288 = vsmask.f32 256
      %vm289 = vmand %vm287, %vm288
      %v290 = vld [vmem:[%s286] sm:$0x1]
      %v291 = vsel %vm289, 0, %v290
      %292 = vst [vmem:[%s286] sm:$0x1] %v291
      %v293 = vld [vmem:[%s286 + $0x10] sm:$0x1]
      %v294 = vsel %vm289, 0, %v293
      %295 = vst [vmem:[%s286 + $0x10] sm:$0x1] %v294
      %v296 = vld [vmem:[%s286 + $0x20] sm:$0x1]
      %v297 = vsel %vm289, 0, %v296
      %298 = vst [vmem:[%s286 + $0x20] sm:$0x1] %v297
      %v299 = vld [vmem:[%s286 + $0x30] sm:$0x1]
      %v300 = vsel %vm289, 0, %v299
      %301 = vst [vmem:[%s286 + $0x30] sm:$0x1] %v300
      %v302 = vld [vmem:[%s286 + $0x40] sm:$0x1]
      %v303 = vsel %vm289, 0, %v302
      %304 = vst [vmem:[%s286 + $0x40] sm:$0x1] %v303
      %v305 = vld [vmem:[%s286 + $0x50] sm:$0x1]
      %v306 = vsel %vm289, 0, %v305
      %307 = vst [vmem:[%s286 + $0x50] sm:$0x1] %v306
      %v308 = vld [vmem:[%s286 + $0x60] sm:$0x1]
      %v309 = vsel %vm289, 0, %v308
      %310 = vst [vmem:[%s286 + $0x60] sm:$0x1] %v309
      %v311 = vld [vmem:[%s286 + $0x70] sm:$0x1]
      %v312 = vsel %vm289, 0, %v311
      %313 = vst [vmem:[%s286 + $0x70] sm:$0x1] %v312
      %v314 = vld [vmem:[%s286 + $0x80] sm:$0x1]
      %v315 = vsel %vm289, 0, %v314
      %316 = vst [vmem:[%s286 + $0x80] sm:$0x1] %v315
      %v317 = vld [vmem:[%s286 + $0x90] sm:$0x1]
      %v318 = vsel %vm289, 0, %v317
      %319 = vst [vmem:[%s286 + $0x90] sm:$0x1] %v318
      %v320 = vld [vmem:[%s286 + $0xa0] sm:$0x1]
      %v321 = vsel %vm289, 0, %v320
      %322 = vst [vmem:[%s286 + $0xa0] sm:$0x1] %v321
      %v323 = vld [vmem:[%s286 + $0xb0] sm:$0x1]
      %v324 = vsel %vm289, 0, %v323
      %325 = vst [vmem:[%s286 + $0xb0] sm:$0x1] %v324
      %v326 = vld [vmem:[%s286 + $0xc0] sm:$0x1]
      %v327 = vsel %vm289, 0, %v326
      %328 = vst [vmem:[%s286 + $0xc0] sm:$0x1] %v327
      %v329 = vld [vmem:[%s286 + $0xd0] sm:$0x1]
      %v330 = vsel %vm289, 0, %v329
      %331 = vst [vmem:[%s286 + $0xd0] sm:$0x1] %v330
      %v332 = vld [vmem:[%s286 + $0xe0] sm:$0x1]
      %v333 = vsel %vm289, 0, %v332
      %334 = vst [vmem:[%s286 + $0xe0] sm:$0x1] %v333
      %v335 = vld [vmem:[%s286 + $0xf0] sm:$0x1]
      %v336 = vsel %vm289, 0, %v335
      %337 = vst [vmem:[%s286 + $0xf0] sm:$0x1] %v336
      %vm338 = vsmask.f32 7938
      %vm339 = vmand %vm287, %vm338
      %v340 = vld [vmem:[%s286 + $0x8] sm:$0x1]
      %v341 = vsel %vm339, 0, %v340
      %342 = vst [vmem:[%s286 + $0x8] sm:$0x1] %v341
      %v343 = vld [vmem:[%s286 + $0x18] sm:$0x1]
      %v344 = vsel %vm339, 0, %v343
      %345 = vst [vmem:[%s286 + $0x18] sm:$0x1] %v344
      %v346 = vld [vmem:[%s286 + $0x28] sm:$0x1]
      %v347 = vsel %vm339, 0, %v346
      %348 = vst [vmem:[%s286 + $0x28] sm:$0x1] %v347
      %v349 = vld [vmem:[%s286 + $0x38] sm:$0x1]
      %v350 = vsel %vm339, 0, %v349
      %351 = vst [vmem:[%s286 + $0x38] sm:$0x1] %v350
      %v352 = vld [vmem:[%s286 + $0x48] sm:$0x1]
      %v353 = vsel %vm339, 0, %v352
      %354 = vst [vmem:[%s286 + $0x48] sm:$0x1] %v353
      %v355 = vld [vmem:[%s286 + $0x58] sm:$0x1]
      %v356 = vsel %vm339, 0, %v355
      %357 = vst [vmem:[%s286 + $0x58] sm:$0x1] %v356
      %v358 = vld [vmem:[%s286 + $0x68] sm:$0x1]
      %v359 = vsel %vm339, 0, %v358
      %360 = vst [vmem:[%s286 + $0x68] sm:$0x1] %v359
      %v361 = vld [vmem:[%s286 + $0x78] sm:$0x1]
      %v362 = vsel %vm339, 0, %v361
      %363 = vst [vmem:[%s286 + $0x78] sm:$0x1] %v362
      %v364 = vld [vmem:[%s286 + $0x88] sm:$0x1]
      %v365 = vsel %vm339, 0, %v364
      %366 = vst [vmem:[%s286 + $0x88] sm:$0x1] %v365
      %v367 = vld [vmem:[%s286 + $0x98] sm:$0x1]
      %v368 = vsel %vm339, 0, %v367
      %369 = vst [vmem:[%s286 + $0x98] sm:$0x1] %v368
      %v370 = vld [vmem:[%s286 + $0xa8] sm:$0x1]
      %v371 = vsel %vm339, 0, %v370
      %372 = vst [vmem:[%s286 + $0xa8] sm:$0x1] %v371
      %v373 = vld [vmem:[%s286 + $0xb8] sm:$0x1]
      %v374 = vsel %vm339, 0, %v373
      %375 = vst [vmem:[%s286 + $0xb8] sm:$0x1] %v374
      %v376 = vld [vmem:[%s286 + $0xc8] sm:$0x1]
      %v377 = vsel %vm339, 0, %v376
      %378 = vst [vmem:[%s286 + $0xc8] sm:$0x1] %v377
      %v379 = vld [vmem:[%s286 + $0xd8] sm:$0x1]
      %v380 = vsel %vm339, 0, %v379
      %381 = vst [vmem:[%s286 + $0xd8] sm:$0x1] %v380
      %v382 = vld [vmem:[%s286 + $0xe8] sm:$0x1]
      %v383 = vsel %vm339, 0, %v382
      %384 = vst [vmem:[%s286 + $0xe8] sm:$0x1] %v383
      %v385 = vld [vmem:[%s286 + $0xf8] sm:$0x1]
      %v386 = vsel %vm339, 0, %v385
      %387 = vst [vmem:[%s286 + $0xf8] sm:$0x1] %v386
      %vm388 = vcmask 130048
      %389 = vst.msk [vmem:[#allocation3] sm:$0xff] %vm388, 0
      %390 = vst.msk [vmem:[#allocation3 + $0x8] sm:$0xff] %vm388, 0
      %s391 = scalar_lea.vmem [#allocation3], 272
      %392 = vst.msk [vmem:[%s391] sm:$0xff] %vm388, 0
      %393 = vst.msk [vmem:[%s391 + $0x8] sm:$0xff] %vm388, 0
      %s394 = scalar_lea.vmem [#allocation3], 16
      %vm395 = vcmask 122880
      %vm396 = vmand %vm395, %vm288
      %v397 = vld [vmem:[%s394] sm:$0x1]
      %v398 = vsel %vm396, 0, %v397
      %399 = vst [vmem:[%s394] sm:$0x1] %v398
      %v400 = vld [vmem:[%s394 + $0x10] sm:$0x1]
      %v401 = vsel %vm396, 0, %v400
      %402 = vst [vmem:[%s394 + $0x10] sm:$0x1] %v401
      %v403 = vld [vmem:[%s394 + $0x20] sm:$0x1]
      %v404 = vsel %vm396, 0, %v403
      %405 = vst [vmem:[%s394 + $0x20] sm:$0x1] %v404
      %v406 = vld [vmem:[%s394 + $0x30] sm:$0x1]
      %v407 = vsel %vm396, 0, %v406
      %408 = vst [vmem:[%s394 + $0x30] sm:$0x1] %v407
      %v409 = vld [vmem:[%s394 + $0x40] sm:$0x1]
      %v410 = vsel %vm396, 0, %v409
      %411 = vst [vmem:[%s394 + $0x40] sm:$0x1] %v410
      %v412 = vld [vmem:[%s394 + $0x50] sm:$0x1]
      %v413 = vsel %vm396, 0, %v412
      %414 = vst [vmem:[%s394 + $0x50] sm:$0x1] %v413
      %v415 = vld [vmem:[%s394 + $0x60] sm:$0x1]
      %v416 = vsel %vm396, 0, %v415
      %417 = vst [vmem:[%s394 + $0x60] sm:$0x1] %v416
      %v418 = vld [vmem:[%s394 + $0x70] sm:$0x1]
      %v419 = vsel %vm396, 0, %v418
      %420 = vst [vmem:[%s394 + $0x70] sm:$0x1] %v419
      %v421 = vld [vmem:[%s394 + $0x80] sm:$0x1]
      %v422 = vsel %vm396, 0, %v421
      %423 = vst [vmem:[%s394 + $0x80] sm:$0x1] %v422
      %v424 = vld [vmem:[%s394 + $0x90] sm:$0x1]
      %v425 = vsel %vm396, 0, %v424
      %426 = vst [vmem:[%s394 + $0x90] sm:$0x1] %v425
      %v427 = vld [vmem:[%s394 + $0xa0] sm:$0x1]
      %v428 = vsel %vm396, 0, %v427
      %429 = vst [vmem:[%s394 + $0xa0] sm:$0x1] %v428
      %v430 = vld [vmem:[%s394 + $0xb0] sm:$0x1]
      %v431 = vsel %vm396, 0, %v430
      %432 = vst [vmem:[%s394 + $0xb0] sm:$0x1] %v431
      %v433 = vld [vmem:[%s394 + $0xc0] sm:$0x1]
      %v434 = vsel %vm396, 0, %v433
      %435 = vst [vmem:[%s394 + $0xc0] sm:$0x1] %v434
      %v436 = vld [vmem:[%s394 + $0xd0] sm:$0x1]
      %v437 = vsel %vm396, 0, %v436
      %438 = vst [vmem:[%s394 + $0xd0] sm:$0x1] %v437
      %v439 = vld [vmem:[%s394 + $0xe0] sm:$0x1]
      %v440 = vsel %vm396, 0, %v439
      %441 = vst [vmem:[%s394 + $0xe0] sm:$0x1] %v440
      %v442 = vld [vmem:[%s394 + $0xf0] sm:$0x1]
      %v443 = vsel %vm396, 0, %v442
      %444 = vst [vmem:[%s394 + $0xf0] sm:$0x1] %v443
      %vm445 = vmand %vm395, %vm338
      %v446 = vld [vmem:[%s394 + $0x8] sm:$0x1]
      %v447 = vsel %vm445, 0, %v446
      %448 = vst [vmem:[%s394 + $0x8] sm:$0x1] %v447
      %v449 = vld [vmem:[%s394 + $0x18] sm:$0x1]
      %v450 = vsel %vm445, 0, %v449
      %451 = vst [vmem:[%s394 + $0x18] sm:$0x1] %v450
      %v452 = vld [vmem:[%s394 + $0x28] sm:$0x1]
      %v453 = vsel %vm445, 0, %v452
      %454 = vst [vmem:[%s394 + $0x28] sm:$0x1] %v453
      %v455 = vld [vmem:[%s394 + $0x38] sm:$0x1]
      %v456 = vsel %vm445, 0, %v455
      %457 = vst [vmem:[%s394 + $0x38] sm:$0x1] %v456
      %v458 = vld [vmem:[%s394 + $0x48] sm:$0x1]
      %v459 = vsel %vm445, 0, %v458
      %460 = vst [vmem:[%s394 + $0x48] sm:$0x1] %v459
      %v461 = vld [vmem:[%s394 + $0x58] sm:$0x1]
      %v462 = vsel %vm445, 0, %v461
      %463 = vst [vmem:[%s394 + $0x58] sm:$0x1] %v462
      %v464 = vld [vmem:[%s394 + $0x68] sm:$0x1]
      %v465 = vsel %vm445, 0, %v464
      %466 = vst [vmem:[%s394 + $0x68] sm:$0x1] %v465
      %v467 = vld [vmem:[%s394 + $0x78] sm:$0x1]
      %v468 = vsel %vm445, 0, %v467
      %469 = vst [vmem:[%s394 + $0x78] sm:$0x1] %v468
      %v470 = vld [vmem:[%s394 + $0x88] sm:$0x1]
      %v471 = vsel %vm445, 0, %v470
      %472 = vst [vmem:[%s394 + $0x88] sm:$0x1] %v471
      %v473 = vld [vmem:[%s394 + $0x98] sm:$0x1]
      %v474 = vsel %vm445, 0, %v473
      %475 = vst [vmem:[%s394 + $0x98] sm:$0x1] %v474
      %v476 = vld [vmem:[%s394 + $0xa8] sm:$0x1]
      %v477 = vsel %vm445, 0, %v476
      %478 = vst [vmem:[%s394 + $0xa8] sm:$0x1] %v477
      %v479 = vld [vmem:[%s394 + $0xb8] sm:$0x1]
      %v480 = vsel %vm445, 0, %v479
      %481 = vst [vmem:[%s394 + $0xb8] sm:$0x1] %v480
      %v482 = vld [vmem:[%s394 + $0xc8] sm:$0x1]
      %v483 = vsel %vm445, 0, %v482
      %484 = vst [vmem:[%s394 + $0xc8] sm:$0x1] %v483
      %v485 = vld [vmem:[%s394 + $0xd8] sm:$0x1]
      %v486 = vsel %vm445, 0, %v485
      %487 = vst [vmem:[%s394 + $0xd8] sm:$0x1] %v486
      %v488 = vld [vmem:[%s394 + $0xe8] sm:$0x1]
      %v489 = vsel %vm445, 0, %v488
      %490 = vst [vmem:[%s394 + $0xe8] sm:$0x1] %v489
      %v491 = vld [vmem:[%s394 + $0xf8] sm:$0x1]
      %v492 = vsel %vm445, 0, %v491
      %493 = vst [vmem:[%s394 + $0xf8] sm:$0x1] %v492
      %vm494 = vcmask 261120
      %495 = vst.msk [vmem:[#allocation4] sm:$0xff] %vm494, 0
      %496 = vst.msk [vmem:[#allocation4 + $0x8] sm:$0xff] %vm494, 0
      %s497 = scalar_lea.vmem [#allocation4], 272
      %498 = vst.msk [vmem:[%s497] sm:$0xff] %vm494, 0
      %499 = vst.msk [vmem:[%s497 + $0x8] sm:$0xff] %vm494, 0
      %s500 = scalar_lea.vmem [#allocation4], 16
      %vm501 = vcmask 253952
      %vm502 = vmand %vm501, %vm288
      %v503 = vld [vmem:[%s500] sm:$0x1]
      %v504 = vsel %vm502, 0, %v503
      %505 = vst [vmem:[%s500] sm:$0x1] %v504
      %v506 = vld [vmem:[%s500 + $0x10] sm:$0x1]
      %v507 = vsel %vm502, 0, %v506
      %508 = vst [vmem:[%s500 + $0x10] sm:$0x1] %v507
      %v509 = vld [vmem:[%s500 + $0x20] sm:$0x1]
      %v510 = vsel %vm502, 0, %v509
      %511 = vst [vmem:[%s500 + $0x20] sm:$0x1] %v510
      %v512 = vld [vmem:[%s500 + $0x30] sm:$0x1]
      %v513 = vsel %vm502, 0, %v512
      %514 = vst [vmem:[%s500 + $0x30] sm:$0x1] %v513
      %v515 = vld [vmem:[%s500 + $0x40] sm:$0x1]
      %v516 = vsel %vm502, 0, %v515
      %517 = vst [vmem:[%s500 + $0x40] sm:$0x1] %v516
      %v518 = vld [vmem:[%s500 + $0x50] sm:$0x1]
      %v519 = vsel %vm502, 0, %v518
      %520 = vst [vmem:[%s500 + $0x50] sm:$0x1] %v519
      %v521 = vld [vmem:[%s500 + $0x60] sm:$0x1]
      %v522 = vsel %vm502, 0, %v521
      %523 = vst [vmem:[%s500 + $0x60] sm:$0x1] %v522
      %v524 = vld [vmem:[%s500 + $0x70] sm:$0x1]
      %v525 = vsel %vm502, 0, %v524
      %526 = vst [vmem:[%s500 + $0x70] sm:$0x1] %v525
      %v527 = vld [vmem:[%s500 + $0x80] sm:$0x1]
      %v528 = vsel %vm502, 0, %v527
      %529 = vst [vmem:[%s500 + $0x80] sm:$0x1] %v528
      %v530 = vld [vmem:[%s500 + $0x90] sm:$0x1]
      %v531 = vsel %vm502, 0, %v530
      %532 = vst [vmem:[%s500 + $0x90] sm:$0x1] %v531
      %v533 = vld [vmem:[%s500 + $0xa0] sm:$0x1]
      %v534 = vsel %vm502, 0, %v533
      %535 = vst [vmem:[%s500 + $0xa0] sm:$0x1] %v534
      %v536 = vld [vmem:[%s500 + $0xb0] sm:$0x1]
      %v537 = vsel %vm502, 0, %v536
      %538 = vst [vmem:[%s500 + $0xb0] sm:$0x1] %v537
      %v539 = vld [vmem:[%s500 + $0xc0] sm:$0x1]
      %v540 = vsel %vm502, 0, %v539
      %541 = vst [vmem:[%s500 + $0xc0] sm:$0x1] %v540
      %v542 = vld [vmem:[%s500 + $0xd0] sm:$0x1]
      %v543 = vsel %vm502, 0, %v542
      %544 = vst [vmem:[%s500 + $0xd0] sm:$0x1] %v543
      %v545 = vld [vmem:[%s500 + $0xe0] sm:$0x1]
      %v546 = vsel %vm502, 0, %v545
      %547 = vst [vmem:[%s500 + $0xe0] sm:$0x1] %v546
      %v548 = vld [vmem:[%s500 + $0xf0] sm:$0x1]
      %v549 = vsel %vm502, 0, %v548
      %550 = vst [vmem:[%s500 + $0xf0] sm:$0x1] %v549
      %vm551 = vmand %vm501, %vm338
      %v552 = vld [vmem:[%s500 + $0x8] sm:$0x1]
      %v553 = vsel %vm551, 0, %v552
      %554 = vst [vmem:[%s500 + $0x8] sm:$0x1] %v553
      %v555 = vld [vmem:[%s500 + $0x18] sm:$0x1]
      %v556 = vsel %vm551, 0, %v555
      %557 = vst [vmem:[%s500 + $0x18] sm:$0x1] %v556
      %v558 = vld [vmem:[%s500 + $0x28] sm:$0x1]
      %v559 = vsel %vm551, 0, %v558
      %560 = vst [vmem:[%s500 + $0x28] sm:$0x1] %v559
      %v561 = vld [vmem:[%s500 + $0x38] sm:$0x1]
      %v562 = vsel %vm551, 0, %v561
      %563 = vst [vmem:[%s500 + $0x38] sm:$0x1] %v562
      %v564 = vld [vmem:[%s500 + $0x48] sm:$0x1]
      %v565 = vsel %vm551, 0, %v564
      %566 = vst [vmem:[%s500 + $0x48] sm:$0x1] %v565
      %v567 = vld [vmem:[%s500 + $0x58] sm:$0x1]
      %v568 = vsel %vm551, 0, %v567
      %569 = vst [vmem:[%s500 + $0x58] sm:$0x1] %v568
      %v570 = vld [vmem:[%s500 + $0x68] sm:$0x1]
      %v571 = vsel %vm551, 0, %v570
      %572 = vst [vmem:[%s500 + $0x68] sm:$0x1] %v571
      %v573 = vld [vmem:[%s500 + $0x78] sm:$0x1]
      %v574 = vsel %vm551, 0, %v573
      %575 = vst [vmem:[%s500 + $0x78] sm:$0x1] %v574
      %v576 = vld [vmem:[%s500 + $0x88] sm:$0x1]
      %v577 = vsel %vm551, 0, %v576
      %578 = vst [vmem:[%s500 + $0x88] sm:$0x1] %v577
      %v579 = vld [vmem:[%s500 + $0x98] sm:$0x1]
      %v580 = vsel %vm551, 0, %v579
      %581 = vst [vmem:[%s500 + $0x98] sm:$0x1] %v580
      %v582 = vld [vmem:[%s500 + $0xa8] sm:$0x1]
      %v583 = vsel %vm551, 0, %v582
      %584 = vst [vmem:[%s500 + $0xa8] sm:$0x1] %v583
      %v585 = vld [vmem:[%s500 + $0xb8] sm:$0x1]
      %v586 = vsel %vm551, 0, %v585
      %587 = vst [vmem:[%s500 + $0xb8] sm:$0x1] %v586
      %v588 = vld [vmem:[%s500 + $0xc8] sm:$0x1]
      %v589 = vsel %vm551, 0, %v588
      %590 = vst [vmem:[%s500 + $0xc8] sm:$0x1] %v589
      %v591 = vld [vmem:[%s500 + $0xd8] sm:$0x1]
      %v592 = vsel %vm551, 0, %v591
      %593 = vst [vmem:[%s500 + $0xd8] sm:$0x1] %v592
      %v594 = vld [vmem:[%s500 + $0xe8] sm:$0x1]
      %v595 = vsel %vm551, 0, %v594
      %596 = vst [vmem:[%s500 + $0xe8] sm:$0x1] %v595
      %v597 = vld [vmem:[%s500 + $0xf8] sm:$0x1]
      %v598 = vsel %vm551, 0, %v597
      %599 = vst [vmem:[%s500 + $0xf8] sm:$0x1] %v598
      %v600 = vld [vmem:[%s273] sm:$0xff]
      %v601 = vld [vmem:[%s273 + $0x8] sm:$0xff]
      %v602 = vld [vmem:[%s273 + $0x10] sm:$0xff]
      %v603 = vld [vmem:[%s273 + $0x18] sm:$0xff]
      %v604 = vld [vmem:[%s273 + $0x20] sm:$0xff]
      %v605 = vld [vmem:[%s273 + $0x28] sm:$0xff]
      %v606 = vld [vmem:[%s273 + $0x30] sm:$0xff]
      %v607 = vld [vmem:[%s273 + $0x38] sm:$0xff]
      %v608 = vld [vmem:[%s273 + $0x40] sm:$0xff]
      %v609 = vld [vmem:[%s273 + $0x48] sm:$0xff]
      %v610 = vld [vmem:[%s273 + $0x50] sm:$0xff]
      %v611 = vld [vmem:[%s273 + $0x58] sm:$0xff]
      %v612 = vld [vmem:[%s273 + $0x60] sm:$0xff]
      %v613 = vld [vmem:[%s273 + $0x68] sm:$0xff]
      %v614 = vld [vmem:[%s273 + $0x70] sm:$0xff]
      %v615 = vld [vmem:[%s273 + $0x78] sm:$0xff]
      %v616 = vld [vmem:[%s273 + $0x80] sm:$0xff]
      %v617 = vld [vmem:[%s273 + $0x88] sm:$0xff]
      %v618 = vld [vmem:[%s273 + $0x90] sm:$0xff]
      %v619 = vld [vmem:[%s273 + $0x98] sm:$0xff]
      %v620 = vld [vmem:[%s273 + $0xa0] sm:$0xff]
      %v621 = vld [vmem:[%s273 + $0xa8] sm:$0xff]
      %v622 = vld [vmem:[%s273 + $0xb0] sm:$0xff]
      %v623 = vld [vmem:[%s273 + $0xb8] sm:$0xff]
      %v624 = vld [vmem:[%s273 + $0xc0] sm:$0xff]
      %v625 = vld [vmem:[%s273 + $0xc8] sm:$0xff]
      %v626 = vld [vmem:[%s273 + $0xd0] sm:$0xff]
      %v627 = vld [vmem:[%s273 + $0xd8] sm:$0xff]
      %v628 = vld [vmem:[%s273 + $0xe0] sm:$0xff]
      %v629 = vld [vmem:[%s273 + $0xe8] sm:$0xff]
      %v630 = vld [vmem:[%s273 + $0xf0] sm:$0xff]
      %v631 = vld [vmem:[%s273 + $0xf8] sm:$0xff]
      %v632 = vpack.c.bf16 %v601, %v600
      %v633 = vpack.c.bf16 %v603, %v602
      %v634 = vpack.c.bf16 %v605, %v604
      %v635 = vpack.c.bf16 %v607, %v606
      %v636 = vpack.c.bf16 %v609, %v608
      %v637 = vpack.c.bf16 %v611, %v610
      %v638 = vpack.c.bf16 %v613, %v612
      %v639 = vpack.c.bf16 %v615, %v614
      %v640 = vpack.c.bf16 %v617, %v616
      %v641 = vpack.c.bf16 %v619, %v618
      %v642 = vpack.c.bf16 %v621, %v620
      %v643 = vpack.c.bf16 %v623, %v622
      %v644 = vpack.c.bf16 %v625, %v624
      %v645 = vpack.c.bf16 %v627, %v626
      %v646 = vpack.c.bf16 %v629, %v628
      %v647 = vpack.c.bf16 %v631, %v630
      %v649 = vshrl.u32 %v632, 16
      %v651 = vrot.slane %v649, 7
      %v652 = vshll.u32 %v632, 16
      %v654 = vor.u32 %v651, %v652
      %v656 = vshrl.u32 %v633, 16
      %v658 = vrot.slane %v656, 7
      %v659 = vshll.u32 %v633, 16
      %v661 = vor.u32 %v658, %v659
      %v663 = vshrl.u32 %v634, 16
      %v665 = vrot.slane %v663, 7
      %v666 = vshll.u32 %v634, 16
      %v668 = vor.u32 %v665, %v666
      %v670 = vshrl.u32 %v635, 16
      %v672 = vrot.slane %v670, 7
      %v673 = vshll.u32 %v635, 16
      %v675 = vor.u32 %v672, %v673
      %v677 = vshrl.u32 %v636, 16
      %v679 = vrot.slane %v677, 7
      %v680 = vshll.u32 %v636, 16
      %v682 = vor.u32 %v679, %v680
      %v684 = vshrl.u32 %v637, 16
      %v686 = vrot.slane %v684, 7
      %v687 = vshll.u32 %v637, 16
      %v689 = vor.u32 %v686, %v687
      %v691 = vshrl.u32 %v638, 16
      %v693 = vrot.slane %v691, 7
      %v694 = vshll.u32 %v638, 16
      %v696 = vor.u32 %v693, %v694
      %v698 = vshrl.u32 %v639, 16
      %v700 = vrot.slane %v698, 7
      %v701 = vshll.u32 %v639, 16
      %v703 = vor.u32 %v700, %v701
      %v705 = vshrl.u32 %v640, 16
      %v707 = vrot.slane %v705, 7
      %v708 = vshll.u32 %v640, 16
      %v710 = vor.u32 %v707, %v708
      %v712 = vshrl.u32 %v641, 16
      %v714 = vrot.slane %v712, 7
      %v715 = vshll.u32 %v641, 16
      %v717 = vor.u32 %v714, %v715
      %v719 = vshrl.u32 %v642, 16
      %v721 = vrot.slane %v719, 7
      %v722 = vshll.u32 %v642, 16
      %v724 = vor.u32 %v721, %v722
      %v726 = vshrl.u32 %v643, 16
      %v728 = vrot.slane %v726, 7
      %v729 = vshll.u32 %v643, 16
      %v731 = vor.u32 %v728, %v729
      %v733 = vshrl.u32 %v644, 16
      %v735 = vrot.slane %v733, 7
      %v736 = vshll.u32 %v644, 16
      %v738 = vor.u32 %v735, %v736
      %v740 = vshrl.u32 %v645, 16
      %v742 = vrot.slane %v740, 7
      %v743 = vshll.u32 %v645, 16
      %v745 = vor.u32 %v742, %v743
      %v747 = vshrl.u32 %v646, 16
      %v749 = vrot.slane %v747, 7
      %v750 = vshll.u32 %v646, 16
      %v752 = vor.u32 %v749, %v750
      %v754 = vshrl.u32 %v647, 16
      %v756 = vrot.slane %v754, 7
      %v757 = vshll.u32 %v647, 16
      %v759 = vor.u32 %v756, %v757
      %vm792 = vcmask 23552
      %vm793 = vmand %vm792, %vm338
      %v794 = vld [vmem:[%s286] sm:$0xff]
      %v795 = vsel %vm793, %v654, %v794
      %796 = vst [vmem:[%s286] sm:$0xff] %v795
      %v797 = vld [vmem:[%s286 + $0x8] sm:$0x1]
      %v798 = vsel %vm289, %v651, %v797
      %799 = vst [vmem:[%s286 + $0x8] sm:$0x1] %v798
      %v800 = vld [vmem:[%s286 + $0x10] sm:$0xff]
      %v801 = vsel %vm793, %v661, %v800
      %802 = vst [vmem:[%s286 + $0x10] sm:$0xff] %v801
      %v803 = vld [vmem:[%s286 + $0x18] sm:$0x1]
      %v804 = vsel %vm289, %v658, %v803
      %805 = vst [vmem:[%s286 + $0x18] sm:$0x1] %v804
      %v806 = vld [vmem:[%s286 + $0x20] sm:$0xff]
      %v807 = vsel %vm793, %v668, %v806
      %808 = vst [vmem:[%s286 + $0x20] sm:$0xff] %v807
      %v809 = vld [vmem:[%s286 + $0x28] sm:$0x1]
      %v810 = vsel %vm289, %v665, %v809
      %811 = vst [vmem:[%s286 + $0x28] sm:$0x1] %v810
      %v812 = vld [vmem:[%s286 + $0x30] sm:$0xff]
      %v813 = vsel %vm793, %v675, %v812
      %814 = vst [vmem:[%s286 + $0x30] sm:$0xff] %v813
      %v815 = vld [vmem:[%s286 + $0x38] sm:$0x1]
      %v816 = vsel %vm289, %v672, %v815
      %817 = vst [vmem:[%s286 + $0x38] sm:$0x1] %v816
      %v818 = vld [vmem:[%s286 + $0x40] sm:$0xff]
      %v819 = vsel %vm793, %v682, %v818
      %820 = vst [vmem:[%s286 + $0x40] sm:$0xff] %v819
      %v821 = vld [vmem:[%s286 + $0x48] sm:$0x1]
      %v822 = vsel %vm289, %v679, %v821
      %823 = vst [vmem:[%s286 + $0x48] sm:$0x1] %v822
      %v824 = vld [vmem:[%s286 + $0x50] sm:$0xff]
      %v825 = vsel %vm793, %v689, %v824
      %826 = vst [vmem:[%s286 + $0x50] sm:$0xff] %v825
      %v827 = vld [vmem:[%s286 + $0x58] sm:$0x1]
      %v828 = vsel %vm289, %v686, %v827
      %829 = vst [vmem:[%s286 + $0x58] sm:$0x1] %v828
      %v830 = vld [vmem:[%s286 + $0x60] sm:$0xff]
      %v831 = vsel %vm793, %v696, %v830
      %832 = vst [vmem:[%s286 + $0x60] sm:$0xff] %v831
      %v833 = vld [vmem:[%s286 + $0x68] sm:$0x1]
      %v834 = vsel %vm289, %v693, %v833
      %835 = vst [vmem:[%s286 + $0x68] sm:$0x1] %v834
      %v836 = vld [vmem:[%s286 + $0x70] sm:$0xff]
      %v837 = vsel %vm793, %v703, %v836
      %838 = vst [vmem:[%s286 + $0x70] sm:$0xff] %v837
      %v839 = vld [vmem:[%s286 + $0x78] sm:$0x1]
      %v840 = vsel %vm289, %v700, %v839
      %841 = vst [vmem:[%s286 + $0x78] sm:$0x1] %v840
      %v842 = vld [vmem:[%s286 + $0x80] sm:$0xff]
      %v843 = vsel %vm793, %v710, %v842
      %844 = vst [vmem:[%s286 + $0x80] sm:$0xff] %v843
      %v845 = vld [vmem:[%s286 + $0x88] sm:$0x1]
      %v846 = vsel %vm289, %v707, %v845
      %847 = vst [vmem:[%s286 + $0x88] sm:$0x1] %v846
      %v848 = vld [vmem:[%s286 + $0x90] sm:$0xff]
      %v849 = vsel %vm793, %v717, %v848
      %850 = vst [vmem:[%s286 + $0x90] sm:$0xff] %v849
      %v851 = vld [vmem:[%s286 + $0x98] sm:$0x1]
      %v852 = vsel %vm289, %v714, %v851
      %853 = vst [vmem:[%s286 + $0x98] sm:$0x1] %v852
      %v854 = vld [vmem:[%s286 + $0xa0] sm:$0xff]
      %v855 = vsel %vm793, %v724, %v854
      %856 = vst [vmem:[%s286 + $0xa0] sm:$0xff] %v855
      %v857 = vld [vmem:[%s286 + $0xa8] sm:$0x1]
      %v858 = vsel %vm289, %v721, %v857
      %859 = vst [vmem:[%s286 + $0xa8] sm:$0x1] %v858
      %v860 = vld [vmem:[%s286 + $0xb0] sm:$0xff]
      %v861 = vsel %vm793, %v731, %v860
      %862 = vst [vmem:[%s286 + $0xb0] sm:$0xff] %v861
      %v863 = vld [vmem:[%s286 + $0xb8] sm:$0x1]
      %v864 = vsel %vm289, %v728, %v863
      %865 = vst [vmem:[%s286 + $0xb8] sm:$0x1] %v864
      %v866 = vld [vmem:[%s286 + $0xc0] sm:$0xff]
      %v867 = vsel %vm793, %v738, %v866
      %868 = vst [vmem:[%s286 + $0xc0] sm:$0xff] %v867
      %v869 = vld [vmem:[%s286 + $0xc8] sm:$0x1]
      %v870 = vsel %vm289, %v735, %v869
      %871 = vst [vmem:[%s286 + $0xc8] sm:$0x1] %v870
      %v872 = vld [vmem:[%s286 + $0xd0] sm:$0xff]
      %v873 = vsel %vm793, %v745, %v872
      %874 = vst [vmem:[%s286 + $0xd0] sm:$0xff] %v873
      %v875 = vld [vmem:[%s286 + $0xd8] sm:$0x1]
      %v876 = vsel %vm289, %v742, %v875
      %877 = vst [vmem:[%s286 + $0xd8] sm:$0x1] %v876
      %v878 = vld [vmem:[%s286 + $0xe0] sm:$0xff]
      %v879 = vsel %vm793, %v752, %v878
      %880 = vst [vmem:[%s286 + $0xe0] sm:$0xff] %v879
      %v881 = vld [vmem:[%s286 + $0xe8] sm:$0x1]
      %v882 = vsel %vm289, %v749, %v881
      %883 = vst [vmem:[%s286 + $0xe8] sm:$0x1] %v882
      %v884 = vld [vmem:[%s286 + $0xf0] sm:$0xff]
      %v885 = vsel %vm793, %v759, %v884
      %886 = vst [vmem:[%s286 + $0xf0] sm:$0xff] %v885
      %v887 = vld [vmem:[%s286 + $0xf8] sm:$0x1]
      %v888 = vsel %vm289, %v756, %v887
      %889 = vst [vmem:[%s286 + $0xf8] sm:$0x1] %v888
      %v890 = vld [vmem:[#allocation2] sm:$0xff]
      %v891 = vld [vmem:[#allocation2 + $0x10] sm:$0xff]
      %v892 = vld [vmem:[#allocation2 + $0x20] sm:$0xff]
      %v893 = vld [vmem:[#allocation2 + $0x30] sm:$0xff]
      %v894 = vld [vmem:[#allocation2 + $0x40] sm:$0xff]
      %v895 = vld [vmem:[#allocation2 + $0x50] sm:$0xff]
      %v896 = vld [vmem:[#allocation2 + $0x60] sm:$0xff]
      %v897 = vld [vmem:[#allocation2 + $0x70] sm:$0xff]
      %v898 = vld [vmem:[#allocation2 + $0x80] sm:$0xff]
      %v899 = vld [vmem:[#allocation2 + $0x90] sm:$0xff]
      %v900 = vld [vmem:[#allocation2 + $0xa0] sm:$0xff]
      %v901 = vld [vmem:[#allocation2 + $0xb0] sm:$0xff]
      %v902 = vld [vmem:[#allocation2 + $0xc0] sm:$0xff]
      %v903 = vld [vmem:[#allocation2 + $0xd0] sm:$0xff]
      %v904 = vld [vmem:[#allocation2 + $0xe0] sm:$0xff]
      %v905 = vld [vmem:[#allocation2 + $0xf0] sm:$0xff]
      %v906 = vld [vmem:[%s1] sm:$0x3]
      %v907 = vld [vmem:[#allocation2 + $0x8] sm:$0x1]
      %v908 = vld [vmem:[#allocation2 + $0x18] sm:$0x1]
      %v909 = vld [vmem:[#allocation2 + $0x28] sm:$0x1]
      %v910 = vld [vmem:[#allocation2 + $0x38] sm:$0x1]
      %v911 = vld [vmem:[#allocation2 + $0x48] sm:$0x1]
      %v912 = vld [vmem:[#allocation2 + $0x58] sm:$0x1]
      %v913 = vld [vmem:[#allocation2 + $0x68] sm:$0x1]
      %v914 = vld [vmem:[#allocation2 + $0x78] sm:$0x1]
      %v915 = vld [vmem:[#allocation2 + $0x88] sm:$0x1]
      %v916 = vld [vmem:[#allocation2 + $0x98] sm:$0x1]
      %v917 = vld [vmem:[#allocation2 + $0xa8] sm:$0x1]
      %v918 = vld [vmem:[#allocation2 + $0xb8] sm:$0x1]
      %v919 = vld [vmem:[#allocation2 + $0xc8] sm:$0x1]
      %v920 = vld [vmem:[#allocation2 + $0xd8] sm:$0x1]
      %v921 = vld [vmem:[#allocation2 + $0xe8] sm:$0x1]
      %v922 = vld [vmem:[#allocation2 + $0xf8] sm:$0x1]
      %vm923 = vsmask.f32 7424
      %v925 = vshrl.u32 %v890, 16
      %v927 = vshll.u32 %v890, 16
      %v929 = vrot.slane %v927, 1
      %v930 = vor.u32 %v925, %v929
      %v932 = vshll.u32 %v907, 16
      %v934 = vrot.slane %v932, 1
      %v935 = vsel %vm923, %v930, %v934
      %v937 = vshrl.u32 %v891, 16
      %v939 = vshll.u32 %v891, 16
      %v941 = vrot.slane %v939, 1
      %v942 = vor.u32 %v937, %v941
      %v944 = vshll.u32 %v908, 16
      %v946 = vrot.slane %v944, 1
      %v947 = vsel %vm923, %v942, %v946
      %v949 = vshrl.u32 %v892, 16
      %v951 = vshll.u32 %v892, 16
      %v953 = vrot.slane %v951, 1
      %v954 = vor.u32 %v949, %v953
      %v956 = vshll.u32 %v909, 16
      %v958 = vrot.slane %v956, 1
      %v959 = vsel %vm923, %v954, %v958
      %v961 = vshrl.u32 %v893, 16
      %v963 = vshll.u32 %v893, 16
      %v965 = vrot.slane %v963, 1
      %v966 = vor.u32 %v961, %v965
      %v968 = vshll.u32 %v910, 16
      %v970 = vrot.slane %v968, 1
      %v971 = vsel %vm923, %v966, %v970
      %v973 = vshrl.u32 %v894, 16
      %v975 = vshll.u32 %v894, 16
      %v977 = vrot.slane %v975, 1
      %v978 = vor.u32 %v973, %v977
      %v980 = vshll.u32 %v911, 16
      %v982 = vrot.slane %v980, 1
      %v983 = vsel %vm923, %v978, %v982
      %v985 = vshrl.u32 %v895, 16
      %v987 = vshll.u32 %v895, 16
      %v989 = vrot.slane %v987, 1
      %v990 = vor.u32 %v985, %v989
      %v992 = vshll.u32 %v912, 16
      %v994 = vrot.slane %v992, 1
      %v995 = vsel %vm923, %v990, %v994
      %v997 = vshrl.u32 %v896, 16
      %v999 = vshll.u32 %v896, 16
      %v1001 = vrot.slane %v999, 1
      %v1002 = vor.u32 %v997, %v1001
      %v1004 = vshll.u32 %v913, 16
      %v1006 = vrot.slane %v1004, 1
      %v1007 = vsel %vm923, %v1002, %v1006
      %v1009 = vshrl.u32 %v897, 16
      %v1011 = vshll.u32 %v897, 16
      %v1013 = vrot.slane %v1011, 1
      %v1014 = vor.u32 %v1009, %v1013
      %v1016 = vshll.u32 %v914, 16
      %v1018 = vrot.slane %v1016, 1
      %v1019 = vsel %vm923, %v1014, %v1018
      %v1021 = vshrl.u32 %v898, 16
      %v1023 = vshll.u32 %v898, 16
      %v1025 = vrot.slane %v1023, 1
      %v1026 = vor.u32 %v1021, %v1025
      %v1028 = vshll.u32 %v915, 16
      %v1030 = vrot.slane %v1028, 1
      %v1031 = vsel %vm923, %v1026, %v1030
      %v1033 = vshrl.u32 %v899, 16
      %v1035 = vshll.u32 %v899, 16
      %v1037 = vrot.slane %v1035, 1
      %v1038 = vor.u32 %v1033, %v1037
      %v1040 = vshll.u32 %v916, 16
      %v1042 = vrot.slane %v1040, 1
      %v1043 = vsel %vm923, %v1038, %v1042
      %v1045 = vshrl.u32 %v900, 16
      %v1047 = vshll.u32 %v900, 16
      %v1049 = vrot.slane %v1047, 1
      %v1050 = vor.u32 %v1045, %v1049
      %v1052 = vshll.u32 %v917, 16
      %v1054 = vrot.slane %v1052, 1
      %v1055 = vsel %vm923, %v1050, %v1054
      %v1057 = vshrl.u32 %v901, 16
      %v1059 = vshll.u32 %v901, 16
      %v1061 = vrot.slane %v1059, 1
      %v1062 = vor.u32 %v1057, %v1061
      %v1064 = vshll.u32 %v918, 16
      %v1066 = vrot.slane %v1064, 1
      %v1067 = vsel %vm923, %v1062, %v1066
      %v1069 = vshrl.u32 %v902, 16
      %v1071 = vshll.u32 %v902, 16
      %v1073 = vrot.slane %v1071, 1
      %v1074 = vor.u32 %v1069, %v1073
      %v1076 = vshll.u32 %v919, 16
      %v1078 = vrot.slane %v1076, 1
      %v1079 = vsel %vm923, %v1074, %v1078
      %v1081 = vshrl.u32 %v903, 16
      %v1083 = vshll.u32 %v903, 16
      %v1085 = vrot.slane %v1083, 1
      %v1086 = vor.u32 %v1081, %v1085
      %v1088 = vshll.u32 %v920, 16
      %v1090 = vrot.slane %v1088, 1
      %v1091 = vsel %vm923, %v1086, %v1090
      %v1093 = vshrl.u32 %v904, 16
      %v1095 = vshll.u32 %v904, 16
      %v1097 = vrot.slane %v1095, 1
      %v1098 = vor.u32 %v1093, %v1097
      %v1100 = vshll.u32 %v921, 16
      %v1102 = vrot.slane %v1100, 1
      %v1103 = vsel %vm923, %v1098, %v1102
      %v1105 = vshrl.u32 %v905, 16
      %v1107 = vshll.u32 %v905, 16
      %v1109 = vrot.slane %v1107, 1
      %v1110 = vor.u32 %v1105, %v1109
      %v1112 = vshll.u32 %v922, 16
      %v1114 = vrot.slane %v1112, 1
      %v1115 = vsel %vm923, %v1110, %v1114
      %s1116 = scalar_lea.vmem %s1, 2
      %v1117 = vld [vmem:[%s1116] sm:$0x3]
      %v1119 = vsel %vm280, %v935, 0
      %v1122 = vsel %vm280, %v947, 0
      %v1125 = vsel %vm280, %v959, 0
      %v1128 = vsel %vm280, %v971, 0
      %v1131 = vsel %vm280, %v983, 0
      %v1134 = vsel %vm280, %v995, 0
      %v1137 = vsel %vm280, %v1007, 0
      %v1140 = vsel %vm280, %v1019, 0
      %v1143 = vsel %vm280, %v1031, 0
      %v1146 = vsel %vm280, %v1043, 0
      %v1149 = vsel %vm280, %v1055, 0
      %v1152 = vsel %vm280, %v1067, 0
      %v1155 = vsel %vm280, %v1079, 0
      %v1158 = vsel %vm280, %v1091, 0
      %v1161 = vsel %vm280, %v1103, 0
      %v1164 = vsel %vm280, %v1115, 0
      %vm1166 = vcmask 1040384
      %vm1167 = vcmask 1041408
      %v1168 = vsel %vm1166, 4294967295, 65535
      %v1169 = vsel %vm1167, %v1168, 0
      %v1171 = vand.u32 %v1117, %v1169
      %1173 = vmatprep.subr.bf16.mxu0 0
      %1174 = vmatpush1.bf16.msra.mxu0 %v1171
      %1175 = vmatprep.subr.bf16.mxu0 0
      %1176 = vmatpush1.bf16.msra.mxu0 0
      %1177 = vmatprep.subr.bf16.mxu0 0
      %1178 = vmatpush1.bf16.msra.mxu0 0
      %1179 = vmatprep.subr.bf16.mxu0 0
      %1180 = vmatpush1.bf16.msra.mxu0 0
      %1181 = vmatprep.subr.bf16.mxu0 0
      %1182 = vmatpush1.bf16.msra.mxu0 0
      %1183 = vmatprep.subr.bf16.mxu0 0
      %1184 = vmatpush1.bf16.msra.mxu0 0
      %1185 = vmatprep.subr.bf16.mxu0 0
      %1186 = vmatpush1.bf16.msra.mxu0 0
      %1187 = vmatprep.subr.bf16.mxu0 0
      %1188 = vmatpush1.bf16.msra.mxu0 0
      %1189 = vmatprep.subr.bf16.mxu0 0
      %1190 = vmatpush1.bf16.msra.mxu0 0
      %1191 = vmatprep.subr.bf16.mxu0 0
      %1192 = vmatpush1.bf16.msra.mxu0 0
      %1193 = vmatprep.subr.bf16.mxu0 0
      %1194 = vmatpush1.bf16.msra.mxu0 0
      %1195 = vmatprep.subr.bf16.mxu0 0
      %1196 = vmatpush1.bf16.msra.mxu0 0
      %1197 = vmatprep.subr.bf16.mxu0 0
      %1198 = vmatpush1.bf16.msra.mxu0 0
      %1199 = vmatprep.subr.bf16.mxu0 0
      %1200 = vmatpush1.bf16.msra.mxu0 0
      %1201 = vmatprep.subr.bf16.mxu0 0
      %1202 = vmatpush1.bf16.msra.mxu0 0
      %1203 = vmatprep.subr.bf16.mxu0 0
      %1204 = vmatpush1.bf16.msra.mxu0 0
      %1205 = vmatprep.mubr.bf16.mxu0 0
      %1206 = vmatmul.mubr.bf16.gmra.mrb[0].mxu0 %v1119
      %v1207 = vpop.f32.mrb[0].mxu0
      %v1208 = vadd.f32 0.0, %v1207
      %v1209 = vpop.f32.mrb[0].mxu0
      %v1210 = vpop.f32.mrb[0].mxu0
      %v1211 = vadd.f32 0.0, %v1210
      %v1212 = vpop.f32.mrb[0].mxu0
      %1213 = vmatprep.mubr.bf16.mxu0 0
      %1214 = vmatmul.mubr.bf16.gmra.mrb[0].mxu0 %v1122
      %v1215 = vpop.f32.mrb[0].mxu0
      %v1216 = vadd.f32 0.0, %v1215
      %v1217 = vpop.f32.mrb[0].mxu0
      %v1218 = vpop.f32.mrb[0].mxu0
      %v1219 = vadd.f32 0.0, %v1218
      %v1220 = vpop.f32.mrb[0].mxu0
      %1221 = vmatprep.mubr.bf16.mxu0 0
      %1222 = vmatmul.mubr.bf16.gmra.mrb[0].mxu0 %v1125
      %v1223 = vpop.f32.mrb[0].mxu0
      %v1224 = vadd.f32 0.0, %v1223
      %v1225 = vpop.f32.mrb[0].mxu0
      %v1226 = vpop.f32.mrb[0].mxu0
      %v1227 = vadd.f32 0.0, %v1226
      %v1228 = vpop.f32.mrb[0].mxu0
      %1229 = vmatprep.mubr.bf16.mxu0 0
      %1230 = vmatmul.mubr.bf16.gmra.mrb[0].mxu0 %v1128
      %v1231 = vpop.f32.mrb[0].mxu0
      %v1232 = vadd.f32 0.0, %v1231
      %v1233 = vpop.f32.mrb[0].mxu0
      %v1234 = vpop.f32.mrb[0].mxu0
      %v1235 = vadd.f32 0.0, %v1234
      %v1236 = vpop.f32.mrb[0].mxu0
      %1237 = vmatprep.mubr.bf16.mxu0 0
      %1238 = vmatmul.mubr.bf16.gmra.mrb[0].mxu0 %v1131
      %v1239 = vpop.f32.mrb[0].mxu0
      %v1240 = vadd.f32 0.0, %v1239
      %v1241 = vpop.f32.mrb[0].mxu0
      %v1242 = vpop.f32.mrb[0].mxu0
      %v1243 = vadd.f32 0.0, %v1242
      %v1244 = vpop.f32.mrb[0].mxu0
      %1245 = vmatprep.mubr.bf16.mxu0 0
      %1246 = vmatmul.mubr.bf16.gmra.mrb[0].mxu0 %v1134
      %v1247 = vpop.f32.mrb[0].mxu0
      %v1248 = vadd.f32 0.0, %v1247
      %v1249 = vpop.f32.mrb[0].mxu0
      %v1250 = vpop.f32.mrb[0].mxu0
      %v1251 = vadd.f32 0.0, %v1250
      %v1252 = vpop.f32.mrb[0].mxu0
      %1253 = vmatprep.mubr.bf16.mxu0 0
      %1254 = vmatmul.mubr.bf16.gmra.mrb[0].mxu0 %v1137
      %v1255 = vpop.f32.mrb[0].mxu0
      %v1256 = vadd.f32 0.0, %v1255
      %v1257 = vpop.f32.mrb[0].mxu0
      %v1258 = vpop.f32.mrb[0].mxu0
      %v1259 = vadd.f32 0.0, %v1258
      %v1260 = vpop.f32.mrb[0].mxu0
      %1261 = vmatprep.mubr.bf16.mxu0 0
      %1262 = vmatmul.mubr.bf16.gmra.mrb[0].mxu0 %v1140
      %v1263 = vpop.f32.mrb[0].mxu0
      %v1264 = vadd.f32 0.0, %v1263
      %v1265 = vpop.f32.mrb[0].mxu0
      %v1266 = vpop.f32.mrb[0].mxu0
      %v1267 = vadd.f32 0.0, %v1266
      %v1268 = vpop.f32.mrb[0].mxu0
      %1269 = vmatprep.mubr.bf16.mxu0 0
      %1270 = vmatmul.mubr.bf16.gmra.mrb[0].mxu0 %v1143
      %v1271 = vpop.f32.mrb[0].mxu0
      %v1272 = vadd.f32 0.0, %v1271
      %v1273 = vpop.f32.mrb[0].mxu0
      %v1274 = vpop.f32.mrb[0].mxu0
      %v1275 = vadd.f32 0.0, %v1274
      %v1276 = vpop.f32.mrb[0].mxu0
      %1277 = vmatprep.mubr.bf16.mxu0 0
      %1278 = vmatmul.mubr.bf16.gmra.mrb[0].mxu0 %v1146
      %v1279 = vpop.f32.mrb[0].mxu0
      %v1280 = vadd.f32 0.0, %v1279
      %v1281 = vpop.f32.mrb[0].mxu0
      %v1282 = vpop.f32.mrb[0].mxu0
      %v1283 = vadd.f32 0.0, %v1282
      %v1284 = vpop.f32.mrb[0].mxu0
      %1285 = vmatprep.mubr.bf16.mxu0 0
      %1286 = vmatmul.mubr.bf16.gmra.mrb[0].mxu0 %v1149
      %v1287 = vpop.f32.mrb[0].mxu0
      %v1288 = vadd.f32 0.0, %v1287
      %v1289 = vpop.f32.mrb[0].mxu0
      %v1290 = vpop.f32.mrb[0].mxu0
      %v1291 = vadd.f32 0.0, %v1290
      %v1292 = vpop.f32.mrb[0].mxu0
      %1293 = vmatprep.mubr.bf16.mxu0 0
      %1294 = vmatmul.mubr.bf16.gmra.mrb[0].mxu0 %v1152
      %v1295 = vpop.f32.mrb[0].mxu0
      %v1296 = vadd.f32 0.0, %v1295
      %v1297 = vpop.f32.mrb[0].mxu0
      %v1298 = vpop.f32.mrb[0].mxu0
      %v1299 = vadd.f32 0.0, %v1298
      %v1300 = vpop.f32.mrb[0].mxu0
      %1301 = vmatprep.mubr.bf16.mxu0 0
      %1302 = vmatmul.mubr.bf16.gmra.mrb[0].mxu0 %v1155
      %v1303 = vpop.f32.mrb[0].mxu0
      %v1304 = vadd.f32 0.0, %v1303
      %v1305 = vpop.f32.mrb[0].mxu0
      %v1306 = vpop.f32.mrb[0].mxu0
      %v1307 = vadd.f32 0.0, %v1306
      %v1308 = vpop.f32.mrb[0].mxu0
      %1309 = vmatprep.mubr.bf16.mxu0 0
      %1310 = vmatmul.mubr.bf16.gmra.mrb[0].mxu0 %v1158
      %v1311 = vpop.f32.mrb[0].mxu0
      %v1312 = vadd.f32 0.0, %v1311
      %v1313 = vpop.f32.mrb[0].mxu0
      %v1314 = vpop.f32.mrb[0].mxu0
      %v1315 = vadd.f32 0.0, %v1314
      %v1316 = vpop.f32.mrb[0].mxu0
      %1317 = vmatprep.mubr.bf16.mxu0 0
      %1318 = vmatmul.mubr.bf16.gmra.mrb[0].mxu0 %v1161
      %v1319 = vpop.f32.mrb[0].mxu0
      %v1320 = vadd.f32 0.0, %v1319
      %v1321 = vpop.f32.mrb[0].mxu0
      %v1322 = vpop.f32.mrb[0].mxu0
      %v1323 = vadd.f32 0.0, %v1322
      %v1324 = vpop.f32.mrb[0].mxu0
      %1325 = vmatprep.mubr.bf16.mxu0 0
      %1326 = vmatmul.mubr.bf16.gmra.mrb[0].mxu0 %v1164
      %v1327 = vpop.f32.mrb[0].mxu0
      %v1328 = vadd.f32 0.0, %v1327
      %v1329 = vpop.f32.mrb[0].mxu0
      %v1330 = vpop.f32.mrb[0].mxu0
      %v1331 = vadd.f32 0.0, %v1330
      %v1332 = vpop.f32.mrb[0].mxu0
      %1333 = vdwg.mxu0
      %v1334 = vsel %vm280, %v890, 0
      %v1336 = vsel %vm280, %v891, 0
      %v1338 = vsel %vm280, %v892, 0
      %v1340 = vsel %vm280, %v893, 0
      %v1342 = vsel %vm280, %v894, 0
      %v1344 = vsel %vm280, %v895, 0
      %v1346 = vsel %vm280, %v896, 0
      %v1348 = vsel %vm280, %v897, 0
      %v1350 = vsel %vm280, %v898, 0
      %v1352 = vsel %vm280, %v899, 0
      %v1354 = vsel %vm280, %v900, 0
      %v1356 = vsel %vm280, %v901, 0
      %v1358 = vsel %vm280, %v902, 0
      %v1360 = vsel %vm280, %v903, 0
      %v1362 = vsel %vm280, %v904, 0
      %v1364 = vsel %vm280, %v905, 0
      %v1367 = vand.u32 %v906, %v1169
      %1369 = vmatprep.subr.bf16.mxu0 0
      %1370 = vmatpush1.bf16.msra.mxu0 %v1367
      %1371 = vmatprep.subr.bf16.mxu0 0
      %1372 = vmatpush1.bf16.msra.mxu0 0
      %1373 = vmatprep.subr.bf16.mxu0 0
      %1374 = vmatpush1.bf16.msra.mxu0 0
      %1375 = vmatprep.subr.bf16.mxu0 0
      %1376 = vmatpush1.bf16.msra.mxu0 0
      %1377 = vmatprep.subr.bf16.mxu0 0
      %1378 = vmatpush1.bf16.msra.mxu0 0
      %1379 = vmatprep.subr.bf16.mxu0 0
      %1380 = vmatpush1.bf16.msra.mxu0 0
      %1381 = vmatprep.subr.bf16.mxu0 0
      %1382 = vmatpush1.bf16.msra.mxu0 0
      %1383 = vmatprep.subr.bf16.mxu0 0
      %1384 = vmatpush1.bf16.msra.mxu0 0
      %1385 = vmatprep.subr.bf16.mxu0 0
      %1386 = vmatpush1.bf16.msra.mxu0 0
      %1387 = vmatprep.subr.bf16.mxu0 0
      %1388 = vmatpush1.bf16.msra.mxu0 0
      %1389 = vmatprep.subr.bf16.mxu0 0
      %1390 = vmatpush1.bf16.msra.mxu0 0
      %1391 = vmatprep.subr.bf16.mxu0 0
      %1392 = vmatpush1.bf16.msra.mxu0 0
      %1393 = vmatprep.subr.bf16.mxu0 0
      %1394 = vmatpush1.bf16.msra.mxu0 0
      %1395 = vmatprep.subr.bf16.mxu0 0
      %1396 = vmatpush1.bf16.msra.mxu0 0
      %1397 = vmatprep.subr.bf16.mxu0 0
      %1398 = vmatpush1.bf16.msra.mxu0 0
      %1399 = vmatprep.subr.bf16.mxu0 0
      %1400 = vmatpush1.bf16.msra.mxu0 0
      %1401 = vmatprep.mubr.bf16.mxu0 0
      %1402 = vmatmul.mubr.bf16.gmra.mrb[0].mxu0 %v1334
      %v1403 = vpop.f32.mrb[0].mxu0
      %v1404 = vadd.f32 %v1208, %v1403
      %v1405 = vpop.f32.mrb[0].mxu0
      %v1406 = vpop.f32.mrb[0].mxu0
      %v1407 = vadd.f32 %v1211, %v1406
      %v1408 = vpop.f32.mrb[0].mxu0
      %1409 = vmatprep.mubr.bf16.mxu0 0
      %1410 = vmatmul.mubr.bf16.gmra.mrb[0].mxu0 %v1336
      %v1411 = vpop.f32.mrb[0].mxu0
      %v1412 = vadd.f32 %v1216, %v1411
      %v1413 = vpop.f32.mrb[0].mxu0
      %v1414 = vpop.f32.mrb[0].mxu0
      %v1415 = vadd.f32 %v1219, %v1414
      %v1416 = vpop.f32.mrb[0].mxu0
      %1417 = vmatprep.mubr.bf16.mxu0 0
      %1418 = vmatmul.mubr.bf16.gmra.mrb[0].mxu0 %v1338
      %v1419 = vpop.f32.mrb[0].mxu0
      %v1420 = vadd.f32 %v1224, %v1419
      %v1421 = vpop.f32.mrb[0].mxu0
      %v1422 = vpop.f32.mrb[0].mxu0
      %v1423 = vadd.f32 %v1227, %v1422
      %v1424 = vpop.f32.mrb[0].mxu0
      %1425 = vmatprep.mubr.bf16.mxu0 0
      %1426 = vmatmul.mubr.bf16.gmra.mrb[0].mxu0 %v1340
      %v1427 = vpop.f32.mrb[0].mxu0
      %v1428 = vadd.f32 %v1232, %v1427
      %v1429 = vpop.f32.mrb[0].mxu0
      %v1430 = vpop.f32.mrb[0].mxu0
      %v1431 = vadd.f32 %v1235, %v1430
      %v1432 = vpop.f32.mrb[0].mxu0
      %1433 = vmatprep.mubr.bf16.mxu0 0
      %1434 = vmatmul.mubr.bf16.gmra.mrb[0].mxu0 %v1342
      %v1435 = vpop.f32.mrb[0].mxu0
      %v1436 = vadd.f32 %v1240, %v1435
      %v1437 = vpop.f32.mrb[0].mxu0
      %v1438 = vpop.f32.mrb[0].mxu0
      %v1439 = vadd.f32 %v1243, %v1438
      %v1440 = vpop.f32.mrb[0].mxu0
      %1441 = vmatprep.mubr.bf16.mxu0 0
      %1442 = vmatmul.mubr.bf16.gmra.mrb[0].mxu0 %v1344
      %v1443 = vpop.f32.mrb[0].mxu0
      %v1444 = vadd.f32 %v1248, %v1443
      %v1445 = vpop.f32.mrb[0].mxu0
      %v1446 = vpop.f32.mrb[0].mxu0
      %v1447 = vadd.f32 %v1251, %v1446
      %v1448 = vpop.f32.mrb[0].mxu0
      %1449 = vmatprep.mubr.bf16.mxu0 0
      %1450 = vmatmul.mubr.bf16.gmra.mrb[0].mxu0 %v1346
      %v1451 = vpop.f32.mrb[0].mxu0
      %v1452 = vadd.f32 %v1256, %v1451
      %v1453 = vpop.f32.mrb[0].mxu0
      %v1454 = vpop.f32.mrb[0].mxu0
      %v1455 = vadd.f32 %v1259, %v1454
      %v1456 = vpop.f32.mrb[0].mxu0
      %1457 = vmatprep.mubr.bf16.mxu0 0
      %1458 = vmatmul.mubr.bf16.gmra.mrb[0].mxu0 %v1348
      %v1459 = vpop.f32.mrb[0].mxu0
      %v1460 = vadd.f32 %v1264, %v1459
      %v1461 = vpop.f32.mrb[0].mxu0
      %v1462 = vpop.f32.mrb[0].mxu0
      %v1463 = vadd.f32 %v1267, %v1462
      %v1464 = vpop.f32.mrb[0].mxu0
      %1465 = vmatprep.mubr.bf16.mxu0 0
      %1466 = vmatmul.mubr.bf16.gmra.mrb[0].mxu0 %v1350
      %v1467 = vpop.f32.mrb[0].mxu0
      %v1468 = vadd.f32 %v1272, %v1467
      %v1469 = vpop.f32.mrb[0].mxu0
      %v1470 = vpop.f32.mrb[0].mxu0
      %v1471 = vadd.f32 %v1275, %v1470
      %v1472 = vpop.f32.mrb[0].mxu0
      %1473 = vmatprep.mubr.bf16.mxu0 0
      %1474 = vmatmul.mubr.bf16.gmra.mrb[0].mxu0 %v1352
      %v1475 = vpop.f32.mrb[0].mxu0
      %v1476 = vadd.f32 %v1280, %v1475
      %v1477 = vpop.f32.mrb[0].mxu0
      %v1478 = vpop.f32.mrb[0].mxu0
      %v1479 = vadd.f32 %v1283, %v1478
      %v1480 = vpop.f32.mrb[0].mxu0
      %1481 = vmatprep.mubr.bf16.mxu0 0
      %1482 = vmatmul.mubr.bf16.gmra.mrb[0].mxu0 %v1354
      %v1483 = vpop.f32.mrb[0].mxu0
      %v1484 = vadd.f32 %v1288, %v1483
      %v1485 = vpop.f32.mrb[0].mxu0
      %v1486 = vpop.f32.mrb[0].mxu0
      %v1487 = vadd.f32 %v1291, %v1486
      %v1488 = vpop.f32.mrb[0].mxu0
      %1489 = vmatprep.mubr.bf16.mxu0 0
      %1490 = vmatmul.mubr.bf16.gmra.mrb[0].mxu0 %v1356
      %v1491 = vpop.f32.mrb[0].mxu0
      %v1492 = vadd.f32 %v1296, %v1491
      %v1493 = vpop.f32.mrb[0].mxu0
      %v1494 = vpop.f32.mrb[0].mxu0
      %v1495 = vadd.f32 %v1299, %v1494
      %v1496 = vpop.f32.mrb[0].mxu0
      %1497 = vmatprep.mubr.bf16.mxu0 0
      %1498 = vmatmul.mubr.bf16.gmra.mrb[0].mxu0 %v1358
      %v1499 = vpop.f32.mrb[0].mxu0
      %v1500 = vadd.f32 %v1304, %v1499
      %v1501 = vpop.f32.mrb[0].mxu0
      %v1502 = vpop.f32.mrb[0].mxu0
      %v1503 = vadd.f32 %v1307, %v1502
      %v1504 = vpop.f32.mrb[0].mxu0
      %1505 = vmatprep.mubr.bf16.mxu0 0
      %1506 = vmatmul.mubr.bf16.gmra.mrb[0].mxu0 %v1360
      %v1507 = vpop.f32.mrb[0].mxu0
      %v1508 = vadd.f32 %v1312, %v1507
      %v1509 = vpop.f32.mrb[0].mxu0
      %v1510 = vpop.f32.mrb[0].mxu0
      %v1511 = vadd.f32 %v1315, %v1510
      %v1512 = vpop.f32.mrb[0].mxu0
      %1513 = vmatprep.mubr.bf16.mxu0 0
      %1514 = vmatmul.mubr.bf16.gmra.mrb[0].mxu0 %v1362
      %v1515 = vpop.f32.mrb[0].mxu0
      %v1516 = vadd.f32 %v1320, %v1515
      %v1517 = vpop.f32.mrb[0].mxu0
      %v1518 = vpop.f32.mrb[0].mxu0
      %v1519 = vadd.f32 %v1323, %v1518
      %v1520 = vpop.f32.mrb[0].mxu0
      %1521 = vmatprep.mubr.bf16.mxu0 0
      %1522 = vmatmul.mubr.bf16.gmra.mrb[0].mxu0 %v1364
      %v1523 = vpop.f32.mrb[0].mxu0
      %v1524 = vadd.f32 %v1328, %v1523
      %v1525 = vpop.f32.mrb[0].mxu0
      %v1526 = vpop.f32.mrb[0].mxu0
      %v1527 = vadd.f32 %v1331, %v1526
      %v1528 = vpop.f32.mrb[0].mxu0
      %1529 = vdwg.mxu0
      %v1530 = vld [vmem:[#allocation2] sm:$0xfe]
      %v1531 = vld [vmem:[#allocation2 + $0x10] sm:$0xfe]
      %v1532 = vld [vmem:[#allocation2 + $0x20] sm:$0xfe]
      %v1533 = vld [vmem:[#allocation2 + $0x30] sm:$0xfe]
      %v1534 = vld [vmem:[#allocation2 + $0x40] sm:$0xfe]
      %v1535 = vld [vmem:[#allocation2 + $0x50] sm:$0xfe]
      %v1536 = vld [vmem:[#allocation2 + $0x60] sm:$0xfe]
      %v1537 = vld [vmem:[#allocation2 + $0x70] sm:$0xfe]
      %v1538 = vld [vmem:[#allocation2 + $0x80] sm:$0xfe]
      %v1539 = vld [vmem:[#allocation2 + $0x90] sm:$0xfe]
      %v1540 = vld [vmem:[#allocation2 + $0xa0] sm:$0xfe]
      %v1541 = vld [vmem:[#allocation2 + $0xb0] sm:$0xfe]
      %v1542 = vld [vmem:[#allocation2 + $0xc0] sm:$0xfe]
      %v1543 = vld [vmem:[#allocation2 + $0xd0] sm:$0xfe]
      %v1544 = vld [vmem:[#allocation2 + $0xe0] sm:$0xfe]
      %v1545 = vld [vmem:[#allocation2 + $0xf0] sm:$0xfe]
      %vm1578 = vcmask 1046528
      %v1579 = vrot.slane %v1530, 1
      %v1580 = vrot.slane %v907, 1
      %v1581 = vsel %vm1578, %v1579, %v1580
      %v1582 = vrot.slane %v1531, 1
      %v1583 = vrot.slane %v908, 1
      %v1584 = vsel %vm1578, %v1582, %v1583
      %v1585 = vrot.slane %v1532, 1
      %v1586 = vrot.slane %v909, 1
      %v1587 = vsel %vm1578, %v1585, %v1586
      %v1588 = vrot.slane %v1533, 1
      %v1589 = vrot.slane %v910, 1
      %v1590 = vsel %vm1578, %v1588, %v1589
      %v1591 = vrot.slane %v1534, 1
      %v1592 = vrot.slane %v911, 1
      %v1593 = vsel %vm1578, %v1591, %v1592
      %v1594 = vrot.slane %v1535, 1
      %v1595 = vrot.slane %v912, 1
      %v1596 = vsel %vm1578, %v1594, %v1595
      %v1597 = vrot.slane %v1536, 1
      %v1598 = vrot.slane %v913, 1
      %v1599 = vsel %vm1578, %v1597, %v1598
      %v1600 = vrot.slane %v1537, 1
      %v1601 = vrot.slane %v914, 1
      %v1602 = vsel %vm1578, %v1600, %v1601
      %v1603 = vrot.slane %v1538, 1
      %v1604 = vrot.slane %v915, 1
      %v1605 = vsel %vm1578, %v1603, %v1604
      %v1606 = vrot.slane %v1539, 1
      %v1607 = vrot.slane %v916, 1
      %v1608 = vsel %vm1578, %v1606, %v1607
      %v1609 = vrot.slane %v1540, 1
      %v1610 = vrot.slane %v917, 1
      %v1611 = vsel %vm1578, %v1609, %v1610
      %v1612 = vrot.slane %v1541, 1
      %v1613 = vrot.slane %v918, 1
      %v1614 = vsel %vm1578, %v1612, %v1613
      %v1615 = vrot.slane %v1542, 1
      %v1616 = vrot.slane %v919, 1
      %v1617 = vsel %vm1578, %v1615, %v1616
      %v1618 = vrot.slane %v1543, 1
      %v1619 = vrot.slane %v920, 1
      %v1620 = vsel %vm1578, %v1618, %v1619
      %v1621 = vrot.slane %v1544, 1
      %v1622 = vrot.slane %v921, 1
      %v1623 = vsel %vm1578, %v1621, %v1622
      %v1624 = vrot.slane %v1545, 1
      %v1625 = vrot.slane %v922, 1
      %v1626 = vsel %vm1578, %v1624, %v1625
      %s1627 = scalar_lea.vmem %s1, 4
      %v1628 = vld [vmem:[%s1627] sm:$0x3]
      %v1630 = vsel %vm280, %v1581, 0
      %v1633 = vsel %vm280, %v1584, 0
      %v1636 = vsel %vm280, %v1587, 0
      %v1639 = vsel %vm280, %v1590, 0
      %v1642 = vsel %vm280, %v1593, 0
      %v1645 = vsel %vm280, %v1596, 0
      %v1648 = vsel %vm280, %v1599, 0
      %v1651 = vsel %vm280, %v1602, 0
      %v1654 = vsel %vm280, %v1605, 0
      %v1657 = vsel %vm280, %v1608, 0
      %v1660 = vsel %vm280, %v1611, 0
      %v1663 = vsel %vm280, %v1614, 0
      %v1666 = vsel %vm280, %v1617, 0
      %v1669 = vsel %vm280, %v1620, 0
      %v1672 = vsel %vm280, %v1623, 0
      %v1675 = vsel %vm280, %v1626, 0
      %v1678 = vand.u32 %v1628, %v1169
      %1680 = vmatprep.subr.bf16.mxu0 0
      %1681 = vmatpush1.bf16.msra.mxu0 %v1678
      %1682 = vmatprep.subr.bf16.mxu0 0
      %1683 = vmatpush1.bf16.msra.mxu0 0
      %1684 = vmatprep.subr.bf16.mxu0 0
      %1685 = vmatpush1.bf16.msra.mxu0 0
      %1686 = vmatprep.subr.bf16.mxu0 0
      %1687 = vmatpush1.bf16.msra.mxu0 0
      %1688 = vmatprep.subr.bf16.mxu0 0
      %1689 = vmatpush1.bf16.msra.mxu0 0
      %1690 = vmatprep.subr.bf16.mxu0 0
      %1691 = vmatpush1.bf16.msra.mxu0 0
      %1692 = vmatprep.subr.bf16.mxu0 0
      %1693 = vmatpush1.bf16.msra.mxu0 0
      %1694 = vmatprep.subr.bf16.mxu0 0
      %1695 = vmatpush1.bf16.msra.mxu0 0
      %1696 = vmatprep.subr.bf16.mxu0 0
      %1697 = vmatpush1.bf16.msra.mxu0 0
      %1698 = vmatprep.subr.bf16.mxu0 0
      %1699 = vmatpush1.bf16.msra.mxu0 0
      %1700 = vmatprep.subr.bf16.mxu0 0
      %1701 = vmatpush1.bf16.msra.mxu0 0
      %1702 = vmatprep.subr.bf16.mxu0 0
      %1703 = vmatpush1.bf16.msra.mxu0 0
      %1704 = vmatprep.subr.bf16.mxu0 0
      %1705 = vmatpush1.bf16.msra.mxu0 0
      %1706 = vmatprep.subr.bf16.mxu0 0
      %1707 = vmatpush1.bf16.msra.mxu0 0
      %1708 = vmatprep.subr.bf16.mxu0 0
      %1709 = vmatpush1.bf16.msra.mxu0 0
      %1710 = vmatprep.subr.bf16.mxu0 0
      %1711 = vmatpush1.bf16.msra.mxu0 0
      %1712 = vmatprep.mubr.bf16.mxu0 0
      %1713 = vmatmul.mubr.bf16.gmra.mrb[0].mxu0 %v1630
      %v1714 = vpop.f32.mrb[0].mxu0
      %v1715 = vadd.f32 0.0, %v1714
      %v1716 = vpop.f32.mrb[0].mxu0
      %v1717 = vpop.f32.mrb[0].mxu0
      %v1718 = vadd.f32 0.0, %v1717
      %v1719 = vpop.f32.mrb[0].mxu0
      %1720 = vmatprep.mubr.bf16.mxu0 0
      %1721 = vmatmul.mubr.bf16.gmra.mrb[0].mxu0 %v1633
      %v1722 = vpop.f32.mrb[0].mxu0
      %v1723 = vadd.f32 0.0, %v1722
      %v1724 = vpop.f32.mrb[0].mxu0
      %v1725 = vpop.f32.mrb[0].mxu0
      %v1726 = vadd.f32 0.0, %v1725
      %v1727 = vpop.f32.mrb[0].mxu0
      %1728 = vmatprep.mubr.bf16.mxu0 0
      %1729 = vmatmul.mubr.bf16.gmra.mrb[0].mxu0 %v1636
      %v1730 = vpop.f32.mrb[0].mxu0
      %v1731 = vadd.f32 0.0, %v1730
      %v1732 = vpop.f32.mrb[0].mxu0
      %v1733 = vpop.f32.mrb[0].mxu0
      %v1734 = vadd.f32 0.0, %v1733
      %v1735 = vpop.f32.mrb[0].mxu0
      %1736 = vmatprep.mubr.bf16.mxu0 0
      %1737 = vmatmul.mubr.bf16.gmra.mrb[0].mxu0 %v1639
      %v1738 = vpop.f32.mrb[0].mxu0
      %v1739 = vadd.f32 0.0, %v1738
      %v1740 = vpop.f32.mrb[0].mxu0
      %v1741 = vpop.f32.mrb[0].mxu0
      %v1742 = vadd.f32 0.0, %v1741
      %v1743 = vpop.f32.mrb[0].mxu0
      %1744 = vmatprep.mubr.bf16.mxu0 0
      %1745 = vmatmul.mubr.bf16.gmra.mrb[0].mxu0 %v1642
      %v1746 = vpop.f32.mrb[0].mxu0
      %v1747 = vadd.f32 0.0, %v1746
      %v1748 = vpop.f32.mrb[0].mxu0
      %v1749 = vpop.f32.mrb[0].mxu0
      %v1750 = vadd.f32 0.0, %v1749
      %v1751 = vpop.f32.mrb[0].mxu0
      %1752 = vmatprep.mubr.bf16.mxu0 0
      %1753 = vmatmul.mubr.bf16.gmra.mrb[0].mxu0 %v1645
      %v1754 = vpop.f32.mrb[0].mxu0
      %v1755 = vadd.f32 0.0, %v1754
      %v1756 = vpop.f32.mrb[0].mxu0
      %v1757 = vpop.f32.mrb[0].mxu0
      %v1758 = vadd.f32 0.0, %v1757
      %v1759 = vpop.f32.mrb[0].mxu0
      %1760 = vmatprep.mubr.bf16.mxu0 0
      %1761 = vmatmul.mubr.bf16.gmra.mrb[0].mxu0 %v1648
      %v1762 = vpop.f32.mrb[0].mxu0
      %v1763 = vadd.f32 0.0, %v1762
      %v1764 = vpop.f32.mrb[0].mxu0
      %v1765 = vpop.f32.mrb[0].mxu0
      %v1766 = vadd.f32 0.0, %v1765
      %v1767 = vpop.f32.mrb[0].mxu0
      %1768 = vmatprep.mubr.bf16.mxu0 0
      %1769 = vmatmul.mubr.bf16.gmra.mrb[0].mxu0 %v1651
      %v1770 = vpop.f32.mrb[0].mxu0
      %v1771 = vadd.f32 0.0, %v1770
      %v1772 = vpop.f32.mrb[0].mxu0
      %v1773 = vpop.f32.mrb[0].mxu0
      %v1774 = vadd.f32 0.0, %v1773
      %v1775 = vpop.f32.mrb[0].mxu0
      %1776 = vmatprep.mubr.bf16.mxu0 0
      %1777 = vmatmul.mubr.bf16.gmra.mrb[0].mxu0 %v1654
      %v1778 = vpop.f32.mrb[0].mxu0
      %v1779 = vadd.f32 0.0, %v1778
      %v1780 = vpop.f32.mrb[0].mxu0
      %v1781 = vpop.f32.mrb[0].mxu0
      %v1782 = vadd.f32 0.0, %v1781
      %v1783 = vpop.f32.mrb[0].mxu0
      %1784 = vmatprep.mubr.bf16.mxu0 0
      %1785 = vmatmul.mubr.bf16.gmra.mrb[0].mxu0 %v1657
      %v1786 = vpop.f32.mrb[0].mxu0
      %v1787 = vadd.f32 0.0, %v1786
      %v1788 = vpop.f32.mrb[0].mxu0
      %v1789 = vpop.f32.mrb[0].mxu0
      %v1790 = vadd.f32 0.0, %v1789
      %v1791 = vpop.f32.mrb[0].mxu0
      %1792 = vmatprep.mubr.bf16.mxu0 0
      %1793 = vmatmul.mubr.bf16.gmra.mrb[0].mxu0 %v1660
      %v1794 = vpop.f32.mrb[0].mxu0
      %v1795 = vadd.f32 0.0, %v1794
      %v1796 = vpop.f32.mrb[0].mxu0
      %v1797 = vpop.f32.mrb[0].mxu0
      %v1798 = vadd.f32 0.0, %v1797
      %v1799 = vpop.f32.mrb[0].mxu0
      %1800 = vmatprep.mubr.bf16.mxu0 0
      %1801 = vmatmul.mubr.bf16.gmra.mrb[0].mxu0 %v1663
      %v1802 = vpop.f32.mrb[0].mxu0
      %v1803 = vadd.f32 0.0, %v1802
      %v1804 = vpop.f32.mrb[0].mxu0
      %v1805 = vpop.f32.mrb[0].mxu0
      %v1806 = vadd.f32 0.0, %v1805
      %v1807 = vpop.f32.mrb[0].mxu0
      %1808 = vmatprep.mubr.bf16.mxu0 0
      %1809 = vmatmul.mubr.bf16.gmra.mrb[0].mxu0 %v1666
      %v1810 = vpop.f32.mrb[0].mxu0
      %v1811 = vadd.f32 0.0, %v1810
      %v1812 = vpop.f32.mrb[0].mxu0
      %v1813 = vpop.f32.mrb[0].mxu0
      %v1814 = vadd.f32 0.0, %v1813
      %v1815 = vpop.f32.mrb[0].mxu0
      %1816 = vmatprep.mubr.bf16.mxu0 0
      %1817 = vmatmul.mubr.bf16.gmra.mrb[0].mxu0 %v1669
      %v1818 = vpop.f32.mrb[0].mxu0
      %v1819 = vadd.f32 0.0, %v1818
      %v1820 = vpop.f32.mrb[0].mxu0
      %v1821 = vpop.f32.mrb[0].mxu0
      %v1822 = vadd.f32 0.0, %v1821
      %v1823 = vpop.f32.mrb[0].mxu0
      %1824 = vmatprep.mubr.bf16.mxu0 0
      %1825 = vmatmul.mubr.bf16.gmra.mrb[0].mxu0 %v1672
      %v1826 = vpop.f32.mrb[0].mxu0
      %v1827 = vadd.f32 0.0, %v1826
      %v1828 = vpop.f32.mrb[0].mxu0
      %v1829 = vpop.f32.mrb[0].mxu0
      %v1830 = vadd.f32 0.0, %v1829
      %v1831 = vpop.f32.mrb[0].mxu0
      %1832 = vmatprep.mubr.bf16.mxu0 0
      %1833 = vmatmul.mubr.bf16.gmra.mrb[0].mxu0 %v1675
      %v1834 = vpop.f32.mrb[0].mxu0
      %v1835 = vadd.f32 0.0, %v1834
      %v1836 = vpop.f32.mrb[0].mxu0
      %v1837 = vpop.f32.mrb[0].mxu0
      %v1838 = vadd.f32 0.0, %v1837
      %v1839 = vpop.f32.mrb[0].mxu0
      %1840 = vdwg.mxu0
      %v1841 = vadd.f32 %v1404, %v1715
      %v1842 = vadd.f32 %v1407, %v1718
      %v1843 = vadd.f32 %v1412, %v1723
      %v1844 = vadd.f32 %v1415, %v1726
      %v1845 = vadd.f32 %v1420, %v1731
      %v1846 = vadd.f32 %v1423, %v1734
      %v1847 = vadd.f32 %v1428, %v1739
      %v1848 = vadd.f32 %v1431, %v1742
      %v1849 = vadd.f32 %v1436, %v1747
      %v1850 = vadd.f32 %v1439, %v1750
      %v1851 = vadd.f32 %v1444, %v1755
      %v1852 = vadd.f32 %v1447, %v1758
      %v1853 = vadd.f32 %v1452, %v1763
      %v1854 = vadd.f32 %v1455, %v1766
      %v1855 = vadd.f32 %v1460, %v1771
      %v1856 = vadd.f32 %v1463, %v1774
      %v1857 = vadd.f32 %v1468, %v1779
      %v1858 = vadd.f32 %v1471, %v1782
      %v1859 = vadd.f32 %v1476, %v1787
      %v1860 = vadd.f32 %v1479, %v1790
      %v1861 = vadd.f32 %v1484, %v1795
      %v1862 = vadd.f32 %v1487, %v1798
      %v1863 = vadd.f32 %v1492, %v1803
      %v1864 = vadd.f32 %v1495, %v1806
      %v1865 = vadd.f32 %v1500, %v1811
      %v1866 = vadd.f32 %v1503, %v1814
      %v1867 = vadd.f32 %v1508, %v1819
      %v1868 = vadd.f32 %v1511, %v1822
      %v1869 = vadd.f32 %v1516, %v1827
      %v1870 = vadd.f32 %v1519, %v1830
      %v1871 = vadd.f32 %v1524, %v1835
      %v1872 = vadd.f32 %v1527, %v1838
      %v1873 = vld [vmem:[%s286] sm:$0xff]
      %v1874 = vld [vmem:[%s286 + $0x10] sm:$0xff]
      %v1875 = vld [vmem:[%s286 + $0x20] sm:$0xff]
      %v1876 = vld [vmem:[%s286 + $0x30] sm:$0xff]
      %v1877 = vld [vmem:[%s286 + $0x40] sm:$0xff]
      %v1878 = vld [vmem:[%s286 + $0x50] sm:$0xff]
      %v1879 = vld [vmem:[%s286 + $0x60] sm:$0xff]
      %v1880 = vld [vmem:[%s286 + $0x70] sm:$0xff]
      %v1881 = vld [vmem:[%s286 + $0x80] sm:$0xff]
      %v1882 = vld [vmem:[%s286 + $0x90] sm:$0xff]
      %v1883 = vld [vmem:[%s286 + $0xa0] sm:$0xff]
      %v1884 = vld [vmem:[%s286 + $0xb0] sm:$0xff]
      %v1885 = vld [vmem:[%s286 + $0xc0] sm:$0xff]
      %v1886 = vld [vmem:[%s286 + $0xd0] sm:$0xff]
      %v1887 = vld [vmem:[%s286 + $0xe0] sm:$0xff]
      %v1888 = vld [vmem:[%s286 + $0xf0] sm:$0xff]
      %s1889 = scalar_lea.vmem %s1, 6
      %v1890 = vld [vmem:[%s1889] sm:$0x3]
      %v1892 = vsel %vm280, %v1873, 0
      %v1895 = vsel %vm280, %v1874, 0
      %v1898 = vsel %vm280, %v1875, 0
      %v1901 = vsel %vm280, %v1876, 0
      %v1904 = vsel %vm280, %v1877, 0
      %v1907 = vsel %vm280, %v1878, 0
      %v1910 = vsel %vm280, %v1879, 0
      %v1913 = vsel %vm280, %v1880, 0
      %v1916 = vsel %vm280, %v1881, 0
      %v1919 = vsel %vm280, %v1882, 0
      %v1922 = vsel %vm280, %v1883, 0
      %v1925 = vsel %vm280, %v1884, 0
      %v1928 = vsel %vm280, %v1885, 0
      %v1931 = vsel %vm280, %v1886, 0
      %v1934 = vsel %vm280, %v1887, 0
      %v1937 = vsel %vm280, %v1888, 0
      %v1940 = vand.u32 %v1890, %v1169
      %1942 = vmatprep.subr.bf16.mxu0 0
      %1943 = vmatpush1.bf16.msra.mxu0 %v1940
      %1944 = vmatprep.subr.bf16.mxu0 0
      %1945 = vmatpush1.bf16.msra.mxu0 0
      %1946 = vmatprep.subr.bf16.mxu0 0
      %1947 = vmatpush1.bf16.msra.mxu0 0
      %1948 = vmatprep.subr.bf16.mxu0 0
      %1949 = vmatpush1.bf16.msra.mxu0 0
      %1950 = vmatprep.subr.bf16.mxu0 0
      %1951 = vmatpush1.bf16.msra.mxu0 0
      %1952 = vmatprep.subr.bf16.mxu0 0
      %1953 = vmatpush1.bf16.msra.mxu0 0
      %1954 = vmatprep.subr.bf16.mxu0 0
      %1955 = vmatpush1.bf16.msra.mxu0 0
      %1956 = vmatprep.subr.bf16.mxu0 0
      %1957 = vmatpush1.bf16.msra.mxu0 0
      %1958 = vmatprep.subr.bf16.mxu0 0
      %1959 = vmatpush1.bf16.msra.mxu0 0
      %1960 = vmatprep.subr.bf16.mxu0 0
      %1961 = vmatpush1.bf16.msra.mxu0 0
      %1962 = vmatprep.subr.bf16.mxu0 0
      %1963 = vmatpush1.bf16.msra.mxu0 0
      %1964 = vmatprep.subr.bf16.mxu0 0
      %1965 = vmatpush1.bf16.msra.mxu0 0
      %1966 = vmatprep.subr.bf16.mxu0 0
      %1967 = vmatpush1.bf16.msra.mxu0 0
      %1968 = vmatprep.subr.bf16.mxu0 0
      %1969 = vmatpush1.bf16.msra.mxu0 0
      %1970 = vmatprep.subr.bf16.mxu0 0
      %1971 = vmatpush1.bf16.msra.mxu0 0
      %1972 = vmatprep.subr.bf16.mxu0 0
      %1973 = vmatpush1.bf16.msra.mxu0 0
      %1974 = vmatprep.mubr.bf16.mxu0 0
      %1975 = vmatmul.mubr.bf16.gmra.mrb[0].mxu0 %v1892
      %v1976 = vpop.f32.mrb[0].mxu0
      %v1977 = vadd.f32 0.0, %v1976
      %v1978 = vpop.f32.mrb[0].mxu0
      %v1979 = vpop.f32.mrb[0].mxu0
      %v1980 = vadd.f32 0.0, %v1979
      %v1981 = vpop.f32.mrb[0].mxu0
      %1982 = vmatprep.mubr.bf16.mxu0 0
      %1983 = vmatmul.mubr.bf16.gmra.mrb[0].mxu0 %v1895
      %v1984 = vpop.f32.mrb[0].mxu0
      %v1985 = vadd.f32 0.0, %v1984
      %v1986 = vpop.f32.mrb[0].mxu0
      %v1987 = vpop.f32.mrb[0].mxu0
      %v1988 = vadd.f32 0.0, %v1987
      %v1989 = vpop.f32.mrb[0].mxu0
      %1990 = vmatprep.mubr.bf16.mxu0 0
      %1991 = vmatmul.mubr.bf16.gmra.mrb[0].mxu0 %v1898
      %v1992 = vpop.f32.mrb[0].mxu0
      %v1993 = vadd.f32 0.0, %v1992
      %v1994 = vpop.f32.mrb[0].mxu0
      %v1995 = vpop.f32.mrb[0].mxu0
      %v1996 = vadd.f32 0.0, %v1995
      %v1997 = vpop.f32.mrb[0].mxu0
      %1998 = vmatprep.mubr.bf16.mxu0 0
      %1999 = vmatmul.mubr.bf16.gmra.mrb[0].mxu0 %v1901
      %v2000 = vpop.f32.mrb[0].mxu0
      %v2001 = vadd.f32 0.0, %v2000
      %v2002 = vpop.f32.mrb[0].mxu0
      %v2003 = vpop.f32.mrb[0].mxu0
      %v2004 = vadd.f32 0.0, %v2003
      %v2005 = vpop.f32.mrb[0].mxu0
      %2006 = vmatprep.mubr.bf16.mxu0 0
      %2007 = vmatmul.mubr.bf16.gmra.mrb[0].mxu0 %v1904
      %v2008 = vpop.f32.mrb[0].mxu0
      %v2009 = vadd.f32 0.0, %v2008
      %v2010 = vpop.f32.mrb[0].mxu0
      %v2011 = vpop.f32.mrb[0].mxu0
      %v2012 = vadd.f32 0.0, %v2011
      %v2013 = vpop.f32.mrb[0].mxu0
      %2014 = vmatprep.mubr.bf16.mxu0 0
      %2015 = vmatmul.mubr.bf16.gmra.mrb[0].mxu0 %v1907
      %v2016 = vpop.f32.mrb[0].mxu0
      %v2017 = vadd.f32 0.0, %v2016
      %v2018 = vpop.f32.mrb[0].mxu0
      %v2019 = vpop.f32.mrb[0].mxu0
      %v2020 = vadd.f32 0.0, %v2019
      %v2021 = vpop.f32.mrb[0].mxu0
      %2022 = vmatprep.mubr.bf16.mxu0 0
      %2023 = vmatmul.mubr.bf16.gmra.mrb[0].mxu0 %v1910
      %v2024 = vpop.f32.mrb[0].mxu0
      %v2025 = vadd.f32 0.0, %v2024
      %v2026 = vpop.f32.mrb[0].mxu0
      %v2027 = vpop.f32.mrb[0].mxu0
      %v2028 = vadd.f32 0.0, %v2027
      %v2029 = vpop.f32.mrb[0].mxu0
      %2030 = vmatprep.mubr.bf16.mxu0 0
      %2031 = vmatmul.mubr.bf16.gmra.mrb[0].mxu0 %v1913
      %v2032 = vpop.f32.mrb[0].mxu0
      %v2033 = vadd.f32 0.0, %v2032
      %v2034 = vpop.f32.mrb[0].mxu0
      %v2035 = vpop.f32.mrb[0].mxu0
      %v2036 = vadd.f32 0.0, %v2035
      %v2037 = vpop.f32.mrb[0].mxu0
      %2038 = vmatprep.mubr.bf16.mxu0 0
      %2039 = vmatmul.mubr.bf16.gmra.mrb[0].mxu0 %v1916
      %v2040 = vpop.f32.mrb[0].mxu0
      %v2041 = vadd.f32 0.0, %v2040
      %v2042 = vpop.f32.mrb[0].mxu0
      %v2043 = vpop.f32.mrb[0].mxu0
      %v2044 = vadd.f32 0.0, %v2043
      %v2045 = vpop.f32.mrb[0].mxu0
      %2046 = vmatprep.mubr.bf16.mxu0 0
      %2047 = vmatmul.mubr.bf16.gmra.mrb[0].mxu0 %v1919
      %v2048 = vpop.f32.mrb[0].mxu0
      %v2049 = vadd.f32 0.0, %v2048
      %v2050 = vpop.f32.mrb[0].mxu0
      %v2051 = vpop.f32.mrb[0].mxu0
      %v2052 = vadd.f32 0.0, %v2051
      %v2053 = vpop.f32.mrb[0].mxu0
      %2054 = vmatprep.mubr.bf16.mxu0 0
      %2055 = vmatmul.mubr.bf16.gmra.mrb[0].mxu0 %v1922
      %v2056 = vpop.f32.mrb[0].mxu0
      %v2057 = vadd.f32 0.0, %v2056
      %v2058 = vpop.f32.mrb[0].mxu0
      %v2059 = vpop.f32.mrb[0].mxu0
      %v2060 = vadd.f32 0.0, %v2059
      %v2061 = vpop.f32.mrb[0].mxu0
      %2062 = vmatprep.mubr.bf16.mxu0 0
      %2063 = vmatmul.mubr.bf16.gmra.mrb[0].mxu0 %v1925
      %v2064 = vpop.f32.mrb[0].mxu0
      %v2065 = vadd.f32 0.0, %v2064
      %v2066 = vpop.f32.mrb[0].mxu0
      %v2067 = vpop.f32.mrb[0].mxu0
      %v2068 = vadd.f32 0.0, %v2067
      %v2069 = vpop.f32.mrb[0].mxu0
      %2070 = vmatprep.mubr.bf16.mxu0 0
      %2071 = vmatmul.mubr.bf16.gmra.mrb[0].mxu0 %v1928
      %v2072 = vpop.f32.mrb[0].mxu0
      %v2073 = vadd.f32 0.0, %v2072
      %v2074 = vpop.f32.mrb[0].mxu0
      %v2075 = vpop.f32.mrb[0].mxu0
      %v2076 = vadd.f32 0.0, %v2075
      %v2077 = vpop.f32.mrb[0].mxu0
      %2078 = vmatprep.mubr.bf16.mxu0 0
      %2079 = vmatmul.mubr.bf16.gmra.mrb[0].mxu0 %v1931
      %v2080 = vpop.f32.mrb[0].mxu0
      %v2081 = vadd.f32 0.0, %v2080
      %v2082 = vpop.f32.mrb[0].mxu0
      %v2083 = vpop.f32.mrb[0].mxu0
      %v2084 = vadd.f32 0.0, %v2083
      %v2085 = vpop.f32.mrb[0].mxu0
      %2086 = vmatprep.mubr.bf16.mxu0 0
      %2087 = vmatmul.mubr.bf16.gmra.mrb[0].mxu0 %v1934
      %v2088 = vpop.f32.mrb[0].mxu0
      %v2089 = vadd.f32 0.0, %v2088
      %v2090 = vpop.f32.mrb[0].mxu0
      %v2091 = vpop.f32.mrb[0].mxu0
      %v2092 = vadd.f32 0.0, %v2091
      %v2093 = vpop.f32.mrb[0].mxu0
      %2094 = vmatprep.mubr.bf16.mxu0 0
      %2095 = vmatmul.mubr.bf16.gmra.mrb[0].mxu0 %v1937
      %v2096 = vpop.f32.mrb[0].mxu0
      %v2097 = vadd.f32 0.0, %v2096
      %v2098 = vpop.f32.mrb[0].mxu0
      %v2099 = vpop.f32.mrb[0].mxu0
      %v2100 = vadd.f32 0.0, %v2099
      %v2101 = vpop.f32.mrb[0].mxu0
      %2102 = vdwg.mxu0
      %v2103 = vadd.f32 %v1841, %v1977
      %v2104 = vadd.f32 %v1842, %v1980
      %v2105 = vadd.f32 %v1843, %v1985
      %v2106 = vadd.f32 %v1844, %v1988
      %v2107 = vadd.f32 %v1845, %v1993
      %v2108 = vadd.f32 %v1846, %v1996
      %v2109 = vadd.f32 %v1847, %v2001
      %v2110 = vadd.f32 %v1848, %v2004
      %v2111 = vadd.f32 %v1849, %v2009
      %v2112 = vadd.f32 %v1850, %v2012
      %v2113 = vadd.f32 %v1851, %v2017
      %v2114 = vadd.f32 %v1852, %v2020
      %v2115 = vadd.f32 %v1853, %v2025
      %v2116 = vadd.f32 %v1854, %v2028
      %v2117 = vadd.f32 %v1855, %v2033
      %v2118 = vadd.f32 %v1856, %v2036
      %v2119 = vadd.f32 %v1857, %v2041
      %v2120 = vadd.f32 %v1858, %v2044
      %v2121 = vadd.f32 %v1859, %v2049
      %v2122 = vadd.f32 %v1860, %v2052
      %v2123 = vadd.f32 %v1861, %v2057
      %v2124 = vadd.f32 %v1862, %v2060
      %v2125 = vadd.f32 %v1863, %v2065
      %v2126 = vadd.f32 %v1864, %v2068
      %v2127 = vadd.f32 %v1865, %v2073
      %v2128 = vadd.f32 %v1866, %v2076
      %v2129 = vadd.f32 %v1867, %v2081
      %v2130 = vadd.f32 %v1868, %v2084
      %v2131 = vadd.f32 %v1869, %v2089
      %v2132 = vadd.f32 %v1870, %v2092
      %v2133 = vadd.f32 %v1871, %v2097
      %v2134 = vadd.f32 %v1872, %v2100
      %v2135 = vld [vmem:[%s286] sm:$0xff]
      %v2136 = vld [vmem:[%s286 + $0x8] sm:$0x1]
      %v2137 = vld [vmem:[%s286 + $0x10] sm:$0xff]
      %v2138 = vld [vmem:[%s286 + $0x18] sm:$0x1]
      %v2139 = vld [vmem:[%s286 + $0x20] sm:$0xff]
      %v2140 = vld [vmem:[%s286 + $0x28] sm:$0x1]
      %v2141 = vld [vmem:[%s286 + $0x30] sm:$0xff]
      %v2142 = vld [vmem:[%s286 + $0x38] sm:$0x1]
      %v2143 = vld [vmem:[%s286 + $0x40] sm:$0xff]
      %v2144 = vld [vmem:[%s286 + $0x48] sm:$0x1]
      %v2145 = vld [vmem:[%s286 + $0x50] sm:$0xff]
      %v2146 = vld [vmem:[%s286 + $0x58] sm:$0x1]
      %v2147 = vld [vmem:[%s286 + $0x60] sm:$0xff]
      %v2148 = vld [vmem:[%s286 + $0x68] sm:$0x1]
      %v2149 = vld [vmem:[%s286 + $0x70] sm:$0xff]
      %v2150 = vld [vmem:[%s286 + $0x78] sm:$0x1]
      %v2151 = vld [vmem:[%s286 + $0x80] sm:$0xff]
      %v2152 = vld [vmem:[%s286 + $0x88] sm:$0x1]
      %v2153 = vld [vmem:[%s286 + $0x90] sm:$0xff]
      %v2154 = vld [vmem:[%s286 + $0x98] sm:$0x1]
      %v2155 = vld [vmem:[%s286 + $0xa0] sm:$0xff]
      %v2156 = vld [vmem:[%s286 + $0xa8] sm:$0x1]
      %v2157 = vld [vmem:[%s286 + $0xb0] sm:$0xff]
      %v2158 = vld [vmem:[%s286 + $0xb8] sm:$0x1]
      %v2159 = vld [vmem:[%s286 + $0xc0] sm:$0xff]
      %v2160 = vld [vmem:[%s286 + $0xc8] sm:$0x1]
      %v2161 = vld [vmem:[%s286 + $0xd0] sm:$0xff]
      %v2162 = vld [vmem:[%s286 + $0xd8] sm:$0x1]
      %v2163 = vld [vmem:[%s286 + $0xe0] sm:$0xff]
      %v2164 = vld [vmem:[%s286 + $0xe8] sm:$0x1]
      %v2165 = vld [vmem:[%s286 + $0xf0] sm:$0xff]
      %v2166 = vld [vmem:[%s286 + $0xf8] sm:$0x1]
      %v2168 = vshrl.u32 %v2135, 16
      %v2170 = vshll.u32 %v2135, 16
      %v2172 = vrot.slane %v2170, 1
      %v2173 = vor.u32 %v2168, %v2172
      %v2175 = vshll.u32 %v2136, 16
      %v2177 = vrot.slane %v2175, 1
      %v2178 = vsel %vm923, %v2173, %v2177
      %v2180 = vshrl.u32 %v2137, 16
      %v2182 = vshll.u32 %v2137, 16
      %v2184 = vrot.slane %v2182, 1
      %v2185 = vor.u32 %v2180, %v2184
      %v2187 = vshll.u32 %v2138, 16
      %v2189 = vrot.slane %v2187, 1
      %v2190 = vsel %vm923, %v2185, %v2189
      %v2192 = vshrl.u32 %v2139, 16
      %v2194 = vshll.u32 %v2139, 16
      %v2196 = vrot.slane %v2194, 1
      %v2197 = vor.u32 %v2192, %v2196
      %v2199 = vshll.u32 %v2140, 16
      %v2201 = vrot.slane %v2199, 1
      %v2202 = vsel %vm923, %v2197, %v2201
      %v2204 = vshrl.u32 %v2141, 16
      %v2206 = vshll.u32 %v2141, 16
      %v2208 = vrot.slane %v2206, 1
      %v2209 = vor.u32 %v2204, %v2208
      %v2211 = vshll.u32 %v2142, 16
      %v2213 = vrot.slane %v2211, 1
      %v2214 = vsel %vm923, %v2209, %v2213
      %v2216 = vshrl.u32 %v2143, 16
      %v2218 = vshll.u32 %v2143, 16
      %v2220 = vrot.slane %v2218, 1
      %v2221 = vor.u32 %v2216, %v2220
      %v2223 = vshll.u32 %v2144, 16
      %v2225 = vrot.slane %v2223, 1
      %v2226 = vsel %vm923, %v2221, %v2225
      %v2228 = vshrl.u32 %v2145, 16
      %v2230 = vshll.u32 %v2145, 16
      %v2232 = vrot.slane %v2230, 1
      %v2233 = vor.u32 %v2228, %v2232
      %v2235 = vshll.u32 %v2146, 16
      %v2237 = vrot.slane %v2235, 1
      %v2238 = vsel %vm923, %v2233, %v2237
      %v2240 = vshrl.u32 %v2147, 16
      %v2242 = vshll.u32 %v2147, 16
      %v2244 = vrot.slane %v2242, 1
      %v2245 = vor.u32 %v2240, %v2244
      %v2247 = vshll.u32 %v2148, 16
      %v2249 = vrot.slane %v2247, 1
      %v2250 = vsel %vm923, %v2245, %v2249
      %v2252 = vshrl.u32 %v2149, 16
      %v2254 = vshll.u32 %v2149, 16
      %v2256 = vrot.slane %v2254, 1
      %v2257 = vor.u32 %v2252, %v2256
      %v2259 = vshll.u32 %v2150, 16
      %v2261 = vrot.slane %v2259, 1
      %v2262 = vsel %vm923, %v2257, %v2261
      %v2264 = vshrl.u32 %v2151, 16
      %v2266 = vshll.u32 %v2151, 16
      %v2268 = vrot.slane %v2266, 1
      %v2269 = vor.u32 %v2264, %v2268
      %v2271 = vshll.u32 %v2152, 16
      %v2273 = vrot.slane %v2271, 1
      %v2274 = vsel %vm923, %v2269, %v2273
      %v2276 = vshrl.u32 %v2153, 16
      %v2278 = vshll.u32 %v2153, 16
      %v2280 = vrot.slane %v2278, 1
      %v2281 = vor.u32 %v2276, %v2280
      %v2283 = vshll.u32 %v2154, 16
      %v2285 = vrot.slane %v2283, 1
      %v2286 = vsel %vm923, %v2281, %v2285
      %v2288 = vshrl.u32 %v2155, 16
      %v2290 = vshll.u32 %v2155, 16
      %v2292 = vrot.slane %v2290, 1
      %v2293 = vor.u32 %v2288, %v2292
      %v2295 = vshll.u32 %v2156, 16
      %v2297 = vrot.slane %v2295, 1
      %v2298 = vsel %vm923, %v2293, %v2297
      %v2300 = vshrl.u32 %v2157, 16
      %v2302 = vshll.u32 %v2157, 16
      %v2304 = vrot.slane %v2302, 1
      %v2305 = vor.u32 %v2300, %v2304
      %v2307 = vshll.u32 %v2158, 16
      %v2309 = vrot.slane %v2307, 1
      %v2310 = vsel %vm923, %v2305, %v2309
      %v2312 = vshrl.u32 %v2159, 16
      %v2314 = vshll.u32 %v2159, 16
      %v2316 = vrot.slane %v2314, 1
      %v2317 = vor.u32 %v2312, %v2316
      %v2319 = vshll.u32 %v2160, 16
      %v2321 = vrot.slane %v2319, 1
      %v2322 = vsel %vm923, %v2317, %v2321
      %v2324 = vshrl.u32 %v2161, 16
      %v2326 = vshll.u32 %v2161, 16
      %v2328 = vrot.slane %v2326, 1
      %v2329 = vor.u32 %v2324, %v2328
      %v2331 = vshll.u32 %v2162, 16
      %v2333 = vrot.slane %v2331, 1
      %v2334 = vsel %vm923, %v2329, %v2333
      %v2336 = vshrl.u32 %v2163, 16
      %v2338 = vshll.u32 %v2163, 16
      %v2340 = vrot.slane %v2338, 1
      %v2341 = vor.u32 %v2336, %v2340
      %v2343 = vshll.u32 %v2164, 16
      %v2345 = vrot.slane %v2343, 1
      %v2346 = vsel %vm923, %v2341, %v2345
      %v2348 = vshrl.u32 %v2165, 16
      %v2350 = vshll.u32 %v2165, 16
      %v2352 = vrot.slane %v2350, 1
      %v2353 = vor.u32 %v2348, %v2352
      %v2355 = vshll.u32 %v2166, 16
      %v2357 = vrot.slane %v2355, 1
      %v2358 = vsel %vm923, %v2353, %v2357
      %s2359 = scalar_lea.vmem %s1, 8
      %v2360 = vld [vmem:[%s2359] sm:$0x3]
      %v2362 = vsel %vm280, %v2178, 0
      %v2365 = vsel %vm280, %v2190, 0
      %v2368 = vsel %vm280, %v2202, 0
      %v2371 = vsel %vm280, %v2214, 0
      %v2374 = vsel %vm280, %v2226, 0
      %v2377 = vsel %vm280, %v2238, 0
      %v2380 = vsel %vm280, %v2250, 0
      %v2383 = vsel %vm280, %v2262, 0
      %v2386 = vsel %vm280, %v2274, 0
      %v2389 = vsel %vm280, %v2286, 0
      %v2392 = vsel %vm280, %v2298, 0
      %v2395 = vsel %vm280, %v2310, 0
      %v2398 = vsel %vm280, %v2322, 0
      %v2401 = vsel %vm280, %v2334, 0
      %v2404 = vsel %vm280, %v2346, 0
      %v2407 = vsel %vm280, %v2358, 0
      %v2410 = vand.u32 %v2360, %v1169
      %2412 = vmatprep.subr.bf16.mxu0 0
      %2413 = vmatpush1.bf16.msra.mxu0 %v2410
      %2414 = vmatprep.subr.bf16.mxu0 0
      %2415 = vmatpush1.bf16.msra.mxu0 0
      %2416 = vmatprep.subr.bf16.mxu0 0
      %2417 = vmatpush1.bf16.msra.mxu0 0
      %2418 = vmatprep.subr.bf16.mxu0 0
      %2419 = vmatpush1.bf16.msra.mxu0 0
      %2420 = vmatprep.subr.bf16.mxu0 0
      %2421 = vmatpush1.bf16.msra.mxu0 0
      %2422 = vmatprep.subr.bf16.mxu0 0
      %2423 = vmatpush1.bf16.msra.mxu0 0
      %2424 = vmatprep.subr.bf16.mxu0 0
      %2425 = vmatpush1.bf16.msra.mxu0 0
      %2426 = vmatprep.subr.bf16.mxu0 0
      %2427 = vmatpush1.bf16.msra.mxu0 0
      %2428 = vmatprep.subr.bf16.mxu0 0
      %2429 = vmatpush1.bf16.msra.mxu0 0
      %2430 = vmatprep.subr.bf16.mxu0 0
      %2431 = vmatpush1.bf16.msra.mxu0 0
      %2432 = vmatprep.subr.bf16.mxu0 0
      %2433 = vmatpush1.bf16.msra.mxu0 0
      %2434 = vmatprep.subr.bf16.mxu0 0
      %2435 = vmatpush1.bf16.msra.mxu0 0
      %2436 = vmatprep.subr.bf16.mxu0 0
      %2437 = vmatpush1.bf16.msra.mxu0 0
      %2438 = vmatprep.subr.bf16.mxu0 0
      %2439 = vmatpush1.bf16.msra.mxu0 0
      %2440 = vmatprep.subr.bf16.mxu0 0
      %2441 = vmatpush1.bf16.msra.mxu0 0
      %2442 = vmatprep.subr.bf16.mxu0 0
      %2443 = vmatpush1.bf16.msra.mxu0 0
      %2444 = vmatprep.mubr.bf16.mxu0 0
      %2445 = vmatmul.mubr.bf16.gmra.mrb[0].mxu0 %v2362
      %v2446 = vpop.f32.mrb[0].mxu0
      %v2447 = vadd.f32 0.0, %v2446
      %v2448 = vpop.f32.mrb[0].mxu0
      %v2449 = vpop.f32.mrb[0].mxu0
      %v2450 = vadd.f32 0.0, %v2449
      %v2451 = vpop.f32.mrb[0].mxu0
      %2452 = vmatprep.mubr.bf16.mxu0 0
      %2453 = vmatmul.mubr.bf16.gmra.mrb[0].mxu0 %v2365
      %v2454 = vpop.f32.mrb[0].mxu0
      %v2455 = vadd.f32 0.0, %v2454
      %v2456 = vpop.f32.mrb[0].mxu0
      %v2457 = vpop.f32.mrb[0].mxu0
      %v2458 = vadd.f32 0.0, %v2457
      %v2459 = vpop.f32.mrb[0].mxu0
      %2460 = vmatprep.mubr.bf16.mxu0 0
      %2461 = vmatmul.mubr.bf16.gmra.mrb[0].mxu0 %v2368
      %v2462 = vpop.f32.mrb[0].mxu0
      %v2463 = vadd.f32 0.0, %v2462
      %v2464 = vpop.f32.mrb[0].mxu0
      %v2465 = vpop.f32.mrb[0].mxu0
      %v2466 = vadd.f32 0.0, %v2465
      %v2467 = vpop.f32.mrb[0].mxu0
      %2468 = vmatprep.mubr.bf16.mxu0 0
      %2469 = vmatmul.mubr.bf16.gmra.mrb[0].mxu0 %v2371
      %v2470 = vpop.f32.mrb[0].mxu0
      %v2471 = vadd.f32 0.0, %v2470
      %v2472 = vpop.f32.mrb[0].mxu0
      %v2473 = vpop.f32.mrb[0].mxu0
      %v2474 = vadd.f32 0.0, %v2473
      %v2475 = vpop.f32.mrb[0].mxu0
      %2476 = vmatprep.mubr.bf16.mxu0 0
      %2477 = vmatmul.mubr.bf16.gmra.mrb[0].mxu0 %v2374
      %v2478 = vpop.f32.mrb[0].mxu0
      %v2479 = vadd.f32 0.0, %v2478
      %v2480 = vpop.f32.mrb[0].mxu0
      %v2481 = vpop.f32.mrb[0].mxu0
      %v2482 = vadd.f32 0.0, %v2481
      %v2483 = vpop.f32.mrb[0].mxu0
      %2484 = vmatprep.mubr.bf16.mxu0 0
      %2485 = vmatmul.mubr.bf16.gmra.mrb[0].mxu0 %v2377
      %v2486 = vpop.f32.mrb[0].mxu0
      %v2487 = vadd.f32 0.0, %v2486
      %v2488 = vpop.f32.mrb[0].mxu0
      %v2489 = vpop.f32.mrb[0].mxu0
      %v2490 = vadd.f32 0.0, %v2489
      %v2491 = vpop.f32.mrb[0].mxu0
      %2492 = vmatprep.mubr.bf16.mxu0 0
      %2493 = vmatmul.mubr.bf16.gmra.mrb[0].mxu0 %v2380
      %v2494 = vpop.f32.mrb[0].mxu0
      %v2495 = vadd.f32 0.0, %v2494
      %v2496 = vpop.f32.mrb[0].mxu0
      %v2497 = vpop.f32.mrb[0].mxu0
      %v2498 = vadd.f32 0.0, %v2497
      %v2499 = vpop.f32.mrb[0].mxu0
      %2500 = vmatprep.mubr.bf16.mxu0 0
      %2501 = vmatmul.mubr.bf16.gmra.mrb[0].mxu0 %v2383
      %v2502 = vpop.f32.mrb[0].mxu0
      %v2503 = vadd.f32 0.0, %v2502
      %v2504 = vpop.f32.mrb[0].mxu0
      %v2505 = vpop.f32.mrb[0].mxu0
      %v2506 = vadd.f32 0.0, %v2505
      %v2507 = vpop.f32.mrb[0].mxu0
      %2508 = vmatprep.mubr.bf16.mxu0 0
      %2509 = vmatmul.mubr.bf16.gmra.mrb[0].mxu0 %v2386
      %v2510 = vpop.f32.mrb[0].mxu0
      %v2511 = vadd.f32 0.0, %v2510
      %v2512 = vpop.f32.mrb[0].mxu0
      %v2513 = vpop.f32.mrb[0].mxu0
      %v2514 = vadd.f32 0.0, %v2513
      %v2515 = vpop.f32.mrb[0].mxu0
      %2516 = vmatprep.mubr.bf16.mxu0 0
      %2517 = vmatmul.mubr.bf16.gmra.mrb[0].mxu0 %v2389
      %v2518 = vpop.f32.mrb[0].mxu0
      %v2519 = vadd.f32 0.0, %v2518
      %v2520 = vpop.f32.mrb[0].mxu0
      %v2521 = vpop.f32.mrb[0].mxu0
      %v2522 = vadd.f32 0.0, %v2521
      %v2523 = vpop.f32.mrb[0].mxu0
      %2524 = vmatprep.mubr.bf16.mxu0 0
      %2525 = vmatmul.mubr.bf16.gmra.mrb[0].mxu0 %v2392
      %v2526 = vpop.f32.mrb[0].mxu0
      %v2527 = vadd.f32 0.0, %v2526
      %v2528 = vpop.f32.mrb[0].mxu0
      %v2529 = vpop.f32.mrb[0].mxu0
      %v2530 = vadd.f32 0.0, %v2529
      %v2531 = vpop.f32.mrb[0].mxu0
      %2532 = vmatprep.mubr.bf16.mxu0 0
      %2533 = vmatmul.mubr.bf16.gmra.mrb[0].mxu0 %v2395
      %v2534 = vpop.f32.mrb[0].mxu0
      %v2535 = vadd.f32 0.0, %v2534
      %v2536 = vpop.f32.mrb[0].mxu0
      %v2537 = vpop.f32.mrb[0].mxu0
      %v2538 = vadd.f32 0.0, %v2537
      %v2539 = vpop.f32.mrb[0].mxu0
      %2540 = vmatprep.mubr.bf16.mxu0 0
      %2541 = vmatmul.mubr.bf16.gmra.mrb[0].mxu0 %v2398
      %v2542 = vpop.f32.mrb[0].mxu0
      %v2543 = vadd.f32 0.0, %v2542
      %v2544 = vpop.f32.mrb[0].mxu0
      %v2545 = vpop.f32.mrb[0].mxu0
      %v2546 = vadd.f32 0.0, %v2545
      %v2547 = vpop.f32.mrb[0].mxu0
      %2548 = vmatprep.mubr.bf16.mxu0 0
      %2549 = vmatmul.mubr.bf16.gmra.mrb[0].mxu0 %v2401
      %v2550 = vpop.f32.mrb[0].mxu0
      %v2551 = vadd.f32 0.0, %v2550
      %v2552 = vpop.f32.mrb[0].mxu0
      %v2553 = vpop.f32.mrb[0].mxu0
      %v2554 = vadd.f32 0.0, %v2553
      %v2555 = vpop.f32.mrb[0].mxu0
      %2556 = vmatprep.mubr.bf16.mxu0 0
      %2557 = vmatmul.mubr.bf16.gmra.mrb[0].mxu0 %v2404
      %v2558 = vpop.f32.mrb[0].mxu0
      %v2559 = vadd.f32 0.0, %v2558
      %v2560 = vpop.f32.mrb[0].mxu0
      %v2561 = vpop.f32.mrb[0].mxu0
      %v2562 = vadd.f32 0.0, %v2561
      %v2563 = vpop.f32.mrb[0].mxu0
      %2564 = vmatprep.mubr.bf16.mxu0 0
      %2565 = vmatmul.mubr.bf16.gmra.mrb[0].mxu0 %v2407
      %v2566 = vpop.f32.mrb[0].mxu0
      %v2567 = vadd.f32 0.0, %v2566
      %v2568 = vpop.f32.mrb[0].mxu0
      %v2569 = vpop.f32.mrb[0].mxu0
      %v2570 = vadd.f32 0.0, %v2569
      %v2571 = vpop.f32.mrb[0].mxu0
      %2572 = vdwg.mxu0
      %v2573 = vadd.f32 %v2103, %v2447
      %v2574 = vadd.f32 %v2104, %v2450
      %v2575 = vadd.f32 %v2105, %v2455
      %v2576 = vadd.f32 %v2106, %v2458
      %v2577 = vadd.f32 %v2107, %v2463
      %v2578 = vadd.f32 %v2108, %v2466
      %v2579 = vadd.f32 %v2109, %v2471
      %v2580 = vadd.f32 %v2110, %v2474
      %v2581 = vadd.f32 %v2111, %v2479
      %v2582 = vadd.f32 %v2112, %v2482
      %v2583 = vadd.f32 %v2113, %v2487
      %v2584 = vadd.f32 %v2114, %v2490
      %v2585 = vadd.f32 %v2115, %v2495
      %v2586 = vadd.f32 %v2116, %v2498
      %v2587 = vadd.f32 %v2117, %v2503
      %v2588 = vadd.f32 %v2118, %v2506
      %v2589 = vadd.f32 %v2119, %v2511
      %v2590 = vadd.f32 %v2120, %v2514
      %v2591 = vadd.f32 %v2121, %v2519
      %v2592 = vadd.f32 %v2122, %v2522
      %v2593 = vadd.f32 %v2123, %v2527
      %v2594 = vadd.f32 %v2124, %v2530
      %v2595 = vadd.f32 %v2125, %v2535
      %v2596 = vadd.f32 %v2126, %v2538
      %v2597 = vadd.f32 %v2127, %v2543
      %v2598 = vadd.f32 %v2128, %v2546
      %v2599 = vadd.f32 %v2129, %v2551
      %v2600 = vadd.f32 %v2130, %v2554
      %v2601 = vadd.f32 %v2131, %v2559
      %v2602 = vadd.f32 %v2132, %v2562
      %v2603 = vadd.f32 %v2133, %v2567
      %v2604 = vadd.f32 %v2134, %v2570
      %v2605 = vld [vmem:[%s286] sm:$0xfe]
      %v2606 = vld [vmem:[%s286 + $0x10] sm:$0xfe]
      %v2607 = vld [vmem:[%s286 + $0x20] sm:$0xfe]
      %v2608 = vld [vmem:[%s286 + $0x30] sm:$0xfe]
      %v2609 = vld [vmem:[%s286 + $0x40] sm:$0xfe]
      %v2610 = vld [vmem:[%s286 + $0x50] sm:$0xfe]
      %v2611 = vld [vmem:[%s286 + $0x60] sm:$0xfe]
      %v2612 = vld [vmem:[%s286 + $0x70] sm:$0xfe]
      %v2613 = vld [vmem:[%s286 + $0x80] sm:$0xfe]
      %v2614 = vld [vmem:[%s286 + $0x90] sm:$0xfe]
      %v2615 = vld [vmem:[%s286 + $0xa0] sm:$0xfe]
      %v2616 = vld [vmem:[%s286 + $0xb0] sm:$0xfe]
      %v2617 = vld [vmem:[%s286 + $0xc0] sm:$0xfe]
      %v2618 = vld [vmem:[%s286 + $0xd0] sm:$0xfe]
      %v2619 = vld [vmem:[%s286 + $0xe0] sm:$0xfe]
      %v2620 = vld [vmem:[%s286 + $0xf0] sm:$0xfe]
      %v2653 = vrot.slane %v2605, 1
      %v2654 = vrot.slane %v2136, 1
      %v2655 = vsel %vm1578, %v2653, %v2654
      %v2656 = vrot.slane %v2606, 1
      %v2657 = vrot.slane %v2138, 1
      %v2658 = vsel %vm1578, %v2656, %v2657
      %v2659 = vrot.slane %v2607, 1
      %v2660 = vrot.slane %v2140, 1
      %v2661 = vsel %vm1578, %v2659, %v2660
      %v2662 = vrot.slane %v2608, 1
      %v2663 = vrot.slane %v2142, 1
      %v2664 = vsel %vm1578, %v2662, %v2663
      %v2665 = vrot.slane %v2609, 1
      %v2666 = vrot.slane %v2144, 1
      %v2667 = vsel %vm1578, %v2665, %v2666
      %v2668 = vrot.slane %v2610, 1
      %v2669 = vrot.slane %v2146, 1
      %v2670 = vsel %vm1578, %v2668, %v2669
      %v2671 = vrot.slane %v2611, 1
      %v2672 = vrot.slane %v2148, 1
      %v2673 = vsel %vm1578, %v2671, %v2672
      %v2674 = vrot.slane %v2612, 1
      %v2675 = vrot.slane %v2150, 1
      %v2676 = vsel %vm1578, %v2674, %v2675
      %v2677 = vrot.slane %v2613, 1
      %v2678 = vrot.slane %v2152, 1
      %v2679 = vsel %vm1578, %v2677, %v2678
      %v2680 = vrot.slane %v2614, 1
      %v2681 = vrot.slane %v2154, 1
      %v2682 = vsel %vm1578, %v2680, %v2681
      %v2683 = vrot.slane %v2615, 1
      %v2684 = vrot.slane %v2156, 1
      %v2685 = vsel %vm1578, %v2683, %v2684
      %v2686 = vrot.slane %v2616, 1
      %v2687 = vrot.slane %v2158, 1
      %v2688 = vsel %vm1578, %v2686, %v2687
      %v2689 = vrot.slane %v2617, 1
      %v2690 = vrot.slane %v2160, 1
      %v2691 = vsel %vm1578, %v2689, %v2690
      %v2692 = vrot.slane %v2618, 1
      %v2693 = vrot.slane %v2162, 1
      %v2694 = vsel %vm1578, %v2692, %v2693
      %v2695 = vrot.slane %v2619, 1
      %v2696 = vrot.slane %v2164, 1
      %v2697 = vsel %vm1578, %v2695, %v2696
      %v2698 = vrot.slane %v2620, 1
      %v2699 = vrot.slane %v2166, 1
      %v2700 = vsel %vm1578, %v2698, %v2699
      %s2701 = scalar_lea.vmem %s1, 10
      %v2702 = vld [vmem:[%s2701] sm:$0x3]
      %v2704 = vsel %vm280, %v2655, 0
      %v2707 = vsel %vm280, %v2658, 0
      %v2710 = vsel %vm280, %v2661, 0
      %v2713 = vsel %vm280, %v2664, 0
      %v2716 = vsel %vm280, %v2667, 0
      %v2719 = vsel %vm280, %v2670, 0
      %v2722 = vsel %vm280, %v2673, 0
      %v2725 = vsel %vm280, %v2676, 0
      %v2728 = vsel %vm280, %v2679, 0
      %v2731 = vsel %vm280, %v2682, 0
      %v2734 = vsel %vm280, %v2685, 0
      %v2737 = vsel %vm280, %v2688, 0
      %v2740 = vsel %vm280, %v2691, 0
      %v2743 = vsel %vm280, %v2694, 0
      %v2746 = vsel %vm280, %v2697, 0
      %v2749 = vsel %vm280, %v2700, 0
      %v2752 = vand.u32 %v2702, %v1169
      %2754 = vmatprep.subr.bf16.mxu0 0
      %2755 = vmatpush1.bf16.msra.mxu0 %v2752
      %2756 = vmatprep.subr.bf16.mxu0 0
      %2757 = vmatpush1.bf16.msra.mxu0 0
      %2758 = vmatprep.subr.bf16.mxu0 0
      %2759 = vmatpush1.bf16.msra.mxu0 0
      %2760 = vmatprep.subr.bf16.mxu0 0
      %2761 = vmatpush1.bf16.msra.mxu0 0
      %2762 = vmatprep.subr.bf16.mxu0 0
      %2763 = vmatpush1.bf16.msra.mxu0 0
      %2764 = vmatprep.subr.bf16.mxu0 0
      %2765 = vmatpush1.bf16.msra.mxu0 0
      %2766 = vmatprep.subr.bf16.mxu0 0
      %2767 = vmatpush1.bf16.msra.mxu0 0
      %2768 = vmatprep.subr.bf16.mxu0 0
      %2769 = vmatpush1.bf16.msra.mxu0 0
      %2770 = vmatprep.subr.bf16.mxu0 0
      %2771 = vmatpush1.bf16.msra.mxu0 0
      %2772 = vmatprep.subr.bf16.mxu0 0
      %2773 = vmatpush1.bf16.msra.mxu0 0
      %2774 = vmatprep.subr.bf16.mxu0 0
      %2775 = vmatpush1.bf16.msra.mxu0 0
      %2776 = vmatprep.subr.bf16.mxu0 0
      %2777 = vmatpush1.bf16.msra.mxu0 0
      %2778 = vmatprep.subr.bf16.mxu0 0
      %2779 = vmatpush1.bf16.msra.mxu0 0
      %2780 = vmatprep.subr.bf16.mxu0 0
      %2781 = vmatpush1.bf16.msra.mxu0 0
      %2782 = vmatprep.subr.bf16.mxu0 0
      %2783 = vmatpush1.bf16.msra.mxu0 0
      %2784 = vmatprep.subr.bf16.mxu0 0
      %2785 = vmatpush1.bf16.msra.mxu0 0
      %2786 = vmatprep.mubr.bf16.mxu0 0
      %2787 = vmatmul.mubr.bf16.gmra.mrb[0].mxu0 %v2704
      %v2788 = vpop.f32.mrb[0].mxu0
      %v2789 = vadd.f32 0.0, %v2788
      %v2790 = vpop.f32.mrb[0].mxu0
      %v2791 = vpop.f32.mrb[0].mxu0
      %v2792 = vadd.f32 0.0, %v2791
      %v2793 = vpop.f32.mrb[0].mxu0
      %2794 = vmatprep.mubr.bf16.mxu0 0
      %2795 = vmatmul.mubr.bf16.gmra.mrb[0].mxu0 %v2707
      %v2796 = vpop.f32.mrb[0].mxu0
      %v2797 = vadd.f32 0.0, %v2796
      %v2798 = vpop.f32.mrb[0].mxu0
      %v2799 = vpop.f32.mrb[0].mxu0
      %v2800 = vadd.f32 0.0, %v2799
      %v2801 = vpop.f32.mrb[0].mxu0
      %2802 = vmatprep.mubr.bf16.mxu0 0
      %2803 = vmatmul.mubr.bf16.gmra.mrb[0].mxu0 %v2710
      %v2804 = vpop.f32.mrb[0].mxu0
      %v2805 = vadd.f32 0.0, %v2804
      %v2806 = vpop.f32.mrb[0].mxu0
      %v2807 = vpop.f32.mrb[0].mxu0
      %v2808 = vadd.f32 0.0, %v2807
      %v2809 = vpop.f32.mrb[0].mxu0
      %2810 = vmatprep.mubr.bf16.mxu0 0
      %2811 = vmatmul.mubr.bf16.gmra.mrb[0].mxu0 %v2713
      %v2812 = vpop.f32.mrb[0].mxu0
      %v2813 = vadd.f32 0.0, %v2812
      %v2814 = vpop.f32.mrb[0].mxu0
      %v2815 = vpop.f32.mrb[0].mxu0
      %v2816 = vadd.f32 0.0, %v2815
      %v2817 = vpop.f32.mrb[0].mxu0
      %2818 = vmatprep.mubr.bf16.mxu0 0
      %2819 = vmatmul.mubr.bf16.gmra.mrb[0].mxu0 %v2716
      %v2820 = vpop.f32.mrb[0].mxu0
      %v2821 = vadd.f32 0.0, %v2820
      %v2822 = vpop.f32.mrb[0].mxu0
      %v2823 = vpop.f32.mrb[0].mxu0
      %v2824 = vadd.f32 0.0, %v2823
      %v2825 = vpop.f32.mrb[0].mxu0
      %2826 = vmatprep.mubr.bf16.mxu0 0
      %2827 = vmatmul.mubr.bf16.gmra.mrb[0].mxu0 %v2719
      %v2828 = vpop.f32.mrb[0].mxu0
      %v2829 = vadd.f32 0.0, %v2828
      %v2830 = vpop.f32.mrb[0].mxu0
      %v2831 = vpop.f32.mrb[0].mxu0
      %v2832 = vadd.f32 0.0, %v2831
      %v2833 = vpop.f32.mrb[0].mxu0
      %2834 = vmatprep.mubr.bf16.mxu0 0
      %2835 = vmatmul.mubr.bf16.gmra.mrb[0].mxu0 %v2722
      %v2836 = vpop.f32.mrb[0].mxu0
      %v2837 = vadd.f32 0.0, %v2836
      %v2838 = vpop.f32.mrb[0].mxu0
      %v2839 = vpop.f32.mrb[0].mxu0
      %v2840 = vadd.f32 0.0, %v2839
      %v2841 = vpop.f32.mrb[0].mxu0
      %2842 = vmatprep.mubr.bf16.mxu0 0
      %2843 = vmatmul.mubr.bf16.gmra.mrb[0].mxu0 %v2725
      %v2844 = vpop.f32.mrb[0].mxu0
      %v2845 = vadd.f32 0.0, %v2844
      %v2846 = vpop.f32.mrb[0].mxu0
      %v2847 = vpop.f32.mrb[0].mxu0
      %v2848 = vadd.f32 0.0, %v2847
      %v2849 = vpop.f32.mrb[0].mxu0
      %2850 = vmatprep.mubr.bf16.mxu0 0
      %2851 = vmatmul.mubr.bf16.gmra.mrb[0].mxu0 %v2728
      %v2852 = vpop.f32.mrb[0].mxu0
      %v2853 = vadd.f32 0.0, %v2852
      %v2854 = vpop.f32.mrb[0].mxu0
      %v2855 = vpop.f32.mrb[0].mxu0
      %v2856 = vadd.f32 0.0, %v2855
      %v2857 = vpop.f32.mrb[0].mxu0
      %2858 = vmatprep.mubr.bf16.mxu0 0
      %2859 = vmatmul.mubr.bf16.gmra.mrb[0].mxu0 %v2731
      %v2860 = vpop.f32.mrb[0].mxu0
      %v2861 = vadd.f32 0.0, %v2860
      %v2862 = vpop.f32.mrb[0].mxu0
      %v2863 = vpop.f32.mrb[0].mxu0
      %v2864 = vadd.f32 0.0, %v2863
      %v2865 = vpop.f32.mrb[0].mxu0
      %2866 = vmatprep.mubr.bf16.mxu0 0
      %2867 = vmatmul.mubr.bf16.gmra.mrb[0].mxu0 %v2734
      %v2868 = vpop.f32.mrb[0].mxu0
      %v2869 = vadd.f32 0.0, %v2868
      %v2870 = vpop.f32.mrb[0].mxu0
      %v2871 = vpop.f32.mrb[0].mxu0
      %v2872 = vadd.f32 0.0, %v2871
      %v2873 = vpop.f32.mrb[0].mxu0
      %2874 = vmatprep.mubr.bf16.mxu0 0
      %2875 = vmatmul.mubr.bf16.gmra.mrb[0].mxu0 %v2737
      %v2876 = vpop.f32.mrb[0].mxu0
      %v2877 = vadd.f32 0.0, %v2876
      %v2878 = vpop.f32.mrb[0].mxu0
      %v2879 = vpop.f32.mrb[0].mxu0
      %v2880 = vadd.f32 0.0, %v2879
      %v2881 = vpop.f32.mrb[0].mxu0
      %2882 = vmatprep.mubr.bf16.mxu0 0
      %2883 = vmatmul.mubr.bf16.gmra.mrb[0].mxu0 %v2740
      %v2884 = vpop.f32.mrb[0].mxu0
      %v2885 = vadd.f32 0.0, %v2884
      %v2886 = vpop.f32.mrb[0].mxu0
      %v2887 = vpop.f32.mrb[0].mxu0
      %v2888 = vadd.f32 0.0, %v2887
      %v2889 = vpop.f32.mrb[0].mxu0
      %2890 = vmatprep.mubr.bf16.mxu0 0
      %2891 = vmatmul.mubr.bf16.gmra.mrb[0].mxu0 %v2743
      %v2892 = vpop.f32.mrb[0].mxu0
      %v2893 = vadd.f32 0.0, %v2892
      %v2894 = vpop.f32.mrb[0].mxu0
      %v2895 = vpop.f32.mrb[0].mxu0
      %v2896 = vadd.f32 0.0, %v2895
      %v2897 = vpop.f32.mrb[0].mxu0
      %2898 = vmatprep.mubr.bf16.mxu0 0
      %2899 = vmatmul.mubr.bf16.gmra.mrb[0].mxu0 %v2746
      %v2900 = vpop.f32.mrb[0].mxu0
      %v2901 = vadd.f32 0.0, %v2900
      %v2902 = vpop.f32.mrb[0].mxu0
      %v2903 = vpop.f32.mrb[0].mxu0
      %v2904 = vadd.f32 0.0, %v2903
      %v2905 = vpop.f32.mrb[0].mxu0
      %2906 = vmatprep.mubr.bf16.mxu0 0
      %2907 = vmatmul.mubr.bf16.gmra.mrb[0].mxu0 %v2749
      %v2908 = vpop.f32.mrb[0].mxu0
      %v2909 = vadd.f32 0.0, %v2908
      %v2910 = vpop.f32.mrb[0].mxu0
      %v2911 = vpop.f32.mrb[0].mxu0
      %v2912 = vadd.f32 0.0, %v2911
      %v2913 = vpop.f32.mrb[0].mxu0
      %2914 = vdwg.mxu0
      %v2915 = vadd.f32 %v2573, %v2789
      %v2916 = vadd.f32 %v2574, %v2792
      %v2917 = vadd.f32 %v2575, %v2797
      %v2918 = vadd.f32 %v2576, %v2800
      %v2919 = vadd.f32 %v2577, %v2805
      %v2920 = vadd.f32 %v2578, %v2808
      %v2921 = vadd.f32 %v2579, %v2813
      %v2922 = vadd.f32 %v2580, %v2816
      %v2923 = vadd.f32 %v2581, %v2821
      %v2924 = vadd.f32 %v2582, %v2824
      %v2925 = vadd.f32 %v2583, %v2829
      %v2926 = vadd.f32 %v2584, %v2832
      %v2927 = vadd.f32 %v2585, %v2837
      %v2928 = vadd.f32 %v2586, %v2840
      %v2929 = vadd.f32 %v2587, %v2845
      %v2930 = vadd.f32 %v2588, %v2848
      %v2931 = vadd.f32 %v2589, %v2853
      %v2932 = vadd.f32 %v2590, %v2856
      %v2933 = vadd.f32 %v2591, %v2861
      %v2934 = vadd.f32 %v2592, %v2864
      %v2935 = vadd.f32 %v2593, %v2869
      %v2936 = vadd.f32 %v2594, %v2872
      %v2937 = vadd.f32 %v2595, %v2877
      %v2938 = vadd.f32 %v2596, %v2880
      %v2939 = vadd.f32 %v2597, %v2885
      %v2940 = vadd.f32 %v2598, %v2888
      %v2941 = vadd.f32 %v2599, %v2893
      %v2942 = vadd.f32 %v2600, %v2896
      %v2943 = vadd.f32 %v2601, %v2901
      %v2944 = vadd.f32 %v2602, %v2904
      %v2945 = vadd.f32 %v2603, %v2909
      %v2946 = vadd.f32 %v2604, %v2912
      %s2947 = scalar_lea.vmem [#allocation2], 32
      %v2948 = vld [vmem:[%s2947] sm:$0xff]
      %v2949 = vld [vmem:[%s2947 + $0x10] sm:$0xff]
      %v2950 = vld [vmem:[%s2947 + $0x20] sm:$0xff]
      %v2951 = vld [vmem:[%s2947 + $0x30] sm:$0xff]
      %v2952 = vld [vmem:[%s2947 + $0x40] sm:$0xff]
      %v2953 = vld [vmem:[%s2947 + $0x50] sm:$0xff]
      %v2954 = vld [vmem:[%s2947 + $0x60] sm:$0xff]
      %v2955 = vld [vmem:[%s2947 + $0x70] sm:$0xff]
      %v2956 = vld [vmem:[%s2947 + $0x80] sm:$0xff]
      %v2957 = vld [vmem:[%s2947 + $0x90] sm:$0xff]
      %v2958 = vld [vmem:[%s2947 + $0xa0] sm:$0xff]
      %v2959 = vld [vmem:[%s2947 + $0xb0] sm:$0xff]
      %v2960 = vld [vmem:[%s2947 + $0xc0] sm:$0xff]
      %v2961 = vld [vmem:[%s2947 + $0xd0] sm:$0xff]
      %v2962 = vld [vmem:[%s2947 + $0xe0] sm:$0xff]
      %v2963 = vld [vmem:[%s2947 + $0xf0] sm:$0xff]
      %s2964 = scalar_lea.vmem %s1, 12
      %v2965 = vld [vmem:[%s2964] sm:$0x3]
      %v2967 = vsel %vm280, %v2948, 0
      %v2970 = vsel %vm280, %v2949, 0
      %v2973 = vsel %vm280, %v2950, 0
      %v2976 = vsel %vm280, %v2951, 0
      %v2979 = vsel %vm280, %v2952, 0
      %v2982 = vsel %vm280, %v2953, 0
      %v2985 = vsel %vm280, %v2954, 0
      %v2988 = vsel %vm280, %v2955, 0
      %v2991 = vsel %vm280, %v2956, 0
      %v2994 = vsel %vm280, %v2957, 0
      %v2997 = vsel %vm280, %v2958, 0
      %v3000 = vsel %vm280, %v2959, 0
      %v3003 = vsel %vm280, %v2960, 0
      %v3006 = vsel %vm280, %v2961, 0
      %v3009 = vsel %vm280, %v2962, 0
      %v3012 = vsel %vm280, %v2963, 0
      %v3015 = vand.u32 %v2965, %v1169
      %3017 = vmatprep.subr.bf16.mxu0 0
      %3018 = vmatpush1.bf16.msra.mxu0 %v3015
      %3019 = vmatprep.subr.bf16.mxu0 0
      %3020 = vmatpush1.bf16.msra.mxu0 0
      %3021 = vmatprep.subr.bf16.mxu0 0
      %3022 = vmatpush1.bf16.msra.mxu0 0
      %3023 = vmatprep.subr.bf16.mxu0 0
      %3024 = vmatpush1.bf16.msra.mxu0 0
      %3025 = vmatprep.subr.bf16.mxu0 0
      %3026 = vmatpush1.bf16.msra.mxu0 0
      %3027 = vmatprep.subr.bf16.mxu0 0
      %3028 = vmatpush1.bf16.msra.mxu0 0
      %3029 = vmatprep.subr.bf16.mxu0 0
      %3030 = vmatpush1.bf16.msra.mxu0 0
      %3031 = vmatprep.subr.bf16.mxu0 0
      %3032 = vmatpush1.bf16.msra.mxu0 0
      %3033 = vmatprep.subr.bf16.mxu0 0
      %3034 = vmatpush1.bf16.msra.mxu0 0
      %3035 = vmatprep.subr.bf16.mxu0 0
      %3036 = vmatpush1.bf16.msra.mxu0 0
      %3037 = vmatprep.subr.bf16.mxu0 0
      %3038 = vmatpush1.bf16.msra.mxu0 0
      %3039 = vmatprep.subr.bf16.mxu0 0
      %3040 = vmatpush1.bf16.msra.mxu0 0
      %3041 = vmatprep.subr.bf16.mxu0 0
      %3042 = vmatpush1.bf16.msra.mxu0 0
      %3043 = vmatprep.subr.bf16.mxu0 0
      %3044 = vmatpush1.bf16.msra.mxu0 0
      %3045 = vmatprep.subr.bf16.mxu0 0
      %3046 = vmatpush1.bf16.msra.mxu0 0
      %3047 = vmatprep.subr.bf16.mxu0 0
      %3048 = vmatpush1.bf16.msra.mxu0 0
      %3049 = vmatprep.mubr.bf16.mxu0 0
      %3050 = vmatmul.mubr.bf16.gmra.mrb[0].mxu0 %v2967
      %v3051 = vpop.f32.mrb[0].mxu0
      %v3052 = vadd.f32 0.0, %v3051
      %v3053 = vpop.f32.mrb[0].mxu0
      %v3054 = vpop.f32.mrb[0].mxu0
      %v3055 = vadd.f32 0.0, %v3054
      %v3056 = vpop.f32.mrb[0].mxu0
      %3057 = vmatprep.mubr.bf16.mxu0 0
      %3058 = vmatmul.mubr.bf16.gmra.mrb[0].mxu0 %v2970
      %v3059 = vpop.f32.mrb[0].mxu0
      %v3060 = vadd.f32 0.0, %v3059
      %v3061 = vpop.f32.mrb[0].mxu0
      %v3062 = vpop.f32.mrb[0].mxu0
      %v3063 = vadd.f32 0.0, %v3062
      %v3064 = vpop.f32.mrb[0].mxu0
      %3065 = vmatprep.mubr.bf16.mxu0 0
      %3066 = vmatmul.mubr.bf16.gmra.mrb[0].mxu0 %v2973
      %v3067 = vpop.f32.mrb[0].mxu0
      %v3068 = vadd.f32 0.0, %v3067
      %v3069 = vpop.f32.mrb[0].mxu0
      %v3070 = vpop.f32.mrb[0].mxu0
      %v3071 = vadd.f32 0.0, %v3070
      %v3072 = vpop.f32.mrb[0].mxu0
      %3073 = vmatprep.mubr.bf16.mxu0 0
      %3074 = vmatmul.mubr.bf16.gmra.mrb[0].mxu0 %v2976
      %v3075 = vpop.f32.mrb[0].mxu0
      %v3076 = vadd.f32 0.0, %v3075
      %v3077 = vpop.f32.mrb[0].mxu0
      %v3078 = vpop.f32.mrb[0].mxu0
      %v3079 = vadd.f32 0.0, %v3078
      %v3080 = vpop.f32.mrb[0].mxu0
      %3081 = vmatprep.mubr.bf16.mxu0 0
      %3082 = vmatmul.mubr.bf16.gmra.mrb[0].mxu0 %v2979
      %v3083 = vpop.f32.mrb[0].mxu0
      %v3084 = vadd.f32 0.0, %v3083
      %v3085 = vpop.f32.mrb[0].mxu0
      %v3086 = vpop.f32.mrb[0].mxu0
      %v3087 = vadd.f32 0.0, %v3086
      %v3088 = vpop.f32.mrb[0].mxu0
      %3089 = vmatprep.mubr.bf16.mxu0 0
      %3090 = vmatmul.mubr.bf16.gmra.mrb[0].mxu0 %v2982
      %v3091 = vpop.f32.mrb[0].mxu0
      %v3092 = vadd.f32 0.0, %v3091
      %v3093 = vpop.f32.mrb[0].mxu0
      %v3094 = vpop.f32.mrb[0].mxu0
      %v3095 = vadd.f32 0.0, %v3094
      %v3096 = vpop.f32.mrb[0].mxu0
      %3097 = vmatprep.mubr.bf16.mxu0 0
      %3098 = vmatmul.mubr.bf16.gmra.mrb[0].mxu0 %v2985
      %v3099 = vpop.f32.mrb[0].mxu0
      %v3100 = vadd.f32 0.0, %v3099
      %v3101 = vpop.f32.mrb[0].mxu0
      %v3102 = vpop.f32.mrb[0].mxu0
      %v3103 = vadd.f32 0.0, %v3102
      %v3104 = vpop.f32.mrb[0].mxu0
      %3105 = vmatprep.mubr.bf16.mxu0 0
      %3106 = vmatmul.mubr.bf16.gmra.mrb[0].mxu0 %v2988
      %v3107 = vpop.f32.mrb[0].mxu0
      %v3108 = vadd.f32 0.0, %v3107
      %v3109 = vpop.f32.mrb[0].mxu0
      %v3110 = vpop.f32.mrb[0].mxu0
      %v3111 = vadd.f32 0.0, %v3110
      %v3112 = vpop.f32.mrb[0].mxu0
      %3113 = vmatprep.mubr.bf16.mxu0 0
      %3114 = vmatmul.mubr.bf16.gmra.mrb[0].mxu0 %v2991
      %v3115 = vpop.f32.mrb[0].mxu0
      %v3116 = vadd.f32 0.0, %v3115
      %v3117 = vpop.f32.mrb[0].mxu0
      %v3118 = vpop.f32.mrb[0].mxu0
      %v3119 = vadd.f32 0.0, %v3118
      %v3120 = vpop.f32.mrb[0].mxu0
      %3121 = vmatprep.mubr.bf16.mxu0 0
      %3122 = vmatmul.mubr.bf16.gmra.mrb[0].mxu0 %v2994
      %v3123 = vpop.f32.mrb[0].mxu0
      %v3124 = vadd.f32 0.0, %v3123
      %v3125 = vpop.f32.mrb[0].mxu0
      %v3126 = vpop.f32.mrb[0].mxu0
      %v3127 = vadd.f32 0.0, %v3126
      %v3128 = vpop.f32.mrb[0].mxu0
      %3129 = vmatprep.mubr.bf16.mxu0 0
      %3130 = vmatmul.mubr.bf16.gmra.mrb[0].mxu0 %v2997
      %v3131 = vpop.f32.mrb[0].mxu0
      %v3132 = vadd.f32 0.0, %v3131
      %v3133 = vpop.f32.mrb[0].mxu0
      %v3134 = vpop.f32.mrb[0].mxu0
      %v3135 = vadd.f32 0.0, %v3134
      %v3136 = vpop.f32.mrb[0].mxu0
      %3137 = vmatprep.mubr.bf16.mxu0 0
      %3138 = vmatmul.mubr.bf16.gmra.mrb[0].mxu0 %v3000
      %v3139 = vpop.f32.mrb[0].mxu0
      %v3140 = vadd.f32 0.0, %v3139
      %v3141 = vpop.f32.mrb[0].mxu0
      %v3142 = vpop.f32.mrb[0].mxu0
      %v3143 = vadd.f32 0.0, %v3142
      %v3144 = vpop.f32.mrb[0].mxu0
      %3145 = vmatprep.mubr.bf16.mxu0 0
      %3146 = vmatmul.mubr.bf16.gmra.mrb[0].mxu0 %v3003
      %v3147 = vpop.f32.mrb[0].mxu0
      %v3148 = vadd.f32 0.0, %v3147
      %v3149 = vpop.f32.mrb[0].mxu0
      %v3150 = vpop.f32.mrb[0].mxu0
      %v3151 = vadd.f32 0.0, %v3150
      %v3152 = vpop.f32.mrb[0].mxu0
      %3153 = vmatprep.mubr.bf16.mxu0 0
      %3154 = vmatmul.mubr.bf16.gmra.mrb[0].mxu0 %v3006
      %v3155 = vpop.f32.mrb[0].mxu0
      %v3156 = vadd.f32 0.0, %v3155
      %v3157 = vpop.f32.mrb[0].mxu0
      %v3158 = vpop.f32.mrb[0].mxu0
      %v3159 = vadd.f32 0.0, %v3158
      %v3160 = vpop.f32.mrb[0].mxu0
      %3161 = vmatprep.mubr.bf16.mxu0 0
      %3162 = vmatmul.mubr.bf16.gmra.mrb[0].mxu0 %v3009
      %v3163 = vpop.f32.mrb[0].mxu0
      %v3164 = vadd.f32 0.0, %v3163
      %v3165 = vpop.f32.mrb[0].mxu0
      %v3166 = vpop.f32.mrb[0].mxu0
      %v3167 = vadd.f32 0.0, %v3166
      %v3168 = vpop.f32.mrb[0].mxu0
      %3169 = vmatprep.mubr.bf16.mxu0 0
      %3170 = vmatmul.mubr.bf16.gmra.mrb[0].mxu0 %v3012
      %v3171 = vpop.f32.mrb[0].mxu0
      %v3172 = vadd.f32 0.0, %v3171
      %v3173 = vpop.f32.mrb[0].mxu0
      %v3174 = vpop.f32.mrb[0].mxu0
      %v3175 = vadd.f32 0.0, %v3174
      %v3176 = vpop.f32.mrb[0].mxu0
      %3177 = vdwg.mxu0
      %v3178 = vadd.f32 %v2915, %v3052
      %v3179 = vadd.f32 %v2916, %v3055
      %v3180 = vadd.f32 %v2917, %v3060
      %v3181 = vadd.f32 %v2918, %v3063
      %v3182 = vadd.f32 %v2919, %v3068
      %v3183 = vadd.f32 %v2920, %v3071
      %v3184 = vadd.f32 %v2921, %v3076
      %v3185 = vadd.f32 %v2922, %v3079
      %v3186 = vadd.f32 %v2923, %v3084
      %v3187 = vadd.f32 %v2924, %v3087
      %v3188 = vadd.f32 %v2925, %v3092
      %v3189 = vadd.f32 %v2926, %v3095
      %v3190 = vadd.f32 %v2927, %v3100
      %v3191 = vadd.f32 %v2928, %v3103
      %v3192 = vadd.f32 %v2929, %v3108
      %v3193 = vadd.f32 %v2930, %v3111
      %v3194 = vadd.f32 %v2931, %v3116
      %v3195 = vadd.f32 %v2932, %v3119
      %v3196 = vadd.f32 %v2933, %v3124
      %v3197 = vadd.f32 %v2934, %v3127
      %v3198 = vadd.f32 %v2935, %v3132
      %v3199 = vadd.f32 %v2936, %v3135
      %v3200 = vadd.f32 %v2937, %v3140
      %v3201 = vadd.f32 %v2938, %v3143
      %v3202 = vadd.f32 %v2939, %v3148
      %v3203 = vadd.f32 %v2940, %v3151
      %v3204 = vadd.f32 %v2941, %v3156
      %v3205 = vadd.f32 %v2942, %v3159
      %v3206 = vadd.f32 %v2943, %v3164
      %v3207 = vadd.f32 %v2944, %v3167
      %v3208 = vadd.f32 %v2945, %v3172
      %v3209 = vadd.f32 %v2946, %v3175
      %v3210 = vld [vmem:[%s2947] sm:$0xff]
      %v3211 = vld [vmem:[%s2947 + $0x8] sm:$0x1]
      %v3212 = vld [vmem:[%s2947 + $0x10] sm:$0xff]
      %v3213 = vld [vmem:[%s2947 + $0x18] sm:$0x1]
      %v3214 = vld [vmem:[%s2947 + $0x20] sm:$0xff]
      %v3215 = vld [vmem:[%s2947 + $0x28] sm:$0x1]
      %v3216 = vld [vmem:[%s2947 + $0x30] sm:$0xff]
      %v3217 = vld [vmem:[%s2947 + $0x38] sm:$0x1]
      %v3218 = vld [vmem:[%s2947 + $0x40] sm:$0xff]
      %v3219 = vld [vmem:[%s2947 + $0x48] sm:$0x1]
      %v3220 = vld [vmem:[%s2947 + $0x50] sm:$0xff]
      %v3221 = vld [vmem:[%s2947 + $0x58] sm:$0x1]
      %v3222 = vld [vmem:[%s2947 + $0x60] sm:$0xff]
      %v3223 = vld [vmem:[%s2947 + $0x68] sm:$0x1]
      %v3224 = vld [vmem:[%s2947 + $0x70] sm:$0xff]
      %v3225 = vld [vmem:[%s2947 + $0x78] sm:$0x1]
      %v3226 = vld [vmem:[%s2947 + $0x80] sm:$0xff]
      %v3227 = vld [vmem:[%s2947 + $0x88] sm:$0x1]
      %v3228 = vld [vmem:[%s2947 + $0x90] sm:$0xff]
      %v3229 = vld [vmem:[%s2947 + $0x98] sm:$0x1]
      %v3230 = vld [vmem:[%s2947 + $0xa0] sm:$0xff]
      %v3231 = vld [vmem:[%s2947 + $0xa8] sm:$0x1]
      %v3232 = vld [vmem:[%s2947 + $0xb0] sm:$0xff]
      %v3233 = vld [vmem:[%s2947 + $0xb8] sm:$0x1]
      %v3234 = vld [vmem:[%s2947 + $0xc0] sm:$0xff]
      %v3235 = vld [vmem:[%s2947 + $0xc8] sm:$0x1]
      %v3236 = vld [vmem:[%s2947 + $0xd0] sm:$0xff]
      %v3237 = vld [vmem:[%s2947 + $0xd8] sm:$0x1]
      %v3238 = vld [vmem:[%s2947 + $0xe0] sm:$0xff]
      %v3239 = vld [vmem:[%s2947 + $0xe8] sm:$0x1]
      %v3240 = vld [vmem:[%s2947 + $0xf0] sm:$0xff]
      %v3241 = vld [vmem:[%s2947 + $0xf8] sm:$0x1]
      %v3243 = vshrl.u32 %v3210, 16
      %v3245 = vshll.u32 %v3210, 16
      %v3247 = vrot.slane %v3245, 1
      %v3248 = vor.u32 %v3243, %v3247
      %v3250 = vshll.u32 %v3211, 16
      %v3252 = vrot.slane %v3250, 1
      %v3253 = vsel %vm923, %v3248, %v3252
      %v3255 = vshrl.u32 %v3212, 16
      %v3257 = vshll.u32 %v3212, 16
      %v3259 = vrot.slane %v3257, 1
      %v3260 = vor.u32 %v3255, %v3259
      %v3262 = vshll.u32 %v3213, 16
      %v3264 = vrot.slane %v3262, 1
      %v3265 = vsel %vm923, %v3260, %v3264
      %v3267 = vshrl.u32 %v3214, 16
      %v3269 = vshll.u32 %v3214, 16
      %v3271 = vrot.slane %v3269, 1
      %v3272 = vor.u32 %v3267, %v3271
      %v3274 = vshll.u32 %v3215, 16
      %v3276 = vrot.slane %v3274, 1
      %v3277 = vsel %vm923, %v3272, %v3276
      %v3279 = vshrl.u32 %v3216, 16
      %v3281 = vshll.u32 %v3216, 16
      %v3283 = vrot.slane %v3281, 1
      %v3284 = vor.u32 %v3279, %v3283
      %v3286 = vshll.u32 %v3217, 16
      %v3288 = vrot.slane %v3286, 1
      %v3289 = vsel %vm923, %v3284, %v3288
      %v3291 = vshrl.u32 %v3218, 16
      %v3293 = vshll.u32 %v3218, 16
      %v3295 = vrot.slane %v3293, 1
      %v3296 = vor.u32 %v3291, %v3295
      %v3298 = vshll.u32 %v3219, 16
      %v3300 = vrot.slane %v3298, 1
      %v3301 = vsel %vm923, %v3296, %v3300
      %v3303 = vshrl.u32 %v3220, 16
      %v3305 = vshll.u32 %v3220, 16
      %v3307 = vrot.slane %v3305, 1
      %v3308 = vor.u32 %v3303, %v3307
      %v3310 = vshll.u32 %v3221, 16
      %v3312 = vrot.slane %v3310, 1
      %v3313 = vsel %vm923, %v3308, %v3312
      %v3315 = vshrl.u32 %v3222, 16
      %v3317 = vshll.u32 %v3222, 16
      %v3319 = vrot.slane %v3317, 1
      %v3320 = vor.u32 %v3315, %v3319
      %v3322 = vshll.u32 %v3223, 16
      %v3324 = vrot.slane %v3322, 1
      %v3325 = vsel %vm923, %v3320, %v3324
      %v3327 = vshrl.u32 %v3224, 16
      %v3329 = vshll.u32 %v3224, 16
      %v3331 = vrot.slane %v3329, 1
      %v3332 = vor.u32 %v3327, %v3331
      %v3334 = vshll.u32 %v3225, 16
      %v3336 = vrot.slane %v3334, 1
      %v3337 = vsel %vm923, %v3332, %v3336
      %v3339 = vshrl.u32 %v3226, 16
      %v3341 = vshll.u32 %v3226, 16
      %v3343 = vrot.slane %v3341, 1
      %v3344 = vor.u32 %v3339, %v3343
      %v3346 = vshll.u32 %v3227, 16
      %v3348 = vrot.slane %v3346, 1
      %v3349 = vsel %vm923, %v3344, %v3348
      %v3351 = vshrl.u32 %v3228, 16
      %v3353 = vshll.u32 %v3228, 16
      %v3355 = vrot.slane %v3353, 1
      %v3356 = vor.u32 %v3351, %v3355
      %v3358 = vshll.u32 %v3229, 16
      %v3360 = vrot.slane %v3358, 1
      %v3361 = vsel %vm923, %v3356, %v3360
      %v3363 = vshrl.u32 %v3230, 16
      %v3365 = vshll.u32 %v3230, 16
      %v3367 = vrot.slane %v3365, 1
      %v3368 = vor.u32 %v3363, %v3367
      %v3370 = vshll.u32 %v3231, 16
      %v3372 = vrot.slane %v3370, 1
      %v3373 = vsel %vm923, %v3368, %v3372
      %v3375 = vshrl.u32 %v3232, 16
      %v3377 = vshll.u32 %v3232, 16
      %v3379 = vrot.slane %v3377, 1
      %v3380 = vor.u32 %v3375, %v3379
      %v3382 = vshll.u32 %v3233, 16
      %v3384 = vrot.slane %v3382, 1
      %v3385 = vsel %vm923, %v3380, %v3384
      %v3387 = vshrl.u32 %v3234, 16
      %v3389 = vshll.u32 %v3234, 16
      %v3391 = vrot.slane %v3389, 1
      %v3392 = vor.u32 %v3387, %v3391
      %v3394 = vshll.u32 %v3235, 16
      %v3396 = vrot.slane %v3394, 1
      %v3397 = vsel %vm923, %v3392, %v3396
      %v3399 = vshrl.u32 %v3236, 16
      %v3401 = vshll.u32 %v3236, 16
      %v3403 = vrot.slane %v3401, 1
      %v3404 = vor.u32 %v3399, %v3403
      %v3406 = vshll.u32 %v3237, 16
      %v3408 = vrot.slane %v3406, 1
      %v3409 = vsel %vm923, %v3404, %v3408
      %v3411 = vshrl.u32 %v3238, 16
      %v3413 = vshll.u32 %v3238, 16
      %v3415 = vrot.slane %v3413, 1
      %v3416 = vor.u32 %v3411, %v3415
      %v3418 = vshll.u32 %v3239, 16
      %v3420 = vrot.slane %v3418, 1
      %v3421 = vsel %vm923, %v3416, %v3420
      %v3423 = vshrl.u32 %v3240, 16
      %v3425 = vshll.u32 %v3240, 16
      %v3427 = vrot.slane %v3425, 1
      %v3428 = vor.u32 %v3423, %v3427
      %v3430 = vshll.u32 %v3241, 16
      %v3432 = vrot.slane %v3430, 1
      %v3433 = vsel %vm923, %v3428, %v3432
      %s3434 = scalar_lea.vmem %s1, 14
      %v3435 = vld [vmem:[%s3434] sm:$0x3]
      %v3437 = vsel %vm280, %v3253, 0
      %v3440 = vsel %vm280, %v3265, 0
      %v3443 = vsel %vm280, %v3277, 0
      %v3446 = vsel %vm280, %v3289, 0
      %v3449 = vsel %vm280, %v3301, 0
      %v3452 = vsel %vm280, %v3313, 0
      %v3455 = vsel %vm280, %v3325, 0
      %v3458 = vsel %vm280, %v3337, 0
      %v3461 = vsel %vm280, %v3349, 0
      %v3464 = vsel %vm280, %v3361, 0
      %v3467 = vsel %vm280, %v3373, 0
      %v3470 = vsel %vm280, %v3385, 0
      %v3473 = vsel %vm280, %v3397, 0
      %v3476 = vsel %vm280, %v3409, 0
      %v3479 = vsel %vm280, %v3421, 0
      %v3482 = vsel %vm280, %v3433, 0
      %v3485 = vand.u32 %v3435, %v1169
      %3487 = vmatprep.subr.bf16.mxu0 0
      %3488 = vmatpush1.bf16.msra.mxu0 %v3485
      %3489 = vmatprep.subr.bf16.mxu0 0
      %3490 = vmatpush1.bf16.msra.mxu0 0
      %3491 = vmatprep.subr.bf16.mxu0 0
      %3492 = vmatpush1.bf16.msra.mxu0 0
      %3493 = vmatprep.subr.bf16.mxu0 0
      %3494 = vmatpush1.bf16.msra.mxu0 0
      %3495 = vmatprep.subr.bf16.mxu0 0
      %3496 = vmatpush1.bf16.msra.mxu0 0
      %3497 = vmatprep.subr.bf16.mxu0 0
      %3498 = vmatpush1.bf16.msra.mxu0 0
      %3499 = vmatprep.subr.bf16.mxu0 0
      %3500 = vmatpush1.bf16.msra.mxu0 0
      %3501 = vmatprep.subr.bf16.mxu0 0
      %3502 = vmatpush1.bf16.msra.mxu0 0
      %3503 = vmatprep.subr.bf16.mxu0 0
      %3504 = vmatpush1.bf16.msra.mxu0 0
      %3505 = vmatprep.subr.bf16.mxu0 0
      %3506 = vmatpush1.bf16.msra.mxu0 0
      %3507 = vmatprep.subr.bf16.mxu0 0
      %3508 = vmatpush1.bf16.msra.mxu0 0
      %3509 = vmatprep.subr.bf16.mxu0 0
      %3510 = vmatpush1.bf16.msra.mxu0 0
      %3511 = vmatprep.subr.bf16.mxu0 0
      %3512 = vmatpush1.bf16.msra.mxu0 0
      %3513 = vmatprep.subr.bf16.mxu0 0
      %3514 = vmatpush1.bf16.msra.mxu0 0
      %3515 = vmatprep.subr.bf16.mxu0 0
      %3516 = vmatpush1.bf16.msra.mxu0 0
      %3517 = vmatprep.subr.bf16.mxu0 0
      %3518 = vmatpush1.bf16.msra.mxu0 0
      %3519 = vmatprep.mubr.bf16.mxu0 0
      %3520 = vmatmul.mubr.bf16.gmra.mrb[0].mxu0 %v3437
      %v3521 = vpop.f32.mrb[0].mxu0
      %v3522 = vadd.f32 0.0, %v3521
      %v3523 = vpop.f32.mrb[0].mxu0
      %v3524 = vpop.f32.mrb[0].mxu0
      %v3525 = vadd.f32 0.0, %v3524
      %v3526 = vpop.f32.mrb[0].mxu0
      %3527 = vmatprep.mubr.bf16.mxu0 0
      %3528 = vmatmul.mubr.bf16.gmra.mrb[0].mxu0 %v3440
      %v3529 = vpop.f32.mrb[0].mxu0
      %v3530 = vadd.f32 0.0, %v3529
      %v3531 = vpop.f32.mrb[0].mxu0
      %v3532 = vpop.f32.mrb[0].mxu0
      %v3533 = vadd.f32 0.0, %v3532
      %v3534 = vpop.f32.mrb[0].mxu0
      %3535 = vmatprep.mubr.bf16.mxu0 0
      %3536 = vmatmul.mubr.bf16.gmra.mrb[0].mxu0 %v3443
      %v3537 = vpop.f32.mrb[0].mxu0
      %v3538 = vadd.f32 0.0, %v3537
      %v3539 = vpop.f32.mrb[0].mxu0
      %v3540 = vpop.f32.mrb[0].mxu0
      %v3541 = vadd.f32 0.0, %v3540
      %v3542 = vpop.f32.mrb[0].mxu0
      %3543 = vmatprep.mubr.bf16.mxu0 0
      %3544 = vmatmul.mubr.bf16.gmra.mrb[0].mxu0 %v3446
      %v3545 = vpop.f32.mrb[0].mxu0
      %v3546 = vadd.f32 0.0, %v3545
      %v3547 = vpop.f32.mrb[0].mxu0
      %v3548 = vpop.f32.mrb[0].mxu0
      %v3549 = vadd.f32 0.0, %v3548
      %v3550 = vpop.f32.mrb[0].mxu0
      %3551 = vmatprep.mubr.bf16.mxu0 0
      %3552 = vmatmul.mubr.bf16.gmra.mrb[0].mxu0 %v3449
      %v3553 = vpop.f32.mrb[0].mxu0
      %v3554 = vadd.f32 0.0, %v3553
      %v3555 = vpop.f32.mrb[0].mxu0
      %v3556 = vpop.f32.mrb[0].mxu0
      %v3557 = vadd.f32 0.0, %v3556
      %v3558 = vpop.f32.mrb[0].mxu0
      %3559 = vmatprep.mubr.bf16.mxu0 0
      %3560 = vmatmul.mubr.bf16.gmra.mrb[0].mxu0 %v3452
      %v3561 = vpop.f32.mrb[0].mxu0
      %v3562 = vadd.f32 0.0, %v3561
      %v3563 = vpop.f32.mrb[0].mxu0
      %v3564 = vpop.f32.mrb[0].mxu0
      %v3565 = vadd.f32 0.0, %v3564
      %v3566 = vpop.f32.mrb[0].mxu0
      %3567 = vmatprep.mubr.bf16.mxu0 0
      %3568 = vmatmul.mubr.bf16.gmra.mrb[0].mxu0 %v3455
      %v3569 = vpop.f32.mrb[0].mxu0
      %v3570 = vadd.f32 0.0, %v3569
      %v3571 = vpop.f32.mrb[0].mxu0
      %v3572 = vpop.f32.mrb[0].mxu0
      %v3573 = vadd.f32 0.0, %v3572
      %v3574 = vpop.f32.mrb[0].mxu0
      %3575 = vmatprep.mubr.bf16.mxu0 0
      %3576 = vmatmul.mubr.bf16.gmra.mrb[0].mxu0 %v3458
      %v3577 = vpop.f32.mrb[0].mxu0
      %v3578 = vadd.f32 0.0, %v3577
      %v3579 = vpop.f32.mrb[0].mxu0
      %v3580 = vpop.f32.mrb[0].mxu0
      %v3581 = vadd.f32 0.0, %v3580
      %v3582 = vpop.f32.mrb[0].mxu0
      %3583 = vmatprep.mubr.bf16.mxu0 0
      %3584 = vmatmul.mubr.bf16.gmra.mrb[0].mxu0 %v3461
      %v3585 = vpop.f32.mrb[0].mxu0
      %v3586 = vadd.f32 0.0, %v3585
      %v3587 = vpop.f32.mrb[0].mxu0
      %v3588 = vpop.f32.mrb[0].mxu0
      %v3589 = vadd.f32 0.0, %v3588
      %v3590 = vpop.f32.mrb[0].mxu0
      %3591 = vmatprep.mubr.bf16.mxu0 0
      %3592 = vmatmul.mubr.bf16.gmra.mrb[0].mxu0 %v3464
      %v3593 = vpop.f32.mrb[0].mxu0
      %v3594 = vadd.f32 0.0, %v3593
      %v3595 = vpop.f32.mrb[0].mxu0
      %v3596 = vpop.f32.mrb[0].mxu0
      %v3597 = vadd.f32 0.0, %v3596
      %v3598 = vpop.f32.mrb[0].mxu0
      %3599 = vmatprep.mubr.bf16.mxu0 0
      %3600 = vmatmul.mubr.bf16.gmra.mrb[0].mxu0 %v3467
      %v3601 = vpop.f32.mrb[0].mxu0
      %v3602 = vadd.f32 0.0, %v3601
      %v3603 = vpop.f32.mrb[0].mxu0
      %v3604 = vpop.f32.mrb[0].mxu0
      %v3605 = vadd.f32 0.0, %v3604
      %v3606 = vpop.f32.mrb[0].mxu0
      %3607 = vmatprep.mubr.bf16.mxu0 0
      %3608 = vmatmul.mubr.bf16.gmra.mrb[0].mxu0 %v3470
      %v3609 = vpop.f32.mrb[0].mxu0
      %v3610 = vadd.f32 0.0, %v3609
      %v3611 = vpop.f32.mrb[0].mxu0
      %v3612 = vpop.f32.mrb[0].mxu0
      %v3613 = vadd.f32 0.0, %v3612
      %v3614 = vpop.f32.mrb[0].mxu0
      %3615 = vmatprep.mubr.bf16.mxu0 0
      %3616 = vmatmul.mubr.bf16.gmra.mrb[0].mxu0 %v3473
      %v3617 = vpop.f32.mrb[0].mxu0
      %v3618 = vadd.f32 0.0, %v3617
      %v3619 = vpop.f32.mrb[0].mxu0
      %v3620 = vpop.f32.mrb[0].mxu0
      %v3621 = vadd.f32 0.0, %v3620
      %v3622 = vpop.f32.mrb[0].mxu0
      %3623 = vmatprep.mubr.bf16.mxu0 0
      %3624 = vmatmul.mubr.bf16.gmra.mrb[0].mxu0 %v3476
      %v3625 = vpop.f32.mrb[0].mxu0
      %v3626 = vadd.f32 0.0, %v3625
      %v3627 = vpop.f32.mrb[0].mxu0
      %v3628 = vpop.f32.mrb[0].mxu0
      %v3629 = vadd.f32 0.0, %v3628
      %v3630 = vpop.f32.mrb[0].mxu0
      %3631 = vmatprep.mubr.bf16.mxu0 0
      %3632 = vmatmul.mubr.bf16.gmra.mrb[0].mxu0 %v3479
      %v3633 = vpop.f32.mrb[0].mxu0
      %v3634 = vadd.f32 0.0, %v3633
      %v3635 = vpop.f32.mrb[0].mxu0
      %v3636 = vpop.f32.mrb[0].mxu0
      %v3637 = vadd.f32 0.0, %v3636
      %v3638 = vpop.f32.mrb[0].mxu0
      %3639 = vmatprep.mubr.bf16.mxu0 0
      %3640 = vmatmul.mubr.bf16.gmra.mrb[0].mxu0 %v3482
      %v3641 = vpop.f32.mrb[0].mxu0
      %v3642 = vadd.f32 0.0, %v3641
      %v3643 = vpop.f32.mrb[0].mxu0
      %v3644 = vpop.f32.mrb[0].mxu0
      %v3645 = vadd.f32 0.0, %v3644
      %v3646 = vpop.f32.mrb[0].mxu0
      %3647 = vdwg.mxu0
      %v3648 = vadd.f32 %v3178, %v3522
      %v3649 = vadd.f32 %v3179, %v3525
      %v3650 = vadd.f32 %v3180, %v3530
      %v3651 = vadd.f32 %v3181, %v3533
      %v3652 = vadd.f32 %v3182, %v3538
      %v3653 = vadd.f32 %v3183, %v3541
      %v3654 = vadd.f32 %v3184, %v3546
      %v3655 = vadd.f32 %v3185, %v3549
      %v3656 = vadd.f32 %v3186, %v3554
      %v3657 = vadd.f32 %v3187, %v3557
      %v3658 = vadd.f32 %v3188, %v3562
      %v3659 = vadd.f32 %v3189, %v3565
      %v3660 = vadd.f32 %v3190, %v3570
      %v3661 = vadd.f32 %v3191, %v3573
      %v3662 = vadd.f32 %v3192, %v3578
      %v3663 = vadd.f32 %v3193, %v3581
      %v3664 = vadd.f32 %v3194, %v3586
      %v3665 = vadd.f32 %v3195, %v3589
      %v3666 = vadd.f32 %v3196, %v3594
      %v3667 = vadd.f32 %v3197, %v3597
      %v3668 = vadd.f32 %v3198, %v3602
      %v3669 = vadd.f32 %v3199, %v3605
      %v3670 = vadd.f32 %v3200, %v3610
      %v3671 = vadd.f32 %v3201, %v3613
      %v3672 = vadd.f32 %v3202, %v3618
      %v3673 = vadd.f32 %v3203, %v3621
      %v3674 = vadd.f32 %v3204, %v3626
      %v3675 = vadd.f32 %v3205, %v3629
      %v3676 = vadd.f32 %v3206, %v3634
      %v3677 = vadd.f32 %v3207, %v3637
      %v3678 = vadd.f32 %v3208, %v3642
      %v3679 = vadd.f32 %v3209, %v3645
      %v3680 = vld [vmem:[%s2947] sm:$0xfe]
      %v3681 = vld [vmem:[%s2947 + $0x10] sm:$0xfe]
      %v3682 = vld [vmem:[%s2947 + $0x20] sm:$0xfe]
      %v3683 = vld [vmem:[%s2947 + $0x30] sm:$0xfe]
      %v3684 = vld [vmem:[%s2947 + $0x40] sm:$0xfe]
      %v3685 = vld [vmem:[%s2947 + $0x50] sm:$0xfe]
      %v3686 = vld [vmem:[%s2947 + $0x60] sm:$0xfe]
      %v3687 = vld [vmem:[%s2947 + $0x70] sm:$0xfe]
      %v3688 = vld [vmem:[%s2947 + $0x80] sm:$0xfe]
      %v3689 = vld [vmem:[%s2947 + $0x90] sm:$0xfe]
      %v3690 = vld [vmem:[%s2947 + $0xa0] sm:$0xfe]
      %v3691 = vld [vmem:[%s2947 + $0xb0] sm:$0xfe]
      %v3692 = vld [vmem:[%s2947 + $0xc0] sm:$0xfe]
      %v3693 = vld [vmem:[%s2947 + $0xd0] sm:$0xfe]
      %v3694 = vld [vmem:[%s2947 + $0xe0] sm:$0xfe]
      %v3695 = vld [vmem:[%s2947 + $0xf0] sm:$0xfe]
      %v3728 = vrot.slane %v3680, 1
      %v3729 = vrot.slane %v3211, 1
      %v3730 = vsel %vm1578, %v3728, %v3729
      %v3731 = vrot.slane %v3681, 1
      %v3732 = vrot.slane %v3213, 1
      %v3733 = vsel %vm1578, %v3731, %v3732
      %v3734 = vrot.slane %v3682, 1
      %v3735 = vrot.slane %v3215, 1
      %v3736 = vsel %vm1578, %v3734, %v3735
      %v3737 = vrot.slane %v3683, 1
      %v3738 = vrot.slane %v3217, 1
      %v3739 = vsel %vm1578, %v3737, %v3738
      %v3740 = vrot.slane %v3684, 1
      %v3741 = vrot.slane %v3219, 1
      %v3742 = vsel %vm1578, %v3740, %v3741
      %v3743 = vrot.slane %v3685, 1
      %v3744 = vrot.slane %v3221, 1
      %v3745 = vsel %vm1578, %v3743, %v3744
      %v3746 = vrot.slane %v3686, 1
      %v3747 = vrot.slane %v3223, 1
      %v3748 = vsel %vm1578, %v3746, %v3747
      %v3749 = vrot.slane %v3687, 1
      %v3750 = vrot.slane %v3225, 1
      %v3751 = vsel %vm1578, %v3749, %v3750
      %v3752 = vrot.slane %v3688, 1
      %v3753 = vrot.slane %v3227, 1
      %v3754 = vsel %vm1578, %v3752, %v3753
      %v3755 = vrot.slane %v3689, 1
      %v3756 = vrot.slane %v3229, 1
      %v3757 = vsel %vm1578, %v3755, %v3756
      %v3758 = vrot.slane %v3690, 1
      %v3759 = vrot.slane %v3231, 1
      %v3760 = vsel %vm1578, %v3758, %v3759
      %v3761 = vrot.slane %v3691, 1
      %v3762 = vrot.slane %v3233, 1
      %v3763 = vsel %vm1578, %v3761, %v3762
      %v3764 = vrot.slane %v3692, 1
      %v3765 = vrot.slane %v3235, 1
      %v3766 = vsel %vm1578, %v3764, %v3765
      %v3767 = vrot.slane %v3693, 1
      %v3768 = vrot.slane %v3237, 1
      %v3769 = vsel %vm1578, %v3767, %v3768
      %v3770 = vrot.slane %v3694, 1
      %v3771 = vrot.slane %v3239, 1
      %v3772 = vsel %vm1578, %v3770, %v3771
      %v3773 = vrot.slane %v3695, 1
      %v3774 = vrot.slane %v3241, 1
      %v3775 = vsel %vm1578, %v3773, %v3774
      %s3776 = scalar_lea.vmem %s1, 16
      %v3777 = vld [vmem:[%s3776] sm:$0x3]
      %v3779 = vsel %vm280, %v3730, 0
      %v3782 = vsel %vm280, %v3733, 0
      %v3785 = vsel %vm280, %v3736, 0
      %v3788 = vsel %vm280, %v3739, 0
      %v3791 = vsel %vm280, %v3742, 0
      %v3794 = vsel %vm280, %v3745, 0
      %v3797 = vsel %vm280, %v3748, 0
      %v3800 = vsel %vm280, %v3751, 0
      %v3803 = vsel %vm280, %v3754, 0
      %v3806 = vsel %vm280, %v3757, 0
      %v3809 = vsel %vm280, %v3760, 0
      %v3812 = vsel %vm280, %v3763, 0
      %v3815 = vsel %vm280, %v3766, 0
      %v3818 = vsel %vm280, %v3769, 0
      %v3821 = vsel %vm280, %v3772, 0
      %v3824 = vsel %vm280, %v3775, 0
      %v3827 = vand.u32 %v3777, %v1169
      %3829 = vmatprep.subr.bf16.mxu0 0
      %3830 = vmatpush1.bf16.msra.mxu0 %v3827
      %3831 = vmatprep.subr.bf16.mxu0 0
      %3832 = vmatpush1.bf16.msra.mxu0 0
      %3833 = vmatprep.subr.bf16.mxu0 0
      %3834 = vmatpush1.bf16.msra.mxu0 0
      %3835 = vmatprep.subr.bf16.mxu0 0
      %3836 = vmatpush1.bf16.msra.mxu0 0
      %3837 = vmatprep.subr.bf16.mxu0 0
      %3838 = vmatpush1.bf16.msra.mxu0 0
      %3839 = vmatprep.subr.bf16.mxu0 0
      %3840 = vmatpush1.bf16.msra.mxu0 0
      %3841 = vmatprep.subr.bf16.mxu0 0
      %3842 = vmatpush1.bf16.msra.mxu0 0
      %3843 = vmatprep.subr.bf16.mxu0 0
      %3844 = vmatpush1.bf16.msra.mxu0 0
      %3845 = vmatprep.subr.bf16.mxu0 0
      %3846 = vmatpush1.bf16.msra.mxu0 0
      %3847 = vmatprep.subr.bf16.mxu0 0
      %3848 = vmatpush1.bf16.msra.mxu0 0
      %3849 = vmatprep.subr.bf16.mxu0 0
      %3850 = vmatpush1.bf16.msra.mxu0 0
      %3851 = vmatprep.subr.bf16.mxu0 0
      %3852 = vmatpush1.bf16.msra.mxu0 0
      %3853 = vmatprep.subr.bf16.mxu0 0
      %3854 = vmatpush1.bf16.msra.mxu0 0
      %3855 = vmatprep.subr.bf16.mxu0 0
      %3856 = vmatpush1.bf16.msra.mxu0 0
      %3857 = vmatprep.subr.bf16.mxu0 0
      %3858 = vmatpush1.bf16.msra.mxu0 0
      %3859 = vmatprep.subr.bf16.mxu0 0
      %3860 = vmatpush1.bf16.msra.mxu0 0
      %3861 = vmatprep.mubr.bf16.mxu0 0
      %3862 = vmatmul.mubr.bf16.gmra.mrb[0].mxu0 %v3779
      %v3863 = vpop.f32.mrb[0].mxu0
      %v3864 = vadd.f32 0.0, %v3863
      %v3865 = vpop.f32.mrb[0].mxu0
      %v3866 = vpop.f32.mrb[0].mxu0
      %v3867 = vadd.f32 0.0, %v3866
      %v3868 = vpop.f32.mrb[0].mxu0
      %3869 = vmatprep.mubr.bf16.mxu0 0
      %3870 = vmatmul.mubr.bf16.gmra.mrb[0].mxu0 %v3782
      %v3871 = vpop.f32.mrb[0].mxu0
      %v3872 = vadd.f32 0.0, %v3871
      %v3873 = vpop.f32.mrb[0].mxu0
      %v3874 = vpop.f32.mrb[0].mxu0
      %v3875 = vadd.f32 0.0, %v3874
      %v3876 = vpop.f32.mrb[0].mxu0
      %3877 = vmatprep.mubr.bf16.mxu0 0
      %3878 = vmatmul.mubr.bf16.gmra.mrb[0].mxu0 %v3785
      %v3879 = vpop.f32.mrb[0].mxu0
      %v3880 = vadd.f32 0.0, %v3879
      %v3881 = vpop.f32.mrb[0].mxu0
      %v3882 = vpop.f32.mrb[0].mxu0
      %v3883 = vadd.f32 0.0, %v3882
      %v3884 = vpop.f32.mrb[0].mxu0
      %3885 = vmatprep.mubr.bf16.mxu0 0
      %3886 = vmatmul.mubr.bf16.gmra.mrb[0].mxu0 %v3788
      %v3887 = vpop.f32.mrb[0].mxu0
      %v3888 = vadd.f32 0.0, %v3887
      %v3889 = vpop.f32.mrb[0].mxu0
      %v3890 = vpop.f32.mrb[0].mxu0
      %v3891 = vadd.f32 0.0, %v3890
      %v3892 = vpop.f32.mrb[0].mxu0
      %3893 = vmatprep.mubr.bf16.mxu0 0
      %3894 = vmatmul.mubr.bf16.gmra.mrb[0].mxu0 %v3791
      %v3895 = vpop.f32.mrb[0].mxu0
      %v3896 = vadd.f32 0.0, %v3895
      %v3897 = vpop.f32.mrb[0].mxu0
      %v3898 = vpop.f32.mrb[0].mxu0
      %v3899 = vadd.f32 0.0, %v3898
      %v3900 = vpop.f32.mrb[0].mxu0
      %3901 = vmatprep.mubr.bf16.mxu0 0
      %3902 = vmatmul.mubr.bf16.gmra.mrb[0].mxu0 %v3794
      %v3903 = vpop.f32.mrb[0].mxu0
      %v3904 = vadd.f32 0.0, %v3903
      %v3905 = vpop.f32.mrb[0].mxu0
      %v3906 = vpop.f32.mrb[0].mxu0
      %v3907 = vadd.f32 0.0, %v3906
      %v3908 = vpop.f32.mrb[0].mxu0
      %3909 = vmatprep.mubr.bf16.mxu0 0
      %3910 = vmatmul.mubr.bf16.gmra.mrb[0].mxu0 %v3797
      %v3911 = vpop.f32.mrb[0].mxu0
      %v3912 = vadd.f32 0.0, %v3911
      %v3913 = vpop.f32.mrb[0].mxu0
      %v3914 = vpop.f32.mrb[0].mxu0
      %v3915 = vadd.f32 0.0, %v3914
      %v3916 = vpop.f32.mrb[0].mxu0
      %3917 = vmatprep.mubr.bf16.mxu0 0
      %3918 = vmatmul.mubr.bf16.gmra.mrb[0].mxu0 %v3800
      %v3919 = vpop.f32.mrb[0].mxu0
      %v3920 = vadd.f32 0.0, %v3919
      %v3921 = vpop.f32.mrb[0].mxu0
      %v3922 = vpop.f32.mrb[0].mxu0
      %v3923 = vadd.f32 0.0, %v3922
      %v3924 = vpop.f32.mrb[0].mxu0
      %3925 = vmatprep.mubr.bf16.mxu0 0
      %3926 = vmatmul.mubr.bf16.gmra.mrb[0].mxu0 %v3803
      %v3927 = vpop.f32.mrb[0].mxu0
      %v3928 = vadd.f32 0.0, %v3927
      %v3929 = vpop.f32.mrb[0].mxu0
      %v3930 = vpop.f32.mrb[0].mxu0
      %v3931 = vadd.f32 0.0, %v3930
      %v3932 = vpop.f32.mrb[0].mxu0
      %3933 = vmatprep.mubr.bf16.mxu0 0
      %3934 = vmatmul.mubr.bf16.gmra.mrb[0].mxu0 %v3806
      %v3935 = vpop.f32.mrb[0].mxu0
      %v3936 = vadd.f32 0.0, %v3935
      %v3937 = vpop.f32.mrb[0].mxu0
      %v3938 = vpop.f32.mrb[0].mxu0
      %v3939 = vadd.f32 0.0, %v3938
      %v3940 = vpop.f32.mrb[0].mxu0
      %3941 = vmatprep.mubr.bf16.mxu0 0
      %3942 = vmatmul.mubr.bf16.gmra.mrb[0].mxu0 %v3809
      %v3943 = vpop.f32.mrb[0].mxu0
      %v3944 = vadd.f32 0.0, %v3943
      %v3945 = vpop.f32.mrb[0].mxu0
      %v3946 = vpop.f32.mrb[0].mxu0
      %v3947 = vadd.f32 0.0, %v3946
      %v3948 = vpop.f32.mrb[0].mxu0
      %3949 = vmatprep.mubr.bf16.mxu0 0
      %3950 = vmatmul.mubr.bf16.gmra.mrb[0].mxu0 %v3812
      %v3951 = vpop.f32.mrb[0].mxu0
      %v3952 = vadd.f32 0.0, %v3951
      %v3953 = vpop.f32.mrb[0].mxu0
      %v3954 = vpop.f32.mrb[0].mxu0
      %v3955 = vadd.f32 0.0, %v3954
      %v3956 = vpop.f32.mrb[0].mxu0
      %3957 = vmatprep.mubr.bf16.mxu0 0
      %3958 = vmatmul.mubr.bf16.gmra.mrb[0].mxu0 %v3815
      %v3959 = vpop.f32.mrb[0].mxu0
      %v3960 = vadd.f32 0.0, %v3959
      %v3961 = vpop.f32.mrb[0].mxu0
      %v3962 = vpop.f32.mrb[0].mxu0
      %v3963 = vadd.f32 0.0, %v3962
      %v3964 = vpop.f32.mrb[0].mxu0
      %3965 = vmatprep.mubr.bf16.mxu0 0
      %3966 = vmatmul.mubr.bf16.gmra.mrb[0].mxu0 %v3818
      %v3967 = vpop.f32.mrb[0].mxu0
      %v3968 = vadd.f32 0.0, %v3967
      %v3969 = vpop.f32.mrb[0].mxu0
      %v3970 = vpop.f32.mrb[0].mxu0
      %v3971 = vadd.f32 0.0, %v3970
      %v3972 = vpop.f32.mrb[0].mxu0
      %3973 = vmatprep.mubr.bf16.mxu0 0
      %3974 = vmatmul.mubr.bf16.gmra.mrb[0].mxu0 %v3821
      %v3975 = vpop.f32.mrb[0].mxu0
      %v3976 = vadd.f32 0.0, %v3975
      %v3977 = vpop.f32.mrb[0].mxu0
      %v3978 = vpop.f32.mrb[0].mxu0
      %v3979 = vadd.f32 0.0, %v3978
      %v3980 = vpop.f32.mrb[0].mxu0
      %3981 = vmatprep.mubr.bf16.mxu0 0
      %3982 = vmatmul.mubr.bf16.gmra.mrb[0].mxu0 %v3824
      %v3983 = vpop.f32.mrb[0].mxu0
      %v3984 = vadd.f32 0.0, %v3983
      %v3985 = vpop.f32.mrb[0].mxu0
      %v3986 = vpop.f32.mrb[0].mxu0
      %v3987 = vadd.f32 0.0, %v3986
      %v3988 = vpop.f32.mrb[0].mxu0
      %3989 = vdwg.mxu0
      %v3990 = vadd.f32 %v3648, %v3864
      %v3991 = vadd.f32 %v3649, %v3867
      %v3992 = vadd.f32 %v3650, %v3872
      %v3993 = vadd.f32 %v3651, %v3875
      %v3994 = vadd.f32 %v3652, %v3880
      %v3995 = vadd.f32 %v3653, %v3883
      %v3996 = vadd.f32 %v3654, %v3888
      %v3997 = vadd.f32 %v3655, %v3891
      %v3998 = vadd.f32 %v3656, %v3896
      %v3999 = vadd.f32 %v3657, %v3899
      %v4000 = vadd.f32 %v3658, %v3904
      %v4001 = vadd.f32 %v3659, %v3907
      %v4002 = vadd.f32 %v3660, %v3912
      %v4003 = vadd.f32 %v3661, %v3915
      %v4004 = vadd.f32 %v3662, %v3920
      %v4005 = vadd.f32 %v3663, %v3923
      %v4006 = vadd.f32 %v3664, %v3928
      %v4007 = vadd.f32 %v3665, %v3931
      %v4008 = vadd.f32 %v3666, %v3936
      %v4009 = vadd.f32 %v3667, %v3939
      %v4010 = vadd.f32 %v3668, %v3944
      %v4011 = vadd.f32 %v3669, %v3947
      %v4012 = vadd.f32 %v3670, %v3952
      %v4013 = vadd.f32 %v3671, %v3955
      %v4014 = vadd.f32 %v3672, %v3960
      %v4015 = vadd.f32 %v3673, %v3963
      %v4016 = vadd.f32 %v3674, %v3968
      %v4017 = vadd.f32 %v3675, %v3971
      %v4018 = vadd.f32 %v3676, %v3976
      %v4019 = vadd.f32 %v3677, %v3979
      %v4020 = vadd.f32 %v3678, %v3984
      %v4021 = vadd.f32 %v3679, %v3987
      %v4022 = vld [vmem:[%s2] sm:$0x1]
      %v4024 = vlaneseq
      %v4025 = vshrl.u32 %v4024, 7
      %v4026 = vsub.s32 0, %v4025
      %v4027 = vrot.slane %v4022, %v4026
      %v4029 = vadd.f32 %v3990, %v4027
      %v4030 = vadd.f32 %v3991, %v4027
      %v4031 = vadd.f32 %v3992, %v4027
      %v4032 = vadd.f32 %v3993, %v4027
      %v4033 = vadd.f32 %v3994, %v4027
      %v4034 = vadd.f32 %v3995, %v4027
      %v4035 = vadd.f32 %v3996, %v4027
      %v4036 = vadd.f32 %v3997, %v4027
      %v4037 = vadd.f32 %v3998, %v4027
      %v4038 = vadd.f32 %v3999, %v4027
      %v4039 = vadd.f32 %v4000, %v4027
      %v4040 = vadd.f32 %v4001, %v4027
      %v4041 = vadd.f32 %v4002, %v4027
      %v4042 = vadd.f32 %v4003, %v4027
      %v4043 = vadd.f32 %v4004, %v4027
      %v4044 = vadd.f32 %v4005, %v4027
      %v4045 = vadd.f32 %v4006, %v4027
      %v4046 = vadd.f32 %v4007, %v4027
      %v4047 = vadd.f32 %v4008, %v4027
      %v4048 = vadd.f32 %v4009, %v4027
      %v4049 = vadd.f32 %v4010, %v4027
      %v4050 = vadd.f32 %v4011, %v4027
      %v4051 = vadd.f32 %v4012, %v4027
      %v4052 = vadd.f32 %v4013, %v4027
      %v4053 = vadd.f32 %v4014, %v4027
      %v4054 = vadd.f32 %v4015, %v4027
      %v4055 = vadd.f32 %v4016, %v4027
      %v4056 = vadd.f32 %v4017, %v4027
      %v4057 = vadd.f32 %v4018, %v4027
      %v4058 = vadd.f32 %v4019, %v4027
      %v4059 = vadd.f32 %v4020, %v4027
      %v4060 = vadd.f32 %v4021, %v4027
      %v4061 = vmax.f32 %v4029, 0.0
      %v4062 = vmax.f32 %v4030, 0.0
      %v4063 = vmax.f32 %v4031, 0.0
      %v4064 = vmax.f32 %v4032, 0.0
      %v4065 = vmax.f32 %v4033, 0.0
      %v4066 = vmax.f32 %v4034, 0.0
      %v4067 = vmax.f32 %v4035, 0.0
      %v4068 = vmax.f32 %v4036, 0.0
      %v4069 = vmax.f32 %v4037, 0.0
      %v4070 = vmax.f32 %v4038, 0.0
      %v4071 = vmax.f32 %v4039, 0.0
      %v4072 = vmax.f32 %v4040, 0.0
      %v4073 = vmax.f32 %v4041, 0.0
      %v4074 = vmax.f32 %v4042, 0.0
      %v4075 = vmax.f32 %v4043, 0.0
      %v4076 = vmax.f32 %v4044, 0.0
      %v4077 = vmax.f32 %v4045, 0.0
      %v4078 = vmax.f32 %v4046, 0.0
      %v4079 = vmax.f32 %v4047, 0.0
      %v4080 = vmax.f32 %v4048, 0.0
      %v4081 = vmax.f32 %v4049, 0.0
      %v4082 = vmax.f32 %v4050, 0.0
      %v4083 = vmax.f32 %v4051, 0.0
      %v4084 = vmax.f32 %v4052, 0.0
      %v4085 = vmax.f32 %v4053, 0.0
      %v4086 = vmax.f32 %v4054, 0.0
      %v4087 = vmax.f32 %v4055, 0.0
      %v4088 = vmax.f32 %v4056, 0.0
      %v4089 = vmax.f32 %v4057, 0.0
      %v4090 = vmax.f32 %v4058, 0.0
      %v4091 = vmax.f32 %v4059, 0.0
      %v4092 = vmax.f32 %v4060, 0.0
      %v4093 = vpack.c.bf16 %v4062, %v4061
      %v4094 = vpack.c.bf16 %v4064, %v4063
      %v4095 = vpack.c.bf16 %v4066, %v4065
      %v4096 = vpack.c.bf16 %v4068, %v4067
      %v4097 = vpack.c.bf16 %v4070, %v4069
      %v4098 = vpack.c.bf16 %v4072, %v4071
      %v4099 = vpack.c.bf16 %v4074, %v4073
      %v4100 = vpack.c.bf16 %v4076, %v4075
      %v4101 = vpack.c.bf16 %v4078, %v4077
      %v4102 = vpack.c.bf16 %v4080, %v4079
      %v4103 = vpack.c.bf16 %v4082, %v4081
      %v4104 = vpack.c.bf16 %v4084, %v4083
      %v4105 = vpack.c.bf16 %v4086, %v4085
      %v4106 = vpack.c.bf16 %v4088, %v4087
      %v4107 = vpack.c.bf16 %v4090, %v4089
      %v4108 = vpack.c.bf16 %v4092, %v4091
      %v4110 = vshrl.u32 %v4093, 16
      %v4112 = vrot.slane %v4110, 7
      %v4113 = vshll.u32 %v4093, 16
      %v4115 = vor.u32 %v4112, %v4113
      %v4117 = vshrl.u32 %v4094, 16
      %v4119 = vrot.slane %v4117, 7
      %v4120 = vshll.u32 %v4094, 16
      %v4122 = vor.u32 %v4119, %v4120
      %v4124 = vshrl.u32 %v4095, 16
      %v4126 = vrot.slane %v4124, 7
      %v4127 = vshll.u32 %v4095, 16
      %v4129 = vor.u32 %v4126, %v4127
      %v4131 = vshrl.u32 %v4096, 16
      %v4133 = vrot.slane %v4131, 7
      %v4134 = vshll.u32 %v4096, 16
      %v4136 = vor.u32 %v4133, %v4134
      %v4138 = vshrl.u32 %v4097, 16
      %v4140 = vrot.slane %v4138, 7
      %v4141 = vshll.u32 %v4097, 16
      %v4143 = vor.u32 %v4140, %v4141
      %v4145 = vshrl.u32 %v4098, 16
      %v4147 = vrot.slane %v4145, 7
      %v4148 = vshll.u32 %v4098, 16
      %v4150 = vor.u32 %v4147, %v4148
      %v4152 = vshrl.u32 %v4099, 16
      %v4154 = vrot.slane %v4152, 7
      %v4155 = vshll.u32 %v4099, 16
      %v4157 = vor.u32 %v4154, %v4155
      %v4159 = vshrl.u32 %v4100, 16
      %v4161 = vrot.slane %v4159, 7
      %v4162 = vshll.u32 %v4100, 16
      %v4164 = vor.u32 %v4161, %v4162
      %v4166 = vshrl.u32 %v4101, 16
      %v4168 = vrot.slane %v4166, 7
      %v4169 = vshll.u32 %v4101, 16
      %v4171 = vor.u32 %v4168, %v4169
      %v4173 = vshrl.u32 %v4102, 16
      %v4175 = vrot.slane %v4173, 7
      %v4176 = vshll.u32 %v4102, 16
      %v4178 = vor.u32 %v4175, %v4176
      %v4180 = vshrl.u32 %v4103, 16
      %v4182 = vrot.slane %v4180, 7
      %v4183 = vshll.u32 %v4103, 16
      %v4185 = vor.u32 %v4182, %v4183
      %v4187 = vshrl.u32 %v4104, 16
      %v4189 = vrot.slane %v4187, 7
      %v4190 = vshll.u32 %v4104, 16
      %v4192 = vor.u32 %v4189, %v4190
      %v4194 = vshrl.u32 %v4105, 16
      %v4196 = vrot.slane %v4194, 7
      %v4197 = vshll.u32 %v4105, 16
      %v4199 = vor.u32 %v4196, %v4197
      %v4201 = vshrl.u32 %v4106, 16
      %v4203 = vrot.slane %v4201, 7
      %v4204 = vshll.u32 %v4106, 16
      %v4206 = vor.u32 %v4203, %v4204
      %v4208 = vshrl.u32 %v4107, 16
      %v4210 = vrot.slane %v4208, 7
      %v4211 = vshll.u32 %v4107, 16
      %v4213 = vor.u32 %v4210, %v4211
      %v4215 = vshrl.u32 %v4108, 16
      %v4217 = vrot.slane %v4215, 7
      %v4218 = vshll.u32 %v4108, 16
      %v4220 = vor.u32 %v4217, %v4218
      %vm4253 = vcmask 130048
      %vm4254 = vmand %vm4253, %vm338
      %v4255 = vld [vmem:[%s394] sm:$0xff]
      %v4256 = vsel %vm4254, %v4115, %v4255
      %4257 = vst [vmem:[%s394] sm:$0xff] %v4256
      %v4258 = vld [vmem:[%s394 + $0x8] sm:$0x1]
      %v4259 = vsel %vm396, %v4112, %v4258
      %4260 = vst [vmem:[%s394 + $0x8] sm:$0x1] %v4259
      %v4261 = vld [vmem:[%s394 + $0x10] sm:$0xff]
      %v4262 = vsel %vm4254, %v4122, %v4261
      %4263 = vst [vmem:[%s394 + $0x10] sm:$0xff] %v4262
      %v4264 = vld [vmem:[%s394 + $0x18] sm:$0x1]
      %v4265 = vsel %vm396, %v4119, %v4264
      %4266 = vst [vmem:[%s394 + $0x18] sm:$0x1] %v4265
      %v4267 = vld [vmem:[%s394 + $0x20] sm:$0xff]
      %v4268 = vsel %vm4254, %v4129, %v4267
      %4269 = vst [vmem:[%s394 + $0x20] sm:$0xff] %v4268
      %v4270 = vld [vmem:[%s394 + $0x28] sm:$0x1]
      %v4271 = vsel %vm396, %v4126, %v4270
      %4272 = vst [vmem:[%s394 + $0x28] sm:$0x1] %v4271
      %v4273 = vld [vmem:[%s394 + $0x30] sm:$0xff]
      %v4274 = vsel %vm4254, %v4136, %v4273
      %4275 = vst [vmem:[%s394 + $0x30] sm:$0xff] %v4274
      %v4276 = vld [vmem:[%s394 + $0x38] sm:$0x1]
      %v4277 = vsel %vm396, %v4133, %v4276
      %4278 = vst [vmem:[%s394 + $0x38] sm:$0x1] %v4277
      %v4279 = vld [vmem:[%s394 + $0x40] sm:$0xff]
      %v4280 = vsel %vm4254, %v4143, %v4279
      %4281 = vst [vmem:[%s394 + $0x40] sm:$0xff] %v4280
      %v4282 = vld [vmem:[%s394 + $0x48] sm:$0x1]
      %v4283 = vsel %vm396, %v4140, %v4282
      %4284 = vst [vmem:[%s394 + $0x48] sm:$0x1] %v4283
      %v4285 = vld [vmem:[%s394 + $0x50] sm:$0xff]
      %v4286 = vsel %vm4254, %v4150, %v4285
      %4287 = vst [vmem:[%s394 + $0x50] sm:$0xff] %v4286
      %v4288 = vld [vmem:[%s394 + $0x58] sm:$0x1]
      %v4289 = vsel %vm396, %v4147, %v4288
      %4290 = vst [vmem:[%s394 + $0x58] sm:$0x1] %v4289
      %v4291 = vld [vmem:[%s394 + $0x60] sm:$0xff]
      %v4292 = vsel %vm4254, %v4157, %v4291
      %4293 = vst [vmem:[%s394 + $0x60] sm:$0xff] %v4292
      %v4294 = vld [vmem:[%s394 + $0x68] sm:$0x1]
      %v4295 = vsel %vm396, %v4154, %v4294
      %4296 = vst [vmem:[%s394 + $0x68] sm:$0x1] %v4295
      %v4297 = vld [vmem:[%s394 + $0x70] sm:$0xff]
      %v4298 = vsel %vm4254, %v4164, %v4297
      %4299 = vst [vmem:[%s394 + $0x70] sm:$0xff] %v4298
      %v4300 = vld [vmem:[%s394 + $0x78] sm:$0x1]
      %v4301 = vsel %vm396, %v4161, %v4300
      %4302 = vst [vmem:[%s394 + $0x78] sm:$0x1] %v4301
      %v4303 = vld [vmem:[%s394 + $0x80] sm:$0xff]
      %v4304 = vsel %vm4254, %v4171, %v4303
      %4305 = vst [vmem:[%s394 + $0x80] sm:$0xff] %v4304
      %v4306 = vld [vmem:[%s394 + $0x88] sm:$0x1]
      %v4307 = vsel %vm396, %v4168, %v4306
      %4308 = vst [vmem:[%s394 + $0x88] sm:$0x1] %v4307
      %v4309 = vld [vmem:[%s394 + $0x90] sm:$0xff]
      %v4310 = vsel %vm4254, %v4178, %v4309
      %4311 = vst [vmem:[%s394 + $0x90] sm:$0xff] %v4310
      %v4312 = vld [vmem:[%s394 + $0x98] sm:$0x1]
      %v4313 = vsel %vm396, %v4175, %v4312
      %4314 = vst [vmem:[%s394 + $0x98] sm:$0x1] %v4313
      %v4315 = vld [vmem:[%s394 + $0xa0] sm:$0xff]
      %v4316 = vsel %vm4254, %v4185, %v4315
      %4317 = vst [vmem:[%s394 + $0xa0] sm:$0xff] %v4316
      %v4318 = vld [vmem:[%s394 + $0xa8] sm:$0x1]
      %v4319 = vsel %vm396, %v4182, %v4318
      %4320 = vst [vmem:[%s394 + $0xa8] sm:$0x1] %v4319
      %v4321 = vld [vmem:[%s394 + $0xb0] sm:$0xff]
      %v4322 = vsel %vm4254, %v4192, %v4321
      %4323 = vst [vmem:[%s394 + $0xb0] sm:$0xff] %v4322
      %v4324 = vld [vmem:[%s394 + $0xb8] sm:$0x1]
      %v4325 = vsel %vm396, %v4189, %v4324
      %4326 = vst [vmem:[%s394 + $0xb8] sm:$0x1] %v4325
      %v4327 = vld [vmem:[%s394 + $0xc0] sm:$0xff]
      %v4328 = vsel %vm4254, %v4199, %v4327
      %4329 = vst [vmem:[%s394 + $0xc0] sm:$0xff] %v4328
      %v4330 = vld [vmem:[%s394 + $0xc8] sm:$0x1]
      %v4331 = vsel %vm396, %v4196, %v4330
      %4332 = vst [vmem:[%s394 + $0xc8] sm:$0x1] %v4331
      %v4333 = vld [vmem:[%s394 + $0xd0] sm:$0xff]
      %v4334 = vsel %vm4254, %v4206, %v4333
      %4335 = vst [vmem:[%s394 + $0xd0] sm:$0xff] %v4334
      %v4336 = vld [vmem:[%s394 + $0xd8] sm:$0x1]
      %v4337 = vsel %vm396, %v4203, %v4336
      %4338 = vst [vmem:[%s394 + $0xd8] sm:$0x1] %v4337
      %v4339 = vld [vmem:[%s394 + $0xe0] sm:$0xff]
      %v4340 = vsel %vm4254, %v4213, %v4339
      %4341 = vst [vmem:[%s394 + $0xe0] sm:$0xff] %v4340
      %v4342 = vld [vmem:[%s394 + $0xe8] sm:$0x1]
      %v4343 = vsel %vm396, %v4210, %v4342
      %4344 = vst [vmem:[%s394 + $0xe8] sm:$0x1] %v4343
      %v4345 = vld [vmem:[%s394 + $0xf0] sm:$0xff]
      %v4346 = vsel %vm4254, %v4220, %v4345
      %4347 = vst [vmem:[%s394 + $0xf0] sm:$0xff] %v4346
      %v4348 = vld [vmem:[%s394 + $0xf8] sm:$0x1]
      %v4349 = vsel %vm396, %v4217, %v4348
      %4350 = vst [vmem:[%s394 + $0xf8] sm:$0x1] %v4349
      %v4351 = vld [vmem:[#allocation3] sm:$0xff]
      %v4352 = vld [vmem:[#allocation3 + $0x10] sm:$0xff]
      %v4353 = vld [vmem:[#allocation3 + $0x20] sm:$0xff]
      %v4354 = vld [vmem:[#allocation3 + $0x30] sm:$0xff]
      %v4355 = vld [vmem:[#allocation3 + $0x40] sm:$0xff]
      %v4356 = vld [vmem:[#allocation3 + $0x50] sm:$0xff]
      %v4357 = vld [vmem:[#allocation3 + $0x60] sm:$0xff]
      %v4358 = vld [vmem:[#allocation3 + $0x70] sm:$0xff]
      %v4359 = vld [vmem:[#allocation3 + $0x80] sm:$0xff]
      %v4360 = vld [vmem:[#allocation3 + $0x90] sm:$0xff]
      %v4361 = vld [vmem:[#allocation3 + $0xa0] sm:$0xff]
      %v4362 = vld [vmem:[#allocation3 + $0xb0] sm:$0xff]
      %v4363 = vld [vmem:[#allocation3 + $0xc0] sm:$0xff]
      %v4364 = vld [vmem:[#allocation3 + $0xd0] sm:$0xff]
      %v4365 = vld [vmem:[#allocation3 + $0xe0] sm:$0xff]
      %v4366 = vld [vmem:[#allocation3 + $0xf0] sm:$0xff]
      %v4367 = vld [vmem:[%s3] sm:$0xf]
      %v4368 = vld [vmem:[%s3 + $0x4] sm:$0xf]
      %v4369 = vld [vmem:[#allocation3 + $0x8] sm:$0x1]
      %v4370 = vld [vmem:[#allocation3 + $0x18] sm:$0x1]
      %v4371 = vld [vmem:[#allocation3 + $0x28] sm:$0x1]
      %v4372 = vld [vmem:[#allocation3 + $0x38] sm:$0x1]
      %v4373 = vld [vmem:[#allocation3 + $0x48] sm:$0x1]
      %v4374 = vld [vmem:[#allocation3 + $0x58] sm:$0x1]
      %v4375 = vld [vmem:[#allocation3 + $0x68] sm:$0x1]
      %v4376 = vld [vmem:[#allocation3 + $0x78] sm:$0x1]
      %v4377 = vld [vmem:[#allocation3 + $0x88] sm:$0x1]
      %v4378 = vld [vmem:[#allocation3 + $0x98] sm:$0x1]
      %v4379 = vld [vmem:[#allocation3 + $0xa8] sm:$0x1]
      %v4380 = vld [vmem:[#allocation3 + $0xb8] sm:$0x1]
      %v4381 = vld [vmem:[#allocation3 + $0xc8] sm:$0x1]
      %v4382 = vld [vmem:[#allocation3 + $0xd8] sm:$0x1]
      %v4383 = vld [vmem:[#allocation3 + $0xe8] sm:$0x1]
      %v4384 = vld [vmem:[#allocation3 + $0xf8] sm:$0x1]
      %v4386 = vshrl.u32 %v4351, 16
      %v4388 = vshll.u32 %v4351, 16
      %v4390 = vrot.slane %v4388, 1
      %v4391 = vor.u32 %v4386, %v4390
      %v4393 = vshll.u32 %v4369, 16
      %v4395 = vrot.slane %v4393, 1
      %v4396 = vsel %vm923, %v4391, %v4395
      %v4398 = vshrl.u32 %v4352, 16
      %v4400 = vshll.u32 %v4352, 16
      %v4402 = vrot.slane %v4400, 1
      %v4403 = vor.u32 %v4398, %v4402
      %v4405 = vshll.u32 %v4370, 16
      %v4407 = vrot.slane %v4405, 1
      %v4408 = vsel %vm923, %v4403, %v4407
      %v4410 = vshrl.u32 %v4353, 16
      %v4412 = vshll.u32 %v4353, 16
      %v4414 = vrot.slane %v4412, 1
      %v4415 = vor.u32 %v4410, %v4414
      %v4417 = vshll.u32 %v4371, 16
      %v4419 = vrot.slane %v4417, 1
      %v4420 = vsel %vm923, %v4415, %v4419
      %v4422 = vshrl.u32 %v4354, 16
      %v4424 = vshll.u32 %v4354, 16
      %v4426 = vrot.slane %v4424, 1
      %v4427 = vor.u32 %v4422, %v4426
      %v4429 = vshll.u32 %v4372, 16
      %v4431 = vrot.slane %v4429, 1
      %v4432 = vsel %vm923, %v4427, %v4431
      %v4434 = vshrl.u32 %v4355, 16
      %v4436 = vshll.u32 %v4355, 16
      %v4438 = vrot.slane %v4436, 1
      %v4439 = vor.u32 %v4434, %v4438
      %v4441 = vshll.u32 %v4373, 16
      %v4443 = vrot.slane %v4441, 1
      %v4444 = vsel %vm923, %v4439, %v4443
      %v4446 = vshrl.u32 %v4356, 16
      %v4448 = vshll.u32 %v4356, 16
      %v4450 = vrot.slane %v4448, 1
      %v4451 = vor.u32 %v4446, %v4450
      %v4453 = vshll.u32 %v4374, 16
      %v4455 = vrot.slane %v4453, 1
      %v4456 = vsel %vm923, %v4451, %v4455
      %v4458 = vshrl.u32 %v4357, 16
      %v4460 = vshll.u32 %v4357, 16
      %v4462 = vrot.slane %v4460, 1
      %v4463 = vor.u32 %v4458, %v4462
      %v4465 = vshll.u32 %v4375, 16
      %v4467 = vrot.slane %v4465, 1
      %v4468 = vsel %vm923, %v4463, %v4467
      %v4470 = vshrl.u32 %v4358, 16
      %v4472 = vshll.u32 %v4358, 16
      %v4474 = vrot.slane %v4472, 1
      %v4475 = vor.u32 %v4470, %v4474
      %v4477 = vshll.u32 %v4376, 16
      %v4479 = vrot.slane %v4477, 1
      %v4480 = vsel %vm923, %v4475, %v4479
      %v4482 = vshrl.u32 %v4359, 16
      %v4484 = vshll.u32 %v4359, 16
      %v4486 = vrot.slane %v4484, 1
      %v4487 = vor.u32 %v4482, %v4486
      %v4489 = vshll.u32 %v4377, 16
      %v4491 = vrot.slane %v4489, 1
      %v4492 = vsel %vm923, %v4487, %v4491
      %v4494 = vshrl.u32 %v4360, 16
      %v4496 = vshll.u32 %v4360, 16
      %v4498 = vrot.slane %v4496, 1
      %v4499 = vor.u32 %v4494, %v4498
      %v4501 = vshll.u32 %v4378, 16
      %v4503 = vrot.slane %v4501, 1
      %v4504 = vsel %vm923, %v4499, %v4503
      %v4506 = vshrl.u32 %v4361, 16
      %v4508 = vshll.u32 %v4361, 16
      %v4510 = vrot.slane %v4508, 1
      %v4511 = vor.u32 %v4506, %v4510
      %v4513 = vshll.u32 %v4379, 16
      %v4515 = vrot.slane %v4513, 1
      %v4516 = vsel %vm923, %v4511, %v4515
      %v4518 = vshrl.u32 %v4362, 16
      %v4520 = vshll.u32 %v4362, 16
      %v4522 = vrot.slane %v4520, 1
      %v4523 = vor.u32 %v4518, %v4522
      %v4525 = vshll.u32 %v4380, 16
      %v4527 = vrot.slane %v4525, 1
      %v4528 = vsel %vm923, %v4523, %v4527
      %v4530 = vshrl.u32 %v4363, 16
      %v4532 = vshll.u32 %v4363, 16
      %v4534 = vrot.slane %v4532, 1
      %v4535 = vor.u32 %v4530, %v4534
      %v4537 = vshll.u32 %v4381, 16
      %v4539 = vrot.slane %v4537, 1
      %v4540 = vsel %vm923, %v4535, %v4539
      %v4542 = vshrl.u32 %v4364, 16
      %v4544 = vshll.u32 %v4364, 16
      %v4546 = vrot.slane %v4544, 1
      %v4547 = vor.u32 %v4542, %v4546
      %v4549 = vshll.u32 %v4382, 16
      %v4551 = vrot.slane %v4549, 1
      %v4552 = vsel %vm923, %v4547, %v4551
      %v4554 = vshrl.u32 %v4365, 16
      %v4556 = vshll.u32 %v4365, 16
      %v4558 = vrot.slane %v4556, 1
      %v4559 = vor.u32 %v4554, %v4558
      %v4561 = vshll.u32 %v4383, 16
      %v4563 = vrot.slane %v4561, 1
      %v4564 = vsel %vm923, %v4559, %v4563
      %v4566 = vshrl.u32 %v4366, 16
      %v4568 = vshll.u32 %v4366, 16
      %v4570 = vrot.slane %v4568, 1
      %v4571 = vor.u32 %v4566, %v4570
      %v4573 = vshll.u32 %v4384, 16
      %v4575 = vrot.slane %v4573, 1
      %v4576 = vsel %vm923, %v4571, %v4575
      %s4577 = scalar_lea.vmem %s3, 8
      %v4578 = vld [vmem:[%s4577] sm:$0xf]
      %v4579 = vld [vmem:[%s4577 + $0x4] sm:$0xf]
      %v4582 = vunpack.c.l.b16 %v4578
      %v4583 = vunpack.c.l.b16 %v4579
      %v4584 = vpack.c.b16 %v4583, %v4582
      %v4587 = vsel %vm388, %v4396, 0
      %v4590 = vsel %vm388, %v4408, 0
      %v4593 = vsel %vm388, %v4420, 0
      %v4596 = vsel %vm388, %v4432, 0
      %v4599 = vsel %vm388, %v4444, 0
      %v4602 = vsel %vm388, %v4456, 0
      %v4605 = vsel %vm388, %v4468, 0
      %v4608 = vsel %vm388, %v4480, 0
      %v4611 = vsel %vm388, %v4492, 0
      %v4614 = vsel %vm388, %v4504, 0
      %v4617 = vsel %vm388, %v4516, 0
      %v4620 = vsel %vm388, %v4528, 0
      %v4623 = vsel %vm388, %v4540, 0
      %v4626 = vsel %vm388, %v4552, 0
      %v4629 = vsel %vm388, %v4564, 0
      %v4632 = vsel %vm388, %v4576, 0
      %4634 = vmatprep.subr.bf16.mxu0 0
      %4635 = vmatpush1.bf16.msra.mxu0 %v4584
      %4636 = vmatprep.subr.bf16.mxu0 0
      %4637 = vmatpush1.bf16.msra.mxu0 0
      %4638 = vmatprep.subr.bf16.mxu0 0
      %4639 = vmatpush1.bf16.msra.mxu0 0
      %4640 = vmatprep.subr.bf16.mxu0 0
      %4641 = vmatpush1.bf16.msra.mxu0 0
      %4642 = vmatprep.subr.bf16.mxu0 0
      %4643 = vmatpush1.bf16.msra.mxu0 0
      %4644 = vmatprep.subr.bf16.mxu0 0
      %4645 = vmatpush1.bf16.msra.mxu0 0
      %4646 = vmatprep.subr.bf16.mxu0 0
      %4647 = vmatpush1.bf16.msra.mxu0 0
      %4648 = vmatprep.subr.bf16.mxu0 0
      %4649 = vmatpush1.bf16.msra.mxu0 0
      %4650 = vmatprep.subr.bf16.mxu0 0
      %4651 = vmatpush1.bf16.msra.mxu0 0
      %4652 = vmatprep.subr.bf16.mxu0 0
      %4653 = vmatpush1.bf16.msra.mxu0 0
      %4654 = vmatprep.subr.bf16.mxu0 0
      %4655 = vmatpush1.bf16.msra.mxu0 0
      %4656 = vmatprep.subr.bf16.mxu0 0
      %4657 = vmatpush1.bf16.msra.mxu0 0
      %4658 = vmatprep.subr.bf16.mxu0 0
      %4659 = vmatpush1.bf16.msra.mxu0 0
      %4660 = vmatprep.subr.bf16.mxu0 0
      %4661 = vmatpush1.bf16.msra.mxu0 0
      %4662 = vmatprep.subr.bf16.mxu0 0
      %4663 = vmatpush1.bf16.msra.mxu0 0
      %4664 = vmatprep.subr.bf16.mxu0 0
      %4665 = vmatpush1.bf16.msra.mxu0 0
      %4666 = vmatprep.mubr.bf16.mxu0 0
      %4667 = vmatmul.mubr.bf16.gmra.mrb[0].mxu0 %v4587
      %v4668 = vpop.f32.mrb[0].mxu0
      %v4669 = vadd.f32 0.0, %v4668
      %v4670 = vpop.f32.mrb[0].mxu0
      %v4671 = vpop.f32.mrb[0].mxu0
      %v4672 = vadd.f32 0.0, %v4671
      %v4673 = vpop.f32.mrb[0].mxu0
      %4674 = vmatprep.mubr.bf16.mxu0 0
      %4675 = vmatmul.mubr.bf16.gmra.mrb[0].mxu0 %v4590
      %v4676 = vpop.f32.mrb[0].mxu0
      %v4677 = vadd.f32 0.0, %v4676
      %v4678 = vpop.f32.mrb[0].mxu0
      %v4679 = vpop.f32.mrb[0].mxu0
      %v4680 = vadd.f32 0.0, %v4679
      %v4681 = vpop.f32.mrb[0].mxu0
      %4682 = vmatprep.mubr.bf16.mxu0 0
      %4683 = vmatmul.mubr.bf16.gmra.mrb[0].mxu0 %v4593
      %v4684 = vpop.f32.mrb[0].mxu0
      %v4685 = vadd.f32 0.0, %v4684
      %v4686 = vpop.f32.mrb[0].mxu0
      %v4687 = vpop.f32.mrb[0].mxu0
      %v4688 = vadd.f32 0.0, %v4687
      %v4689 = vpop.f32.mrb[0].mxu0
      %4690 = vmatprep.mubr.bf16.mxu0 0
      %4691 = vmatmul.mubr.bf16.gmra.mrb[0].mxu0 %v4596
      %v4692 = vpop.f32.mrb[0].mxu0
      %v4693 = vadd.f32 0.0, %v4692
      %v4694 = vpop.f32.mrb[0].mxu0
      %v4695 = vpop.f32.mrb[0].mxu0
      %v4696 = vadd.f32 0.0, %v4695
      %v4697 = vpop.f32.mrb[0].mxu0
      %4698 = vmatprep.mubr.bf16.mxu0 0
      %4699 = vmatmul.mubr.bf16.gmra.mrb[0].mxu0 %v4599
      %v4700 = vpop.f32.mrb[0].mxu0
      %v4701 = vadd.f32 0.0, %v4700
      %v4702 = vpop.f32.mrb[0].mxu0
      %v4703 = vpop.f32.mrb[0].mxu0
      %v4704 = vadd.f32 0.0, %v4703
      %v4705 = vpop.f32.mrb[0].mxu0
      %4706 = vmatprep.mubr.bf16.mxu0 0
      %4707 = vmatmul.mubr.bf16.gmra.mrb[0].mxu0 %v4602
      %v4708 = vpop.f32.mrb[0].mxu0
      %v4709 = vadd.f32 0.0, %v4708
      %v4710 = vpop.f32.mrb[0].mxu0
      %v4711 = vpop.f32.mrb[0].mxu0
      %v4712 = vadd.f32 0.0, %v4711
      %v4713 = vpop.f32.mrb[0].mxu0
      %4714 = vmatprep.mubr.bf16.mxu0 0
      %4715 = vmatmul.mubr.bf16.gmra.mrb[0].mxu0 %v4605
      %v4716 = vpop.f32.mrb[0].mxu0
      %v4717 = vadd.f32 0.0, %v4716
      %v4718 = vpop.f32.mrb[0].mxu0
      %v4719 = vpop.f32.mrb[0].mxu0
      %v4720 = vadd.f32 0.0, %v4719
      %v4721 = vpop.f32.mrb[0].mxu0
      %4722 = vmatprep.mubr.bf16.mxu0 0
      %4723 = vmatmul.mubr.bf16.gmra.mrb[0].mxu0 %v4608
      %v4724 = vpop.f32.mrb[0].mxu0
      %v4725 = vadd.f32 0.0, %v4724
      %v4726 = vpop.f32.mrb[0].mxu0
      %v4727 = vpop.f32.mrb[0].mxu0
      %v4728 = vadd.f32 0.0, %v4727
      %v4729 = vpop.f32.mrb[0].mxu0
      %4730 = vmatprep.mubr.bf16.mxu0 0
      %4731 = vmatmul.mubr.bf16.gmra.mrb[0].mxu0 %v4611
      %v4732 = vpop.f32.mrb[0].mxu0
      %v4733 = vadd.f32 0.0, %v4732
      %v4734 = vpop.f32.mrb[0].mxu0
      %v4735 = vpop.f32.mrb[0].mxu0
      %v4736 = vadd.f32 0.0, %v4735
      %v4737 = vpop.f32.mrb[0].mxu0
      %4738 = vmatprep.mubr.bf16.mxu0 0
      %4739 = vmatmul.mubr.bf16.gmra.mrb[0].mxu0 %v4614
      %v4740 = vpop.f32.mrb[0].mxu0
      %v4741 = vadd.f32 0.0, %v4740
      %v4742 = vpop.f32.mrb[0].mxu0
      %v4743 = vpop.f32.mrb[0].mxu0
      %v4744 = vadd.f32 0.0, %v4743
      %v4745 = vpop.f32.mrb[0].mxu0
      %4746 = vmatprep.mubr.bf16.mxu0 0
      %4747 = vmatmul.mubr.bf16.gmra.mrb[0].mxu0 %v4617
      %v4748 = vpop.f32.mrb[0].mxu0
      %v4749 = vadd.f32 0.0, %v4748
      %v4750 = vpop.f32.mrb[0].mxu0
      %v4751 = vpop.f32.mrb[0].mxu0
      %v4752 = vadd.f32 0.0, %v4751
      %v4753 = vpop.f32.mrb[0].mxu0
      %4754 = vmatprep.mubr.bf16.mxu0 0
      %4755 = vmatmul.mubr.bf16.gmra.mrb[0].mxu0 %v4620
      %v4756 = vpop.f32.mrb[0].mxu0
      %v4757 = vadd.f32 0.0, %v4756
      %v4758 = vpop.f32.mrb[0].mxu0
      %v4759 = vpop.f32.mrb[0].mxu0
      %v4760 = vadd.f32 0.0, %v4759
      %v4761 = vpop.f32.mrb[0].mxu0
      %4762 = vmatprep.mubr.bf16.mxu0 0
      %4763 = vmatmul.mubr.bf16.gmra.mrb[0].mxu0 %v4623
      %v4764 = vpop.f32.mrb[0].mxu0
      %v4765 = vadd.f32 0.0, %v4764
      %v4766 = vpop.f32.mrb[0].mxu0
      %v4767 = vpop.f32.mrb[0].mxu0
      %v4768 = vadd.f32 0.0, %v4767
      %v4769 = vpop.f32.mrb[0].mxu0
      %4770 = vmatprep.mubr.bf16.mxu0 0
      %4771 = vmatmul.mubr.bf16.gmra.mrb[0].mxu0 %v4626
      %v4772 = vpop.f32.mrb[0].mxu0
      %v4773 = vadd.f32 0.0, %v4772
      %v4774 = vpop.f32.mrb[0].mxu0
      %v4775 = vpop.f32.mrb[0].mxu0
      %v4776 = vadd.f32 0.0, %v4775
      %v4777 = vpop.f32.mrb[0].mxu0
      %4778 = vmatprep.mubr.bf16.mxu0 0
      %4779 = vmatmul.mubr.bf16.gmra.mrb[0].mxu0 %v4629
      %v4780 = vpop.f32.mrb[0].mxu0
      %v4781 = vadd.f32 0.0, %v4780
      %v4782 = vpop.f32.mrb[0].mxu0
      %v4783 = vpop.f32.mrb[0].mxu0
      %v4784 = vadd.f32 0.0, %v4783
      %v4785 = vpop.f32.mrb[0].mxu0
      %4786 = vmatprep.mubr.bf16.mxu0 0
      %4787 = vmatmul.mubr.bf16.gmra.mrb[0].mxu0 %v4632
      %v4788 = vpop.f32.mrb[0].mxu0
      %v4789 = vadd.f32 0.0, %v4788
      %v4790 = vpop.f32.mrb[0].mxu0
      %v4791 = vpop.f32.mrb[0].mxu0
      %v4792 = vadd.f32 0.0, %v4791
      %v4793 = vpop.f32.mrb[0].mxu0
      %4794 = vdwg.mxu0
      %v4797 = vunpack.c.l.b16 %v4367
      %v4798 = vunpack.c.l.b16 %v4368
      %v4799 = vpack.c.b16 %v4798, %v4797
      %v4801 = vsel %vm388, %v4351, 0
      %v4803 = vsel %vm388, %v4352, 0
      %v4805 = vsel %vm388, %v4353, 0
      %v4807 = vsel %vm388, %v4354, 0
      %v4809 = vsel %vm388, %v4355, 0
      %v4811 = vsel %vm388, %v4356, 0
      %v4813 = vsel %vm388, %v4357, 0
      %v4815 = vsel %vm388, %v4358, 0
      %v4817 = vsel %vm388, %v4359, 0
      %v4819 = vsel %vm388, %v4360, 0
      %v4821 = vsel %vm388, %v4361, 0
      %v4823 = vsel %vm388, %v4362, 0
      %v4825 = vsel %vm388, %v4363, 0
      %v4827 = vsel %vm388, %v4364, 0
      %v4829 = vsel %vm388, %v4365, 0
      %v4831 = vsel %vm388, %v4366, 0
      %4833 = vmatprep.subr.bf16.mxu0 0
      %4834 = vmatpush1.bf16.msra.mxu0 %v4799
      %4835 = vmatprep.subr.bf16.mxu0 0
      %4836 = vmatpush1.bf16.msra.mxu0 0
      %4837 = vmatprep.subr.bf16.mxu0 0
      %4838 = vmatpush1.bf16.msra.mxu0 0
      %4839 = vmatprep.subr.bf16.mxu0 0
      %4840 = vmatpush1.bf16.msra.mxu0 0
      %4841 = vmatprep.subr.bf16.mxu0 0
      %4842 = vmatpush1.bf16.msra.mxu0 0
      %4843 = vmatprep.subr.bf16.mxu0 0
      %4844 = vmatpush1.bf16.msra.mxu0 0
      %4845 = vmatprep.subr.bf16.mxu0 0
      %4846 = vmatpush1.bf16.msra.mxu0 0
      %4847 = vmatprep.subr.bf16.mxu0 0
      %4848 = vmatpush1.bf16.msra.mxu0 0
      %4849 = vmatprep.subr.bf16.mxu0 0
      %4850 = vmatpush1.bf16.msra.mxu0 0
      %4851 = vmatprep.subr.bf16.mxu0 0
      %4852 = vmatpush1.bf16.msra.mxu0 0
      %4853 = vmatprep.subr.bf16.mxu0 0
      %4854 = vmatpush1.bf16.msra.mxu0 0
      %4855 = vmatprep.subr.bf16.mxu0 0
      %4856 = vmatpush1.bf16.msra.mxu0 0
      %4857 = vmatprep.subr.bf16.mxu0 0
      %4858 = vmatpush1.bf16.msra.mxu0 0
      %4859 = vmatprep.subr.bf16.mxu0 0
      %4860 = vmatpush1.bf16.msra.mxu0 0
      %4861 = vmatprep.subr.bf16.mxu0 0
      %4862 = vmatpush1.bf16.msra.mxu0 0
      %4863 = vmatprep.subr.bf16.mxu0 0
      %4864 = vmatpush1.bf16.msra.mxu0 0
      %4865 = vmatprep.mubr.bf16.mxu0 0
      %4866 = vmatmul.mubr.bf16.gmra.mrb[0].mxu0 %v4801
      %v4867 = vpop.f32.mrb[0].mxu0
      %v4868 = vadd.f32 %v4669, %v4867
      %v4869 = vpop.f32.mrb[0].mxu0
      %v4870 = vpop.f32.mrb[0].mxu0
      %v4871 = vadd.f32 %v4672, %v4870
      %v4872 = vpop.f32.mrb[0].mxu0
      %4873 = vmatprep.mubr.bf16.mxu0 0
      %4874 = vmatmul.mubr.bf16.gmra.mrb[0].mxu0 %v4803
      %v4875 = vpop.f32.mrb[0].mxu0
      %v4876 = vadd.f32 %v4677, %v4875
      %v4877 = vpop.f32.mrb[0].mxu0
      %v4878 = vpop.f32.mrb[0].mxu0
      %v4879 = vadd.f32 %v4680, %v4878
      %v4880 = vpop.f32.mrb[0].mxu0
      %4881 = vmatprep.mubr.bf16.mxu0 0
      %4882 = vmatmul.mubr.bf16.gmra.mrb[0].mxu0 %v4805
      %v4883 = vpop.f32.mrb[0].mxu0
      %v4884 = vadd.f32 %v4685, %v4883
      %v4885 = vpop.f32.mrb[0].mxu0
      %v4886 = vpop.f32.mrb[0].mxu0
      %v4887 = vadd.f32 %v4688, %v4886
      %v4888 = vpop.f32.mrb[0].mxu0
      %4889 = vmatprep.mubr.bf16.mxu0 0
      %4890 = vmatmul.mubr.bf16.gmra.mrb[0].mxu0 %v4807
      %v4891 = vpop.f32.mrb[0].mxu0
      %v4892 = vadd.f32 %v4693, %v4891
      %v4893 = vpop.f32.mrb[0].mxu0
      %v4894 = vpop.f32.mrb[0].mxu0
      %v4895 = vadd.f32 %v4696, %v4894
      %v4896 = vpop.f32.mrb[0].mxu0
      %4897 = vmatprep.mubr.bf16.mxu0 0
      %4898 = vmatmul.mubr.bf16.gmra.mrb[0].mxu0 %v4809
      %v4899 = vpop.f32.mrb[0].mxu0
      %v4900 = vadd.f32 %v4701, %v4899
      %v4901 = vpop.f32.mrb[0].mxu0
      %v4902 = vpop.f32.mrb[0].mxu0
      %v4903 = vadd.f32 %v4704, %v4902
      %v4904 = vpop.f32.mrb[0].mxu0
      %4905 = vmatprep.mubr.bf16.mxu0 0
      %4906 = vmatmul.mubr.bf16.gmra.mrb[0].mxu0 %v4811
      %v4907 = vpop.f32.mrb[0].mxu0
      %v4908 = vadd.f32 %v4709, %v4907
      %v4909 = vpop.f32.mrb[0].mxu0
      %v4910 = vpop.f32.mrb[0].mxu0
      %v4911 = vadd.f32 %v4712, %v4910
      %v4912 = vpop.f32.mrb[0].mxu0
      %4913 = vmatprep.mubr.bf16.mxu0 0
      %4914 = vmatmul.mubr.bf16.gmra.mrb[0].mxu0 %v4813
      %v4915 = vpop.f32.mrb[0].mxu0
      %v4916 = vadd.f32 %v4717, %v4915
      %v4917 = vpop.f32.mrb[0].mxu0
      %v4918 = vpop.f32.mrb[0].mxu0
      %v4919 = vadd.f32 %v4720, %v4918
      %v4920 = vpop.f32.mrb[0].mxu0
      %4921 = vmatprep.mubr.bf16.mxu0 0
      %4922 = vmatmul.mubr.bf16.gmra.mrb[0].mxu0 %v4815
      %v4923 = vpop.f32.mrb[0].mxu0
      %v4924 = vadd.f32 %v4725, %v4923
      %v4925 = vpop.f32.mrb[0].mxu0
      %v4926 = vpop.f32.mrb[0].mxu0
      %v4927 = vadd.f32 %v4728, %v4926
      %v4928 = vpop.f32.mrb[0].mxu0
      %4929 = vmatprep.mubr.bf16.mxu0 0
      %4930 = vmatmul.mubr.bf16.gmra.mrb[0].mxu0 %v4817
      %v4931 = vpop.f32.mrb[0].mxu0
      %v4932 = vadd.f32 %v4733, %v4931
      %v4933 = vpop.f32.mrb[0].mxu0
      %v4934 = vpop.f32.mrb[0].mxu0
      %v4935 = vadd.f32 %v4736, %v4934
      %v4936 = vpop.f32.mrb[0].mxu0
      %4937 = vmatprep.mubr.bf16.mxu0 0
      %4938 = vmatmul.mubr.bf16.gmra.mrb[0].mxu0 %v4819
      %v4939 = vpop.f32.mrb[0].mxu0
      %v4940 = vadd.f32 %v4741, %v4939
      %v4941 = vpop.f32.mrb[0].mxu0
      %v4942 = vpop.f32.mrb[0].mxu0
      %v4943 = vadd.f32 %v4744, %v4942
      %v4944 = vpop.f32.mrb[0].mxu0
      %4945 = vmatprep.mubr.bf16.mxu0 0
      %4946 = vmatmul.mubr.bf16.gmra.mrb[0].mxu0 %v4821
      %v4947 = vpop.f32.mrb[0].mxu0
      %v4948 = vadd.f32 %v4749, %v4947
      %v4949 = vpop.f32.mrb[0].mxu0
      %v4950 = vpop.f32.mrb[0].mxu0
      %v4951 = vadd.f32 %v4752, %v4950
      %v4952 = vpop.f32.mrb[0].mxu0
      %4953 = vmatprep.mubr.bf16.mxu0 0
      %4954 = vmatmul.mubr.bf16.gmra.mrb[0].mxu0 %v4823
      %v4955 = vpop.f32.mrb[0].mxu0
      %v4956 = vadd.f32 %v4757, %v4955
      %v4957 = vpop.f32.mrb[0].mxu0
      %v4958 = vpop.f32.mrb[0].mxu0
      %v4959 = vadd.f32 %v4760, %v4958
      %v4960 = vpop.f32.mrb[0].mxu0
      %4961 = vmatprep.mubr.bf16.mxu0 0
      %4962 = vmatmul.mubr.bf16.gmra.mrb[0].mxu0 %v4825
      %v4963 = vpop.f32.mrb[0].mxu0
      %v4964 = vadd.f32 %v4765, %v4963
      %v4965 = vpop.f32.mrb[0].mxu0
      %v4966 = vpop.f32.mrb[0].mxu0
      %v4967 = vadd.f32 %v4768, %v4966
      %v4968 = vpop.f32.mrb[0].mxu0
      %4969 = vmatprep.mubr.bf16.mxu0 0
      %4970 = vmatmul.mubr.bf16.gmra.mrb[0].mxu0 %v4827
      %v4971 = vpop.f32.mrb[0].mxu0
      %v4972 = vadd.f32 %v4773, %v4971
      %v4973 = vpop.f32.mrb[0].mxu0
      %v4974 = vpop.f32.mrb[0].mxu0
      %v4975 = vadd.f32 %v4776, %v4974
      %v4976 = vpop.f32.mrb[0].mxu0
      %4977 = vmatprep.mubr.bf16.mxu0 0
      %4978 = vmatmul.mubr.bf16.gmra.mrb[0].mxu0 %v4829
      %v4979 = vpop.f32.mrb[0].mxu0
      %v4980 = vadd.f32 %v4781, %v4979
      %v4981 = vpop.f32.mrb[0].mxu0
      %v4982 = vpop.f32.mrb[0].mxu0
      %v4983 = vadd.f32 %v4784, %v4982
      %v4984 = vpop.f32.mrb[0].mxu0
      %4985 = vmatprep.mubr.bf16.mxu0 0
      %4986 = vmatmul.mubr.bf16.gmra.mrb[0].mxu0 %v4831
      %v4987 = vpop.f32.mrb[0].mxu0
      %v4988 = vadd.f32 %v4789, %v4987
      %v4989 = vpop.f32.mrb[0].mxu0
      %v4990 = vpop.f32.mrb[0].mxu0
      %v4991 = vadd.f32 %v4792, %v4990
      %v4992 = vpop.f32.mrb[0].mxu0
      %4993 = vdwg.mxu0
      %v4994 = vld [vmem:[#allocation3] sm:$0xfe]
      %v4995 = vld [vmem:[#allocation3 + $0x10] sm:$0xfe]
      %v4996 = vld [vmem:[#allocation3 + $0x20] sm:$0xfe]
      %v4997 = vld [vmem:[#allocation3 + $0x30] sm:$0xfe]
      %v4998 = vld [vmem:[#allocation3 + $0x40] sm:$0xfe]
      %v4999 = vld [vmem:[#allocation3 + $0x50] sm:$0xfe]
      %v5000 = vld [vmem:[#allocation3 + $0x60] sm:$0xfe]
      %v5001 = vld [vmem:[#allocation3 + $0x70] sm:$0xfe]
      %v5002 = vld [vmem:[#allocation3 + $0x80] sm:$0xfe]
      %v5003 = vld [vmem:[#allocation3 + $0x90] sm:$0xfe]
      %v5004 = vld [vmem:[#allocation3 + $0xa0] sm:$0xfe]
      %v5005 = vld [vmem:[#allocation3 + $0xb0] sm:$0xfe]
      %v5006 = vld [vmem:[#allocation3 + $0xc0] sm:$0xfe]
      %v5007 = vld [vmem:[#allocation3 + $0xd0] sm:$0xfe]
      %v5008 = vld [vmem:[#allocation3 + $0xe0] sm:$0xfe]
      %v5009 = vld [vmem:[#allocation3 + $0xf0] sm:$0xfe]
      %v5042 = vrot.slane %v4994, 1
      %v5043 = vrot.slane %v4369, 1
      %v5044 = vsel %vm1578, %v5042, %v5043
      %v5045 = vrot.slane %v4995, 1
      %v5046 = vrot.slane %v4370, 1
      %v5047 = vsel %vm1578, %v5045, %v5046
      %v5048 = vrot.slane %v4996, 1
      %v5049 = vrot.slane %v4371, 1
      %v5050 = vsel %vm1578, %v5048, %v5049
      %v5051 = vrot.slane %v4997, 1
      %v5052 = vrot.slane %v4372, 1
      %v5053 = vsel %vm1578, %v5051, %v5052
      %v5054 = vrot.slane %v4998, 1
      %v5055 = vrot.slane %v4373, 1
      %v5056 = vsel %vm1578, %v5054, %v5055
      %v5057 = vrot.slane %v4999, 1
      %v5058 = vrot.slane %v4374, 1
      %v5059 = vsel %vm1578, %v5057, %v5058
      %v5060 = vrot.slane %v5000, 1
      %v5061 = vrot.slane %v4375, 1
      %v5062 = vsel %vm1578, %v5060, %v5061
      %v5063 = vrot.slane %v5001, 1
      %v5064 = vrot.slane %v4376, 1
      %v5065 = vsel %vm1578, %v5063, %v5064
      %v5066 = vrot.slane %v5002, 1
      %v5067 = vrot.slane %v4377, 1
      %v5068 = vsel %vm1578, %v5066, %v5067
      %v5069 = vrot.slane %v5003, 1
      %v5070 = vrot.slane %v4378, 1
      %v5071 = vsel %vm1578, %v5069, %v5070
      %v5072 = vrot.slane %v5004, 1
      %v5073 = vrot.slane %v4379, 1
      %v5074 = vsel %vm1578, %v5072, %v5073
      %v5075 = vrot.slane %v5005, 1
      %v5076 = vrot.slane %v4380, 1
      %v5077 = vsel %vm1578, %v5075, %v5076
      %v5078 = vrot.slane %v5006, 1
      %v5079 = vrot.slane %v4381, 1
      %v5080 = vsel %vm1578, %v5078, %v5079
      %v5081 = vrot.slane %v5007, 1
      %v5082 = vrot.slane %v4382, 1
      %v5083 = vsel %vm1578, %v5081, %v5082
      %v5084 = vrot.slane %v5008, 1
      %v5085 = vrot.slane %v4383, 1
      %v5086 = vsel %vm1578, %v5084, %v5085
      %v5087 = vrot.slane %v5009, 1
      %v5088 = vrot.slane %v4384, 1
      %v5089 = vsel %vm1578, %v5087, %v5088
      %s5090 = scalar_lea.vmem %s3, 16
      %v5091 = vld [vmem:[%s5090] sm:$0xf]
      %v5092 = vld [vmem:[%s5090 + $0x4] sm:$0xf]
      %v5095 = vunpack.c.l.b16 %v5091
      %v5096 = vunpack.c.l.b16 %v5092
      %v5097 = vpack.c.b16 %v5096, %v5095
      %v5100 = vsel %vm388, %v5044, 0
      %v5103 = vsel %vm388, %v5047, 0
      %v5106 = vsel %vm388, %v5050, 0
      %v5109 = vsel %vm388, %v5053, 0
      %v5112 = vsel %vm388, %v5056, 0
      %v5115 = vsel %vm388, %v5059, 0
      %v5118 = vsel %vm388, %v5062, 0
      %v5121 = vsel %vm388, %v5065, 0
      %v5124 = vsel %vm388, %v5068, 0
      %v5127 = vsel %vm388, %v5071, 0
      %v5130 = vsel %vm388, %v5074, 0
      %v5133 = vsel %vm388, %v5077, 0
      %v5136 = vsel %vm388, %v5080, 0
      %v5139 = vsel %vm388, %v5083, 0
      %v5142 = vsel %vm388, %v5086, 0
      %v5145 = vsel %vm388, %v5089, 0
      %5147 = vmatprep.subr.bf16.mxu0 0
      %5148 = vmatpush1.bf16.msra.mxu0 %v5097
      %5149 = vmatprep.subr.bf16.mxu0 0
      %5150 = vmatpush1.bf16.msra.mxu0 0
      %5151 = vmatprep.subr.bf16.mxu0 0
      %5152 = vmatpush1.bf16.msra.mxu0 0
      %5153 = vmatprep.subr.bf16.mxu0 0
      %5154 = vmatpush1.bf16.msra.mxu0 0
      %5155 = vmatprep.subr.bf16.mxu0 0
      %5156 = vmatpush1.bf16.msra.mxu0 0
      %5157 = vmatprep.subr.bf16.mxu0 0
      %5158 = vmatpush1.bf16.msra.mxu0 0
      %5159 = vmatprep.subr.bf16.mxu0 0
      %5160 = vmatpush1.bf16.msra.mxu0 0
      %5161 = vmatprep.subr.bf16.mxu0 0
      %5162 = vmatpush1.bf16.msra.mxu0 0
      %5163 = vmatprep.subr.bf16.mxu0 0
      %5164 = vmatpush1.bf16.msra.mxu0 0
      %5165 = vmatprep.subr.bf16.mxu0 0
      %5166 = vmatpush1.bf16.msra.mxu0 0
      %5167 = vmatprep.subr.bf16.mxu0 0
      %5168 = vmatpush1.bf16.msra.mxu0 0
      %5169 = vmatprep.subr.bf16.mxu0 0
      %5170 = vmatpush1.bf16.msra.mxu0 0
      %5171 = vmatprep.subr.bf16.mxu0 0
      %5172 = vmatpush1.bf16.msra.mxu0 0
      %5173 = vmatprep.subr.bf16.mxu0 0
      %5174 = vmatpush1.bf16.msra.mxu0 0
      %5175 = vmatprep.subr.bf16.mxu0 0
      %5176 = vmatpush1.bf16.msra.mxu0 0
      %5177 = vmatprep.subr.bf16.mxu0 0
      %5178 = vmatpush1.bf16.msra.mxu0 0
      %5179 = vmatprep.mubr.bf16.mxu0 0
      %5180 = vmatmul.mubr.bf16.gmra.mrb[0].mxu0 %v5100
      %v5181 = vpop.f32.mrb[0].mxu0
      %v5182 = vadd.f32 0.0, %v5181
      %v5183 = vpop.f32.mrb[0].mxu0
      %v5184 = vpop.f32.mrb[0].mxu0
      %v5185 = vadd.f32 0.0, %v5184
      %v5186 = vpop.f32.mrb[0].mxu0
      %5187 = vmatprep.mubr.bf16.mxu0 0
      %5188 = vmatmul.mubr.bf16.gmra.mrb[0].mxu0 %v5103
      %v5189 = vpop.f32.mrb[0].mxu0
      %v5190 = vadd.f32 0.0, %v5189
      %v5191 = vpop.f32.mrb[0].mxu0
      %v5192 = vpop.f32.mrb[0].mxu0
      %v5193 = vadd.f32 0.0, %v5192
      %v5194 = vpop.f32.mrb[0].mxu0
      %5195 = vmatprep.mubr.bf16.mxu0 0
      %5196 = vmatmul.mubr.bf16.gmra.mrb[0].mxu0 %v5106
      %v5197 = vpop.f32.mrb[0].mxu0
      %v5198 = vadd.f32 0.0, %v5197
      %v5199 = vpop.f32.mrb[0].mxu0
      %v5200 = vpop.f32.mrb[0].mxu0
      %v5201 = vadd.f32 0.0, %v5200
      %v5202 = vpop.f32.mrb[0].mxu0
      %5203 = vmatprep.mubr.bf16.mxu0 0
      %5204 = vmatmul.mubr.bf16.gmra.mrb[0].mxu0 %v5109
      %v5205 = vpop.f32.mrb[0].mxu0
      %v5206 = vadd.f32 0.0, %v5205
      %v5207 = vpop.f32.mrb[0].mxu0
      %v5208 = vpop.f32.mrb[0].mxu0
      %v5209 = vadd.f32 0.0, %v5208
      %v5210 = vpop.f32.mrb[0].mxu0
      %5211 = vmatprep.mubr.bf16.mxu0 0
      %5212 = vmatmul.mubr.bf16.gmra.mrb[0].mxu0 %v5112
      %v5213 = vpop.f32.mrb[0].mxu0
      %v5214 = vadd.f32 0.0, %v5213
      %v5215 = vpop.f32.mrb[0].mxu0
      %v5216 = vpop.f32.mrb[0].mxu0
      %v5217 = vadd.f32 0.0, %v5216
      %v5218 = vpop.f32.mrb[0].mxu0
      %5219 = vmatprep.mubr.bf16.mxu0 0
      %5220 = vmatmul.mubr.bf16.gmra.mrb[0].mxu0 %v5115
      %v5221 = vpop.f32.mrb[0].mxu0
      %v5222 = vadd.f32 0.0, %v5221
      %v5223 = vpop.f32.mrb[0].mxu0
      %v5224 = vpop.f32.mrb[0].mxu0
      %v5225 = vadd.f32 0.0, %v5224
      %v5226 = vpop.f32.mrb[0].mxu0
      %5227 = vmatprep.mubr.bf16.mxu0 0
      %5228 = vmatmul.mubr.bf16.gmra.mrb[0].mxu0 %v5118
      %v5229 = vpop.f32.mrb[0].mxu0
      %v5230 = vadd.f32 0.0, %v5229
      %v5231 = vpop.f32.mrb[0].mxu0
      %v5232 = vpop.f32.mrb[0].mxu0
      %v5233 = vadd.f32 0.0, %v5232
      %v5234 = vpop.f32.mrb[0].mxu0
      %5235 = vmatprep.mubr.bf16.mxu0 0
      %5236 = vmatmul.mubr.bf16.gmra.mrb[0].mxu0 %v5121
      %v5237 = vpop.f32.mrb[0].mxu0
      %v5238 = vadd.f32 0.0, %v5237
      %v5239 = vpop.f32.mrb[0].mxu0
      %v5240 = vpop.f32.mrb[0].mxu0
      %v5241 = vadd.f32 0.0, %v5240
      %v5242 = vpop.f32.mrb[0].mxu0
      %5243 = vmatprep.mubr.bf16.mxu0 0
      %5244 = vmatmul.mubr.bf16.gmra.mrb[0].mxu0 %v5124
      %v5245 = vpop.f32.mrb[0].mxu0
      %v5246 = vadd.f32 0.0, %v5245
      %v5247 = vpop.f32.mrb[0].mxu0
      %v5248 = vpop.f32.mrb[0].mxu0
      %v5249 = vadd.f32 0.0, %v5248
      %v5250 = vpop.f32.mrb[0].mxu0
      %5251 = vmatprep.mubr.bf16.mxu0 0
      %5252 = vmatmul.mubr.bf16.gmra.mrb[0].mxu0 %v5127
      %v5253 = vpop.f32.mrb[0].mxu0
      %v5254 = vadd.f32 0.0, %v5253
      %v5255 = vpop.f32.mrb[0].mxu0
      %v5256 = vpop.f32.mrb[0].mxu0
      %v5257 = vadd.f32 0.0, %v5256
      %v5258 = vpop.f32.mrb[0].mxu0
      %5259 = vmatprep.mubr.bf16.mxu0 0
      %5260 = vmatmul.mubr.bf16.gmra.mrb[0].mxu0 %v5130
      %v5261 = vpop.f32.mrb[0].mxu0
      %v5262 = vadd.f32 0.0, %v5261
      %v5263 = vpop.f32.mrb[0].mxu0
      %v5264 = vpop.f32.mrb[0].mxu0
      %v5265 = vadd.f32 0.0, %v5264
      %v5266 = vpop.f32.mrb[0].mxu0
      %5267 = vmatprep.mubr.bf16.mxu0 0
      %5268 = vmatmul.mubr.bf16.gmra.mrb[0].mxu0 %v5133
      %v5269 = vpop.f32.mrb[0].mxu0
      %v5270 = vadd.f32 0.0, %v5269
      %v5271 = vpop.f32.mrb[0].mxu0
      %v5272 = vpop.f32.mrb[0].mxu0
      %v5273 = vadd.f32 0.0, %v5272
      %v5274 = vpop.f32.mrb[0].mxu0
      %5275 = vmatprep.mubr.bf16.mxu0 0
      %5276 = vmatmul.mubr.bf16.gmra.mrb[0].mxu0 %v5136
      %v5277 = vpop.f32.mrb[0].mxu0
      %v5278 = vadd.f32 0.0, %v5277
      %v5279 = vpop.f32.mrb[0].mxu0
      %v5280 = vpop.f32.mrb[0].mxu0
      %v5281 = vadd.f32 0.0, %v5280
      %v5282 = vpop.f32.mrb[0].mxu0
      %5283 = vmatprep.mubr.bf16.mxu0 0
      %5284 = vmatmul.mubr.bf16.gmra.mrb[0].mxu0 %v5139
      %v5285 = vpop.f32.mrb[0].mxu0
      %v5286 = vadd.f32 0.0, %v5285
      %v5287 = vpop.f32.mrb[0].mxu0
      %v5288 = vpop.f32.mrb[0].mxu0
      %v5289 = vadd.f32 0.0, %v5288
      %v5290 = vpop.f32.mrb[0].mxu0
      %5291 = vmatprep.mubr.bf16.mxu0 0
      %5292 = vmatmul.mubr.bf16.gmra.mrb[0].mxu0 %v5142
      %v5293 = vpop.f32.mrb[0].mxu0
      %v5294 = vadd.f32 0.0, %v5293
      %v5295 = vpop.f32.mrb[0].mxu0
      %v5296 = vpop.f32.mrb[0].mxu0
      %v5297 = vadd.f32 0.0, %v5296
      %v5298 = vpop.f32.mrb[0].mxu0
      %5299 = vmatprep.mubr.bf16.mxu0 0
      %5300 = vmatmul.mubr.bf16.gmra.mrb[0].mxu0 %v5145
      %v5301 = vpop.f32.mrb[0].mxu0
      %v5302 = vadd.f32 0.0, %v5301
      %v5303 = vpop.f32.mrb[0].mxu0
      %v5304 = vpop.f32.mrb[0].mxu0
      %v5305 = vadd.f32 0.0, %v5304
      %v5306 = vpop.f32.mrb[0].mxu0
      %5307 = vdwg.mxu0
      %v5308 = vadd.f32 %v4868, %v5182
      %v5309 = vadd.f32 %v4871, %v5185
      %v5310 = vadd.f32 %v4876, %v5190
      %v5311 = vadd.f32 %v4879, %v5193
      %v5312 = vadd.f32 %v4884, %v5198
      %v5313 = vadd.f32 %v4887, %v5201
      %v5314 = vadd.f32 %v4892, %v5206
      %v5315 = vadd.f32 %v4895, %v5209
      %v5316 = vadd.f32 %v4900, %v5214
      %v5317 = vadd.f32 %v4903, %v5217
      %v5318 = vadd.f32 %v4908, %v5222
      %v5319 = vadd.f32 %v4911, %v5225
      %v5320 = vadd.f32 %v4916, %v5230
      %v5321 = vadd.f32 %v4919, %v5233
      %v5322 = vadd.f32 %v4924, %v5238
      %v5323 = vadd.f32 %v4927, %v5241
      %v5324 = vadd.f32 %v4932, %v5246
      %v5325 = vadd.f32 %v4935, %v5249
      %v5326 = vadd.f32 %v4940, %v5254
      %v5327 = vadd.f32 %v4943, %v5257
      %v5328 = vadd.f32 %v4948, %v5262
      %v5329 = vadd.f32 %v4951, %v5265
      %v5330 = vadd.f32 %v4956, %v5270
      %v5331 = vadd.f32 %v4959, %v5273
      %v5332 = vadd.f32 %v4964, %v5278
      %v5333 = vadd.f32 %v4967, %v5281
      %v5334 = vadd.f32 %v4972, %v5286
      %v5335 = vadd.f32 %v4975, %v5289
      %v5336 = vadd.f32 %v4980, %v5294
      %v5337 = vadd.f32 %v4983, %v5297
      %v5338 = vadd.f32 %v4988, %v5302
      %v5339 = vadd.f32 %v4991, %v5305
      %v5340 = vld [vmem:[%s394] sm:$0xff]
      %v5341 = vld [vmem:[%s394 + $0x10] sm:$0xff]
      %v5342 = vld [vmem:[%s394 + $0x20] sm:$0xff]
      %v5343 = vld [vmem:[%s394 + $0x30] sm:$0xff]
      %v5344 = vld [vmem:[%s394 + $0x40] sm:$0xff]
      %v5345 = vld [vmem:[%s394 + $0x50] sm:$0xff]
      %v5346 = vld [vmem:[%s394 + $0x60] sm:$0xff]
      %v5347 = vld [vmem:[%s394 + $0x70] sm:$0xff]
      %v5348 = vld [vmem:[%s394 + $0x80] sm:$0xff]
      %v5349 = vld [vmem:[%s394 + $0x90] sm:$0xff]
      %v5350 = vld [vmem:[%s394 + $0xa0] sm:$0xff]
      %v5351 = vld [vmem:[%s394 + $0xb0] sm:$0xff]
      %v5352 = vld [vmem:[%s394 + $0xc0] sm:$0xff]
      %v5353 = vld [vmem:[%s394 + $0xd0] sm:$0xff]
      %v5354 = vld [vmem:[%s394 + $0xe0] sm:$0xff]
      %v5355 = vld [vmem:[%s394 + $0xf0] sm:$0xff]
      %s5356 = scalar_lea.vmem %s3, 24
      %v5357 = vld [vmem:[%s5356] sm:$0xf]
      %v5358 = vld [vmem:[%s5356 + $0x4] sm:$0xf]
      %v5361 = vunpack.c.l.b16 %v5357
      %v5362 = vunpack.c.l.b16 %v5358
      %v5363 = vpack.c.b16 %v5362, %v5361
      %v5366 = vsel %vm388, %v5340, 0
      %v5369 = vsel %vm388, %v5341, 0
      %v5372 = vsel %vm388, %v5342, 0
      %v5375 = vsel %vm388, %v5343, 0
      %v5378 = vsel %vm388, %v5344, 0
      %v5381 = vsel %vm388, %v5345, 0
      %v5384 = vsel %vm388, %v5346, 0
      %v5387 = vsel %vm388, %v5347, 0
      %v5390 = vsel %vm388, %v5348, 0
      %v5393 = vsel %vm388, %v5349, 0
      %v5396 = vsel %vm388, %v5350, 0
      %v5399 = vsel %vm388, %v5351, 0
      %v5402 = vsel %vm388, %v5352, 0
      %v5405 = vsel %vm388, %v5353, 0
      %v5408 = vsel %vm388, %v5354, 0
      %v5411 = vsel %vm388, %v5355, 0
      %5413 = vmatprep.subr.bf16.mxu0 0
      %5414 = vmatpush1.bf16.msra.mxu0 %v5363
      %5415 = vmatprep.subr.bf16.mxu0 0
      %5416 = vmatpush1.bf16.msra.mxu0 0
      %5417 = vmatprep.subr.bf16.mxu0 0
      %5418 = vmatpush1.bf16.msra.mxu0 0
      %5419 = vmatprep.subr.bf16.mxu0 0
      %5420 = vmatpush1.bf16.msra.mxu0 0
      %5421 = vmatprep.subr.bf16.mxu0 0
      %5422 = vmatpush1.bf16.msra.mxu0 0
      %5423 = vmatprep.subr.bf16.mxu0 0
      %5424 = vmatpush1.bf16.msra.mxu0 0
      %5425 = vmatprep.subr.bf16.mxu0 0
      %5426 = vmatpush1.bf16.msra.mxu0 0
      %5427 = vmatprep.subr.bf16.mxu0 0
      %5428 = vmatpush1.bf16.msra.mxu0 0
      %5429 = vmatprep.subr.bf16.mxu0 0
      %5430 = vmatpush1.bf16.msra.mxu0 0
      %5431 = vmatprep.subr.bf16.mxu0 0
      %5432 = vmatpush1.bf16.msra.mxu0 0
      %5433 = vmatprep.subr.bf16.mxu0 0
      %5434 = vmatpush1.bf16.msra.mxu0 0
      %5435 = vmatprep.subr.bf16.mxu0 0
      %5436 = vmatpush1.bf16.msra.mxu0 0
      %5437 = vmatprep.subr.bf16.mxu0 0
      %5438 = vmatpush1.bf16.msra.mxu0 0
      %5439 = vmatprep.subr.bf16.mxu0 0
      %5440 = vmatpush1.bf16.msra.mxu0 0
      %5441 = vmatprep.subr.bf16.mxu0 0
      %5442 = vmatpush1.bf16.msra.mxu0 0
      %5443 = vmatprep.subr.bf16.mxu0 0
      %5444 = vmatpush1.bf16.msra.mxu0 0
      %5445 = vmatprep.mubr.bf16.mxu0 0
      %5446 = vmatmul.mubr.bf16.gmra.mrb[0].mxu0 %v5366
      %v5447 = vpop.f32.mrb[0].mxu0
      %v5448 = vadd.f32 0.0, %v5447
      %v5449 = vpop.f32.mrb[0].mxu0
      %v5450 = vpop.f32.mrb[0].mxu0
      %v5451 = vadd.f32 0.0, %v5450
      %v5452 = vpop.f32.mrb[0].mxu0
      %5453 = vmatprep.mubr.bf16.mxu0 0
      %5454 = vmatmul.mubr.bf16.gmra.mrb[0].mxu0 %v5369
      %v5455 = vpop.f32.mrb[0].mxu0
      %v5456 = vadd.f32 0.0, %v5455
      %v5457 = vpop.f32.mrb[0].mxu0
      %v5458 = vpop.f32.mrb[0].mxu0
      %v5459 = vadd.f32 0.0, %v5458
      %v5460 = vpop.f32.mrb[0].mxu0
      %5461 = vmatprep.mubr.bf16.mxu0 0
      %5462 = vmatmul.mubr.bf16.gmra.mrb[0].mxu0 %v5372
      %v5463 = vpop.f32.mrb[0].mxu0
      %v5464 = vadd.f32 0.0, %v5463
      %v5465 = vpop.f32.mrb[0].mxu0
      %v5466 = vpop.f32.mrb[0].mxu0
      %v5467 = vadd.f32 0.0, %v5466
      %v5468 = vpop.f32.mrb[0].mxu0
      %5469 = vmatprep.mubr.bf16.mxu0 0
      %5470 = vmatmul.mubr.bf16.gmra.mrb[0].mxu0 %v5375
      %v5471 = vpop.f32.mrb[0].mxu0
      %v5472 = vadd.f32 0.0, %v5471
      %v5473 = vpop.f32.mrb[0].mxu0
      %v5474 = vpop.f32.mrb[0].mxu0
      %v5475 = vadd.f32 0.0, %v5474
      %v5476 = vpop.f32.mrb[0].mxu0
      %5477 = vmatprep.mubr.bf16.mxu0 0
      %5478 = vmatmul.mubr.bf16.gmra.mrb[0].mxu0 %v5378
      %v5479 = vpop.f32.mrb[0].mxu0
      %v5480 = vadd.f32 0.0, %v5479
      %v5481 = vpop.f32.mrb[0].mxu0
      %v5482 = vpop.f32.mrb[0].mxu0
      %v5483 = vadd.f32 0.0, %v5482
      %v5484 = vpop.f32.mrb[0].mxu0
      %5485 = vmatprep.mubr.bf16.mxu0 0
      %5486 = vmatmul.mubr.bf16.gmra.mrb[0].mxu0 %v5381
      %v5487 = vpop.f32.mrb[0].mxu0
      %v5488 = vadd.f32 0.0, %v5487
      %v5489 = vpop.f32.mrb[0].mxu0
      %v5490 = vpop.f32.mrb[0].mxu0
      %v5491 = vadd.f32 0.0, %v5490
      %v5492 = vpop.f32.mrb[0].mxu0
      %5493 = vmatprep.mubr.bf16.mxu0 0
      %5494 = vmatmul.mubr.bf16.gmra.mrb[0].mxu0 %v5384
      %v5495 = vpop.f32.mrb[0].mxu0
      %v5496 = vadd.f32 0.0, %v5495
      %v5497 = vpop.f32.mrb[0].mxu0
      %v5498 = vpop.f32.mrb[0].mxu0
      %v5499 = vadd.f32 0.0, %v5498
      %v5500 = vpop.f32.mrb[0].mxu0
      %5501 = vmatprep.mubr.bf16.mxu0 0
      %5502 = vmatmul.mubr.bf16.gmra.mrb[0].mxu0 %v5387
      %v5503 = vpop.f32.mrb[0].mxu0
      %v5504 = vadd.f32 0.0, %v5503
      %v5505 = vpop.f32.mrb[0].mxu0
      %v5506 = vpop.f32.mrb[0].mxu0
      %v5507 = vadd.f32 0.0, %v5506
      %v5508 = vpop.f32.mrb[0].mxu0
      %5509 = vmatprep.mubr.bf16.mxu0 0
      %5510 = vmatmul.mubr.bf16.gmra.mrb[0].mxu0 %v5390
      %v5511 = vpop.f32.mrb[0].mxu0
      %v5512 = vadd.f32 0.0, %v5511
      %v5513 = vpop.f32.mrb[0].mxu0
      %v5514 = vpop.f32.mrb[0].mxu0
      %v5515 = vadd.f32 0.0, %v5514
      %v5516 = vpop.f32.mrb[0].mxu0
      %5517 = vmatprep.mubr.bf16.mxu0 0
      %5518 = vmatmul.mubr.bf16.gmra.mrb[0].mxu0 %v5393
      %v5519 = vpop.f32.mrb[0].mxu0
      %v5520 = vadd.f32 0.0, %v5519
      %v5521 = vpop.f32.mrb[0].mxu0
      %v5522 = vpop.f32.mrb[0].mxu0
      %v5523 = vadd.f32 0.0, %v5522
      %v5524 = vpop.f32.mrb[0].mxu0
      %5525 = vmatprep.mubr.bf16.mxu0 0
      %5526 = vmatmul.mubr.bf16.gmra.mrb[0].mxu0 %v5396
      %v5527 = vpop.f32.mrb[0].mxu0
      %v5528 = vadd.f32 0.0, %v5527
      %v5529 = vpop.f32.mrb[0].mxu0
      %v5530 = vpop.f32.mrb[0].mxu0
      %v5531 = vadd.f32 0.0, %v5530
      %v5532 = vpop.f32.mrb[0].mxu0
      %5533 = vmatprep.mubr.bf16.mxu0 0
      %5534 = vmatmul.mubr.bf16.gmra.mrb[0].mxu0 %v5399
      %v5535 = vpop.f32.mrb[0].mxu0
      %v5536 = vadd.f32 0.0, %v5535
      %v5537 = vpop.f32.mrb[0].mxu0
      %v5538 = vpop.f32.mrb[0].mxu0
      %v5539 = vadd.f32 0.0, %v5538
      %v5540 = vpop.f32.mrb[0].mxu0
      %5541 = vmatprep.mubr.bf16.mxu0 0
      %5542 = vmatmul.mubr.bf16.gmra.mrb[0].mxu0 %v5402
      %v5543 = vpop.f32.mrb[0].mxu0
      %v5544 = vadd.f32 0.0, %v5543
      %v5545 = vpop.f32.mrb[0].mxu0
      %v5546 = vpop.f32.mrb[0].mxu0
      %v5547 = vadd.f32 0.0, %v5546
      %v5548 = vpop.f32.mrb[0].mxu0
      %5549 = vmatprep.mubr.bf16.mxu0 0
      %5550 = vmatmul.mubr.bf16.gmra.mrb[0].mxu0 %v5405
      %v5551 = vpop.f32.mrb[0].mxu0
      %v5552 = vadd.f32 0.0, %v5551
      %v5553 = vpop.f32.mrb[0].mxu0
      %v5554 = vpop.f32.mrb[0].mxu0
      %v5555 = vadd.f32 0.0, %v5554
      %v5556 = vpop.f32.mrb[0].mxu0
      %5557 = vmatprep.mubr.bf16.mxu0 0
      %5558 = vmatmul.mubr.bf16.gmra.mrb[0].mxu0 %v5408
      %v5559 = vpop.f32.mrb[0].mxu0
      %v5560 = vadd.f32 0.0, %v5559
      %v5561 = vpop.f32.mrb[0].mxu0
      %v5562 = vpop.f32.mrb[0].mxu0
      %v5563 = vadd.f32 0.0, %v5562
      %v5564 = vpop.f32.mrb[0].mxu0
      %5565 = vmatprep.mubr.bf16.mxu0 0
      %5566 = vmatmul.mubr.bf16.gmra.mrb[0].mxu0 %v5411
      %v5567 = vpop.f32.mrb[0].mxu0
      %v5568 = vadd.f32 0.0, %v5567
      %v5569 = vpop.f32.mrb[0].mxu0
      %v5570 = vpop.f32.mrb[0].mxu0
      %v5571 = vadd.f32 0.0, %v5570
      %v5572 = vpop.f32.mrb[0].mxu0
      %5573 = vdwg.mxu0
      %v5574 = vadd.f32 %v5308, %v5448
      %v5575 = vadd.f32 %v5309, %v5451
      %v5576 = vadd.f32 %v5310, %v5456
      %v5577 = vadd.f32 %v5311, %v5459
      %v5578 = vadd.f32 %v5312, %v5464
      %v5579 = vadd.f32 %v5313, %v5467
      %v5580 = vadd.f32 %v5314, %v5472
      %v5581 = vadd.f32 %v5315, %v5475
      %v5582 = vadd.f32 %v5316, %v5480
      %v5583 = vadd.f32 %v5317, %v5483
      %v5584 = vadd.f32 %v5318, %v5488
      %v5585 = vadd.f32 %v5319, %v5491
      %v5586 = vadd.f32 %v5320, %v5496
      %v5587 = vadd.f32 %v5321, %v5499
      %v5588 = vadd.f32 %v5322, %v5504
      %v5589 = vadd.f32 %v5323, %v5507
      %v5590 = vadd.f32 %v5324, %v5512
      %v5591 = vadd.f32 %v5325, %v5515
      %v5592 = vadd.f32 %v5326, %v5520
      %v5593 = vadd.f32 %v5327, %v5523
      %v5594 = vadd.f32 %v5328, %v5528
      %v5595 = vadd.f32 %v5329, %v5531
      %v5596 = vadd.f32 %v5330, %v5536
      %v5597 = vadd.f32 %v5331, %v5539
      %v5598 = vadd.f32 %v5332, %v5544
      %v5599 = vadd.f32 %v5333, %v5547
      %v5600 = vadd.f32 %v5334, %v5552
      %v5601 = vadd.f32 %v5335, %v5555
      %v5602 = vadd.f32 %v5336, %v5560
      %v5603 = vadd.f32 %v5337, %v5563
      %v5604 = vadd.f32 %v5338, %v5568
      %v5605 = vadd.f32 %v5339, %v5571
      %v5606 = vld [vmem:[%s394] sm:$0xff]
      %v5607 = vld [vmem:[%s394 + $0x8] sm:$0x1]
      %v5608 = vld [vmem:[%s394 + $0x10] sm:$0xff]
      %v5609 = vld [vmem:[%s394 + $0x18] sm:$0x1]
      %v5610 = vld [vmem:[%s394 + $0x20] sm:$0xff]
      %v5611 = vld [vmem:[%s394 + $0x28] sm:$0x1]
      %v5612 = vld [vmem:[%s394 + $0x30] sm:$0xff]
      %v5613 = vld [vmem:[%s394 + $0x38] sm:$0x1]
      %v5614 = vld [vmem:[%s394 + $0x40] sm:$0xff]
      %v5615 = vld [vmem:[%s394 + $0x48] sm:$0x1]
      %v5616 = vld [vmem:[%s394 + $0x50] sm:$0xff]
      %v5617 = vld [vmem:[%s394 + $0x58] sm:$0x1]
      %v5618 = vld [vmem:[%s394 + $0x60] sm:$0xff]
      %v5619 = vld [vmem:[%s394 + $0x68] sm:$0x1]
      %v5620 = vld [vmem:[%s394 + $0x70] sm:$0xff]
      %v5621 = vld [vmem:[%s394 + $0x78] sm:$0x1]
      %v5622 = vld [vmem:[%s394 + $0x80] sm:$0xff]
      %v5623 = vld [vmem:[%s394 + $0x88] sm:$0x1]
      %v5624 = vld [vmem:[%s394 + $0x90] sm:$0xff]
      %v5625 = vld [vmem:[%s394 + $0x98] sm:$0x1]
      %v5626 = vld [vmem:[%s394 + $0xa0] sm:$0xff]
      %v5627 = vld [vmem:[%s394 + $0xa8] sm:$0x1]
      %v5628 = vld [vmem:[%s394 + $0xb0] sm:$0xff]
      %v5629 = vld [vmem:[%s394 + $0xb8] sm:$0x1]
      %v5630 = vld [vmem:[%s394 + $0xc0] sm:$0xff]
      %v5631 = vld [vmem:[%s394 + $0xc8] sm:$0x1]
      %v5632 = vld [vmem:[%s394 + $0xd0] sm:$0xff]
      %v5633 = vld [vmem:[%s394 + $0xd8] sm:$0x1]
      %v5634 = vld [vmem:[%s394 + $0xe0] sm:$0xff]
      %v5635 = vld [vmem:[%s394 + $0xe8] sm:$0x1]
      %v5636 = vld [vmem:[%s394 + $0xf0] sm:$0xff]
      %v5637 = vld [vmem:[%s394 + $0xf8] sm:$0x1]
      %v5639 = vshrl.u32 %v5606, 16
      %v5641 = vshll.u32 %v5606, 16
      %v5643 = vrot.slane %v5641, 1
      %v5644 = vor.u32 %v5639, %v5643
      %v5646 = vshll.u32 %v5607, 16
      %v5648 = vrot.slane %v5646, 1
      %v5649 = vsel %vm923, %v5644, %v5648
      %v5651 = vshrl.u32 %v5608, 16
      %v5653 = vshll.u32 %v5608, 16
      %v5655 = vrot.slane %v5653, 1
      %v5656 = vor.u32 %v5651, %v5655
      %v5658 = vshll.u32 %v5609, 16
      %v5660 = vrot.slane %v5658, 1
      %v5661 = vsel %vm923, %v5656, %v5660
      %v5663 = vshrl.u32 %v5610, 16
      %v5665 = vshll.u32 %v5610, 16
      %v5667 = vrot.slane %v5665, 1
      %v5668 = vor.u32 %v5663, %v5667
      %v5670 = vshll.u32 %v5611, 16
      %v5672 = vrot.slane %v5670, 1
      %v5673 = vsel %vm923, %v5668, %v5672
      %v5675 = vshrl.u32 %v5612, 16
      %v5677 = vshll.u32 %v5612, 16
      %v5679 = vrot.slane %v5677, 1
      %v5680 = vor.u32 %v5675, %v5679
      %v5682 = vshll.u32 %v5613, 16
      %v5684 = vrot.slane %v5682, 1
      %v5685 = vsel %vm923, %v5680, %v5684
      %v5687 = vshrl.u32 %v5614, 16
      %v5689 = vshll.u32 %v5614, 16
      %v5691 = vrot.slane %v5689, 1
      %v5692 = vor.u32 %v5687, %v5691
      %v5694 = vshll.u32 %v5615, 16
      %v5696 = vrot.slane %v5694, 1
      %v5697 = vsel %vm923, %v5692, %v5696
      %v5699 = vshrl.u32 %v5616, 16
      %v5701 = vshll.u32 %v5616, 16
      %v5703 = vrot.slane %v5701, 1
      %v5704 = vor.u32 %v5699, %v5703
      %v5706 = vshll.u32 %v5617, 16
      %v5708 = vrot.slane %v5706, 1
      %v5709 = vsel %vm923, %v5704, %v5708
      %v5711 = vshrl.u32 %v5618, 16
      %v5713 = vshll.u32 %v5618, 16
      %v5715 = vrot.slane %v5713, 1
      %v5716 = vor.u32 %v5711, %v5715
      %v5718 = vshll.u32 %v5619, 16
      %v5720 = vrot.slane %v5718, 1
      %v5721 = vsel %vm923, %v5716, %v5720
      %v5723 = vshrl.u32 %v5620, 16
      %v5725 = vshll.u32 %v5620, 16
      %v5727 = vrot.slane %v5725, 1
      %v5728 = vor.u32 %v5723, %v5727
      %v5730 = vshll.u32 %v5621, 16
      %v5732 = vrot.slane %v5730, 1
      %v5733 = vsel %vm923, %v5728, %v5732
      %v5735 = vshrl.u32 %v5622, 16
      %v5737 = vshll.u32 %v5622, 16
      %v5739 = vrot.slane %v5737, 1
      %v5740 = vor.u32 %v5735, %v5739
      %v5742 = vshll.u32 %v5623, 16
      %v5744 = vrot.slane %v5742, 1
      %v5745 = vsel %vm923, %v5740, %v5744
      %v5747 = vshrl.u32 %v5624, 16
      %v5749 = vshll.u32 %v5624, 16
      %v5751 = vrot.slane %v5749, 1
      %v5752 = vor.u32 %v5747, %v5751
      %v5754 = vshll.u32 %v5625, 16
      %v5756 = vrot.slane %v5754, 1
      %v5757 = vsel %vm923, %v5752, %v5756
      %v5759 = vshrl.u32 %v5626, 16
      %v5761 = vshll.u32 %v5626, 16
      %v5763 = vrot.slane %v5761, 1
      %v5764 = vor.u32 %v5759, %v5763
      %v5766 = vshll.u32 %v5627, 16
      %v5768 = vrot.slane %v5766, 1
      %v5769 = vsel %vm923, %v5764, %v5768
      %v5771 = vshrl.u32 %v5628, 16
      %v5773 = vshll.u32 %v5628, 16
      %v5775 = vrot.slane %v5773, 1
      %v5776 = vor.u32 %v5771, %v5775
      %v5778 = vshll.u32 %v5629, 16
      %v5780 = vrot.slane %v5778, 1
      %v5781 = vsel %vm923, %v5776, %v5780
      %v5783 = vshrl.u32 %v5630, 16
      %v5785 = vshll.u32 %v5630, 16
      %v5787 = vrot.slane %v5785, 1
      %v5788 = vor.u32 %v5783, %v5787
      %v5790 = vshll.u32 %v5631, 16
      %v5792 = vrot.slane %v5790, 1
      %v5793 = vsel %vm923, %v5788, %v5792
      %v5795 = vshrl.u32 %v5632, 16
      %v5797 = vshll.u32 %v5632, 16
      %v5799 = vrot.slane %v5797, 1
      %v5800 = vor.u32 %v5795, %v5799
      %v5802 = vshll.u32 %v5633, 16
      %v5804 = vrot.slane %v5802, 1
      %v5805 = vsel %vm923, %v5800, %v5804
      %v5807 = vshrl.u32 %v5634, 16
      %v5809 = vshll.u32 %v5634, 16
      %v5811 = vrot.slane %v5809, 1
      %v5812 = vor.u32 %v5807, %v5811
      %v5814 = vshll.u32 %v5635, 16
      %v5816 = vrot.slane %v5814, 1
      %v5817 = vsel %vm923, %v5812, %v5816
      %v5819 = vshrl.u32 %v5636, 16
      %v5821 = vshll.u32 %v5636, 16
      %v5823 = vrot.slane %v5821, 1
      %v5824 = vor.u32 %v5819, %v5823
      %v5826 = vshll.u32 %v5637, 16
      %v5828 = vrot.slane %v5826, 1
      %v5829 = vsel %vm923, %v5824, %v5828
      %s5830 = scalar_lea.vmem %s3, 32
      %v5831 = vld [vmem:[%s5830] sm:$0xf]
      %v5832 = vld [vmem:[%s5830 + $0x4] sm:$0xf]
      %v5835 = vunpack.c.l.b16 %v5831
      %v5836 = vunpack.c.l.b16 %v5832
      %v5837 = vpack.c.b16 %v5836, %v5835
      %v5840 = vsel %vm388, %v5649, 0
      %v5843 = vsel %vm388, %v5661, 0
      %v5846 = vsel %vm388, %v5673, 0
      %v5849 = vsel %vm388, %v5685, 0
      %v5852 = vsel %vm388, %v5697, 0
      %v5855 = vsel %vm388, %v5709, 0
      %v5858 = vsel %vm388, %v5721, 0
      %v5861 = vsel %vm388, %v5733, 0
      %v5864 = vsel %vm388, %v5745, 0
      %v5867 = vsel %vm388, %v5757, 0
      %v5870 = vsel %vm388, %v5769, 0
      %v5873 = vsel %vm388, %v5781, 0
      %v5876 = vsel %vm388, %v5793, 0
      %v5879 = vsel %vm388, %v5805, 0
      %v5882 = vsel %vm388, %v5817, 0
      %v5885 = vsel %vm388, %v5829, 0
      %5887 = vmatprep.subr.bf16.mxu0 0
      %5888 = vmatpush1.bf16.msra.mxu0 %v5837
      %5889 = vmatprep.subr.bf16.mxu0 0
      %5890 = vmatpush1.bf16.msra.mxu0 0
      %5891 = vmatprep.subr.bf16.mxu0 0
      %5892 = vmatpush1.bf16.msra.mxu0 0
      %5893 = vmatprep.subr.bf16.mxu0 0
      %5894 = vmatpush1.bf16.msra.mxu0 0
      %5895 = vmatprep.subr.bf16.mxu0 0
      %5896 = vmatpush1.bf16.msra.mxu0 0
      %5897 = vmatprep.subr.bf16.mxu0 0
      %5898 = vmatpush1.bf16.msra.mxu0 0
      %5899 = vmatprep.subr.bf16.mxu0 0
      %5900 = vmatpush1.bf16.msra.mxu0 0
      %5901 = vmatprep.subr.bf16.mxu0 0
      %5902 = vmatpush1.bf16.msra.mxu0 0
      %5903 = vmatprep.subr.bf16.mxu0 0
      %5904 = vmatpush1.bf16.msra.mxu0 0
      %5905 = vmatprep.subr.bf16.mxu0 0
      %5906 = vmatpush1.bf16.msra.mxu0 0
      %5907 = vmatprep.subr.bf16.mxu0 0
      %5908 = vmatpush1.bf16.msra.mxu0 0
      %5909 = vmatprep.subr.bf16.mxu0 0
      %5910 = vmatpush1.bf16.msra.mxu0 0
      %5911 = vmatprep.subr.bf16.mxu0 0
      %5912 = vmatpush1.bf16.msra.mxu0 0
      %5913 = vmatprep.subr.bf16.mxu0 0
      %5914 = vmatpush1.bf16.msra.mxu0 0
      %5915 = vmatprep.subr.bf16.mxu0 0
      %5916 = vmatpush1.bf16.msra.mxu0 0
      %5917 = vmatprep.subr.bf16.mxu0 0
      %5918 = vmatpush1.bf16.msra.mxu0 0
      %5919 = vmatprep.mubr.bf16.mxu0 0
      %5920 = vmatmul.mubr.bf16.gmra.mrb[0].mxu0 %v5840
      %v5921 = vpop.f32.mrb[0].mxu0
      %v5922 = vadd.f32 0.0, %v5921
      %v5923 = vpop.f32.mrb[0].mxu0
      %v5924 = vpop.f32.mrb[0].mxu0
      %v5925 = vadd.f32 0.0, %v5924
      %v5926 = vpop.f32.mrb[0].mxu0
      %5927 = vmatprep.mubr.bf16.mxu0 0
      %5928 = vmatmul.mubr.bf16.gmra.mrb[0].mxu0 %v5843
      %v5929 = vpop.f32.mrb[0].mxu0
      %v5930 = vadd.f32 0.0, %v5929
      %v5931 = vpop.f32.mrb[0].mxu0
      %v5932 = vpop.f32.mrb[0].mxu0
      %v5933 = vadd.f32 0.0, %v5932
      %v5934 = vpop.f32.mrb[0].mxu0
      %5935 = vmatprep.mubr.bf16.mxu0 0
      %5936 = vmatmul.mubr.bf16.gmra.mrb[0].mxu0 %v5846
      %v5937 = vpop.f32.mrb[0].mxu0
      %v5938 = vadd.f32 0.0, %v5937
      %v5939 = vpop.f32.mrb[0].mxu0
      %v5940 = vpop.f32.mrb[0].mxu0
      %v5941 = vadd.f32 0.0, %v5940
      %v5942 = vpop.f32.mrb[0].mxu0
      %5943 = vmatprep.mubr.bf16.mxu0 0
      %5944 = vmatmul.mubr.bf16.gmra.mrb[0].mxu0 %v5849
      %v5945 = vpop.f32.mrb[0].mxu0
      %v5946 = vadd.f32 0.0, %v5945
      %v5947 = vpop.f32.mrb[0].mxu0
      %v5948 = vpop.f32.mrb[0].mxu0
      %v5949 = vadd.f32 0.0, %v5948
      %v5950 = vpop.f32.mrb[0].mxu0
      %5951 = vmatprep.mubr.bf16.mxu0 0
      %5952 = vmatmul.mubr.bf16.gmra.mrb[0].mxu0 %v5852
      %v5953 = vpop.f32.mrb[0].mxu0
      %v5954 = vadd.f32 0.0, %v5953
      %v5955 = vpop.f32.mrb[0].mxu0
      %v5956 = vpop.f32.mrb[0].mxu0
      %v5957 = vadd.f32 0.0, %v5956
      %v5958 = vpop.f32.mrb[0].mxu0
      %5959 = vmatprep.mubr.bf16.mxu0 0
      %5960 = vmatmul.mubr.bf16.gmra.mrb[0].mxu0 %v5855
      %v5961 = vpop.f32.mrb[0].mxu0
      %v5962 = vadd.f32 0.0, %v5961
      %v5963 = vpop.f32.mrb[0].mxu0
      %v5964 = vpop.f32.mrb[0].mxu0
      %v5965 = vadd.f32 0.0, %v5964
      %v5966 = vpop.f32.mrb[0].mxu0
      %5967 = vmatprep.mubr.bf16.mxu0 0
      %5968 = vmatmul.mubr.bf16.gmra.mrb[0].mxu0 %v5858
      %v5969 = vpop.f32.mrb[0].mxu0
      %v5970 = vadd.f32 0.0, %v5969
      %v5971 = vpop.f32.mrb[0].mxu0
      %v5972 = vpop.f32.mrb[0].mxu0
      %v5973 = vadd.f32 0.0, %v5972
      %v5974 = vpop.f32.mrb[0].mxu0
      %5975 = vmatprep.mubr.bf16.mxu0 0
      %5976 = vmatmul.mubr.bf16.gmra.mrb[0].mxu0 %v5861
      %v5977 = vpop.f32.mrb[0].mxu0
      %v5978 = vadd.f32 0.0, %v5977
      %v5979 = vpop.f32.mrb[0].mxu0
      %v5980 = vpop.f32.mrb[0].mxu0
      %v5981 = vadd.f32 0.0, %v5980
      %v5982 = vpop.f32.mrb[0].mxu0
      %5983 = vmatprep.mubr.bf16.mxu0 0
      %5984 = vmatmul.mubr.bf16.gmra.mrb[0].mxu0 %v5864
      %v5985 = vpop.f32.mrb[0].mxu0
      %v5986 = vadd.f32 0.0, %v5985
      %v5987 = vpop.f32.mrb[0].mxu0
      %v5988 = vpop.f32.mrb[0].mxu0
      %v5989 = vadd.f32 0.0, %v5988
      %v5990 = vpop.f32.mrb[0].mxu0
      %5991 = vmatprep.mubr.bf16.mxu0 0
      %5992 = vmatmul.mubr.bf16.gmra.mrb[0].mxu0 %v5867
      %v5993 = vpop.f32.mrb[0].mxu0
      %v5994 = vadd.f32 0.0, %v5993
      %v5995 = vpop.f32.mrb[0].mxu0
      %v5996 = vpop.f32.mrb[0].mxu0
      %v5997 = vadd.f32 0.0, %v5996
      %v5998 = vpop.f32.mrb[0].mxu0
      %5999 = vmatprep.mubr.bf16.mxu0 0
      %6000 = vmatmul.mubr.bf16.gmra.mrb[0].mxu0 %v5870
      %v6001 = vpop.f32.mrb[0].mxu0
      %v6002 = vadd.f32 0.0, %v6001
      %v6003 = vpop.f32.mrb[0].mxu0
      %v6004 = vpop.f32.mrb[0].mxu0
      %v6005 = vadd.f32 0.0, %v6004
      %v6006 = vpop.f32.mrb[0].mxu0
      %6007 = vmatprep.mubr.bf16.mxu0 0
      %6008 = vmatmul.mubr.bf16.gmra.mrb[0].mxu0 %v5873
      %v6009 = vpop.f32.mrb[0].mxu0
      %v6010 = vadd.f32 0.0, %v6009
      %v6011 = vpop.f32.mrb[0].mxu0
      %v6012 = vpop.f32.mrb[0].mxu0
      %v6013 = vadd.f32 0.0, %v6012
      %v6014 = vpop.f32.mrb[0].mxu0
      %6015 = vmatprep.mubr.bf16.mxu0 0
      %6016 = vmatmul.mubr.bf16.gmra.mrb[0].mxu0 %v5876
      %v6017 = vpop.f32.mrb[0].mxu0
      %v6018 = vadd.f32 0.0, %v6017
      %v6019 = vpop.f32.mrb[0].mxu0
      %v6020 = vpop.f32.mrb[0].mxu0
      %v6021 = vadd.f32 0.0, %v6020
      %v6022 = vpop.f32.mrb[0].mxu0
      %6023 = vmatprep.mubr.bf16.mxu0 0
      %6024 = vmatmul.mubr.bf16.gmra.mrb[0].mxu0 %v5879
      %v6025 = vpop.f32.mrb[0].mxu0
      %v6026 = vadd.f32 0.0, %v6025
      %v6027 = vpop.f32.mrb[0].mxu0
      %v6028 = vpop.f32.mrb[0].mxu0
      %v6029 = vadd.f32 0.0, %v6028
      %v6030 = vpop.f32.mrb[0].mxu0
      %6031 = vmatprep.mubr.bf16.mxu0 0
      %6032 = vmatmul.mubr.bf16.gmra.mrb[0].mxu0 %v5882
      %v6033 = vpop.f32.mrb[0].mxu0
      %v6034 = vadd.f32 0.0, %v6033
      %v6035 = vpop.f32.mrb[0].mxu0
      %v6036 = vpop.f32.mrb[0].mxu0
      %v6037 = vadd.f32 0.0, %v6036
      %v6038 = vpop.f32.mrb[0].mxu0
      %6039 = vmatprep.mubr.bf16.mxu0 0
      %6040 = vmatmul.mubr.bf16.gmra.mrb[0].mxu0 %v5885
      %v6041 = vpop.f32.mrb[0].mxu0
      %v6042 = vadd.f32 0.0, %v6041
      %v6043 = vpop.f32.mrb[0].mxu0
      %v6044 = vpop.f32.mrb[0].mxu0
      %v6045 = vadd.f32 0.0, %v6044
      %v6046 = vpop.f32.mrb[0].mxu0
      %6047 = vdwg.mxu0
      %v6048 = vadd.f32 %v5574, %v5922
      %v6049 = vadd.f32 %v5575, %v5925
      %v6050 = vadd.f32 %v5576, %v5930
      %v6051 = vadd.f32 %v5577, %v5933
      %v6052 = vadd.f32 %v5578, %v5938
      %v6053 = vadd.f32 %v5579, %v5941
      %v6054 = vadd.f32 %v5580, %v5946
      %v6055 = vadd.f32 %v5581, %v5949
      %v6056 = vadd.f32 %v5582, %v5954
      %v6057 = vadd.f32 %v5583, %v5957
      %v6058 = vadd.f32 %v5584, %v5962
      %v6059 = vadd.f32 %v5585, %v5965
      %v6060 = vadd.f32 %v5586, %v5970
      %v6061 = vadd.f32 %v5587, %v5973
      %v6062 = vadd.f32 %v5588, %v5978
      %v6063 = vadd.f32 %v5589, %v5981
      %v6064 = vadd.f32 %v5590, %v5986
      %v6065 = vadd.f32 %v5591, %v5989
      %v6066 = vadd.f32 %v5592, %v5994
      %v6067 = vadd.f32 %v5593, %v5997
      %v6068 = vadd.f32 %v5594, %v6002
      %v6069 = vadd.f32 %v5595, %v6005
      %v6070 = vadd.f32 %v5596, %v6010
      %v6071 = vadd.f32 %v5597, %v6013
      %v6072 = vadd.f32 %v5598, %v6018
      %v6073 = vadd.f32 %v5599, %v6021
      %v6074 = vadd.f32 %v5600, %v6026
      %v6075 = vadd.f32 %v5601, %v6029
      %v6076 = vadd.f32 %v5602, %v6034
      %v6077 = vadd.f32 %v5603, %v6037
      %v6078 = vadd.f32 %v5604, %v6042
      %v6079 = vadd.f32 %v5605, %v6045
      %v6080 = vld [vmem:[%s394] sm:$0xfe]
      %v6081 = vld [vmem:[%s394 + $0x10] sm:$0xfe]
      %v6082 = vld [vmem:[%s394 + $0x20] sm:$0xfe]
      %v6083 = vld [vmem:[%s394 + $0x30] sm:$0xfe]
      %v6084 = vld [vmem:[%s394 + $0x40] sm:$0xfe]
      %v6085 = vld [vmem:[%s394 + $0x50] sm:$0xfe]
      %v6086 = vld [vmem:[%s394 + $0x60] sm:$0xfe]
      %v6087 = vld [vmem:[%s394 + $0x70] sm:$0xfe]
      %v6088 = vld [vmem:[%s394 + $0x80] sm:$0xfe]
      %v6089 = vld [vmem:[%s394 + $0x90] sm:$0xfe]
      %v6090 = vld [vmem:[%s394 + $0xa0] sm:$0xfe]
      %v6091 = vld [vmem:[%s394 + $0xb0] sm:$0xfe]
      %v6092 = vld [vmem:[%s394 + $0xc0] sm:$0xfe]
      %v6093 = vld [vmem:[%s394 + $0xd0] sm:$0xfe]
      %v6094 = vld [vmem:[%s394 + $0xe0] sm:$0xfe]
      %v6095 = vld [vmem:[%s394 + $0xf0] sm:$0xfe]
      %v6128 = vrot.slane %v6080, 1
      %v6129 = vrot.slane %v5607, 1
      %v6130 = vsel %vm1578, %v6128, %v6129
      %v6131 = vrot.slane %v6081, 1
      %v6132 = vrot.slane %v5609, 1
      %v6133 = vsel %vm1578, %v6131, %v6132
      %v6134 = vrot.slane %v6082, 1
      %v6135 = vrot.slane %v5611, 1
      %v6136 = vsel %vm1578, %v6134, %v6135
      %v6137 = vrot.slane %v6083, 1
      %v6138 = vrot.slane %v5613, 1
      %v6139 = vsel %vm1578, %v6137, %v6138
      %v6140 = vrot.slane %v6084, 1
      %v6141 = vrot.slane %v5615, 1
      %v6142 = vsel %vm1578, %v6140, %v6141
      %v6143 = vrot.slane %v6085, 1
      %v6144 = vrot.slane %v5617, 1
      %v6145 = vsel %vm1578, %v6143, %v6144
      %v6146 = vrot.slane %v6086, 1
      %v6147 = vrot.slane %v5619, 1
      %v6148 = vsel %vm1578, %v6146, %v6147
      %v6149 = vrot.slane %v6087, 1
      %v6150 = vrot.slane %v5621, 1
      %v6151 = vsel %vm1578, %v6149, %v6150
      %v6152 = vrot.slane %v6088, 1
      %v6153 = vrot.slane %v5623, 1
      %v6154 = vsel %vm1578, %v6152, %v6153
      %v6155 = vrot.slane %v6089, 1
      %v6156 = vrot.slane %v5625, 1
      %v6157 = vsel %vm1578, %v6155, %v6156
      %v6158 = vrot.slane %v6090, 1
      %v6159 = vrot.slane %v5627, 1
      %v6160 = vsel %vm1578, %v6158, %v6159
      %v6161 = vrot.slane %v6091, 1
      %v6162 = vrot.slane %v5629, 1
      %v6163 = vsel %vm1578, %v6161, %v6162
      %v6164 = vrot.slane %v6092, 1
      %v6165 = vrot.slane %v5631, 1
      %v6166 = vsel %vm1578, %v6164, %v6165
      %v6167 = vrot.slane %v6093, 1
      %v6168 = vrot.slane %v5633, 1
      %v6169 = vsel %vm1578, %v6167, %v6168
      %v6170 = vrot.slane %v6094, 1
      %v6171 = vrot.slane %v5635, 1
      %v6172 = vsel %vm1578, %v6170, %v6171
      %v6173 = vrot.slane %v6095, 1
      %v6174 = vrot.slane %v5637, 1
      %v6175 = vsel %vm1578, %v6173, %v6174
      %s6176 = scalar_lea.vmem %s3, 40
      %v6177 = vld [vmem:[%s6176] sm:$0xf]
      %v6178 = vld [vmem:[%s6176 + $0x4] sm:$0xf]
      %v6181 = vunpack.c.l.b16 %v6177
      %v6182 = vunpack.c.l.b16 %v6178
      %v6183 = vpack.c.b16 %v6182, %v6181
      %v6186 = vsel %vm388, %v6130, 0
      %v6189 = vsel %vm388, %v6133, 0
      %v6192 = vsel %vm388, %v6136, 0
      %v6195 = vsel %vm388, %v6139, 0
      %v6198 = vsel %vm388, %v6142, 0
      %v6201 = vsel %vm388, %v6145, 0
      %v6204 = vsel %vm388, %v6148, 0
      %v6207 = vsel %vm388, %v6151, 0
      %v6210 = vsel %vm388, %v6154, 0
      %v6213 = vsel %vm388, %v6157, 0
      %v6216 = vsel %vm388, %v6160, 0
      %v6219 = vsel %vm388, %v6163, 0
      %v6222 = vsel %vm388, %v6166, 0
      %v6225 = vsel %vm388, %v6169, 0
      %v6228 = vsel %vm388, %v6172, 0
      %v6231 = vsel %vm388, %v6175, 0
      %6233 = vmatprep.subr.bf16.mxu0 0
      %6234 = vmatpush1.bf16.msra.mxu0 %v6183
      %6235 = vmatprep.subr.bf16.mxu0 0
      %6236 = vmatpush1.bf16.msra.mxu0 0
      %6237 = vmatprep.subr.bf16.mxu0 0
      %6238 = vmatpush1.bf16.msra.mxu0 0
      %6239 = vmatprep.subr.bf16.mxu0 0
      %6240 = vmatpush1.bf16.msra.mxu0 0
      %6241 = vmatprep.subr.bf16.mxu0 0
      %6242 = vmatpush1.bf16.msra.mxu0 0
      %6243 = vmatprep.subr.bf16.mxu0 0
      %6244 = vmatpush1.bf16.msra.mxu0 0
      %6245 = vmatprep.subr.bf16.mxu0 0
      %6246 = vmatpush1.bf16.msra.mxu0 0
      %6247 = vmatprep.subr.bf16.mxu0 0
      %6248 = vmatpush1.bf16.msra.mxu0 0
      %6249 = vmatprep.subr.bf16.mxu0 0
      %6250 = vmatpush1.bf16.msra.mxu0 0
      %6251 = vmatprep.subr.bf16.mxu0 0
      %6252 = vmatpush1.bf16.msra.mxu0 0
      %6253 = vmatprep.subr.bf16.mxu0 0
      %6254 = vmatpush1.bf16.msra.mxu0 0
      %6255 = vmatprep.subr.bf16.mxu0 0
      %6256 = vmatpush1.bf16.msra.mxu0 0
      %6257 = vmatprep.subr.bf16.mxu0 0
      %6258 = vmatpush1.bf16.msra.mxu0 0
      %6259 = vmatprep.subr.bf16.mxu0 0
      %6260 = vmatpush1.bf16.msra.mxu0 0
      %6261 = vmatprep.subr.bf16.mxu0 0
      %6262 = vmatpush1.bf16.msra.mxu0 0
      %6263 = vmatprep.subr.bf16.mxu0 0
      %6264 = vmatpush1.bf16.msra.mxu0 0
      %6265 = vmatprep.mubr.bf16.mxu0 0
      %6266 = vmatmul.mubr.bf16.gmra.mrb[0].mxu0 %v6186
      %v6267 = vpop.f32.mrb[0].mxu0
      %v6268 = vadd.f32 0.0, %v6267
      %v6269 = vpop.f32.mrb[0].mxu0
      %v6270 = vpop.f32.mrb[0].mxu0
      %v6271 = vadd.f32 0.0, %v6270
      %v6272 = vpop.f32.mrb[0].mxu0
      %6273 = vmatprep.mubr.bf16.mxu0 0
      %6274 = vmatmul.mubr.bf16.gmra.mrb[0].mxu0 %v6189
      %v6275 = vpop.f32.mrb[0].mxu0
      %v6276 = vadd.f32 0.0, %v6275
      %v6277 = vpop.f32.mrb[0].mxu0
      %v6278 = vpop.f32.mrb[0].mxu0
      %v6279 = vadd.f32 0.0, %v6278
      %v6280 = vpop.f32.mrb[0].mxu0
      %6281 = vmatprep.mubr.bf16.mxu0 0
      %6282 = vmatmul.mubr.bf16.gmra.mrb[0].mxu0 %v6192
      %v6283 = vpop.f32.mrb[0].mxu0
      %v6284 = vadd.f32 0.0, %v6283
      %v6285 = vpop.f32.mrb[0].mxu0
      %v6286 = vpop.f32.mrb[0].mxu0
      %v6287 = vadd.f32 0.0, %v6286
      %v6288 = vpop.f32.mrb[0].mxu0
      %6289 = vmatprep.mubr.bf16.mxu0 0
      %6290 = vmatmul.mubr.bf16.gmra.mrb[0].mxu0 %v6195
      %v6291 = vpop.f32.mrb[0].mxu0
      %v6292 = vadd.f32 0.0, %v6291
      %v6293 = vpop.f32.mrb[0].mxu0
      %v6294 = vpop.f32.mrb[0].mxu0
      %v6295 = vadd.f32 0.0, %v6294
      %v6296 = vpop.f32.mrb[0].mxu0
      %6297 = vmatprep.mubr.bf16.mxu0 0
      %6298 = vmatmul.mubr.bf16.gmra.mrb[0].mxu0 %v6198
      %v6299 = vpop.f32.mrb[0].mxu0
      %v6300 = vadd.f32 0.0, %v6299
      %v6301 = vpop.f32.mrb[0].mxu0
      %v6302 = vpop.f32.mrb[0].mxu0
      %v6303 = vadd.f32 0.0, %v6302
      %v6304 = vpop.f32.mrb[0].mxu0
      %6305 = vmatprep.mubr.bf16.mxu0 0
      %6306 = vmatmul.mubr.bf16.gmra.mrb[0].mxu0 %v6201
      %v6307 = vpop.f32.mrb[0].mxu0
      %v6308 = vadd.f32 0.0, %v6307
      %v6309 = vpop.f32.mrb[0].mxu0
      %v6310 = vpop.f32.mrb[0].mxu0
      %v6311 = vadd.f32 0.0, %v6310
      %v6312 = vpop.f32.mrb[0].mxu0
      %6313 = vmatprep.mubr.bf16.mxu0 0
      %6314 = vmatmul.mubr.bf16.gmra.mrb[0].mxu0 %v6204
      %v6315 = vpop.f32.mrb[0].mxu0
      %v6316 = vadd.f32 0.0, %v6315
      %v6317 = vpop.f32.mrb[0].mxu0
      %v6318 = vpop.f32.mrb[0].mxu0
      %v6319 = vadd.f32 0.0, %v6318
      %v6320 = vpop.f32.mrb[0].mxu0
      %6321 = vmatprep.mubr.bf16.mxu0 0
      %6322 = vmatmul.mubr.bf16.gmra.mrb[0].mxu0 %v6207
      %v6323 = vpop.f32.mrb[0].mxu0
      %v6324 = vadd.f32 0.0, %v6323
      %v6325 = vpop.f32.mrb[0].mxu0
      %v6326 = vpop.f32.mrb[0].mxu0
      %v6327 = vadd.f32 0.0, %v6326
      %v6328 = vpop.f32.mrb[0].mxu0
      %6329 = vmatprep.mubr.bf16.mxu0 0
      %6330 = vmatmul.mubr.bf16.gmra.mrb[0].mxu0 %v6210
      %v6331 = vpop.f32.mrb[0].mxu0
      %v6332 = vadd.f32 0.0, %v6331
      %v6333 = vpop.f32.mrb[0].mxu0
      %v6334 = vpop.f32.mrb[0].mxu0
      %v6335 = vadd.f32 0.0, %v6334
      %v6336 = vpop.f32.mrb[0].mxu0
      %6337 = vmatprep.mubr.bf16.mxu0 0
      %6338 = vmatmul.mubr.bf16.gmra.mrb[0].mxu0 %v6213
      %v6339 = vpop.f32.mrb[0].mxu0
      %v6340 = vadd.f32 0.0, %v6339
      %v6341 = vpop.f32.mrb[0].mxu0
      %v6342 = vpop.f32.mrb[0].mxu0
      %v6343 = vadd.f32 0.0, %v6342
      %v6344 = vpop.f32.mrb[0].mxu0
      %6345 = vmatprep.mubr.bf16.mxu0 0
      %6346 = vmatmul.mubr.bf16.gmra.mrb[0].mxu0 %v6216
      %v6347 = vpop.f32.mrb[0].mxu0
      %v6348 = vadd.f32 0.0, %v6347
      %v6349 = vpop.f32.mrb[0].mxu0
      %v6350 = vpop.f32.mrb[0].mxu0
      %v6351 = vadd.f32 0.0, %v6350
      %v6352 = vpop.f32.mrb[0].mxu0
      %6353 = vmatprep.mubr.bf16.mxu0 0
      %6354 = vmatmul.mubr.bf16.gmra.mrb[0].mxu0 %v6219
      %v6355 = vpop.f32.mrb[0].mxu0
      %v6356 = vadd.f32 0.0, %v6355
      %v6357 = vpop.f32.mrb[0].mxu0
      %v6358 = vpop.f32.mrb[0].mxu0
      %v6359 = vadd.f32 0.0, %v6358
      %v6360 = vpop.f32.mrb[0].mxu0
      %6361 = vmatprep.mubr.bf16.mxu0 0
      %6362 = vmatmul.mubr.bf16.gmra.mrb[0].mxu0 %v6222
      %v6363 = vpop.f32.mrb[0].mxu0
      %v6364 = vadd.f32 0.0, %v6363
      %v6365 = vpop.f32.mrb[0].mxu0
      %v6366 = vpop.f32.mrb[0].mxu0
      %v6367 = vadd.f32 0.0, %v6366
      %v6368 = vpop.f32.mrb[0].mxu0
      %6369 = vmatprep.mubr.bf16.mxu0 0
      %6370 = vmatmul.mubr.bf16.gmra.mrb[0].mxu0 %v6225
      %v6371 = vpop.f32.mrb[0].mxu0
      %v6372 = vadd.f32 0.0, %v6371
      %v6373 = vpop.f32.mrb[0].mxu0
      %v6374 = vpop.f32.mrb[0].mxu0
      %v6375 = vadd.f32 0.0, %v6374
      %v6376 = vpop.f32.mrb[0].mxu0
      %6377 = vmatprep.mubr.bf16.mxu0 0
      %6378 = vmatmul.mubr.bf16.gmra.mrb[0].mxu0 %v6228
      %v6379 = vpop.f32.mrb[0].mxu0
      %v6380 = vadd.f32 0.0, %v6379
      %v6381 = vpop.f32.mrb[0].mxu0
      %v6382 = vpop.f32.mrb[0].mxu0
      %v6383 = vadd.f32 0.0, %v6382
      %v6384 = vpop.f32.mrb[0].mxu0
      %6385 = vmatprep.mubr.bf16.mxu0 0
      %6386 = vmatmul.mubr.bf16.gmra.mrb[0].mxu0 %v6231
      %v6387 = vpop.f32.mrb[0].mxu0
      %v6388 = vadd.f32 0.0, %v6387
      %v6389 = vpop.f32.mrb[0].mxu0
      %v6390 = vpop.f32.mrb[0].mxu0
      %v6391 = vadd.f32 0.0, %v6390
      %v6392 = vpop.f32.mrb[0].mxu0
      %6393 = vdwg.mxu0
      %v6394 = vadd.f32 %v6048, %v6268
      %v6395 = vadd.f32 %v6049, %v6271
      %v6396 = vadd.f32 %v6050, %v6276
      %v6397 = vadd.f32 %v6051, %v6279
      %v6398 = vadd.f32 %v6052, %v6284
      %v6399 = vadd.f32 %v6053, %v6287
      %v6400 = vadd.f32 %v6054, %v6292
      %v6401 = vadd.f32 %v6055, %v6295
      %v6402 = vadd.f32 %v6056, %v6300
      %v6403 = vadd.f32 %v6057, %v6303
      %v6404 = vadd.f32 %v6058, %v6308
      %v6405 = vadd.f32 %v6059, %v6311
      %v6406 = vadd.f32 %v6060, %v6316
      %v6407 = vadd.f32 %v6061, %v6319
      %v6408 = vadd.f32 %v6062, %v6324
      %v6409 = vadd.f32 %v6063, %v6327
      %v6410 = vadd.f32 %v6064, %v6332
      %v6411 = vadd.f32 %v6065, %v6335
      %v6412 = vadd.f32 %v6066, %v6340
      %v6413 = vadd.f32 %v6067, %v6343
      %v6414 = vadd.f32 %v6068, %v6348
      %v6415 = vadd.f32 %v6069, %v6351
      %v6416 = vadd.f32 %v6070, %v6356
      %v6417 = vadd.f32 %v6071, %v6359
      %v6418 = vadd.f32 %v6072, %v6364
      %v6419 = vadd.f32 %v6073, %v6367
      %v6420 = vadd.f32 %v6074, %v6372
      %v6421 = vadd.f32 %v6075, %v6375
      %v6422 = vadd.f32 %v6076, %v6380
      %v6423 = vadd.f32 %v6077, %v6383
      %v6424 = vadd.f32 %v6078, %v6388
      %v6425 = vadd.f32 %v6079, %v6391
      %s6426 = scalar_lea.vmem [#allocation3], 32
      %v6427 = vld [vmem:[%s6426] sm:$0xff]
      %v6428 = vld [vmem:[%s6426 + $0x10] sm:$0xff]
      %v6429 = vld [vmem:[%s6426 + $0x20] sm:$0xff]
      %v6430 = vld [vmem:[%s6426 + $0x30] sm:$0xff]
      %v6431 = vld [vmem:[%s6426 + $0x40] sm:$0xff]
      %v6432 = vld [vmem:[%s6426 + $0x50] sm:$0xff]
      %v6433 = vld [vmem:[%s6426 + $0x60] sm:$0xff]
      %v6434 = vld [vmem:[%s6426 + $0x70] sm:$0xff]
      %v6435 = vld [vmem:[%s6426 + $0x80] sm:$0xff]
      %v6436 = vld [vmem:[%s6426 + $0x90] sm:$0xff]
      %v6437 = vld [vmem:[%s6426 + $0xa0] sm:$0xff]
      %v6438 = vld [vmem:[%s6426 + $0xb0] sm:$0xff]
      %v6439 = vld [vmem:[%s6426 + $0xc0] sm:$0xff]
      %v6440 = vld [vmem:[%s6426 + $0xd0] sm:$0xff]
      %v6441 = vld [vmem:[%s6426 + $0xe0] sm:$0xff]
      %v6442 = vld [vmem:[%s6426 + $0xf0] sm:$0xff]
      %s6443 = scalar_lea.vmem %s3, 48
      %v6444 = vld [vmem:[%s6443] sm:$0xf]
      %v6445 = vld [vmem:[%s6443 + $0x4] sm:$0xf]
      %v6448 = vunpack.c.l.b16 %v6444
      %v6449 = vunpack.c.l.b16 %v6445
      %v6450 = vpack.c.b16 %v6449, %v6448
      %v6453 = vsel %vm388, %v6427, 0
      %v6456 = vsel %vm388, %v6428, 0
      %v6459 = vsel %vm388, %v6429, 0
      %v6462 = vsel %vm388, %v6430, 0
      %v6465 = vsel %vm388, %v6431, 0
      %v6468 = vsel %vm388, %v6432, 0
      %v6471 = vsel %vm388, %v6433, 0
      %v6474 = vsel %vm388, %v6434, 0
      %v6477 = vsel %vm388, %v6435, 0
      %v6480 = vsel %vm388, %v6436, 0
      %v6483 = vsel %vm388, %v6437, 0
      %v6486 = vsel %vm388, %v6438, 0
      %v6489 = vsel %vm388, %v6439, 0
      %v6492 = vsel %vm388, %v6440, 0
      %v6495 = vsel %vm388, %v6441, 0
      %v6498 = vsel %vm388, %v6442, 0
      %6500 = vmatprep.subr.bf16.mxu0 0
      %6501 = vmatpush1.bf16.msra.mxu0 %v6450
      %6502 = vmatprep.subr.bf16.mxu0 0
      %6503 = vmatpush1.bf16.msra.mxu0 0
      %6504 = vmatprep.subr.bf16.mxu0 0
      %6505 = vmatpush1.bf16.msra.mxu0 0
      %6506 = vmatprep.subr.bf16.mxu0 0
      %6507 = vmatpush1.bf16.msra.mxu0 0
      %6508 = vmatprep.subr.bf16.mxu0 0
      %6509 = vmatpush1.bf16.msra.mxu0 0
      %6510 = vmatprep.subr.bf16.mxu0 0
      %6511 = vmatpush1.bf16.msra.mxu0 0
      %6512 = vmatprep.subr.bf16.mxu0 0
      %6513 = vmatpush1.bf16.msra.mxu0 0
      %6514 = vmatprep.subr.bf16.mxu0 0
      %6515 = vmatpush1.bf16.msra.mxu0 0
      %6516 = vmatprep.subr.bf16.mxu0 0
      %6517 = vmatpush1.bf16.msra.mxu0 0
      %6518 = vmatprep.subr.bf16.mxu0 0
      %6519 = vmatpush1.bf16.msra.mxu0 0
      %6520 = vmatprep.subr.bf16.mxu0 0
      %6521 = vmatpush1.bf16.msra.mxu0 0
      %6522 = vmatprep.subr.bf16.mxu0 0
      %6523 = vmatpush1.bf16.msra.mxu0 0
      %6524 = vmatprep.subr.bf16.mxu0 0
      %6525 = vmatpush1.bf16.msra.mxu0 0
      %6526 = vmatprep.subr.bf16.mxu0 0
      %6527 = vmatpush1.bf16.msra.mxu0 0
      %6528 = vmatprep.subr.bf16.mxu0 0
      %6529 = vmatpush1.bf16.msra.mxu0 0
      %6530 = vmatprep.subr.bf16.mxu0 0
      %6531 = vmatpush1.bf16.msra.mxu0 0
      %6532 = vmatprep.mubr.bf16.mxu0 0
      %6533 = vmatmul.mubr.bf16.gmra.mrb[0].mxu0 %v6453
      %v6534 = vpop.f32.mrb[0].mxu0
      %v6535 = vadd.f32 0.0, %v6534
      %v6536 = vpop.f32.mrb[0].mxu0
      %v6537 = vpop.f32.mrb[0].mxu0
      %v6538 = vadd.f32 0.0, %v6537
      %v6539 = vpop.f32.mrb[0].mxu0
      %6540 = vmatprep.mubr.bf16.mxu0 0
      %6541 = vmatmul.mubr.bf16.gmra.mrb[0].mxu0 %v6456
      %v6542 = vpop.f32.mrb[0].mxu0
      %v6543 = vadd.f32 0.0, %v6542
      %v6544 = vpop.f32.mrb[0].mxu0
      %v6545 = vpop.f32.mrb[0].mxu0
      %v6546 = vadd.f32 0.0, %v6545
      %v6547 = vpop.f32.mrb[0].mxu0
      %6548 = vmatprep.mubr.bf16.mxu0 0
      %6549 = vmatmul.mubr.bf16.gmra.mrb[0].mxu0 %v6459
      %v6550 = vpop.f32.mrb[0].mxu0
      %v6551 = vadd.f32 0.0, %v6550
      %v6552 = vpop.f32.mrb[0].mxu0
      %v6553 = vpop.f32.mrb[0].mxu0
      %v6554 = vadd.f32 0.0, %v6553
      %v6555 = vpop.f32.mrb[0].mxu0
      %6556 = vmatprep.mubr.bf16.mxu0 0
      %6557 = vmatmul.mubr.bf16.gmra.mrb[0].mxu0 %v6462
      %v6558 = vpop.f32.mrb[0].mxu0
      %v6559 = vadd.f32 0.0, %v6558
      %v6560 = vpop.f32.mrb[0].mxu0
      %v6561 = vpop.f32.mrb[0].mxu0
      %v6562 = vadd.f32 0.0, %v6561
      %v6563 = vpop.f32.mrb[0].mxu0
      %6564 = vmatprep.mubr.bf16.mxu0 0
      %6565 = vmatmul.mubr.bf16.gmra.mrb[0].mxu0 %v6465
      %v6566 = vpop.f32.mrb[0].mxu0
      %v6567 = vadd.f32 0.0, %v6566
      %v6568 = vpop.f32.mrb[0].mxu0
      %v6569 = vpop.f32.mrb[0].mxu0
      %v6570 = vadd.f32 0.0, %v6569
      %v6571 = vpop.f32.mrb[0].mxu0
      %6572 = vmatprep.mubr.bf16.mxu0 0
      %6573 = vmatmul.mubr.bf16.gmra.mrb[0].mxu0 %v6468
      %v6574 = vpop.f32.mrb[0].mxu0
      %v6575 = vadd.f32 0.0, %v6574
      %v6576 = vpop.f32.mrb[0].mxu0
      %v6577 = vpop.f32.mrb[0].mxu0
      %v6578 = vadd.f32 0.0, %v6577
      %v6579 = vpop.f32.mrb[0].mxu0
      %6580 = vmatprep.mubr.bf16.mxu0 0
      %6581 = vmatmul.mubr.bf16.gmra.mrb[0].mxu0 %v6471
      %v6582 = vpop.f32.mrb[0].mxu0
      %v6583 = vadd.f32 0.0, %v6582
      %v6584 = vpop.f32.mrb[0].mxu0
      %v6585 = vpop.f32.mrb[0].mxu0
      %v6586 = vadd.f32 0.0, %v6585
      %v6587 = vpop.f32.mrb[0].mxu0
      %6588 = vmatprep.mubr.bf16.mxu0 0
      %6589 = vmatmul.mubr.bf16.gmra.mrb[0].mxu0 %v6474
      %v6590 = vpop.f32.mrb[0].mxu0
      %v6591 = vadd.f32 0.0, %v6590
      %v6592 = vpop.f32.mrb[0].mxu0
      %v6593 = vpop.f32.mrb[0].mxu0
      %v6594 = vadd.f32 0.0, %v6593
      %v6595 = vpop.f32.mrb[0].mxu0
      %6596 = vmatprep.mubr.bf16.mxu0 0
      %6597 = vmatmul.mubr.bf16.gmra.mrb[0].mxu0 %v6477
      %v6598 = vpop.f32.mrb[0].mxu0
      %v6599 = vadd.f32 0.0, %v6598
      %v6600 = vpop.f32.mrb[0].mxu0
      %v6601 = vpop.f32.mrb[0].mxu0
      %v6602 = vadd.f32 0.0, %v6601
      %v6603 = vpop.f32.mrb[0].mxu0
      %6604 = vmatprep.mubr.bf16.mxu0 0
      %6605 = vmatmul.mubr.bf16.gmra.mrb[0].mxu0 %v6480
      %v6606 = vpop.f32.mrb[0].mxu0
      %v6607 = vadd.f32 0.0, %v6606
      %v6608 = vpop.f32.mrb[0].mxu0
      %v6609 = vpop.f32.mrb[0].mxu0
      %v6610 = vadd.f32 0.0, %v6609
      %v6611 = vpop.f32.mrb[0].mxu0
      %6612 = vmatprep.mubr.bf16.mxu0 0
      %6613 = vmatmul.mubr.bf16.gmra.mrb[0].mxu0 %v6483
      %v6614 = vpop.f32.mrb[0].mxu0
      %v6615 = vadd.f32 0.0, %v6614
      %v6616 = vpop.f32.mrb[0].mxu0
      %v6617 = vpop.f32.mrb[0].mxu0
      %v6618 = vadd.f32 0.0, %v6617
      %v6619 = vpop.f32.mrb[0].mxu0
      %6620 = vmatprep.mubr.bf16.mxu0 0
      %6621 = vmatmul.mubr.bf16.gmra.mrb[0].mxu0 %v6486
      %v6622 = vpop.f32.mrb[0].mxu0
      %v6623 = vadd.f32 0.0, %v6622
      %v6624 = vpop.f32.mrb[0].mxu0
      %v6625 = vpop.f32.mrb[0].mxu0
      %v6626 = vadd.f32 0.0, %v6625
      %v6627 = vpop.f32.mrb[0].mxu0
      %6628 = vmatprep.mubr.bf16.mxu0 0
      %6629 = vmatmul.mubr.bf16.gmra.mrb[0].mxu0 %v6489
      %v6630 = vpop.f32.mrb[0].mxu0
      %v6631 = vadd.f32 0.0, %v6630
      %v6632 = vpop.f32.mrb[0].mxu0
      %v6633 = vpop.f32.mrb[0].mxu0
      %v6634 = vadd.f32 0.0, %v6633
      %v6635 = vpop.f32.mrb[0].mxu0
      %6636 = vmatprep.mubr.bf16.mxu0 0
      %6637 = vmatmul.mubr.bf16.gmra.mrb[0].mxu0 %v6492
      %v6638 = vpop.f32.mrb[0].mxu0
      %v6639 = vadd.f32 0.0, %v6638
      %v6640 = vpop.f32.mrb[0].mxu0
      %v6641 = vpop.f32.mrb[0].mxu0
      %v6642 = vadd.f32 0.0, %v6641
      %v6643 = vpop.f32.mrb[0].mxu0
      %6644 = vmatprep.mubr.bf16.mxu0 0
      %6645 = vmatmul.mubr.bf16.gmra.mrb[0].mxu0 %v6495
      %v6646 = vpop.f32.mrb[0].mxu0
      %v6647 = vadd.f32 0.0, %v6646
      %v6648 = vpop.f32.mrb[0].mxu0
      %v6649 = vpop.f32.mrb[0].mxu0
      %v6650 = vadd.f32 0.0, %v6649
      %v6651 = vpop.f32.mrb[0].mxu0
      %6652 = vmatprep.mubr.bf16.mxu0 0
      %6653 = vmatmul.mubr.bf16.gmra.mrb[0].mxu0 %v6498
      %v6654 = vpop.f32.mrb[0].mxu0
      %v6655 = vadd.f32 0.0, %v6654
      %v6656 = vpop.f32.mrb[0].mxu0
      %v6657 = vpop.f32.mrb[0].mxu0
      %v6658 = vadd.f32 0.0, %v6657
      %v6659 = vpop.f32.mrb[0].mxu0
      %6660 = vdwg.mxu0
      %v6661 = vadd.f32 %v6394, %v6535
      %v6662 = vadd.f32 %v6395, %v6538
      %v6663 = vadd.f32 %v6396, %v6543
      %v6664 = vadd.f32 %v6397, %v6546
      %v6665 = vadd.f32 %v6398, %v6551
      %v6666 = vadd.f32 %v6399, %v6554
      %v6667 = vadd.f32 %v6400, %v6559
      %v6668 = vadd.f32 %v6401, %v6562
      %v6669 = vadd.f32 %v6402, %v6567
      %v6670 = vadd.f32 %v6403, %v6570
      %v6671 = vadd.f32 %v6404, %v6575
      %v6672 = vadd.f32 %v6405, %v6578
      %v6673 = vadd.f32 %v6406, %v6583
      %v6674 = vadd.f32 %v6407, %v6586
      %v6675 = vadd.f32 %v6408, %v6591
      %v6676 = vadd.f32 %v6409, %v6594
      %v6677 = vadd.f32 %v6410, %v6599
      %v6678 = vadd.f32 %v6411, %v6602
      %v6679 = vadd.f32 %v6412, %v6607
      %v6680 = vadd.f32 %v6413, %v6610
      %v6681 = vadd.f32 %v6414, %v6615
      %v6682 = vadd.f32 %v6415, %v6618
      %v6683 = vadd.f32 %v6416, %v6623
      %v6684 = vadd.f32 %v6417, %v6626
      %v6685 = vadd.f32 %v6418, %v6631
      %v6686 = vadd.f32 %v6419, %v6634
      %v6687 = vadd.f32 %v6420, %v6639
      %v6688 = vadd.f32 %v6421, %v6642
      %v6689 = vadd.f32 %v6422, %v6647
      %v6690 = vadd.f32 %v6423, %v6650
      %v6691 = vadd.f32 %v6424, %v6655
      %v6692 = vadd.f32 %v6425, %v6658
      %v6693 = vld [vmem:[%s6426] sm:$0xff]
      %v6694 = vld [vmem:[%s6426 + $0x8] sm:$0x1]
      %v6695 = vld [vmem:[%s6426 + $0x10] sm:$0xff]
      %v6696 = vld [vmem:[%s6426 + $0x18] sm:$0x1]
      %v6697 = vld [vmem:[%s6426 + $0x20] sm:$0xff]
      %v6698 = vld [vmem:[%s6426 + $0x28] sm:$0x1]
      %v6699 = vld [vmem:[%s6426 + $0x30] sm:$0xff]
      %v6700 = vld [vmem:[%s6426 + $0x38] sm:$0x1]
      %v6701 = vld [vmem:[%s6426 + $0x40] sm:$0xff]
      %v6702 = vld [vmem:[%s6426 + $0x48] sm:$0x1]
      %v6703 = vld [vmem:[%s6426 + $0x50] sm:$0xff]
      %v6704 = vld [vmem:[%s6426 + $0x58] sm:$0x1]
      %v6705 = vld [vmem:[%s6426 + $0x60] sm:$0xff]
      %v6706 = vld [vmem:[%s6426 + $0x68] sm:$0x1]
      %v6707 = vld [vmem:[%s6426 + $0x70] sm:$0xff]
      %v6708 = vld [vmem:[%s6426 + $0x78] sm:$0x1]
      %v6709 = vld [vmem:[%s6426 + $0x80] sm:$0xff]
      %v6710 = vld [vmem:[%s6426 + $0x88] sm:$0x1]
      %v6711 = vld [vmem:[%s6426 + $0x90] sm:$0xff]
      %v6712 = vld [vmem:[%s6426 + $0x98] sm:$0x1]
      %v6713 = vld [vmem:[%s6426 + $0xa0] sm:$0xff]
      %v6714 = vld [vmem:[%s6426 + $0xa8] sm:$0x1]
      %v6715 = vld [vmem:[%s6426 + $0xb0] sm:$0xff]
      %v6716 = vld [vmem:[%s6426 + $0xb8] sm:$0x1]
      %v6717 = vld [vmem:[%s6426 + $0xc0] sm:$0xff]
      %v6718 = vld [vmem:[%s6426 + $0xc8] sm:$0x1]
      %v6719 = vld [vmem:[%s6426 + $0xd0] sm:$0xff]
      %v6720 = vld [vmem:[%s6426 + $0xd8] sm:$0x1]
      %v6721 = vld [vmem:[%s6426 + $0xe0] sm:$0xff]
      %v6722 = vld [vmem:[%s6426 + $0xe8] sm:$0x1]
      %v6723 = vld [vmem:[%s6426 + $0xf0] sm:$0xff]
      %v6724 = vld [vmem:[%s6426 + $0xf8] sm:$0x1]
      %v6726 = vshrl.u32 %v6693, 16
      %v6728 = vshll.u32 %v6693, 16
      %v6730 = vrot.slane %v6728, 1
      %v6731 = vor.u32 %v6726, %v6730
      %v6733 = vshll.u32 %v6694, 16
      %v6735 = vrot.slane %v6733, 1
      %v6736 = vsel %vm923, %v6731, %v6735
      %v6738 = vshrl.u32 %v6695, 16
      %v6740 = vshll.u32 %v6695, 16
      %v6742 = vrot.slane %v6740, 1
      %v6743 = vor.u32 %v6738, %v6742
      %v6745 = vshll.u32 %v6696, 16
      %v6747 = vrot.slane %v6745, 1
      %v6748 = vsel %vm923, %v6743, %v6747
      %v6750 = vshrl.u32 %v6697, 16
      %v6752 = vshll.u32 %v6697, 16
      %v6754 = vrot.slane %v6752, 1
      %v6755 = vor.u32 %v6750, %v6754
      %v6757 = vshll.u32 %v6698, 16
      %v6759 = vrot.slane %v6757, 1
      %v6760 = vsel %vm923, %v6755, %v6759
      %v6762 = vshrl.u32 %v6699, 16
      %v6764 = vshll.u32 %v6699, 16
      %v6766 = vrot.slane %v6764, 1
      %v6767 = vor.u32 %v6762, %v6766
      %v6769 = vshll.u32 %v6700, 16
      %v6771 = vrot.slane %v6769, 1
      %v6772 = vsel %vm923, %v6767, %v6771
      %v6774 = vshrl.u32 %v6701, 16
      %v6776 = vshll.u32 %v6701, 16
      %v6778 = vrot.slane %v6776, 1
      %v6779 = vor.u32 %v6774, %v6778
      %v6781 = vshll.u32 %v6702, 16
      %v6783 = vrot.slane %v6781, 1
      %v6784 = vsel %vm923, %v6779, %v6783
      %v6786 = vshrl.u32 %v6703, 16
      %v6788 = vshll.u32 %v6703, 16
      %v6790 = vrot.slane %v6788, 1
      %v6791 = vor.u32 %v6786, %v6790
      %v6793 = vshll.u32 %v6704, 16
      %v6795 = vrot.slane %v6793, 1
      %v6796 = vsel %vm923, %v6791, %v6795
      %v6798 = vshrl.u32 %v6705, 16
      %v6800 = vshll.u32 %v6705, 16
      %v6802 = vrot.slane %v6800, 1
      %v6803 = vor.u32 %v6798, %v6802
      %v6805 = vshll.u32 %v6706, 16
      %v6807 = vrot.slane %v6805, 1
      %v6808 = vsel %vm923, %v6803, %v6807
      %v6810 = vshrl.u32 %v6707, 16
      %v6812 = vshll.u32 %v6707, 16
      %v6814 = vrot.slane %v6812, 1
      %v6815 = vor.u32 %v6810, %v6814
      %v6817 = vshll.u32 %v6708, 16
      %v6819 = vrot.slane %v6817, 1
      %v6820 = vsel %vm923, %v6815, %v6819
      %v6822 = vshrl.u32 %v6709, 16
      %v6824 = vshll.u32 %v6709, 16
      %v6826 = vrot.slane %v6824, 1
      %v6827 = vor.u32 %v6822, %v6826
      %v6829 = vshll.u32 %v6710, 16
      %v6831 = vrot.slane %v6829, 1
      %v6832 = vsel %vm923, %v6827, %v6831
      %v6834 = vshrl.u32 %v6711, 16
      %v6836 = vshll.u32 %v6711, 16
      %v6838 = vrot.slane %v6836, 1
      %v6839 = vor.u32 %v6834, %v6838
      %v6841 = vshll.u32 %v6712, 16
      %v6843 = vrot.slane %v6841, 1
      %v6844 = vsel %vm923, %v6839, %v6843
      %v6846 = vshrl.u32 %v6713, 16
      %v6848 = vshll.u32 %v6713, 16
      %v6850 = vrot.slane %v6848, 1
      %v6851 = vor.u32 %v6846, %v6850
      %v6853 = vshll.u32 %v6714, 16
      %v6855 = vrot.slane %v6853, 1
      %v6856 = vsel %vm923, %v6851, %v6855
      %v6858 = vshrl.u32 %v6715, 16
      %v6860 = vshll.u32 %v6715, 16
      %v6862 = vrot.slane %v6860, 1
      %v6863 = vor.u32 %v6858, %v6862
      %v6865 = vshll.u32 %v6716, 16
      %v6867 = vrot.slane %v6865, 1
      %v6868 = vsel %vm923, %v6863, %v6867
      %v6870 = vshrl.u32 %v6717, 16
      %v6872 = vshll.u32 %v6717, 16
      %v6874 = vrot.slane %v6872, 1
      %v6875 = vor.u32 %v6870, %v6874
      %v6877 = vshll.u32 %v6718, 16
      %v6879 = vrot.slane %v6877, 1
      %v6880 = vsel %vm923, %v6875, %v6879
      %v6882 = vshrl.u32 %v6719, 16
      %v6884 = vshll.u32 %v6719, 16
      %v6886 = vrot.slane %v6884, 1
      %v6887 = vor.u32 %v6882, %v6886
      %v6889 = vshll.u32 %v6720, 16
      %v6891 = vrot.slane %v6889, 1
      %v6892 = vsel %vm923, %v6887, %v6891
      %v6894 = vshrl.u32 %v6721, 16
      %v6896 = vshll.u32 %v6721, 16
      %v6898 = vrot.slane %v6896, 1
      %v6899 = vor.u32 %v6894, %v6898
      %v6901 = vshll.u32 %v6722, 16
      %v6903 = vrot.slane %v6901, 1
      %v6904 = vsel %vm923, %v6899, %v6903
      %v6906 = vshrl.u32 %v6723, 16
      %v6908 = vshll.u32 %v6723, 16
      %v6910 = vrot.slane %v6908, 1
      %v6911 = vor.u32 %v6906, %v6910
      %v6913 = vshll.u32 %v6724, 16
      %v6915 = vrot.slane %v6913, 1
      %v6916 = vsel %vm923, %v6911, %v6915
      %s6917 = scalar_lea.vmem %s3, 56
      %v6918 = vld [vmem:[%s6917] sm:$0xf]
      %v6919 = vld [vmem:[%s6917 + $0x4] sm:$0xf]
      %v6922 = vunpack.c.l.b16 %v6918
      %v6923 = vunpack.c.l.b16 %v6919
      %v6924 = vpack.c.b16 %v6923, %v6922
      %v6927 = vsel %vm388, %v6736, 0
      %v6930 = vsel %vm388, %v6748, 0
      %v6933 = vsel %vm388, %v6760, 0
      %v6936 = vsel %vm388, %v6772, 0
      %v6939 = vsel %vm388, %v6784, 0
      %v6942 = vsel %vm388, %v6796, 0
      %v6945 = vsel %vm388, %v6808, 0
      %v6948 = vsel %vm388, %v6820, 0
      %v6951 = vsel %vm388, %v6832, 0
      %v6954 = vsel %vm388, %v6844, 0
      %v6957 = vsel %vm388, %v6856, 0
      %v6960 = vsel %vm388, %v6868, 0
      %v6963 = vsel %vm388, %v6880, 0
      %v6966 = vsel %vm388, %v6892, 0
      %v6969 = vsel %vm388, %v6904, 0
      %v6972 = vsel %vm388, %v6916, 0
      %6974 = vmatprep.subr.bf16.mxu0 0
      %6975 = vmatpush1.bf16.msra.mxu0 %v6924
      %6976 = vmatprep.subr.bf16.mxu0 0
      %6977 = vmatpush1.bf16.msra.mxu0 0
      %6978 = vmatprep.subr.bf16.mxu0 0
      %6979 = vmatpush1.bf16.msra.mxu0 0
      %6980 = vmatprep.subr.bf16.mxu0 0
      %6981 = vmatpush1.bf16.msra.mxu0 0
      %6982 = vmatprep.subr.bf16.mxu0 0
      %6983 = vmatpush1.bf16.msra.mxu0 0
      %6984 = vmatprep.subr.bf16.mxu0 0
      %6985 = vmatpush1.bf16.msra.mxu0 0
      %6986 = vmatprep.subr.bf16.mxu0 0
      %6987 = vmatpush1.bf16.msra.mxu0 0
      %6988 = vmatprep.subr.bf16.mxu0 0
      %6989 = vmatpush1.bf16.msra.mxu0 0
      %6990 = vmatprep.subr.bf16.mxu0 0
      %6991 = vmatpush1.bf16.msra.mxu0 0
      %6992 = vmatprep.subr.bf16.mxu0 0
      %6993 = vmatpush1.bf16.msra.mxu0 0
      %6994 = vmatprep.subr.bf16.mxu0 0
      %6995 = vmatpush1.bf16.msra.mxu0 0
      %6996 = vmatprep.subr.bf16.mxu0 0
      %6997 = vmatpush1.bf16.msra.mxu0 0
      %6998 = vmatprep.subr.bf16.mxu0 0
      %6999 = vmatpush1.bf16.msra.mxu0 0
      %7000 = vmatprep.subr.bf16.mxu0 0
      %7001 = vmatpush1.bf16.msra.mxu0 0
      %7002 = vmatprep.subr.bf16.mxu0 0
      %7003 = vmatpush1.bf16.msra.mxu0 0
      %7004 = vmatprep.subr.bf16.mxu0 0
      %7005 = vmatpush1.bf16.msra.mxu0 0
      %7006 = vmatprep.mubr.bf16.mxu0 0
      %7007 = vmatmul.mubr.bf16.gmra.mrb[0].mxu0 %v6927
      %v7008 = vpop.f32.mrb[0].mxu0
      %v7009 = vadd.f32 0.0, %v7008
      %v7010 = vpop.f32.mrb[0].mxu0
      %v7011 = vpop.f32.mrb[0].mxu0
      %v7012 = vadd.f32 0.0, %v7011
      %v7013 = vpop.f32.mrb[0].mxu0
      %7014 = vmatprep.mubr.bf16.mxu0 0
      %7015 = vmatmul.mubr.bf16.gmra.mrb[0].mxu0 %v6930
      %v7016 = vpop.f32.mrb[0].mxu0
      %v7017 = vadd.f32 0.0, %v7016
      %v7018 = vpop.f32.mrb[0].mxu0
      %v7019 = vpop.f32.mrb[0].mxu0
      %v7020 = vadd.f32 0.0, %v7019
      %v7021 = vpop.f32.mrb[0].mxu0
      %7022 = vmatprep.mubr.bf16.mxu0 0
      %7023 = vmatmul.mubr.bf16.gmra.mrb[0].mxu0 %v6933
      %v7024 = vpop.f32.mrb[0].mxu0
      %v7025 = vadd.f32 0.0, %v7024
      %v7026 = vpop.f32.mrb[0].mxu0
      %v7027 = vpop.f32.mrb[0].mxu0
      %v7028 = vadd.f32 0.0, %v7027
      %v7029 = vpop.f32.mrb[0].mxu0
      %7030 = vmatprep.mubr.bf16.mxu0 0
      %7031 = vmatmul.mubr.bf16.gmra.mrb[0].mxu0 %v6936
      %v7032 = vpop.f32.mrb[0].mxu0
      %v7033 = vadd.f32 0.0, %v7032
      %v7034 = vpop.f32.mrb[0].mxu0
      %v7035 = vpop.f32.mrb[0].mxu0
      %v7036 = vadd.f32 0.0, %v7035
      %v7037 = vpop.f32.mrb[0].mxu0
      %7038 = vmatprep.mubr.bf16.mxu0 0
      %7039 = vmatmul.mubr.bf16.gmra.mrb[0].mxu0 %v6939
      %v7040 = vpop.f32.mrb[0].mxu0
      %v7041 = vadd.f32 0.0, %v7040
      %v7042 = vpop.f32.mrb[0].mxu0
      %v7043 = vpop.f32.mrb[0].mxu0
      %v7044 = vadd.f32 0.0, %v7043
      %v7045 = vpop.f32.mrb[0].mxu0
      %7046 = vmatprep.mubr.bf16.mxu0 0
      %7047 = vmatmul.mubr.bf16.gmra.mrb[0].mxu0 %v6942
      %v7048 = vpop.f32.mrb[0].mxu0
      %v7049 = vadd.f32 0.0, %v7048
      %v7050 = vpop.f32.mrb[0].mxu0
      %v7051 = vpop.f32.mrb[0].mxu0
      %v7052 = vadd.f32 0.0, %v7051
      %v7053 = vpop.f32.mrb[0].mxu0
      %7054 = vmatprep.mubr.bf16.mxu0 0
      %7055 = vmatmul.mubr.bf16.gmra.mrb[0].mxu0 %v6945
      %v7056 = vpop.f32.mrb[0].mxu0
      %v7057 = vadd.f32 0.0, %v7056
      %v7058 = vpop.f32.mrb[0].mxu0
      %v7059 = vpop.f32.mrb[0].mxu0
      %v7060 = vadd.f32 0.0, %v7059
      %v7061 = vpop.f32.mrb[0].mxu0
      %7062 = vmatprep.mubr.bf16.mxu0 0
      %7063 = vmatmul.mubr.bf16.gmra.mrb[0].mxu0 %v6948
      %v7064 = vpop.f32.mrb[0].mxu0
      %v7065 = vadd.f32 0.0, %v7064
      %v7066 = vpop.f32.mrb[0].mxu0
      %v7067 = vpop.f32.mrb[0].mxu0
      %v7068 = vadd.f32 0.0, %v7067
      %v7069 = vpop.f32.mrb[0].mxu0
      %7070 = vmatprep.mubr.bf16.mxu0 0
      %7071 = vmatmul.mubr.bf16.gmra.mrb[0].mxu0 %v6951
      %v7072 = vpop.f32.mrb[0].mxu0
      %v7073 = vadd.f32 0.0, %v7072
      %v7074 = vpop.f32.mrb[0].mxu0
      %v7075 = vpop.f32.mrb[0].mxu0
      %v7076 = vadd.f32 0.0, %v7075
      %v7077 = vpop.f32.mrb[0].mxu0
      %7078 = vmatprep.mubr.bf16.mxu0 0
      %7079 = vmatmul.mubr.bf16.gmra.mrb[0].mxu0 %v6954
      %v7080 = vpop.f32.mrb[0].mxu0
      %v7081 = vadd.f32 0.0, %v7080
      %v7082 = vpop.f32.mrb[0].mxu0
      %v7083 = vpop.f32.mrb[0].mxu0
      %v7084 = vadd.f32 0.0, %v7083
      %v7085 = vpop.f32.mrb[0].mxu0
      %7086 = vmatprep.mubr.bf16.mxu0 0
      %7087 = vmatmul.mubr.bf16.gmra.mrb[0].mxu0 %v6957
      %v7088 = vpop.f32.mrb[0].mxu0
      %v7089 = vadd.f32 0.0, %v7088
      %v7090 = vpop.f32.mrb[0].mxu0
      %v7091 = vpop.f32.mrb[0].mxu0
      %v7092 = vadd.f32 0.0, %v7091
      %v7093 = vpop.f32.mrb[0].mxu0
      %7094 = vmatprep.mubr.bf16.mxu0 0
      %7095 = vmatmul.mubr.bf16.gmra.mrb[0].mxu0 %v6960
      %v7096 = vpop.f32.mrb[0].mxu0
      %v7097 = vadd.f32 0.0, %v7096
      %v7098 = vpop.f32.mrb[0].mxu0
      %v7099 = vpop.f32.mrb[0].mxu0
      %v7100 = vadd.f32 0.0, %v7099
      %v7101 = vpop.f32.mrb[0].mxu0
      %7102 = vmatprep.mubr.bf16.mxu0 0
      %7103 = vmatmul.mubr.bf16.gmra.mrb[0].mxu0 %v6963
      %v7104 = vpop.f32.mrb[0].mxu0
      %v7105 = vadd.f32 0.0, %v7104
      %v7106 = vpop.f32.mrb[0].mxu0
      %v7107 = vpop.f32.mrb[0].mxu0
      %v7108 = vadd.f32 0.0, %v7107
      %v7109 = vpop.f32.mrb[0].mxu0
      %7110 = vmatprep.mubr.bf16.mxu0 0
      %7111 = vmatmul.mubr.bf16.gmra.mrb[0].mxu0 %v6966
      %v7112 = vpop.f32.mrb[0].mxu0
      %v7113 = vadd.f32 0.0, %v7112
      %v7114 = vpop.f32.mrb[0].mxu0
      %v7115 = vpop.f32.mrb[0].mxu0
      %v7116 = vadd.f32 0.0, %v7115
      %v7117 = vpop.f32.mrb[0].mxu0
      %7118 = vmatprep.mubr.bf16.mxu0 0
      %7119 = vmatmul.mubr.bf16.gmra.mrb[0].mxu0 %v6969
      %v7120 = vpop.f32.mrb[0].mxu0
      %v7121 = vadd.f32 0.0, %v7120
      %v7122 = vpop.f32.mrb[0].mxu0
      %v7123 = vpop.f32.mrb[0].mxu0
      %v7124 = vadd.f32 0.0, %v7123
      %v7125 = vpop.f32.mrb[0].mxu0
      %7126 = vmatprep.mubr.bf16.mxu0 0
      %7127 = vmatmul.mubr.bf16.gmra.mrb[0].mxu0 %v6972
      %v7128 = vpop.f32.mrb[0].mxu0
      %v7129 = vadd.f32 0.0, %v7128
      %v7130 = vpop.f32.mrb[0].mxu0
      %v7131 = vpop.f32.mrb[0].mxu0
      %v7132 = vadd.f32 0.0, %v7131
      %v7133 = vpop.f32.mrb[0].mxu0
      %7134 = vdwg.mxu0
      %v7135 = vadd.f32 %v6661, %v7009
      %v7136 = vadd.f32 %v6662, %v7012
      %v7137 = vadd.f32 %v6663, %v7017
      %v7138 = vadd.f32 %v6664, %v7020
      %v7139 = vadd.f32 %v6665, %v7025
      %v7140 = vadd.f32 %v6666, %v7028
      %v7141 = vadd.f32 %v6667, %v7033
      %v7142 = vadd.f32 %v6668, %v7036
      %v7143 = vadd.f32 %v6669, %v7041
      %v7144 = vadd.f32 %v6670, %v7044
      %v7145 = vadd.f32 %v6671, %v7049
      %v7146 = vadd.f32 %v6672, %v7052
      %v7147 = vadd.f32 %v6673, %v7057
      %v7148 = vadd.f32 %v6674, %v7060
      %v7149 = vadd.f32 %v6675, %v7065
      %v7150 = vadd.f32 %v6676, %v7068
      %v7151 = vadd.f32 %v6677, %v7073
      %v7152 = vadd.f32 %v6678, %v7076
      %v7153 = vadd.f32 %v6679, %v7081
      %v7154 = vadd.f32 %v6680, %v7084
      %v7155 = vadd.f32 %v6681, %v7089
      %v7156 = vadd.f32 %v6682, %v7092
      %v7157 = vadd.f32 %v6683, %v7097
      %v7158 = vadd.f32 %v6684, %v7100
      %v7159 = vadd.f32 %v6685, %v7105
      %v7160 = vadd.f32 %v6686, %v7108
      %v7161 = vadd.f32 %v6687, %v7113
      %v7162 = vadd.f32 %v6688, %v7116
      %v7163 = vadd.f32 %v6689, %v7121
      %v7164 = vadd.f32 %v6690, %v7124
      %v7165 = vadd.f32 %v6691, %v7129
      %v7166 = vadd.f32 %v6692, %v7132
      %v7167 = vld [vmem:[%s6426] sm:$0xfe]
      %v7168 = vld [vmem:[%s6426 + $0x10] sm:$0xfe]
      %v7169 = vld [vmem:[%s6426 + $0x20] sm:$0xfe]
      %v7170 = vld [vmem:[%s6426 + $0x30] sm:$0xfe]
      %v7171 = vld [vmem:[%s6426 + $0x40] sm:$0xfe]
      %v7172 = vld [vmem:[%s6426 + $0x50] sm:$0xfe]
      %v7173 = vld [vmem:[%s6426 + $0x60] sm:$0xfe]
      %v7174 = vld [vmem:[%s6426 + $0x70] sm:$0xfe]
      %v7175 = vld [vmem:[%s6426 + $0x80] sm:$0xfe]
      %v7176 = vld [vmem:[%s6426 + $0x90] sm:$0xfe]
      %v7177 = vld [vmem:[%s6426 + $0xa0] sm:$0xfe]
      %v7178 = vld [vmem:[%s6426 + $0xb0] sm:$0xfe]
      %v7179 = vld [vmem:[%s6426 + $0xc0] sm:$0xfe]
      %v7180 = vld [vmem:[%s6426 + $0xd0] sm:$0xfe]
      %v7181 = vld [vmem:[%s6426 + $0xe0] sm:$0xfe]
      %v7182 = vld [vmem:[%s6426 + $0xf0] sm:$0xfe]
      %v7215 = vrot.slane %v7167, 1
      %v7216 = vrot.slane %v6694, 1
      %v7217 = vsel %vm1578, %v7215, %v7216
      %v7218 = vrot.slane %v7168, 1
      %v7219 = vrot.slane %v6696, 1
      %v7220 = vsel %vm1578, %v7218, %v7219
      %v7221 = vrot.slane %v7169, 1
      %v7222 = vrot.slane %v6698, 1
      %v7223 = vsel %vm1578, %v7221, %v7222
      %v7224 = vrot.slane %v7170, 1
      %v7225 = vrot.slane %v6700, 1
      %v7226 = vsel %vm1578, %v7224, %v7225
      %v7227 = vrot.slane %v7171, 1
      %v7228 = vrot.slane %v6702, 1
      %v7229 = vsel %vm1578, %v7227, %v7228
      %v7230 = vrot.slane %v7172, 1
      %v7231 = vrot.slane %v6704, 1
      %v7232 = vsel %vm1578, %v7230, %v7231
      %v7233 = vrot.slane %v7173, 1
      %v7234 = vrot.slane %v6706, 1
      %v7235 = vsel %vm1578, %v7233, %v7234
      %v7236 = vrot.slane %v7174, 1
      %v7237 = vrot.slane %v6708, 1
      %v7238 = vsel %vm1578, %v7236, %v7237
      %v7239 = vrot.slane %v7175, 1
      %v7240 = vrot.slane %v6710, 1
      %v7241 = vsel %vm1578, %v7239, %v7240
      %v7242 = vrot.slane %v7176, 1
      %v7243 = vrot.slane %v6712, 1
      %v7244 = vsel %vm1578, %v7242, %v7243
      %v7245 = vrot.slane %v7177, 1
      %v7246 = vrot.slane %v6714, 1
      %v7247 = vsel %vm1578, %v7245, %v7246
      %v7248 = vrot.slane %v7178, 1
      %v7249 = vrot.slane %v6716, 1
      %v7250 = vsel %vm1578, %v7248, %v7249
      %v7251 = vrot.slane %v7179, 1
      %v7252 = vrot.slane %v6718, 1
      %v7253 = vsel %vm1578, %v7251, %v7252
      %v7254 = vrot.slane %v7180, 1
      %v7255 = vrot.slane %v6720, 1
      %v7256 = vsel %vm1578, %v7254, %v7255
      %v7257 = vrot.slane %v7181, 1
      %v7258 = vrot.slane %v6722, 1
      %v7259 = vsel %vm1578, %v7257, %v7258
      %v7260 = vrot.slane %v7182, 1
      %v7261 = vrot.slane %v6724, 1
      %v7262 = vsel %vm1578, %v7260, %v7261
      %s7263 = scalar_lea.vmem %s3, 64
      %v7264 = vld [vmem:[%s7263] sm:$0xf]
      %v7265 = vld [vmem:[%s7263 + $0x4] sm:$0xf]
      %v7268 = vunpack.c.l.b16 %v7264
      %v7269 = vunpack.c.l.b16 %v7265
      %v7270 = vpack.c.b16 %v7269, %v7268
      %v7273 = vsel %vm388, %v7217, 0
      %v7276 = vsel %vm388, %v7220, 0
      %v7279 = vsel %vm388, %v7223, 0
      %v7282 = vsel %vm388, %v7226, 0
      %v7285 = vsel %vm388, %v7229, 0
      %v7288 = vsel %vm388, %v7232, 0
      %v7291 = vsel %vm388, %v7235, 0
      %v7294 = vsel %vm388, %v7238, 0
      %v7297 = vsel %vm388, %v7241, 0
      %v7300 = vsel %vm388, %v7244, 0
      %v7303 = vsel %vm388, %v7247, 0
      %v7306 = vsel %vm388, %v7250, 0
      %v7309 = vsel %vm388, %v7253, 0
      %v7312 = vsel %vm388, %v7256, 0
      %v7315 = vsel %vm388, %v7259, 0
      %v7318 = vsel %vm388, %v7262, 0
      %7320 = vmatprep.subr.bf16.mxu0 0
      %7321 = vmatpush1.bf16.msra.mxu0 %v7270
      %7322 = vmatprep.subr.bf16.mxu0 0
      %7323 = vmatpush1.bf16.msra.mxu0 0
      %7324 = vmatprep.subr.bf16.mxu0 0
      %7325 = vmatpush1.bf16.msra.mxu0 0
      %7326 = vmatprep.subr.bf16.mxu0 0
      %7327 = vmatpush1.bf16.msra.mxu0 0
      %7328 = vmatprep.subr.bf16.mxu0 0
      %7329 = vmatpush1.bf16.msra.mxu0 0
      %7330 = vmatprep.subr.bf16.mxu0 0
      %7331 = vmatpush1.bf16.msra.mxu0 0
      %7332 = vmatprep.subr.bf16.mxu0 0
      %7333 = vmatpush1.bf16.msra.mxu0 0
      %7334 = vmatprep.subr.bf16.mxu0 0
      %7335 = vmatpush1.bf16.msra.mxu0 0
      %7336 = vmatprep.subr.bf16.mxu0 0
      %7337 = vmatpush1.bf16.msra.mxu0 0
      %7338 = vmatprep.subr.bf16.mxu0 0
      %7339 = vmatpush1.bf16.msra.mxu0 0
      %7340 = vmatprep.subr.bf16.mxu0 0
      %7341 = vmatpush1.bf16.msra.mxu0 0
      %7342 = vmatprep.subr.bf16.mxu0 0
      %7343 = vmatpush1.bf16.msra.mxu0 0
      %7344 = vmatprep.subr.bf16.mxu0 0
      %7345 = vmatpush1.bf16.msra.mxu0 0
      %7346 = vmatprep.subr.bf16.mxu0 0
      %7347 = vmatpush1.bf16.msra.mxu0 0
      %7348 = vmatprep.subr.bf16.mxu0 0
      %7349 = vmatpush1.bf16.msra.mxu0 0
      %7350 = vmatprep.subr.bf16.mxu0 0
      %7351 = vmatpush1.bf16.msra.mxu0 0
      %7352 = vmatprep.mubr.bf16.mxu0 0
      %7353 = vmatmul.mubr.bf16.gmra.mrb[0].mxu0 %v7273
      %v7354 = vpop.f32.mrb[0].mxu0
      %v7355 = vadd.f32 0.0, %v7354
      %v7356 = vpop.f32.mrb[0].mxu0
      %v7357 = vpop.f32.mrb[0].mxu0
      %v7358 = vadd.f32 0.0, %v7357
      %v7359 = vpop.f32.mrb[0].mxu0
      %7360 = vmatprep.mubr.bf16.mxu0 0
      %7361 = vmatmul.mubr.bf16.gmra.mrb[0].mxu0 %v7276
      %v7362 = vpop.f32.mrb[0].mxu0
      %v7363 = vadd.f32 0.0, %v7362
      %v7364 = vpop.f32.mrb[0].mxu0
      %v7365 = vpop.f32.mrb[0].mxu0
      %v7366 = vadd.f32 0.0, %v7365
      %v7367 = vpop.f32.mrb[0].mxu0
      %7368 = vmatprep.mubr.bf16.mxu0 0
      %7369 = vmatmul.mubr.bf16.gmra.mrb[0].mxu0 %v7279
      %v7370 = vpop.f32.mrb[0].mxu0
      %v7371 = vadd.f32 0.0, %v7370
      %v7372 = vpop.f32.mrb[0].mxu0
      %v7373 = vpop.f32.mrb[0].mxu0
      %v7374 = vadd.f32 0.0, %v7373
      %v7375 = vpop.f32.mrb[0].mxu0
      %7376 = vmatprep.mubr.bf16.mxu0 0
      %7377 = vmatmul.mubr.bf16.gmra.mrb[0].mxu0 %v7282
      %v7378 = vpop.f32.mrb[0].mxu0
      %v7379 = vadd.f32 0.0, %v7378
      %v7380 = vpop.f32.mrb[0].mxu0
      %v7381 = vpop.f32.mrb[0].mxu0
      %v7382 = vadd.f32 0.0, %v7381
      %v7383 = vpop.f32.mrb[0].mxu0
      %7384 = vmatprep.mubr.bf16.mxu0 0
      %7385 = vmatmul.mubr.bf16.gmra.mrb[0].mxu0 %v7285
      %v7386 = vpop.f32.mrb[0].mxu0
      %v7387 = vadd.f32 0.0, %v7386
      %v7388 = vpop.f32.mrb[0].mxu0
      %v7389 = vpop.f32.mrb[0].mxu0
      %v7390 = vadd.f32 0.0, %v7389
      %v7391 = vpop.f32.mrb[0].mxu0
      %7392 = vmatprep.mubr.bf16.mxu0 0
      %7393 = vmatmul.mubr.bf16.gmra.mrb[0].mxu0 %v7288
      %v7394 = vpop.f32.mrb[0].mxu0
      %v7395 = vadd.f32 0.0, %v7394
      %v7396 = vpop.f32.mrb[0].mxu0
      %v7397 = vpop.f32.mrb[0].mxu0
      %v7398 = vadd.f32 0.0, %v7397
      %v7399 = vpop.f32.mrb[0].mxu0
      %7400 = vmatprep.mubr.bf16.mxu0 0
      %7401 = vmatmul.mubr.bf16.gmra.mrb[0].mxu0 %v7291
      %v7402 = vpop.f32.mrb[0].mxu0
      %v7403 = vadd.f32 0.0, %v7402
      %v7404 = vpop.f32.mrb[0].mxu0
      %v7405 = vpop.f32.mrb[0].mxu0
      %v7406 = vadd.f32 0.0, %v7405
      %v7407 = vpop.f32.mrb[0].mxu0
      %7408 = vmatprep.mubr.bf16.mxu0 0
      %7409 = vmatmul.mubr.bf16.gmra.mrb[0].mxu0 %v7294
      %v7410 = vpop.f32.mrb[0].mxu0
      %v7411 = vadd.f32 0.0, %v7410
      %v7412 = vpop.f32.mrb[0].mxu0
      %v7413 = vpop.f32.mrb[0].mxu0
      %v7414 = vadd.f32 0.0, %v7413
      %v7415 = vpop.f32.mrb[0].mxu0
      %7416 = vmatprep.mubr.bf16.mxu0 0
      %7417 = vmatmul.mubr.bf16.gmra.mrb[0].mxu0 %v7297
      %v7418 = vpop.f32.mrb[0].mxu0
      %v7419 = vadd.f32 0.0, %v7418
      %v7420 = vpop.f32.mrb[0].mxu0
      %v7421 = vpop.f32.mrb[0].mxu0
      %v7422 = vadd.f32 0.0, %v7421
      %v7423 = vpop.f32.mrb[0].mxu0
      %7424 = vmatprep.mubr.bf16.mxu0 0
      %7425 = vmatmul.mubr.bf16.gmra.mrb[0].mxu0 %v7300
      %v7426 = vpop.f32.mrb[0].mxu0
      %v7427 = vadd.f32 0.0, %v7426
      %v7428 = vpop.f32.mrb[0].mxu0
      %v7429 = vpop.f32.mrb[0].mxu0
      %v7430 = vadd.f32 0.0, %v7429
      %v7431 = vpop.f32.mrb[0].mxu0
      %7432 = vmatprep.mubr.bf16.mxu0 0
      %7433 = vmatmul.mubr.bf16.gmra.mrb[0].mxu0 %v7303
      %v7434 = vpop.f32.mrb[0].mxu0
      %v7435 = vadd.f32 0.0, %v7434
      %v7436 = vpop.f32.mrb[0].mxu0
      %v7437 = vpop.f32.mrb[0].mxu0
      %v7438 = vadd.f32 0.0, %v7437
      %v7439 = vpop.f32.mrb[0].mxu0
      %7440 = vmatprep.mubr.bf16.mxu0 0
      %7441 = vmatmul.mubr.bf16.gmra.mrb[0].mxu0 %v7306
      %v7442 = vpop.f32.mrb[0].mxu0
      %v7443 = vadd.f32 0.0, %v7442
      %v7444 = vpop.f32.mrb[0].mxu0
      %v7445 = vpop.f32.mrb[0].mxu0
      %v7446 = vadd.f32 0.0, %v7445
      %v7447 = vpop.f32.mrb[0].mxu0
      %7448 = vmatprep.mubr.bf16.mxu0 0
      %7449 = vmatmul.mubr.bf16.gmra.mrb[0].mxu0 %v7309
      %v7450 = vpop.f32.mrb[0].mxu0
      %v7451 = vadd.f32 0.0, %v7450
      %v7452 = vpop.f32.mrb[0].mxu0
      %v7453 = vpop.f32.mrb[0].mxu0
      %v7454 = vadd.f32 0.0, %v7453
      %v7455 = vpop.f32.mrb[0].mxu0
      %7456 = vmatprep.mubr.bf16.mxu0 0
      %7457 = vmatmul.mubr.bf16.gmra.mrb[0].mxu0 %v7312
      %v7458 = vpop.f32.mrb[0].mxu0
      %v7459 = vadd.f32 0.0, %v7458
      %v7460 = vpop.f32.mrb[0].mxu0
      %v7461 = vpop.f32.mrb[0].mxu0
      %v7462 = vadd.f32 0.0, %v7461
      %v7463 = vpop.f32.mrb[0].mxu0
      %7464 = vmatprep.mubr.bf16.mxu0 0
      %7465 = vmatmul.mubr.bf16.gmra.mrb[0].mxu0 %v7315
      %v7466 = vpop.f32.mrb[0].mxu0
      %v7467 = vadd.f32 0.0, %v7466
      %v7468 = vpop.f32.mrb[0].mxu0
      %v7469 = vpop.f32.mrb[0].mxu0
      %v7470 = vadd.f32 0.0, %v7469
      %v7471 = vpop.f32.mrb[0].mxu0
      %7472 = vmatprep.mubr.bf16.mxu0 0
      %7473 = vmatmul.mubr.bf16.gmra.mrb[0].mxu0 %v7318
      %v7474 = vpop.f32.mrb[0].mxu0
      %v7475 = vadd.f32 0.0, %v7474
      %v7476 = vpop.f32.mrb[0].mxu0
      %v7477 = vpop.f32.mrb[0].mxu0
      %v7478 = vadd.f32 0.0, %v7477
      %v7479 = vpop.f32.mrb[0].mxu0
      %7480 = vdwg.mxu0
      %v7481 = vadd.f32 %v7135, %v7355
      %v7482 = vadd.f32 %v7136, %v7358
      %v7483 = vadd.f32 %v7137, %v7363
      %v7484 = vadd.f32 %v7138, %v7366
      %v7485 = vadd.f32 %v7139, %v7371
      %v7486 = vadd.f32 %v7140, %v7374
      %v7487 = vadd.f32 %v7141, %v7379
      %v7488 = vadd.f32 %v7142, %v7382
      %v7489 = vadd.f32 %v7143, %v7387
      %v7490 = vadd.f32 %v7144, %v7390
      %v7491 = vadd.f32 %v7145, %v7395
      %v7492 = vadd.f32 %v7146, %v7398
      %v7493 = vadd.f32 %v7147, %v7403
      %v7494 = vadd.f32 %v7148, %v7406
      %v7495 = vadd.f32 %v7149, %v7411
      %v7496 = vadd.f32 %v7150, %v7414
      %v7497 = vadd.f32 %v7151, %v7419
      %v7498 = vadd.f32 %v7152, %v7422
      %v7499 = vadd.f32 %v7153, %v7427
      %v7500 = vadd.f32 %v7154, %v7430
      %v7501 = vadd.f32 %v7155, %v7435
      %v7502 = vadd.f32 %v7156, %v7438
      %v7503 = vadd.f32 %v7157, %v7443
      %v7504 = vadd.f32 %v7158, %v7446
      %v7505 = vadd.f32 %v7159, %v7451
      %v7506 = vadd.f32 %v7160, %v7454
      %v7507 = vadd.f32 %v7161, %v7459
      %v7508 = vadd.f32 %v7162, %v7462
      %v7509 = vadd.f32 %v7163, %v7467
      %v7510 = vadd.f32 %v7164, %v7470
      %v7511 = vadd.f32 %v7165, %v7475
      %v7512 = vadd.f32 %v7166, %v7478
      %v7513 = vld [vmem:[%s4] sm:$0x1]
      %v7515 = vlaneseq
      %v7516 = vshrl.u32 %v7515, 7
      %v7517 = vsub.s32 0, %v7516
      %v7518 = vrot.slane %v7513, %v7517
      %v7520 = vadd.f32 %v7481, %v7518
      %v7521 = vadd.f32 %v7482, %v7518
      %v7522 = vadd.f32 %v7483, %v7518
      %v7523 = vadd.f32 %v7484, %v7518
      %v7524 = vadd.f32 %v7485, %v7518
      %v7525 = vadd.f32 %v7486, %v7518
      %v7526 = vadd.f32 %v7487, %v7518
      %v7527 = vadd.f32 %v7488, %v7518
      %v7528 = vadd.f32 %v7489, %v7518
      %v7529 = vadd.f32 %v7490, %v7518
      %v7530 = vadd.f32 %v7491, %v7518
      %v7531 = vadd.f32 %v7492, %v7518
      %v7532 = vadd.f32 %v7493, %v7518
      %v7533 = vadd.f32 %v7494, %v7518
      %v7534 = vadd.f32 %v7495, %v7518
      %v7535 = vadd.f32 %v7496, %v7518
      %v7536 = vadd.f32 %v7497, %v7518
      %v7537 = vadd.f32 %v7498, %v7518
      %v7538 = vadd.f32 %v7499, %v7518
      %v7539 = vadd.f32 %v7500, %v7518
      %v7540 = vadd.f32 %v7501, %v7518
      %v7541 = vadd.f32 %v7502, %v7518
      %v7542 = vadd.f32 %v7503, %v7518
      %v7543 = vadd.f32 %v7504, %v7518
      %v7544 = vadd.f32 %v7505, %v7518
      %v7545 = vadd.f32 %v7506, %v7518
      %v7546 = vadd.f32 %v7507, %v7518
      %v7547 = vadd.f32 %v7508, %v7518
      %v7548 = vadd.f32 %v7509, %v7518
      %v7549 = vadd.f32 %v7510, %v7518
      %v7550 = vadd.f32 %v7511, %v7518
      %v7551 = vadd.f32 %v7512, %v7518
      %v7552 = vmax.f32 %v7520, 0.0
      %v7553 = vmax.f32 %v7521, 0.0
      %v7554 = vmax.f32 %v7522, 0.0
      %v7555 = vmax.f32 %v7523, 0.0
      %v7556 = vmax.f32 %v7524, 0.0
      %v7557 = vmax.f32 %v7525, 0.0
      %v7558 = vmax.f32 %v7526, 0.0
      %v7559 = vmax.f32 %v7527, 0.0
      %v7560 = vmax.f32 %v7528, 0.0
      %v7561 = vmax.f32 %v7529, 0.0
      %v7562 = vmax.f32 %v7530, 0.0
      %v7563 = vmax.f32 %v7531, 0.0
      %v7564 = vmax.f32 %v7532, 0.0
      %v7565 = vmax.f32 %v7533, 0.0
      %v7566 = vmax.f32 %v7534, 0.0
      %v7567 = vmax.f32 %v7535, 0.0
      %v7568 = vmax.f32 %v7536, 0.0
      %v7569 = vmax.f32 %v7537, 0.0
      %v7570 = vmax.f32 %v7538, 0.0
      %v7571 = vmax.f32 %v7539, 0.0
      %v7572 = vmax.f32 %v7540, 0.0
      %v7573 = vmax.f32 %v7541, 0.0
      %v7574 = vmax.f32 %v7542, 0.0
      %v7575 = vmax.f32 %v7543, 0.0
      %v7576 = vmax.f32 %v7544, 0.0
      %v7577 = vmax.f32 %v7545, 0.0
      %v7578 = vmax.f32 %v7546, 0.0
      %v7579 = vmax.f32 %v7547, 0.0
      %v7580 = vmax.f32 %v7548, 0.0
      %v7581 = vmax.f32 %v7549, 0.0
      %v7582 = vmax.f32 %v7550, 0.0
      %v7583 = vmax.f32 %v7551, 0.0
      %v7584 = vpack.c.bf16 %v7553, %v7552
      %v7585 = vpack.c.bf16 %v7555, %v7554
      %v7586 = vpack.c.bf16 %v7557, %v7556
      %v7587 = vpack.c.bf16 %v7559, %v7558
      %v7588 = vpack.c.bf16 %v7561, %v7560
      %v7589 = vpack.c.bf16 %v7563, %v7562
      %v7590 = vpack.c.bf16 %v7565, %v7564
      %v7591 = vpack.c.bf16 %v7567, %v7566
      %v7592 = vpack.c.bf16 %v7569, %v7568
      %v7593 = vpack.c.bf16 %v7571, %v7570
      %v7594 = vpack.c.bf16 %v7573, %v7572
      %v7595 = vpack.c.bf16 %v7575, %v7574
      %v7596 = vpack.c.bf16 %v7577, %v7576
      %v7597 = vpack.c.bf16 %v7579, %v7578
      %v7598 = vpack.c.bf16 %v7581, %v7580
      %v7599 = vpack.c.bf16 %v7583, %v7582
      %v7601 = vshrl.u32 %v7584, 16
      %v7603 = vrot.slane %v7601, 7
      %v7604 = vshll.u32 %v7584, 16
      %v7606 = vor.u32 %v7603, %v7604
      %v7608 = vshrl.u32 %v7585, 16
      %v7610 = vrot.slane %v7608, 7
      %v7611 = vshll.u32 %v7585, 16
      %v7613 = vor.u32 %v7610, %v7611
      %v7615 = vshrl.u32 %v7586, 16
      %v7617 = vrot.slane %v7615, 7
      %v7618 = vshll.u32 %v7586, 16
      %v7620 = vor.u32 %v7617, %v7618
      %v7622 = vshrl.u32 %v7587, 16
      %v7624 = vrot.slane %v7622, 7
      %v7625 = vshll.u32 %v7587, 16
      %v7627 = vor.u32 %v7624, %v7625
      %v7629 = vshrl.u32 %v7588, 16
      %v7631 = vrot.slane %v7629, 7
      %v7632 = vshll.u32 %v7588, 16
      %v7634 = vor.u32 %v7631, %v7632
      %v7636 = vshrl.u32 %v7589, 16
      %v7638 = vrot.slane %v7636, 7
      %v7639 = vshll.u32 %v7589, 16
      %v7641 = vor.u32 %v7638, %v7639
      %v7643 = vshrl.u32 %v7590, 16
      %v7645 = vrot.slane %v7643, 7
      %v7646 = vshll.u32 %v7590, 16
      %v7648 = vor.u32 %v7645, %v7646
      %v7650 = vshrl.u32 %v7591, 16
      %v7652 = vrot.slane %v7650, 7
      %v7653 = vshll.u32 %v7591, 16
      %v7655 = vor.u32 %v7652, %v7653
      %v7657 = vshrl.u32 %v7592, 16
      %v7659 = vrot.slane %v7657, 7
      %v7660 = vshll.u32 %v7592, 16
      %v7662 = vor.u32 %v7659, %v7660
      %v7664 = vshrl.u32 %v7593, 16
      %v7666 = vrot.slane %v7664, 7
      %v7667 = vshll.u32 %v7593, 16
      %v7669 = vor.u32 %v7666, %v7667
      %v7671 = vshrl.u32 %v7594, 16
      %v7673 = vrot.slane %v7671, 7
      %v7674 = vshll.u32 %v7594, 16
      %v7676 = vor.u32 %v7673, %v7674
      %v7678 = vshrl.u32 %v7595, 16
      %v7680 = vrot.slane %v7678, 7
      %v7681 = vshll.u32 %v7595, 16
      %v7683 = vor.u32 %v7680, %v7681
      %v7685 = vshrl.u32 %v7596, 16
      %v7687 = vrot.slane %v7685, 7
      %v7688 = vshll.u32 %v7596, 16
      %v7690 = vor.u32 %v7687, %v7688
      %v7692 = vshrl.u32 %v7597, 16
      %v7694 = vrot.slane %v7692, 7
      %v7695 = vshll.u32 %v7597, 16
      %v7697 = vor.u32 %v7694, %v7695
      %v7699 = vshrl.u32 %v7598, 16
      %v7701 = vrot.slane %v7699, 7
      %v7702 = vshll.u32 %v7598, 16
      %v7704 = vor.u32 %v7701, %v7702
      %v7706 = vshrl.u32 %v7599, 16
      %v7708 = vrot.slane %v7706, 7
      %v7709 = vshll.u32 %v7599, 16
      %v7711 = vor.u32 %v7708, %v7709
      %vm7744 = vcmask 261120
      %vm7745 = vmand %vm7744, %vm338
      %v7746 = vld [vmem:[%s500] sm:$0xff]
      %v7747 = vsel %vm7745, %v7606, %v7746
      %7748 = vst [vmem:[%s500] sm:$0xff] %v7747
      %v7749 = vld [vmem:[%s500 + $0x8] sm:$0x1]
      %v7750 = vsel %vm502, %v7603, %v7749
      %7751 = vst [vmem:[%s500 + $0x8] sm:$0x1] %v7750
      %v7752 = vld [vmem:[%s500 + $0x10] sm:$0xff]
      %v7753 = vsel %vm7745, %v7613, %v7752
      %7754 = vst [vmem:[%s500 + $0x10] sm:$0xff] %v7753
      %v7755 = vld [vmem:[%s500 + $0x18] sm:$0x1]
      %v7756 = vsel %vm502, %v7610, %v7755
      %7757 = vst [vmem:[%s500 + $0x18] sm:$0x1] %v7756
      %v7758 = vld [vmem:[%s500 + $0x20] sm:$0xff]
      %v7759 = vsel %vm7745, %v7620, %v7758
      %7760 = vst [vmem:[%s500 + $0x20] sm:$0xff] %v7759
      %v7761 = vld [vmem:[%s500 + $0x28] sm:$0x1]
      %v7762 = vsel %vm502, %v7617, %v7761
      %7763 = vst [vmem:[%s500 + $0x28] sm:$0x1] %v7762
      %v7764 = vld [vmem:[%s500 + $0x30] sm:$0xff]
      %v7765 = vsel %vm7745, %v7627, %v7764
      %7766 = vst [vmem:[%s500 + $0x30] sm:$0xff] %v7765
      %v7767 = vld [vmem:[%s500 + $0x38] sm:$0x1]
      %v7768 = vsel %vm502, %v7624, %v7767
      %7769 = vst [vmem:[%s500 + $0x38] sm:$0x1] %v7768
      %v7770 = vld [vmem:[%s500 + $0x40] sm:$0xff]
      %v7771 = vsel %vm7745, %v7634, %v7770
      %7772 = vst [vmem:[%s500 + $0x40] sm:$0xff] %v7771
      %v7773 = vld [vmem:[%s500 + $0x48] sm:$0x1]
      %v7774 = vsel %vm502, %v7631, %v7773
      %7775 = vst [vmem:[%s500 + $0x48] sm:$0x1] %v7774
      %v7776 = vld [vmem:[%s500 + $0x50] sm:$0xff]
      %v7777 = vsel %vm7745, %v7641, %v7776
      %7778 = vst [vmem:[%s500 + $0x50] sm:$0xff] %v7777
      %v7779 = vld [vmem:[%s500 + $0x58] sm:$0x1]
      %v7780 = vsel %vm502, %v7638, %v7779
      %7781 = vst [vmem:[%s500 + $0x58] sm:$0x1] %v7780
      %v7782 = vld [vmem:[%s500 + $0x60] sm:$0xff]
      %v7783 = vsel %vm7745, %v7648, %v7782
      %7784 = vst [vmem:[%s500 + $0x60] sm:$0xff] %v7783
      %v7785 = vld [vmem:[%s500 + $0x68] sm:$0x1]
      %v7786 = vsel %vm502, %v7645, %v7785
      %7787 = vst [vmem:[%s500 + $0x68] sm:$0x1] %v7786
      %v7788 = vld [vmem:[%s500 + $0x70] sm:$0xff]
      %v7789 = vsel %vm7745, %v7655, %v7788
      %7790 = vst [vmem:[%s500 + $0x70] sm:$0xff] %v7789
      %v7791 = vld [vmem:[%s500 + $0x78] sm:$0x1]
      %v7792 = vsel %vm502, %v7652, %v7791
      %7793 = vst [vmem:[%s500 + $0x78] sm:$0x1] %v7792
      %v7794 = vld [vmem:[%s500 + $0x80] sm:$0xff]
      %v7795 = vsel %vm7745, %v7662, %v7794
      %7796 = vst [vmem:[%s500 + $0x80] sm:$0xff] %v7795
      %v7797 = vld [vmem:[%s500 + $0x88] sm:$0x1]
      %v7798 = vsel %vm502, %v7659, %v7797
      %7799 = vst [vmem:[%s500 + $0x88] sm:$0x1] %v7798
      %v7800 = vld [vmem:[%s500 + $0x90] sm:$0xff]
      %v7801 = vsel %vm7745, %v7669, %v7800
      %7802 = vst [vmem:[%s500 + $0x90] sm:$0xff] %v7801
      %v7803 = vld [vmem:[%s500 + $0x98] sm:$0x1]
      %v7804 = vsel %vm502, %v7666, %v7803
      %7805 = vst [vmem:[%s500 + $0x98] sm:$0x1] %v7804
      %v7806 = vld [vmem:[%s500 + $0xa0] sm:$0xff]
      %v7807 = vsel %vm7745, %v7676, %v7806
      %7808 = vst [vmem:[%s500 + $0xa0] sm:$0xff] %v7807
      %v7809 = vld [vmem:[%s500 + $0xa8] sm:$0x1]
      %v7810 = vsel %vm502, %v7673, %v7809
      %7811 = vst [vmem:[%s500 + $0xa8] sm:$0x1] %v7810
      %v7812 = vld [vmem:[%s500 + $0xb0] sm:$0xff]
      %v7813 = vsel %vm7745, %v7683, %v7812
      %7814 = vst [vmem:[%s500 + $0xb0] sm:$0xff] %v7813
      %v7815 = vld [vmem:[%s500 + $0xb8] sm:$0x1]
      %v7816 = vsel %vm502, %v7680, %v7815
      %7817 = vst [vmem:[%s500 + $0xb8] sm:$0x1] %v7816
      %v7818 = vld [vmem:[%s500 + $0xc0] sm:$0xff]
      %v7819 = vsel %vm7745, %v7690, %v7818
      %7820 = vst [vmem:[%s500 + $0xc0] sm:$0xff] %v7819
      %v7821 = vld [vmem:[%s500 + $0xc8] sm:$0x1]
      %v7822 = vsel %vm502, %v7687, %v7821
      %7823 = vst [vmem:[%s500 + $0xc8] sm:$0x1] %v7822
      %v7824 = vld [vmem:[%s500 + $0xd0] sm:$0xff]
      %v7825 = vsel %vm7745, %v7697, %v7824
      %7826 = vst [vmem:[%s500 + $0xd0] sm:$0xff] %v7825
      %v7827 = vld [vmem:[%s500 + $0xd8] sm:$0x1]
      %v7828 = vsel %vm502, %v7694, %v7827
      %7829 = vst [vmem:[%s500 + $0xd8] sm:$0x1] %v7828
      %v7830 = vld [vmem:[%s500 + $0xe0] sm:$0xff]
      %v7831 = vsel %vm7745, %v7704, %v7830
      %7832 = vst [vmem:[%s500 + $0xe0] sm:$0xff] %v7831
      %v7833 = vld [vmem:[%s500 + $0xe8] sm:$0x1]
      %v7834 = vsel %vm502, %v7701, %v7833
      %7835 = vst [vmem:[%s500 + $0xe8] sm:$0x1] %v7834
      %v7836 = vld [vmem:[%s500 + $0xf0] sm:$0xff]
      %v7837 = vsel %vm7745, %v7711, %v7836
      %7838 = vst [vmem:[%s500 + $0xf0] sm:$0xff] %v7837
      %v7839 = vld [vmem:[%s500 + $0xf8] sm:$0x1]
      %v7840 = vsel %vm502, %v7708, %v7839
      %7841 = vst [vmem:[%s500 + $0xf8] sm:$0x1] %v7840
      %v7842 = vld [vmem:[#allocation4] sm:$0xff]
      %v7843 = vld [vmem:[#allocation4 + $0x10] sm:$0xff]
      %v7844 = vld [vmem:[#allocation4 + $0x20] sm:$0xff]
      %v7845 = vld [vmem:[#allocation4 + $0x30] sm:$0xff]
      %v7846 = vld [vmem:[#allocation4 + $0x40] sm:$0xff]
      %v7847 = vld [vmem:[#allocation4 + $0x50] sm:$0xff]
      %v7848 = vld [vmem:[#allocation4 + $0x60] sm:$0xff]
      %v7849 = vld [vmem:[#allocation4 + $0x70] sm:$0xff]
      %v7850 = vld [vmem:[#allocation4 + $0x80] sm:$0xff]
      %v7851 = vld [vmem:[#allocation4 + $0x90] sm:$0xff]
      %v7852 = vld [vmem:[#allocation4 + $0xa0] sm:$0xff]
      %v7853 = vld [vmem:[#allocation4 + $0xb0] sm:$0xff]
      %v7854 = vld [vmem:[#allocation4 + $0xc0] sm:$0xff]
      %v7855 = vld [vmem:[#allocation4 + $0xd0] sm:$0xff]
      %v7856 = vld [vmem:[#allocation4 + $0xe0] sm:$0xff]
      %v7857 = vld [vmem:[#allocation4 + $0xf0] sm:$0xff]
      %v7858 = vld [vmem:[%s5] sm:$0xf]
      %v7859 = vld [vmem:[%s5 + $0x4] sm:$0xf]
      %v7860 = vld [vmem:[%s5 + $0x8] sm:$0xf]
      %v7861 = vld [vmem:[%s5 + $0xc] sm:$0xf]
      %v7862 = vld [vmem:[#allocation4 + $0x8] sm:$0x1]
      %v7863 = vld [vmem:[#allocation4 + $0x18] sm:$0x1]
      %v7864 = vld [vmem:[#allocation4 + $0x28] sm:$0x1]
      %v7865 = vld [vmem:[#allocation4 + $0x38] sm:$0x1]
      %v7866 = vld [vmem:[#allocation4 + $0x48] sm:$0x1]
      %v7867 = vld [vmem:[#allocation4 + $0x58] sm:$0x1]
      %v7868 = vld [vmem:[#allocation4 + $0x68] sm:$0x1]
      %v7869 = vld [vmem:[#allocation4 + $0x78] sm:$0x1]
      %v7870 = vld [vmem:[#allocation4 + $0x88] sm:$0x1]
      %v7871 = vld [vmem:[#allocation4 + $0x98] sm:$0x1]
      %v7872 = vld [vmem:[#allocation4 + $0xa8] sm:$0x1]
      %v7873 = vld [vmem:[#allocation4 + $0xb8] sm:$0x1]
      %v7874 = vld [vmem:[#allocation4 + $0xc8] sm:$0x1]
      %v7875 = vld [vmem:[#allocation4 + $0xd8] sm:$0x1]
      %v7876 = vld [vmem:[#allocation4 + $0xe8] sm:$0x1]
      %v7877 = vld [vmem:[#allocation4 + $0xf8] sm:$0x1]
      %v7879 = vshrl.u32 %v7842, 16
      %v7881 = vshll.u32 %v7842, 16
      %v7883 = vrot.slane %v7881, 1
      %v7884 = vor.u32 %v7879, %v7883
      %v7886 = vshll.u32 %v7862, 16
      %v7888 = vrot.slane %v7886, 1
      %v7889 = vsel %vm923, %v7884, %v7888
      %v7891 = vshrl.u32 %v7843, 16
      %v7893 = vshll.u32 %v7843, 16
      %v7895 = vrot.slane %v7893, 1
      %v7896 = vor.u32 %v7891, %v7895
      %v7898 = vshll.u32 %v7863, 16
      %v7900 = vrot.slane %v7898, 1
      %v7901 = vsel %vm923, %v7896, %v7900
      %v7903 = vshrl.u32 %v7844, 16
      %v7905 = vshll.u32 %v7844, 16
      %v7907 = vrot.slane %v7905, 1
      %v7908 = vor.u32 %v7903, %v7907
      %v7910 = vshll.u32 %v7864, 16
      %v7912 = vrot.slane %v7910, 1
      %v7913 = vsel %vm923, %v7908, %v7912
      %v7915 = vshrl.u32 %v7845, 16
      %v7917 = vshll.u32 %v7845, 16
      %v7919 = vrot.slane %v7917, 1
      %v7920 = vor.u32 %v7915, %v7919
      %v7922 = vshll.u32 %v7865, 16
      %v7924 = vrot.slane %v7922, 1
      %v7925 = vsel %vm923, %v7920, %v7924
      %v7927 = vshrl.u32 %v7846, 16
      %v7929 = vshll.u32 %v7846, 16
      %v7931 = vrot.slane %v7929, 1
      %v7932 = vor.u32 %v7927, %v7931
      %v7934 = vshll.u32 %v7866, 16
      %v7936 = vrot.slane %v7934, 1
      %v7937 = vsel %vm923, %v7932, %v7936
      %v7939 = vshrl.u32 %v7847, 16
      %v7941 = vshll.u32 %v7847, 16
      %v7943 = vrot.slane %v7941, 1
      %v7944 = vor.u32 %v7939, %v7943
      %v7946 = vshll.u32 %v7867, 16
      %v7948 = vrot.slane %v7946, 1
      %v7949 = vsel %vm923, %v7944, %v7948
      %v7951 = vshrl.u32 %v7848, 16
      %v7953 = vshll.u32 %v7848, 16
      %v7955 = vrot.slane %v7953, 1
      %v7956 = vor.u32 %v7951, %v7955
      %v7958 = vshll.u32 %v7868, 16
      %v7960 = vrot.slane %v7958, 1
      %v7961 = vsel %vm923, %v7956, %v7960
      %v7963 = vshrl.u32 %v7849, 16
      %v7965 = vshll.u32 %v7849, 16
      %v7967 = vrot.slane %v7965, 1
      %v7968 = vor.u32 %v7963, %v7967
      %v7970 = vshll.u32 %v7869, 16
      %v7972 = vrot.slane %v7970, 1
      %v7973 = vsel %vm923, %v7968, %v7972
      %v7975 = vshrl.u32 %v7850, 16
      %v7977 = vshll.u32 %v7850, 16
      %v7979 = vrot.slane %v7977, 1
      %v7980 = vor.u32 %v7975, %v7979
      %v7982 = vshll.u32 %v7870, 16
      %v7984 = vrot.slane %v7982, 1
      %v7985 = vsel %vm923, %v7980, %v7984
      %v7987 = vshrl.u32 %v7851, 16
      %v7989 = vshll.u32 %v7851, 16
      %v7991 = vrot.slane %v7989, 1
      %v7992 = vor.u32 %v7987, %v7991
      %v7994 = vshll.u32 %v7871, 16
      %v7996 = vrot.slane %v7994, 1
      %v7997 = vsel %vm923, %v7992, %v7996
      %v7999 = vshrl.u32 %v7852, 16
      %v8001 = vshll.u32 %v7852, 16
      %v8003 = vrot.slane %v8001, 1
      %v8004 = vor.u32 %v7999, %v8003
      %v8006 = vshll.u32 %v7872, 16
      %v8008 = vrot.slane %v8006, 1
      %v8009 = vsel %vm923, %v8004, %v8008
      %v8011 = vshrl.u32 %v7853, 16
      %v8013 = vshll.u32 %v7853, 16
      %v8015 = vrot.slane %v8013, 1
      %v8016 = vor.u32 %v8011, %v8015
      %v8018 = vshll.u32 %v7873, 16
      %v8020 = vrot.slane %v8018, 1
      %v8021 = vsel %vm923, %v8016, %v8020
      %v8023 = vshrl.u32 %v7854, 16
      %v8025 = vshll.u32 %v7854, 16
      %v8027 = vrot.slane %v8025, 1
      %v8028 = vor.u32 %v8023, %v8027
      %v8030 = vshll.u32 %v7874, 16
      %v8032 = vrot.slane %v8030, 1
      %v8033 = vsel %vm923, %v8028, %v8032
      %v8035 = vshrl.u32 %v7855, 16
      %v8037 = vshll.u32 %v7855, 16
      %v8039 = vrot.slane %v8037, 1
      %v8040 = vor.u32 %v8035, %v8039
      %v8042 = vshll.u32 %v7875, 16
      %v8044 = vrot.slane %v8042, 1
      %v8045 = vsel %vm923, %v8040, %v8044
      %v8047 = vshrl.u32 %v7856, 16
      %v8049 = vshll.u32 %v7856, 16
      %v8051 = vrot.slane %v8049, 1
      %v8052 = vor.u32 %v8047, %v8051
      %v8054 = vshll.u32 %v7876, 16
      %v8056 = vrot.slane %v8054, 1
      %v8057 = vsel %vm923, %v8052, %v8056
      %v8059 = vshrl.u32 %v7857, 16
      %v8061 = vshll.u32 %v7857, 16
      %v8063 = vrot.slane %v8061, 1
      %v8064 = vor.u32 %v8059, %v8063
      %v8066 = vshll.u32 %v7877, 16
      %v8068 = vrot.slane %v8066, 1
      %v8069 = vsel %vm923, %v8064, %v8068
      %s8070 = scalar_lea.vmem %s5, 16
      %v8071 = vld [vmem:[%s8070] sm:$0xf]
      %v8072 = vld [vmem:[%s8070 + $0x4] sm:$0xf]
      %v8073 = vld [vmem:[%s8070 + $0x8] sm:$0xf]
      %v8074 = vld [vmem:[%s8070 + $0xc] sm:$0xf]
      %v8079 = vunpack.c.l.b16 %v8071
      %v8080 = vunpack.c.l.b16 %v8072
      %v8081 = vunpack.c.l.b16 %v8073
      %v8082 = vunpack.c.l.b16 %v8074
      %v8083 = vpack.c.b16 %v8080, %v8079
      %v8084 = vpack.c.b16 %v8082, %v8081
      %v8088 = vsel %vm494, %v7889, 0
      %v8091 = vsel %vm494, %v7901, 0
      %v8094 = vsel %vm494, %v7913, 0
      %v8097 = vsel %vm494, %v7925, 0
      %v8100 = vsel %vm494, %v7937, 0
      %v8103 = vsel %vm494, %v7949, 0
      %v8106 = vsel %vm494, %v7961, 0
      %v8109 = vsel %vm494, %v7973, 0
      %v8112 = vsel %vm494, %v7985, 0
      %v8115 = vsel %vm494, %v7997, 0
      %v8118 = vsel %vm494, %v8009, 0
      %v8121 = vsel %vm494, %v8021, 0
      %v8124 = vsel %vm494, %v8033, 0
      %v8127 = vsel %vm494, %v8045, 0
      %v8130 = vsel %vm494, %v8057, 0
      %v8133 = vsel %vm494, %v8069, 0
      %8135 = vmatprep.subr.bf16.mxu0 0
      %8136 = vmatpush1.bf16.msra.mxu0 %v8083
      %8137 = vmatprep.subr.bf16.mxu0 0
      %8138 = vmatpush1.bf16.msra.mxu0 %v8084
      %8139 = vmatprep.subr.bf16.mxu0 0
      %8140 = vmatpush1.bf16.msra.mxu0 0
      %8141 = vmatprep.subr.bf16.mxu0 0
      %8142 = vmatpush1.bf16.msra.mxu0 0
      %8143 = vmatprep.subr.bf16.mxu0 0
      %8144 = vmatpush1.bf16.msra.mxu0 0
      %8145 = vmatprep.subr.bf16.mxu0 0
      %8146 = vmatpush1.bf16.msra.mxu0 0
      %8147 = vmatprep.subr.bf16.mxu0 0
      %8148 = vmatpush1.bf16.msra.mxu0 0
      %8149 = vmatprep.subr.bf16.mxu0 0
      %8150 = vmatpush1.bf16.msra.mxu0 0
      %8151 = vmatprep.subr.bf16.mxu0 0
      %8152 = vmatpush1.bf16.msra.mxu0 0
      %8153 = vmatprep.subr.bf16.mxu0 0
      %8154 = vmatpush1.bf16.msra.mxu0 0
      %8155 = vmatprep.subr.bf16.mxu0 0
      %8156 = vmatpush1.bf16.msra.mxu0 0
      %8157 = vmatprep.subr.bf16.mxu0 0
      %8158 = vmatpush1.bf16.msra.mxu0 0
      %8159 = vmatprep.subr.bf16.mxu0 0
      %8160 = vmatpush1.bf16.msra.mxu0 0
      %8161 = vmatprep.subr.bf16.mxu0 0
      %8162 = vmatpush1.bf16.msra.mxu0 0
      %8163 = vmatprep.subr.bf16.mxu0 0
      %8164 = vmatpush1.bf16.msra.mxu0 0
      %8165 = vmatprep.subr.bf16.mxu0 0
      %8166 = vmatpush1.bf16.msra.mxu0 0
      %8167 = vmatprep.mubr.bf16.mxu0 0
      %8168 = vmatmul.mubr.bf16.gmra.mrb[0].mxu0 %v8088
      %v8169 = vpop.f32.mrb[0].mxu0
      %v8170 = vadd.f32 0.0, %v8169
      %v8171 = vpop.f32.mrb[0].mxu0
      %v8172 = vpop.f32.mrb[0].mxu0
      %v8173 = vadd.f32 0.0, %v8172
      %v8174 = vpop.f32.mrb[0].mxu0
      %8175 = vmatprep.mubr.bf16.mxu0 0
      %8176 = vmatmul.mubr.bf16.gmra.mrb[0].mxu0 %v8091
      %v8177 = vpop.f32.mrb[0].mxu0
      %v8178 = vadd.f32 0.0, %v8177
      %v8179 = vpop.f32.mrb[0].mxu0
      %v8180 = vpop.f32.mrb[0].mxu0
      %v8181 = vadd.f32 0.0, %v8180
      %v8182 = vpop.f32.mrb[0].mxu0
      %8183 = vmatprep.mubr.bf16.mxu0 0
      %8184 = vmatmul.mubr.bf16.gmra.mrb[0].mxu0 %v8094
      %v8185 = vpop.f32.mrb[0].mxu0
      %v8186 = vadd.f32 0.0, %v8185
      %v8187 = vpop.f32.mrb[0].mxu0
      %v8188 = vpop.f32.mrb[0].mxu0
      %v8189 = vadd.f32 0.0, %v8188
      %v8190 = vpop.f32.mrb[0].mxu0
      %8191 = vmatprep.mubr.bf16.mxu0 0
      %8192 = vmatmul.mubr.bf16.gmra.mrb[0].mxu0 %v8097
      %v8193 = vpop.f32.mrb[0].mxu0
      %v8194 = vadd.f32 0.0, %v8193
      %v8195 = vpop.f32.mrb[0].mxu0
      %v8196 = vpop.f32.mrb[0].mxu0
      %v8197 = vadd.f32 0.0, %v8196
      %v8198 = vpop.f32.mrb[0].mxu0
      %8199 = vmatprep.mubr.bf16.mxu0 0
      %8200 = vmatmul.mubr.bf16.gmra.mrb[0].mxu0 %v8100
      %v8201 = vpop.f32.mrb[0].mxu0
      %v8202 = vadd.f32 0.0, %v8201
      %v8203 = vpop.f32.mrb[0].mxu0
      %v8204 = vpop.f32.mrb[0].mxu0
      %v8205 = vadd.f32 0.0, %v8204
      %v8206 = vpop.f32.mrb[0].mxu0
      %8207 = vmatprep.mubr.bf16.mxu0 0
      %8208 = vmatmul.mubr.bf16.gmra.mrb[0].mxu0 %v8103
      %v8209 = vpop.f32.mrb[0].mxu0
      %v8210 = vadd.f32 0.0, %v8209
      %v8211 = vpop.f32.mrb[0].mxu0
      %v8212 = vpop.f32.mrb[0].mxu0
      %v8213 = vadd.f32 0.0, %v8212
      %v8214 = vpop.f32.mrb[0].mxu0
      %8215 = vmatprep.mubr.bf16.mxu0 0
      %8216 = vmatmul.mubr.bf16.gmra.mrb[0].mxu0 %v8106
      %v8217 = vpop.f32.mrb[0].mxu0
      %v8218 = vadd.f32 0.0, %v8217
      %v8219 = vpop.f32.mrb[0].mxu0
      %v8220 = vpop.f32.mrb[0].mxu0
      %v8221 = vadd.f32 0.0, %v8220
      %v8222 = vpop.f32.mrb[0].mxu0
      %8223 = vmatprep.mubr.bf16.mxu0 0
      %8224 = vmatmul.mubr.bf16.gmra.mrb[0].mxu0 %v8109
      %v8225 = vpop.f32.mrb[0].mxu0
      %v8226 = vadd.f32 0.0, %v8225
      %v8227 = vpop.f32.mrb[0].mxu0
      %v8228 = vpop.f32.mrb[0].mxu0
      %v8229 = vadd.f32 0.0, %v8228
      %v8230 = vpop.f32.mrb[0].mxu0
      %8231 = vmatprep.mubr.bf16.mxu0 0
      %8232 = vmatmul.mubr.bf16.gmra.mrb[0].mxu0 %v8112
      %v8233 = vpop.f32.mrb[0].mxu0
      %v8234 = vadd.f32 0.0, %v8233
      %v8235 = vpop.f32.mrb[0].mxu0
      %v8236 = vpop.f32.mrb[0].mxu0
      %v8237 = vadd.f32 0.0, %v8236
      %v8238 = vpop.f32.mrb[0].mxu0
      %8239 = vmatprep.mubr.bf16.mxu0 0
      %8240 = vmatmul.mubr.bf16.gmra.mrb[0].mxu0 %v8115
      %v8241 = vpop.f32.mrb[0].mxu0
      %v8242 = vadd.f32 0.0, %v8241
      %v8243 = vpop.f32.mrb[0].mxu0
      %v8244 = vpop.f32.mrb[0].mxu0
      %v8245 = vadd.f32 0.0, %v8244
      %v8246 = vpop.f32.mrb[0].mxu0
      %8247 = vmatprep.mubr.bf16.mxu0 0
      %8248 = vmatmul.mubr.bf16.gmra.mrb[0].mxu0 %v8118
      %v8249 = vpop.f32.mrb[0].mxu0
      %v8250 = vadd.f32 0.0, %v8249
      %v8251 = vpop.f32.mrb[0].mxu0
      %v8252 = vpop.f32.mrb[0].mxu0
      %v8253 = vadd.f32 0.0, %v8252
      %v8254 = vpop.f32.mrb[0].mxu0
      %8255 = vmatprep.mubr.bf16.mxu0 0
      %8256 = vmatmul.mubr.bf16.gmra.mrb[0].mxu0 %v8121
      %v8257 = vpop.f32.mrb[0].mxu0
      %v8258 = vadd.f32 0.0, %v8257
      %v8259 = vpop.f32.mrb[0].mxu0
      %v8260 = vpop.f32.mrb[0].mxu0
      %v8261 = vadd.f32 0.0, %v8260
      %v8262 = vpop.f32.mrb[0].mxu0
      %8263 = vmatprep.mubr.bf16.mxu0 0
      %8264 = vmatmul.mubr.bf16.gmra.mrb[0].mxu0 %v8124
      %v8265 = vpop.f32.mrb[0].mxu0
      %v8266 = vadd.f32 0.0, %v8265
      %v8267 = vpop.f32.mrb[0].mxu0
      %v8268 = vpop.f32.mrb[0].mxu0
      %v8269 = vadd.f32 0.0, %v8268
      %v8270 = vpop.f32.mrb[0].mxu0
      %8271 = vmatprep.mubr.bf16.mxu0 0
      %8272 = vmatmul.mubr.bf16.gmra.mrb[0].mxu0 %v8127
      %v8273 = vpop.f32.mrb[0].mxu0
      %v8274 = vadd.f32 0.0, %v8273
      %v8275 = vpop.f32.mrb[0].mxu0
      %v8276 = vpop.f32.mrb[0].mxu0
      %v8277 = vadd.f32 0.0, %v8276
      %v8278 = vpop.f32.mrb[0].mxu0
      %8279 = vmatprep.mubr.bf16.mxu0 0
      %8280 = vmatmul.mubr.bf16.gmra.mrb[0].mxu0 %v8130
      %v8281 = vpop.f32.mrb[0].mxu0
      %v8282 = vadd.f32 0.0, %v8281
      %v8283 = vpop.f32.mrb[0].mxu0
      %v8284 = vpop.f32.mrb[0].mxu0
      %v8285 = vadd.f32 0.0, %v8284
      %v8286 = vpop.f32.mrb[0].mxu0
      %8287 = vmatprep.mubr.bf16.mxu0 0
      %8288 = vmatmul.mubr.bf16.gmra.mrb[0].mxu0 %v8133
      %v8289 = vpop.f32.mrb[0].mxu0
      %v8290 = vadd.f32 0.0, %v8289
      %v8291 = vpop.f32.mrb[0].mxu0
      %v8292 = vpop.f32.mrb[0].mxu0
      %v8293 = vadd.f32 0.0, %v8292
      %v8294 = vpop.f32.mrb[0].mxu0
      %8295 = vdwg.mxu0
      %v8300 = vunpack.c.l.b16 %v7858
      %v8301 = vunpack.c.l.b16 %v7859
      %v8302 = vunpack.c.l.b16 %v7860
      %v8303 = vunpack.c.l.b16 %v7861
      %v8304 = vpack.c.b16 %v8301, %v8300
      %v8305 = vpack.c.b16 %v8303, %v8302
      %v8308 = vsel %vm494, %v7842, 0
      %v8310 = vsel %vm494, %v7843, 0
      %v8312 = vsel %vm494, %v7844, 0
      %v8314 = vsel %vm494, %v7845, 0
      %v8316 = vsel %vm494, %v7846, 0
      %v8318 = vsel %vm494, %v7847, 0
      %v8320 = vsel %vm494, %v7848, 0
      %v8322 = vsel %vm494, %v7849, 0
      %v8324 = vsel %vm494, %v7850, 0
      %v8326 = vsel %vm494, %v7851, 0
      %v8328 = vsel %vm494, %v7852, 0
      %v8330 = vsel %vm494, %v7853, 0
      %v8332 = vsel %vm494, %v7854, 0
      %v8334 = vsel %vm494, %v7855, 0
      %v8336 = vsel %vm494, %v7856, 0
      %v8338 = vsel %vm494, %v7857, 0
      %8340 = vmatprep.subr.bf16.mxu0 0
      %8341 = vmatpush1.bf16.msra.mxu0 %v8304
      %8342 = vmatprep.subr.bf16.mxu0 0
      %8343 = vmatpush1.bf16.msra.mxu0 %v8305
      %8344 = vmatprep.subr.bf16.mxu0 0
      %8345 = vmatpush1.bf16.msra.mxu0 0
      %8346 = vmatprep.subr.bf16.mxu0 0
      %8347 = vmatpush1.bf16.msra.mxu0 0
      %8348 = vmatprep.subr.bf16.mxu0 0
      %8349 = vmatpush1.bf16.msra.mxu0 0
      %8350 = vmatprep.subr.bf16.mxu0 0
      %8351 = vmatpush1.bf16.msra.mxu0 0
      %8352 = vmatprep.subr.bf16.mxu0 0
      %8353 = vmatpush1.bf16.msra.mxu0 0
      %8354 = vmatprep.subr.bf16.mxu0 0
      %8355 = vmatpush1.bf16.msra.mxu0 0
      %8356 = vmatprep.subr.bf16.mxu0 0
      %8357 = vmatpush1.bf16.msra.mxu0 0
      %8358 = vmatprep.subr.bf16.mxu0 0
      %8359 = vmatpush1.bf16.msra.mxu0 0
      %8360 = vmatprep.subr.bf16.mxu0 0
      %8361 = vmatpush1.bf16.msra.mxu0 0
      %8362 = vmatprep.subr.bf16.mxu0 0
      %8363 = vmatpush1.bf16.msra.mxu0 0
      %8364 = vmatprep.subr.bf16.mxu0 0
      %8365 = vmatpush1.bf16.msra.mxu0 0
      %8366 = vmatprep.subr.bf16.mxu0 0
      %8367 = vmatpush1.bf16.msra.mxu0 0
      %8368 = vmatprep.subr.bf16.mxu0 0
      %8369 = vmatpush1.bf16.msra.mxu0 0
      %8370 = vmatprep.subr.bf16.mxu0 0
      %8371 = vmatpush1.bf16.msra.mxu0 0
      %8372 = vmatprep.mubr.bf16.mxu0 0
      %8373 = vmatmul.mubr.bf16.gmra.mrb[0].mxu0 %v8308
      %v8374 = vpop.f32.mrb[0].mxu0
      %v8375 = vadd.f32 %v8170, %v8374
      %v8376 = vpop.f32.mrb[0].mxu0
      %v8377 = vpop.f32.mrb[0].mxu0
      %v8378 = vadd.f32 %v8173, %v8377
      %v8379 = vpop.f32.mrb[0].mxu0
      %8380 = vmatprep.mubr.bf16.mxu0 0
      %8381 = vmatmul.mubr.bf16.gmra.mrb[0].mxu0 %v8310
      %v8382 = vpop.f32.mrb[0].mxu0
      %v8383 = vadd.f32 %v8178, %v8382
      %v8384 = vpop.f32.mrb[0].mxu0
      %v8385 = vpop.f32.mrb[0].mxu0
      %v8386 = vadd.f32 %v8181, %v8385
      %v8387 = vpop.f32.mrb[0].mxu0
      %8388 = vmatprep.mubr.bf16.mxu0 0
      %8389 = vmatmul.mubr.bf16.gmra.mrb[0].mxu0 %v8312
      %v8390 = vpop.f32.mrb[0].mxu0
      %v8391 = vadd.f32 %v8186, %v8390
      %v8392 = vpop.f32.mrb[0].mxu0
      %v8393 = vpop.f32.mrb[0].mxu0
      %v8394 = vadd.f32 %v8189, %v8393
      %v8395 = vpop.f32.mrb[0].mxu0
      %8396 = vmatprep.mubr.bf16.mxu0 0
      %8397 = vmatmul.mubr.bf16.gmra.mrb[0].mxu0 %v8314
      %v8398 = vpop.f32.mrb[0].mxu0
      %v8399 = vadd.f32 %v8194, %v8398
      %v8400 = vpop.f32.mrb[0].mxu0
      %v8401 = vpop.f32.mrb[0].mxu0
      %v8402 = vadd.f32 %v8197, %v8401
      %v8403 = vpop.f32.mrb[0].mxu0
      %8404 = vmatprep.mubr.bf16.mxu0 0
      %8405 = vmatmul.mubr.bf16.gmra.mrb[0].mxu0 %v8316
      %v8406 = vpop.f32.mrb[0].mxu0
      %v8407 = vadd.f32 %v8202, %v8406
      %v8408 = vpop.f32.mrb[0].mxu0
      %v8409 = vpop.f32.mrb[0].mxu0
      %v8410 = vadd.f32 %v8205, %v8409
      %v8411 = vpop.f32.mrb[0].mxu0
      %8412 = vmatprep.mubr.bf16.mxu0 0
      %8413 = vmatmul.mubr.bf16.gmra.mrb[0].mxu0 %v8318
      %v8414 = vpop.f32.mrb[0].mxu0
      %v8415 = vadd.f32 %v8210, %v8414
      %v8416 = vpop.f32.mrb[0].mxu0
      %v8417 = vpop.f32.mrb[0].mxu0
      %v8418 = vadd.f32 %v8213, %v8417
      %v8419 = vpop.f32.mrb[0].mxu0
      %8420 = vmatprep.mubr.bf16.mxu0 0
      %8421 = vmatmul.mubr.bf16.gmra.mrb[0].mxu0 %v8320
      %v8422 = vpop.f32.mrb[0].mxu0
      %v8423 = vadd.f32 %v8218, %v8422
      %v8424 = vpop.f32.mrb[0].mxu0
      %v8425 = vpop.f32.mrb[0].mxu0
      %v8426 = vadd.f32 %v8221, %v8425
      %v8427 = vpop.f32.mrb[0].mxu0
      %8428 = vmatprep.mubr.bf16.mxu0 0
      %8429 = vmatmul.mubr.bf16.gmra.mrb[0].mxu0 %v8322
      %v8430 = vpop.f32.mrb[0].mxu0
      %v8431 = vadd.f32 %v8226, %v8430
      %v8432 = vpop.f32.mrb[0].mxu0
      %v8433 = vpop.f32.mrb[0].mxu0
      %v8434 = vadd.f32 %v8229, %v8433
      %v8435 = vpop.f32.mrb[0].mxu0
      %8436 = vmatprep.mubr.bf16.mxu0 0
      %8437 = vmatmul.mubr.bf16.gmra.mrb[0].mxu0 %v8324
      %v8438 = vpop.f32.mrb[0].mxu0
      %v8439 = vadd.f32 %v8234, %v8438
      %v8440 = vpop.f32.mrb[0].mxu0
      %v8441 = vpop.f32.mrb[0].mxu0
      %v8442 = vadd.f32 %v8237, %v8441
      %v8443 = vpop.f32.mrb[0].mxu0
      %8444 = vmatprep.mubr.bf16.mxu0 0
      %8445 = vmatmul.mubr.bf16.gmra.mrb[0].mxu0 %v8326
      %v8446 = vpop.f32.mrb[0].mxu0
      %v8447 = vadd.f32 %v8242, %v8446
      %v8448 = vpop.f32.mrb[0].mxu0
      %v8449 = vpop.f32.mrb[0].mxu0
      %v8450 = vadd.f32 %v8245, %v8449
      %v8451 = vpop.f32.mrb[0].mxu0
      %8452 = vmatprep.mubr.bf16.mxu0 0
      %8453 = vmatmul.mubr.bf16.gmra.mrb[0].mxu0 %v8328
      %v8454 = vpop.f32.mrb[0].mxu0
      %v8455 = vadd.f32 %v8250, %v8454
      %v8456 = vpop.f32.mrb[0].mxu0
      %v8457 = vpop.f32.mrb[0].mxu0
      %v8458 = vadd.f32 %v8253, %v8457
      %v8459 = vpop.f32.mrb[0].mxu0
      %8460 = vmatprep.mubr.bf16.mxu0 0
      %8461 = vmatmul.mubr.bf16.gmra.mrb[0].mxu0 %v8330
      %v8462 = vpop.f32.mrb[0].mxu0
      %v8463 = vadd.f32 %v8258, %v8462
      %v8464 = vpop.f32.mrb[0].mxu0
      %v8465 = vpop.f32.mrb[0].mxu0
      %v8466 = vadd.f32 %v8261, %v8465
      %v8467 = vpop.f32.mrb[0].mxu0
      %8468 = vmatprep.mubr.bf16.mxu0 0
      %8469 = vmatmul.mubr.bf16.gmra.mrb[0].mxu0 %v8332
      %v8470 = vpop.f32.mrb[0].mxu0
      %v8471 = vadd.f32 %v8266, %v8470
      %v8472 = vpop.f32.mrb[0].mxu0
      %v8473 = vpop.f32.mrb[0].mxu0
      %v8474 = vadd.f32 %v8269, %v8473
      %v8475 = vpop.f32.mrb[0].mxu0
      %8476 = vmatprep.mubr.bf16.mxu0 0
      %8477 = vmatmul.mubr.bf16.gmra.mrb[0].mxu0 %v8334
      %v8478 = vpop.f32.mrb[0].mxu0
      %v8479 = vadd.f32 %v8274, %v8478
      %v8480 = vpop.f32.mrb[0].mxu0
      %v8481 = vpop.f32.mrb[0].mxu0
      %v8482 = vadd.f32 %v8277, %v8481
      %v8483 = vpop.f32.mrb[0].mxu0
      %8484 = vmatprep.mubr.bf16.mxu0 0
      %8485 = vmatmul.mubr.bf16.gmra.mrb[0].mxu0 %v8336
      %v8486 = vpop.f32.mrb[0].mxu0
      %v8487 = vadd.f32 %v8282, %v8486
      %v8488 = vpop.f32.mrb[0].mxu0
      %v8489 = vpop.f32.mrb[0].mxu0
      %v8490 = vadd.f32 %v8285, %v8489
      %v8491 = vpop.f32.mrb[0].mxu0
      %8492 = vmatprep.mubr.bf16.mxu0 0
      %8493 = vmatmul.mubr.bf16.gmra.mrb[0].mxu0 %v8338
      %v8494 = vpop.f32.mrb[0].mxu0
      %v8495 = vadd.f32 %v8290, %v8494
      %v8496 = vpop.f32.mrb[0].mxu0
      %v8497 = vpop.f32.mrb[0].mxu0
      %v8498 = vadd.f32 %v8293, %v8497
      %v8499 = vpop.f32.mrb[0].mxu0
      %8500 = vdwg.mxu0
      %v8501 = vld [vmem:[#allocation4] sm:$0xfe]
      %v8502 = vld [vmem:[#allocation4 + $0x10] sm:$0xfe]
      %v8503 = vld [vmem:[#allocation4 + $0x20] sm:$0xfe]
      %v8504 = vld [vmem:[#allocation4 + $0x30] sm:$0xfe]
      %v8505 = vld [vmem:[#allocation4 + $0x40] sm:$0xfe]
      %v8506 = vld [vmem:[#allocation4 + $0x50] sm:$0xfe]
      %v8507 = vld [vmem:[#allocation4 + $0x60] sm:$0xfe]
      %v8508 = vld [vmem:[#allocation4 + $0x70] sm:$0xfe]
      %v8509 = vld [vmem:[#allocation4 + $0x80] sm:$0xfe]
      %v8510 = vld [vmem:[#allocation4 + $0x90] sm:$0xfe]
      %v8511 = vld [vmem:[#allocation4 + $0xa0] sm:$0xfe]
      %v8512 = vld [vmem:[#allocation4 + $0xb0] sm:$0xfe]
      %v8513 = vld [vmem:[#allocation4 + $0xc0] sm:$0xfe]
      %v8514 = vld [vmem:[#allocation4 + $0xd0] sm:$0xfe]
      %v8515 = vld [vmem:[#allocation4 + $0xe0] sm:$0xfe]
      %v8516 = vld [vmem:[#allocation4 + $0xf0] sm:$0xfe]
      %v8549 = vrot.slane %v8501, 1
      %v8550 = vrot.slane %v7862, 1
      %v8551 = vsel %vm1578, %v8549, %v8550
      %v8552 = vrot.slane %v8502, 1
      %v8553 = vrot.slane %v7863, 1
      %v8554 = vsel %vm1578, %v8552, %v8553
      %v8555 = vrot.slane %v8503, 1
      %v8556 = vrot.slane %v7864, 1
      %v8557 = vsel %vm1578, %v8555, %v8556
      %v8558 = vrot.slane %v8504, 1
      %v8559 = vrot.slane %v7865, 1
      %v8560 = vsel %vm1578, %v8558, %v8559
      %v8561 = vrot.slane %v8505, 1
      %v8562 = vrot.slane %v7866, 1
      %v8563 = vsel %vm1578, %v8561, %v8562
      %v8564 = vrot.slane %v8506, 1
      %v8565 = vrot.slane %v7867, 1
      %v8566 = vsel %vm1578, %v8564, %v8565
      %v8567 = vrot.slane %v8507, 1
      %v8568 = vrot.slane %v7868, 1
      %v8569 = vsel %vm1578, %v8567, %v8568
      %v8570 = vrot.slane %v8508, 1
      %v8571 = vrot.slane %v7869, 1
      %v8572 = vsel %vm1578, %v8570, %v8571
      %v8573 = vrot.slane %v8509, 1
      %v8574 = vrot.slane %v7870, 1
      %v8575 = vsel %vm1578, %v8573, %v8574
      %v8576 = vrot.slane %v8510, 1
      %v8577 = vrot.slane %v7871, 1
      %v8578 = vsel %vm1578, %v8576, %v8577
      %v8579 = vrot.slane %v8511, 1
      %v8580 = vrot.slane %v7872, 1
      %v8581 = vsel %vm1578, %v8579, %v8580
      %v8582 = vrot.slane %v8512, 1
      %v8583 = vrot.slane %v7873, 1
      %v8584 = vsel %vm1578, %v8582, %v8583
      %v8585 = vrot.slane %v8513, 1
      %v8586 = vrot.slane %v7874, 1
      %v8587 = vsel %vm1578, %v8585, %v8586
      %v8588 = vrot.slane %v8514, 1
      %v8589 = vrot.slane %v7875, 1
      %v8590 = vsel %vm1578, %v8588, %v8589
      %v8591 = vrot.slane %v8515, 1
      %v8592 = vrot.slane %v7876, 1
      %v8593 = vsel %vm1578, %v8591, %v8592
      %v8594 = vrot.slane %v8516, 1
      %v8595 = vrot.slane %v7877, 1
      %v8596 = vsel %vm1578, %v8594, %v8595
      %s8597 = scalar_lea.vmem %s5, 32
      %v8598 = vld [vmem:[%s8597] sm:$0xf]
      %v8599 = vld [vmem:[%s8597 + $0x4] sm:$0xf]
      %v8600 = vld [vmem:[%s8597 + $0x8] sm:$0xf]
      %v8601 = vld [vmem:[%s8597 + $0xc] sm:$0xf]
      %v8606 = vunpack.c.l.b16 %v8598
      %v8607 = vunpack.c.l.b16 %v8599
      %v8608 = vunpack.c.l.b16 %v8600
      %v8609 = vunpack.c.l.b16 %v8601
      %v8610 = vpack.c.b16 %v8607, %v8606
      %v8611 = vpack.c.b16 %v8609, %v8608
      %v8615 = vsel %vm494, %v8551, 0
      %v8618 = vsel %vm494, %v8554, 0
      %v8621 = vsel %vm494, %v8557, 0
      %v8624 = vsel %vm494, %v8560, 0
      %v8627 = vsel %vm494, %v8563, 0
      %v8630 = vsel %vm494, %v8566, 0
      %v8633 = vsel %vm494, %v8569, 0
      %v8636 = vsel %vm494, %v8572, 0
      %v8639 = vsel %vm494, %v8575, 0
      %v8642 = vsel %vm494, %v8578, 0
      %v8645 = vsel %vm494, %v8581, 0
      %v8648 = vsel %vm494, %v8584, 0
      %v8651 = vsel %vm494, %v8587, 0
      %v8654 = vsel %vm494, %v8590, 0
      %v8657 = vsel %vm494, %v8593, 0
      %v8660 = vsel %vm494, %v8596, 0
      %8662 = vmatprep.subr.bf16.mxu0 0
      %8663 = vmatpush1.bf16.msra.mxu0 %v8610
      %8664 = vmatprep.subr.bf16.mxu0 0
      %8665 = vmatpush1.bf16.msra.mxu0 %v8611
      %8666 = vmatprep.subr.bf16.mxu0 0
      %8667 = vmatpush1.bf16.msra.mxu0 0
      %8668 = vmatprep.subr.bf16.mxu0 0
      %8669 = vmatpush1.bf16.msra.mxu0 0
      %8670 = vmatprep.subr.bf16.mxu0 0
      %8671 = vmatpush1.bf16.msra.mxu0 0
      %8672 = vmatprep.subr.bf16.mxu0 0
      %8673 = vmatpush1.bf16.msra.mxu0 0
      %8674 = vmatprep.subr.bf16.mxu0 0
      %8675 = vmatpush1.bf16.msra.mxu0 0
      %8676 = vmatprep.subr.bf16.mxu0 0
      %8677 = vmatpush1.bf16.msra.mxu0 0
      %8678 = vmatprep.subr.bf16.mxu0 0
      %8679 = vmatpush1.bf16.msra.mxu0 0
      %8680 = vmatprep.subr.bf16.mxu0 0
      %8681 = vmatpush1.bf16.msra.mxu0 0
      %8682 = vmatprep.subr.bf16.mxu0 0
      %8683 = vmatpush1.bf16.msra.mxu0 0
      %8684 = vmatprep.subr.bf16.mxu0 0
      %8685 = vmatpush1.bf16.msra.mxu0 0
      %8686 = vmatprep.subr.bf16.mxu0 0
      %8687 = vmatpush1.bf16.msra.mxu0 0
      %8688 = vmatprep.subr.bf16.mxu0 0
      %8689 = vmatpush1.bf16.msra.mxu0 0
      %8690 = vmatprep.subr.bf16.mxu0 0
      %8691 = vmatpush1.bf16.msra.mxu0 0
      %8692 = vmatprep.subr.bf16.mxu0 0
      %8693 = vmatpush1.bf16.msra.mxu0 0
      %8694 = vmatprep.mubr.bf16.mxu0 0
      %8695 = vmatmul.mubr.bf16.gmra.mrb[0].mxu0 %v8615
      %v8696 = vpop.f32.mrb[0].mxu0
      %v8697 = vadd.f32 0.0, %v8696
      %v8698 = vpop.f32.mrb[0].mxu0
      %v8699 = vpop.f32.mrb[0].mxu0
      %v8700 = vadd.f32 0.0, %v8699
      %v8701 = vpop.f32.mrb[0].mxu0
      %8702 = vmatprep.mubr.bf16.mxu0 0
      %8703 = vmatmul.mubr.bf16.gmra.mrb[0].mxu0 %v8618
      %v8704 = vpop.f32.mrb[0].mxu0
      %v8705 = vadd.f32 0.0, %v8704
      %v8706 = vpop.f32.mrb[0].mxu0
      %v8707 = vpop.f32.mrb[0].mxu0
      %v8708 = vadd.f32 0.0, %v8707
      %v8709 = vpop.f32.mrb[0].mxu0
      %8710 = vmatprep.mubr.bf16.mxu0 0
      %8711 = vmatmul.mubr.bf16.gmra.mrb[0].mxu0 %v8621
      %v8712 = vpop.f32.mrb[0].mxu0
      %v8713 = vadd.f32 0.0, %v8712
      %v8714 = vpop.f32.mrb[0].mxu0
      %v8715 = vpop.f32.mrb[0].mxu0
      %v8716 = vadd.f32 0.0, %v8715
      %v8717 = vpop.f32.mrb[0].mxu0
      %8718 = vmatprep.mubr.bf16.mxu0 0
      %8719 = vmatmul.mubr.bf16.gmra.mrb[0].mxu0 %v8624
      %v8720 = vpop.f32.mrb[0].mxu0
      %v8721 = vadd.f32 0.0, %v8720
      %v8722 = vpop.f32.mrb[0].mxu0
      %v8723 = vpop.f32.mrb[0].mxu0
      %v8724 = vadd.f32 0.0, %v8723
      %v8725 = vpop.f32.mrb[0].mxu0
      %8726 = vmatprep.mubr.bf16.mxu0 0
      %8727 = vmatmul.mubr.bf16.gmra.mrb[0].mxu0 %v8627
      %v8728 = vpop.f32.mrb[0].mxu0
      %v8729 = vadd.f32 0.0, %v8728
      %v8730 = vpop.f32.mrb[0].mxu0
      %v8731 = vpop.f32.mrb[0].mxu0
      %v8732 = vadd.f32 0.0, %v8731
      %v8733 = vpop.f32.mrb[0].mxu0
      %8734 = vmatprep.mubr.bf16.mxu0 0
      %8735 = vmatmul.mubr.bf16.gmra.mrb[0].mxu0 %v8630
      %v8736 = vpop.f32.mrb[0].mxu0
      %v8737 = vadd.f32 0.0, %v8736
      %v8738 = vpop.f32.mrb[0].mxu0
      %v8739 = vpop.f32.mrb[0].mxu0
      %v8740 = vadd.f32 0.0, %v8739
      %v8741 = vpop.f32.mrb[0].mxu0
      %8742 = vmatprep.mubr.bf16.mxu0 0
      %8743 = vmatmul.mubr.bf16.gmra.mrb[0].mxu0 %v8633
      %v8744 = vpop.f32.mrb[0].mxu0
      %v8745 = vadd.f32 0.0, %v8744
      %v8746 = vpop.f32.mrb[0].mxu0
      %v8747 = vpop.f32.mrb[0].mxu0
      %v8748 = vadd.f32 0.0, %v8747
      %v8749 = vpop.f32.mrb[0].mxu0
      %8750 = vmatprep.mubr.bf16.mxu0 0
      %8751 = vmatmul.mubr.bf16.gmra.mrb[0].mxu0 %v8636
      %v8752 = vpop.f32.mrb[0].mxu0
      %v8753 = vadd.f32 0.0, %v8752
      %v8754 = vpop.f32.mrb[0].mxu0
      %v8755 = vpop.f32.mrb[0].mxu0
      %v8756 = vadd.f32 0.0, %v8755
      %v8757 = vpop.f32.mrb[0].mxu0
      %8758 = vmatprep.mubr.bf16.mxu0 0
      %8759 = vmatmul.mubr.bf16.gmra.mrb[0].mxu0 %v8639
      %v8760 = vpop.f32.mrb[0].mxu0
      %v8761 = vadd.f32 0.0, %v8760
      %v8762 = vpop.f32.mrb[0].mxu0
      %v8763 = vpop.f32.mrb[0].mxu0
      %v8764 = vadd.f32 0.0, %v8763
      %v8765 = vpop.f32.mrb[0].mxu0
      %8766 = vmatprep.mubr.bf16.mxu0 0
      %8767 = vmatmul.mubr.bf16.gmra.mrb[0].mxu0 %v8642
      %v8768 = vpop.f32.mrb[0].mxu0
      %v8769 = vadd.f32 0.0, %v8768
      %v8770 = vpop.f32.mrb[0].mxu0
      %v8771 = vpop.f32.mrb[0].mxu0
      %v8772 = vadd.f32 0.0, %v8771
      %v8773 = vpop.f32.mrb[0].mxu0
      %8774 = vmatprep.mubr.bf16.mxu0 0
      %8775 = vmatmul.mubr.bf16.gmra.mrb[0].mxu0 %v8645
      %v8776 = vpop.f32.mrb[0].mxu0
      %v8777 = vadd.f32 0.0, %v8776
      %v8778 = vpop.f32.mrb[0].mxu0
      %v8779 = vpop.f32.mrb[0].mxu0
      %v8780 = vadd.f32 0.0, %v8779
      %v8781 = vpop.f32.mrb[0].mxu0
      %8782 = vmatprep.mubr.bf16.mxu0 0
      %8783 = vmatmul.mubr.bf16.gmra.mrb[0].mxu0 %v8648
      %v8784 = vpop.f32.mrb[0].mxu0
      %v8785 = vadd.f32 0.0, %v8784
      %v8786 = vpop.f32.mrb[0].mxu0
      %v8787 = vpop.f32.mrb[0].mxu0
      %v8788 = vadd.f32 0.0, %v8787
      %v8789 = vpop.f32.mrb[0].mxu0
      %8790 = vmatprep.mubr.bf16.mxu0 0
      %8791 = vmatmul.mubr.bf16.gmra.mrb[0].mxu0 %v8651
      %v8792 = vpop.f32.mrb[0].mxu0
      %v8793 = vadd.f32 0.0, %v8792
      %v8794 = vpop.f32.mrb[0].mxu0
      %v8795 = vpop.f32.mrb[0].mxu0
      %v8796 = vadd.f32 0.0, %v8795
      %v8797 = vpop.f32.mrb[0].mxu0
      %8798 = vmatprep.mubr.bf16.mxu0 0
      %8799 = vmatmul.mubr.bf16.gmra.mrb[0].mxu0 %v8654
      %v8800 = vpop.f32.mrb[0].mxu0
      %v8801 = vadd.f32 0.0, %v8800
      %v8802 = vpop.f32.mrb[0].mxu0
      %v8803 = vpop.f32.mrb[0].mxu0
      %v8804 = vadd.f32 0.0, %v8803
      %v8805 = vpop.f32.mrb[0].mxu0
      %8806 = vmatprep.mubr.bf16.mxu0 0
      %8807 = vmatmul.mubr.bf16.gmra.mrb[0].mxu0 %v8657
      %v8808 = vpop.f32.mrb[0].mxu0
      %v8809 = vadd.f32 0.0, %v8808
      %v8810 = vpop.f32.mrb[0].mxu0
      %v8811 = vpop.f32.mrb[0].mxu0
      %v8812 = vadd.f32 0.0, %v8811
      %v8813 = vpop.f32.mrb[0].mxu0
      %8814 = vmatprep.mubr.bf16.mxu0 0
      %8815 = vmatmul.mubr.bf16.gmra.mrb[0].mxu0 %v8660
      %v8816 = vpop.f32.mrb[0].mxu0
      %v8817 = vadd.f32 0.0, %v8816
      %v8818 = vpop.f32.mrb[0].mxu0
      %v8819 = vpop.f32.mrb[0].mxu0
      %v8820 = vadd.f32 0.0, %v8819
      %v8821 = vpop.f32.mrb[0].mxu0
      %8822 = vdwg.mxu0
      %v8823 = vadd.f32 %v8375, %v8697
      %v8824 = vadd.f32 %v8378, %v8700
      %v8825 = vadd.f32 %v8383, %v8705
      %v8826 = vadd.f32 %v8386, %v8708
      %v8827 = vadd.f32 %v8391, %v8713
      %v8828 = vadd.f32 %v8394, %v8716
      %v8829 = vadd.f32 %v8399, %v8721
      %v8830 = vadd.f32 %v8402, %v8724
      %v8831 = vadd.f32 %v8407, %v8729
      %v8832 = vadd.f32 %v8410, %v8732
      %v8833 = vadd.f32 %v8415, %v8737
      %v8834 = vadd.f32 %v8418, %v8740
      %v8835 = vadd.f32 %v8423, %v8745
      %v8836 = vadd.f32 %v8426, %v8748
      %v8837 = vadd.f32 %v8431, %v8753
      %v8838 = vadd.f32 %v8434, %v8756
      %v8839 = vadd.f32 %v8439, %v8761
      %v8840 = vadd.f32 %v8442, %v8764
      %v8841 = vadd.f32 %v8447, %v8769
      %v8842 = vadd.f32 %v8450, %v8772
      %v8843 = vadd.f32 %v8455, %v8777
      %v8844 = vadd.f32 %v8458, %v8780
      %v8845 = vadd.f32 %v8463, %v8785
      %v8846 = vadd.f32 %v8466, %v8788
      %v8847 = vadd.f32 %v8471, %v8793
      %v8848 = vadd.f32 %v8474, %v8796
      %v8849 = vadd.f32 %v8479, %v8801
      %v8850 = vadd.f32 %v8482, %v8804
      %v8851 = vadd.f32 %v8487, %v8809
      %v8852 = vadd.f32 %v8490, %v8812
      %v8853 = vadd.f32 %v8495, %v8817
      %v8854 = vadd.f32 %v8498, %v8820
      %v8855 = vld [vmem:[%s500] sm:$0xff]
      %v8856 = vld [vmem:[%s500 + $0x10] sm:$0xff]
      %v8857 = vld [vmem:[%s500 + $0x20] sm:$0xff]
      %v8858 = vld [vmem:[%s500 + $0x30] sm:$0xff]
      %v8859 = vld [vmem:[%s500 + $0x40] sm:$0xff]
      %v8860 = vld [vmem:[%s500 + $0x50] sm:$0xff]
      %v8861 = vld [vmem:[%s500 + $0x60] sm:$0xff]
      %v8862 = vld [vmem:[%s500 + $0x70] sm:$0xff]
      %v8863 = vld [vmem:[%s500 + $0x80] sm:$0xff]
      %v8864 = vld [vmem:[%s500 + $0x90] sm:$0xff]
      %v8865 = vld [vmem:[%s500 + $0xa0] sm:$0xff]
      %v8866 = vld [vmem:[%s500 + $0xb0] sm:$0xff]
      %v8867 = vld [vmem:[%s500 + $0xc0] sm:$0xff]
      %v8868 = vld [vmem:[%s500 + $0xd0] sm:$0xff]
      %v8869 = vld [vmem:[%s500 + $0xe0] sm:$0xff]
      %v8870 = vld [vmem:[%s500 + $0xf0] sm:$0xff]
      %s8871 = scalar_lea.vmem %s5, 48
      %v8872 = vld [vmem:[%s8871] sm:$0xf]
      %v8873 = vld [vmem:[%s8871 + $0x4] sm:$0xf]
      %v8874 = vld [vmem:[%s8871 + $0x8] sm:$0xf]
      %v8875 = vld [vmem:[%s8871 + $0xc] sm:$0xf]
      %v8880 = vunpack.c.l.b16 %v8872
      %v8881 = vunpack.c.l.b16 %v8873
      %v8882 = vunpack.c.l.b16 %v8874
      %v8883 = vunpack.c.l.b16 %v8875
      %v8884 = vpack.c.b16 %v8881, %v8880
      %v8885 = vpack.c.b16 %v8883, %v8882
      %v8889 = vsel %vm494, %v8855, 0
      %v8892 = vsel %vm494, %v8856, 0
      %v8895 = vsel %vm494, %v8857, 0
      %v8898 = vsel %vm494, %v8858, 0
      %v8901 = vsel %vm494, %v8859, 0
      %v8904 = vsel %vm494, %v8860, 0
      %v8907 = vsel %vm494, %v8861, 0
      %v8910 = vsel %vm494, %v8862, 0
      %v8913 = vsel %vm494, %v8863, 0
      %v8916 = vsel %vm494, %v8864, 0
      %v8919 = vsel %vm494, %v8865, 0
      %v8922 = vsel %vm494, %v8866, 0
      %v8925 = vsel %vm494, %v8867, 0
      %v8928 = vsel %vm494, %v8868, 0
      %v8931 = vsel %vm494, %v8869, 0
      %v8934 = vsel %vm494, %v8870, 0
      %8936 = vmatprep.subr.bf16.mxu0 0
      %8937 = vmatpush1.bf16.msra.mxu0 %v8884
      %8938 = vmatprep.subr.bf16.mxu0 0
      %8939 = vmatpush1.bf16.msra.mxu0 %v8885
      %8940 = vmatprep.subr.bf16.mxu0 0
      %8941 = vmatpush1.bf16.msra.mxu0 0
      %8942 = vmatprep.subr.bf16.mxu0 0
      %8943 = vmatpush1.bf16.msra.mxu0 0
      %8944 = vmatprep.subr.bf16.mxu0 0
      %8945 = vmatpush1.bf16.msra.mxu0 0
      %8946 = vmatprep.subr.bf16.mxu0 0
      %8947 = vmatpush1.bf16.msra.mxu0 0
      %8948 = vmatprep.subr.bf16.mxu0 0
      %8949 = vmatpush1.bf16.msra.mxu0 0
      %8950 = vmatprep.subr.bf16.mxu0 0
      %8951 = vmatpush1.bf16.msra.mxu0 0
      %8952 = vmatprep.subr.bf16.mxu0 0
      %8953 = vmatpush1.bf16.msra.mxu0 0
      %8954 = vmatprep.subr.bf16.mxu0 0
      %8955 = vmatpush1.bf16.msra.mxu0 0
      %8956 = vmatprep.subr.bf16.mxu0 0
      %8957 = vmatpush1.bf16.msra.mxu0 0
      %8958 = vmatprep.subr.bf16.mxu0 0
      %8959 = vmatpush1.bf16.msra.mxu0 0
      %8960 = vmatprep.subr.bf16.mxu0 0
      %8961 = vmatpush1.bf16.msra.mxu0 0
      %8962 = vmatprep.subr.bf16.mxu0 0
      %8963 = vmatpush1.bf16.msra.mxu0 0
      %8964 = vmatprep.subr.bf16.mxu0 0
      %8965 = vmatpush1.bf16.msra.mxu0 0
      %8966 = vmatprep.subr.bf16.mxu0 0
      %8967 = vmatpush1.bf16.msra.mxu0 0
      %8968 = vmatprep.mubr.bf16.mxu0 0
      %8969 = vmatmul.mubr.bf16.gmra.mrb[0].mxu0 %v8889
      %v8970 = vpop.f32.mrb[0].mxu0
      %v8971 = vadd.f32 0.0, %v8970
      %v8972 = vpop.f32.mrb[0].mxu0
      %v8973 = vpop.f32.mrb[0].mxu0
      %v8974 = vadd.f32 0.0, %v8973
      %v8975 = vpop.f32.mrb[0].mxu0
      %8976 = vmatprep.mubr.bf16.mxu0 0
      %8977 = vmatmul.mubr.bf16.gmra.mrb[0].mxu0 %v8892
      %v8978 = vpop.f32.mrb[0].mxu0
      %v8979 = vadd.f32 0.0, %v8978
      %v8980 = vpop.f32.mrb[0].mxu0
      %v8981 = vpop.f32.mrb[0].mxu0
      %v8982 = vadd.f32 0.0, %v8981
      %v8983 = vpop.f32.mrb[0].mxu0
      %8984 = vmatprep.mubr.bf16.mxu0 0
      %8985 = vmatmul.mubr.bf16.gmra.mrb[0].mxu0 %v8895
      %v8986 = vpop.f32.mrb[0].mxu0
      %v8987 = vadd.f32 0.0, %v8986
      %v8988 = vpop.f32.mrb[0].mxu0
      %v8989 = vpop.f32.mrb[0].mxu0
      %v8990 = vadd.f32 0.0, %v8989
      %v8991 = vpop.f32.mrb[0].mxu0
      %8992 = vmatprep.mubr.bf16.mxu0 0
      %8993 = vmatmul.mubr.bf16.gmra.mrb[0].mxu0 %v8898
      %v8994 = vpop.f32.mrb[0].mxu0
      %v8995 = vadd.f32 0.0, %v8994
      %v8996 = vpop.f32.mrb[0].mxu0
      %v8997 = vpop.f32.mrb[0].mxu0
      %v8998 = vadd.f32 0.0, %v8997
      %v8999 = vpop.f32.mrb[0].mxu0
      %9000 = vmatprep.mubr.bf16.mxu0 0
      %9001 = vmatmul.mubr.bf16.gmra.mrb[0].mxu0 %v8901
      %v9002 = vpop.f32.mrb[0].mxu0
      %v9003 = vadd.f32 0.0, %v9002
      %v9004 = vpop.f32.mrb[0].mxu0
      %v9005 = vpop.f32.mrb[0].mxu0
      %v9006 = vadd.f32 0.0, %v9005
      %v9007 = vpop.f32.mrb[0].mxu0
      %9008 = vmatprep.mubr.bf16.mxu0 0
      %9009 = vmatmul.mubr.bf16.gmra.mrb[0].mxu0 %v8904
      %v9010 = vpop.f32.mrb[0].mxu0
      %v9011 = vadd.f32 0.0, %v9010
      %v9012 = vpop.f32.mrb[0].mxu0
      %v9013 = vpop.f32.mrb[0].mxu0
      %v9014 = vadd.f32 0.0, %v9013
      %v9015 = vpop.f32.mrb[0].mxu0
      %9016 = vmatprep.mubr.bf16.mxu0 0
      %9017 = vmatmul.mubr.bf16.gmra.mrb[0].mxu0 %v8907
      %v9018 = vpop.f32.mrb[0].mxu0
      %v9019 = vadd.f32 0.0, %v9018
      %v9020 = vpop.f32.mrb[0].mxu0
      %v9021 = vpop.f32.mrb[0].mxu0
      %v9022 = vadd.f32 0.0, %v9021
      %v9023 = vpop.f32.mrb[0].mxu0
      %9024 = vmatprep.mubr.bf16.mxu0 0
      %9025 = vmatmul.mubr.bf16.gmra.mrb[0].mxu0 %v8910
      %v9026 = vpop.f32.mrb[0].mxu0
      %v9027 = vadd.f32 0.0, %v9026
      %v9028 = vpop.f32.mrb[0].mxu0
      %v9029 = vpop.f32.mrb[0].mxu0
      %v9030 = vadd.f32 0.0, %v9029
      %v9031 = vpop.f32.mrb[0].mxu0
      %9032 = vmatprep.mubr.bf16.mxu0 0
      %9033 = vmatmul.mubr.bf16.gmra.mrb[0].mxu0 %v8913
      %v9034 = vpop.f32.mrb[0].mxu0
      %v9035 = vadd.f32 0.0, %v9034
      %v9036 = vpop.f32.mrb[0].mxu0
      %v9037 = vpop.f32.mrb[0].mxu0
      %v9038 = vadd.f32 0.0, %v9037
      %v9039 = vpop.f32.mrb[0].mxu0
      %9040 = vmatprep.mubr.bf16.mxu0 0
      %9041 = vmatmul.mubr.bf16.gmra.mrb[0].mxu0 %v8916
      %v9042 = vpop.f32.mrb[0].mxu0
      %v9043 = vadd.f32 0.0, %v9042
      %v9044 = vpop.f32.mrb[0].mxu0
      %v9045 = vpop.f32.mrb[0].mxu0
      %v9046 = vadd.f32 0.0, %v9045
      %v9047 = vpop.f32.mrb[0].mxu0
      %9048 = vmatprep.mubr.bf16.mxu0 0
      %9049 = vmatmul.mubr.bf16.gmra.mrb[0].mxu0 %v8919
      %v9050 = vpop.f32.mrb[0].mxu0
      %v9051 = vadd.f32 0.0, %v9050
      %v9052 = vpop.f32.mrb[0].mxu0
      %v9053 = vpop.f32.mrb[0].mxu0
      %v9054 = vadd.f32 0.0, %v9053
      %v9055 = vpop.f32.mrb[0].mxu0
      %9056 = vmatprep.mubr.bf16.mxu0 0
      %9057 = vmatmul.mubr.bf16.gmra.mrb[0].mxu0 %v8922
      %v9058 = vpop.f32.mrb[0].mxu0
      %v9059 = vadd.f32 0.0, %v9058
      %v9060 = vpop.f32.mrb[0].mxu0
      %v9061 = vpop.f32.mrb[0].mxu0
      %v9062 = vadd.f32 0.0, %v9061
      %v9063 = vpop.f32.mrb[0].mxu0
      %9064 = vmatprep.mubr.bf16.mxu0 0
      %9065 = vmatmul.mubr.bf16.gmra.mrb[0].mxu0 %v8925
      %v9066 = vpop.f32.mrb[0].mxu0
      %v9067 = vadd.f32 0.0, %v9066
      %v9068 = vpop.f32.mrb[0].mxu0
      %v9069 = vpop.f32.mrb[0].mxu0
      %v9070 = vadd.f32 0.0, %v9069
      %v9071 = vpop.f32.mrb[0].mxu0
      %9072 = vmatprep.mubr.bf16.mxu0 0
      %9073 = vmatmul.mubr.bf16.gmra.mrb[0].mxu0 %v8928
      %v9074 = vpop.f32.mrb[0].mxu0
      %v9075 = vadd.f32 0.0, %v9074
      %v9076 = vpop.f32.mrb[0].mxu0
      %v9077 = vpop.f32.mrb[0].mxu0
      %v9078 = vadd.f32 0.0, %v9077
      %v9079 = vpop.f32.mrb[0].mxu0
      %9080 = vmatprep.mubr.bf16.mxu0 0
      %9081 = vmatmul.mubr.bf16.gmra.mrb[0].mxu0 %v8931
      %v9082 = vpop.f32.mrb[0].mxu0
      %v9083 = vadd.f32 0.0, %v9082
      %v9084 = vpop.f32.mrb[0].mxu0
      %v9085 = vpop.f32.mrb[0].mxu0
      %v9086 = vadd.f32 0.0, %v9085
      %v9087 = vpop.f32.mrb[0].mxu0
      %9088 = vmatprep.mubr.bf16.mxu0 0
      %9089 = vmatmul.mubr.bf16.gmra.mrb[0].mxu0 %v8934
      %v9090 = vpop.f32.mrb[0].mxu0
      %v9091 = vadd.f32 0.0, %v9090
      %v9092 = vpop.f32.mrb[0].mxu0
      %v9093 = vpop.f32.mrb[0].mxu0
      %v9094 = vadd.f32 0.0, %v9093
      %v9095 = vpop.f32.mrb[0].mxu0
      %9096 = vdwg.mxu0
      %v9097 = vadd.f32 %v8823, %v8971
      %v9098 = vadd.f32 %v8824, %v8974
      %v9099 = vadd.f32 %v8825, %v8979
      %v9100 = vadd.f32 %v8826, %v8982
      %v9101 = vadd.f32 %v8827, %v8987
      %v9102 = vadd.f32 %v8828, %v8990
      %v9103 = vadd.f32 %v8829, %v8995
      %v9104 = vadd.f32 %v8830, %v8998
      %v9105 = vadd.f32 %v8831, %v9003
      %v9106 = vadd.f32 %v8832, %v9006
      %v9107 = vadd.f32 %v8833, %v9011
      %v9108 = vadd.f32 %v8834, %v9014
      %v9109 = vadd.f32 %v8835, %v9019
      %v9110 = vadd.f32 %v8836, %v9022
      %v9111 = vadd.f32 %v8837, %v9027
      %v9112 = vadd.f32 %v8838, %v9030
      %v9113 = vadd.f32 %v8839, %v9035
      %v9114 = vadd.f32 %v8840, %v9038
      %v9115 = vadd.f32 %v8841, %v9043
      %v9116 = vadd.f32 %v8842, %v9046
      %v9117 = vadd.f32 %v8843, %v9051
      %v9118 = vadd.f32 %v8844, %v9054
      %v9119 = vadd.f32 %v8845, %v9059
      %v9120 = vadd.f32 %v8846, %v9062
      %v9121 = vadd.f32 %v8847, %v9067
      %v9122 = vadd.f32 %v8848, %v9070
      %v9123 = vadd.f32 %v8849, %v9075
      %v9124 = vadd.f32 %v8850, %v9078
      %v9125 = vadd.f32 %v8851, %v9083
      %v9126 = vadd.f32 %v8852, %v9086
      %v9127 = vadd.f32 %v8853, %v9091
      %v9128 = vadd.f32 %v8854, %v9094
      %v9129 = vld [vmem:[%s500] sm:$0xff]
      %v9130 = vld [vmem:[%s500 + $0x8] sm:$0x1]
      %v9131 = vld [vmem:[%s500 + $0x10] sm:$0xff]
      %v9132 = vld [vmem:[%s500 + $0x18] sm:$0x1]
      %v9133 = vld [vmem:[%s500 + $0x20] sm:$0xff]
      %v9134 = vld [vmem:[%s500 + $0x28] sm:$0x1]
      %v9135 = vld [vmem:[%s500 + $0x30] sm:$0xff]
      %v9136 = vld [vmem:[%s500 + $0x38] sm:$0x1]
      %v9137 = vld [vmem:[%s500 + $0x40] sm:$0xff]
      %v9138 = vld [vmem:[%s500 + $0x48] sm:$0x1]
      %v9139 = vld [vmem:[%s500 + $0x50] sm:$0xff]
      %v9140 = vld [vmem:[%s500 + $0x58] sm:$0x1]
      %v9141 = vld [vmem:[%s500 + $0x60] sm:$0xff]
      %v9142 = vld [vmem:[%s500 + $0x68] sm:$0x1]
      %v9143 = vld [vmem:[%s500 + $0x70] sm:$0xff]
      %v9144 = vld [vmem:[%s500 + $0x78] sm:$0x1]
      %v9145 = vld [vmem:[%s500 + $0x80] sm:$0xff]
      %v9146 = vld [vmem:[%s500 + $0x88] sm:$0x1]
      %v9147 = vld [vmem:[%s500 + $0x90] sm:$0xff]
      %v9148 = vld [vmem:[%s500 + $0x98] sm:$0x1]
      %v9149 = vld [vmem:[%s500 + $0xa0] sm:$0xff]
      %v9150 = vld [vmem:[%s500 + $0xa8] sm:$0x1]
      %v9151 = vld [vmem:[%s500 + $0xb0] sm:$0xff]
      %v9152 = vld [vmem:[%s500 + $0xb8] sm:$0x1]
      %v9153 = vld [vmem:[%s500 + $0xc0] sm:$0xff]
      %v9154 = vld [vmem:[%s500 + $0xc8] sm:$0x1]
      %v9155 = vld [vmem:[%s500 + $0xd0] sm:$0xff]
      %v9156 = vld [vmem:[%s500 + $0xd8] sm:$0x1]
      %v9157 = vld [vmem:[%s500 + $0xe0] sm:$0xff]
      %v9158 = vld [vmem:[%s500 + $0xe8] sm:$0x1]
      %v9159 = vld [vmem:[%s500 + $0xf0] sm:$0xff]
      %v9160 = vld [vmem:[%s500 + $0xf8] sm:$0x1]
      %v9162 = vshrl.u32 %v9129, 16
      %v9164 = vshll.u32 %v9129, 16
      %v9166 = vrot.slane %v9164, 1
      %v9167 = vor.u32 %v9162, %v9166
      %v9169 = vshll.u32 %v9130, 16
      %v9171 = vrot.slane %v9169, 1
      %v9172 = vsel %vm923, %v9167, %v9171
      %v9174 = vshrl.u32 %v9131, 16
      %v9176 = vshll.u32 %v9131, 16
      %v9178 = vrot.slane %v9176, 1
      %v9179 = vor.u32 %v9174, %v9178
      %v9181 = vshll.u32 %v9132, 16
      %v9183 = vrot.slane %v9181, 1
      %v9184 = vsel %vm923, %v9179, %v9183
      %v9186 = vshrl.u32 %v9133, 16
      %v9188 = vshll.u32 %v9133, 16
      %v9190 = vrot.slane %v9188, 1
      %v9191 = vor.u32 %v9186, %v9190
      %v9193 = vshll.u32 %v9134, 16
      %v9195 = vrot.slane %v9193, 1
      %v9196 = vsel %vm923, %v9191, %v9195
      %v9198 = vshrl.u32 %v9135, 16
      %v9200 = vshll.u32 %v9135, 16
      %v9202 = vrot.slane %v9200, 1
      %v9203 = vor.u32 %v9198, %v9202
      %v9205 = vshll.u32 %v9136, 16
      %v9207 = vrot.slane %v9205, 1
      %v9208 = vsel %vm923, %v9203, %v9207
      %v9210 = vshrl.u32 %v9137, 16
      %v9212 = vshll.u32 %v9137, 16
      %v9214 = vrot.slane %v9212, 1
      %v9215 = vor.u32 %v9210, %v9214
      %v9217 = vshll.u32 %v9138, 16
      %v9219 = vrot.slane %v9217, 1
      %v9220 = vsel %vm923, %v9215, %v9219
      %v9222 = vshrl.u32 %v9139, 16
      %v9224 = vshll.u32 %v9139, 16
      %v9226 = vrot.slane %v9224, 1
      %v9227 = vor.u32 %v9222, %v9226
      %v9229 = vshll.u32 %v9140, 16
      %v9231 = vrot.slane %v9229, 1
      %v9232 = vsel %vm923, %v9227, %v9231
      %v9234 = vshrl.u32 %v9141, 16
      %v9236 = vshll.u32 %v9141, 16
      %v9238 = vrot.slane %v9236, 1
      %v9239 = vor.u32 %v9234, %v9238
      %v9241 = vshll.u32 %v9142, 16
      %v9243 = vrot.slane %v9241, 1
      %v9244 = vsel %vm923, %v9239, %v9243
      %v9246 = vshrl.u32 %v9143, 16
      %v9248 = vshll.u32 %v9143, 16
      %v9250 = vrot.slane %v9248, 1
      %v9251 = vor.u32 %v9246, %v9250
      %v9253 = vshll.u32 %v9144, 16
      %v9255 = vrot.slane %v9253, 1
      %v9256 = vsel %vm923, %v9251, %v9255
      %v9258 = vshrl.u32 %v9145, 16
      %v9260 = vshll.u32 %v9145, 16
      %v9262 = vrot.slane %v9260, 1
      %v9263 = vor.u32 %v9258, %v9262
      %v9265 = vshll.u32 %v9146, 16
      %v9267 = vrot.slane %v9265, 1
      %v9268 = vsel %vm923, %v9263, %v9267
      %v9270 = vshrl.u32 %v9147, 16
      %v9272 = vshll.u32 %v9147, 16
      %v9274 = vrot.slane %v9272, 1
      %v9275 = vor.u32 %v9270, %v9274
      %v9277 = vshll.u32 %v9148, 16
      %v9279 = vrot.slane %v9277, 1
      %v9280 = vsel %vm923, %v9275, %v9279
      %v9282 = vshrl.u32 %v9149, 16
      %v9284 = vshll.u32 %v9149, 16
      %v9286 = vrot.slane %v9284, 1
      %v9287 = vor.u32 %v9282, %v9286
      %v9289 = vshll.u32 %v9150, 16
      %v9291 = vrot.slane %v9289, 1
      %v9292 = vsel %vm923, %v9287, %v9291
      %v9294 = vshrl.u32 %v9151, 16
      %v9296 = vshll.u32 %v9151, 16
      %v9298 = vrot.slane %v9296, 1
      %v9299 = vor.u32 %v9294, %v9298
      %v9301 = vshll.u32 %v9152, 16
      %v9303 = vrot.slane %v9301, 1
      %v9304 = vsel %vm923, %v9299, %v9303
      %v9306 = vshrl.u32 %v9153, 16
      %v9308 = vshll.u32 %v9153, 16
      %v9310 = vrot.slane %v9308, 1
      %v9311 = vor.u32 %v9306, %v9310
      %v9313 = vshll.u32 %v9154, 16
      %v9315 = vrot.slane %v9313, 1
      %v9316 = vsel %vm923, %v9311, %v9315
      %v9318 = vshrl.u32 %v9155, 16
      %v9320 = vshll.u32 %v9155, 16
      %v9322 = vrot.slane %v9320, 1
      %v9323 = vor.u32 %v9318, %v9322
      %v9325 = vshll.u32 %v9156, 16
      %v9327 = vrot.slane %v9325, 1
      %v9328 = vsel %vm923, %v9323, %v9327
      %v9330 = vshrl.u32 %v9157, 16
      %v9332 = vshll.u32 %v9157, 16
      %v9334 = vrot.slane %v9332, 1
      %v9335 = vor.u32 %v9330, %v9334
      %v9337 = vshll.u32 %v9158, 16
      %v9339 = vrot.slane %v9337, 1
      %v9340 = vsel %vm923, %v9335, %v9339
      %v9342 = vshrl.u32 %v9159, 16
      %v9344 = vshll.u32 %v9159, 16
      %v9346 = vrot.slane %v9344, 1
      %v9347 = vor.u32 %v9342, %v9346
      %v9349 = vshll.u32 %v9160, 16
      %v9351 = vrot.slane %v9349, 1
      %v9352 = vsel %vm923, %v9347, %v9351
      %s9353 = scalar_lea.vmem %s5, 64
      %v9354 = vld [vmem:[%s9353] sm:$0xf]
      %v9355 = vld [vmem:[%s9353 + $0x4] sm:$0xf]
      %v9356 = vld [vmem:[%s9353 + $0x8] sm:$0xf]
      %v9357 = vld [vmem:[%s9353 + $0xc] sm:$0xf]
      %v9362 = vunpack.c.l.b16 %v9354
      %v9363 = vunpack.c.l.b16 %v9355
      %v9364 = vunpack.c.l.b16 %v9356
      %v9365 = vunpack.c.l.b16 %v9357
      %v9366 = vpack.c.b16 %v9363, %v9362
      %v9367 = vpack.c.b16 %v9365, %v9364
      %v9371 = vsel %vm494, %v9172, 0
      %v9374 = vsel %vm494, %v9184, 0
      %v9377 = vsel %vm494, %v9196, 0
      %v9380 = vsel %vm494, %v9208, 0
      %v9383 = vsel %vm494, %v9220, 0
      %v9386 = vsel %vm494, %v9232, 0
      %v9389 = vsel %vm494, %v9244, 0
      %v9392 = vsel %vm494, %v9256, 0
      %v9395 = vsel %vm494, %v9268, 0
      %v9398 = vsel %vm494, %v9280, 0
      %v9401 = vsel %vm494, %v9292, 0
      %v9404 = vsel %vm494, %v9304, 0
      %v9407 = vsel %vm494, %v9316, 0
      %v9410 = vsel %vm494, %v9328, 0
      %v9413 = vsel %vm494, %v9340, 0
      %v9416 = vsel %vm494, %v9352, 0
      %9418 = vmatprep.subr.bf16.mxu0 0
      %9419 = vmatpush1.bf16.msra.mxu0 %v9366
      %9420 = vmatprep.subr.bf16.mxu0 0
      %9421 = vmatpush1.bf16.msra.mxu0 %v9367
      %9422 = vmatprep.subr.bf16.mxu0 0
      %9423 = vmatpush1.bf16.msra.mxu0 0
      %9424 = vmatprep.subr.bf16.mxu0 0
      %9425 = vmatpush1.bf16.msra.mxu0 0
      %9426 = vmatprep.subr.bf16.mxu0 0
      %9427 = vmatpush1.bf16.msra.mxu0 0
      %9428 = vmatprep.subr.bf16.mxu0 0
      %9429 = vmatpush1.bf16.msra.mxu0 0
      %9430 = vmatprep.subr.bf16.mxu0 0
      %9431 = vmatpush1.bf16.msra.mxu0 0
      %9432 = vmatprep.subr.bf16.mxu0 0
      %9433 = vmatpush1.bf16.msra.mxu0 0
      %9434 = vmatprep.subr.bf16.mxu0 0
      %9435 = vmatpush1.bf16.msra.mxu0 0
      %9436 = vmatprep.subr.bf16.mxu0 0
      %9437 = vmatpush1.bf16.msra.mxu0 0
      %9438 = vmatprep.subr.bf16.mxu0 0
      %9439 = vmatpush1.bf16.msra.mxu0 0
      %9440 = vmatprep.subr.bf16.mxu0 0
      %9441 = vmatpush1.bf16.msra.mxu0 0
      %9442 = vmatprep.subr.bf16.mxu0 0
      %9443 = vmatpush1.bf16.msra.mxu0 0
      %9444 = vmatprep.subr.bf16.mxu0 0
      %9445 = vmatpush1.bf16.msra.mxu0 0
      %9446 = vmatprep.subr.bf16.mxu0 0
      %9447 = vmatpush1.bf16.msra.mxu0 0
      %9448 = vmatprep.subr.bf16.mxu0 0
      %9449 = vmatpush1.bf16.msra.mxu0 0
      %9450 = vmatprep.mubr.bf16.mxu0 0
      %9451 = vmatmul.mubr.bf16.gmra.mrb[0].mxu0 %v9371
      %v9452 = vpop.f32.mrb[0].mxu0
      %v9453 = vadd.f32 0.0, %v9452
      %v9454 = vpop.f32.mrb[0].mxu0
      %v9455 = vpop.f32.mrb[0].mxu0
      %v9456 = vadd.f32 0.0, %v9455
      %v9457 = vpop.f32.mrb[0].mxu0
      %9458 = vmatprep.mubr.bf16.mxu0 0
      %9459 = vmatmul.mubr.bf16.gmra.mrb[0].mxu0 %v9374
      %v9460 = vpop.f32.mrb[0].mxu0
      %v9461 = vadd.f32 0.0, %v9460
      %v9462 = vpop.f32.mrb[0].mxu0
      %v9463 = vpop.f32.mrb[0].mxu0
      %v9464 = vadd.f32 0.0, %v9463
      %v9465 = vpop.f32.mrb[0].mxu0
      %9466 = vmatprep.mubr.bf16.mxu0 0
      %9467 = vmatmul.mubr.bf16.gmra.mrb[0].mxu0 %v9377
      %v9468 = vpop.f32.mrb[0].mxu0
      %v9469 = vadd.f32 0.0, %v9468
      %v9470 = vpop.f32.mrb[0].mxu0
      %v9471 = vpop.f32.mrb[0].mxu0
      %v9472 = vadd.f32 0.0, %v9471
      %v9473 = vpop.f32.mrb[0].mxu0
      %9474 = vmatprep.mubr.bf16.mxu0 0
      %9475 = vmatmul.mubr.bf16.gmra.mrb[0].mxu0 %v9380
      %v9476 = vpop.f32.mrb[0].mxu0
      %v9477 = vadd.f32 0.0, %v9476
      %v9478 = vpop.f32.mrb[0].mxu0
      %v9479 = vpop.f32.mrb[0].mxu0
      %v9480 = vadd.f32 0.0, %v9479
      %v9481 = vpop.f32.mrb[0].mxu0
      %9482 = vmatprep.mubr.bf16.mxu0 0
      %9483 = vmatmul.mubr.bf16.gmra.mrb[0].mxu0 %v9383
      %v9484 = vpop.f32.mrb[0].mxu0
      %v9485 = vadd.f32 0.0, %v9484
      %v9486 = vpop.f32.mrb[0].mxu0
      %v9487 = vpop.f32.mrb[0].mxu0
      %v9488 = vadd.f32 0.0, %v9487
      %v9489 = vpop.f32.mrb[0].mxu0
      %9490 = vmatprep.mubr.bf16.mxu0 0
      %9491 = vmatmul.mubr.bf16.gmra.mrb[0].mxu0 %v9386
      %v9492 = vpop.f32.mrb[0].mxu0
      %v9493 = vadd.f32 0.0, %v9492
      %v9494 = vpop.f32.mrb[0].mxu0
      %v9495 = vpop.f32.mrb[0].mxu0
      %v9496 = vadd.f32 0.0, %v9495
      %v9497 = vpop.f32.mrb[0].mxu0
      %9498 = vmatprep.mubr.bf16.mxu0 0
      %9499 = vmatmul.mubr.bf16.gmra.mrb[0].mxu0 %v9389
      %v9500 = vpop.f32.mrb[0].mxu0
      %v9501 = vadd.f32 0.0, %v9500
      %v9502 = vpop.f32.mrb[0].mxu0
      %v9503 = vpop.f32.mrb[0].mxu0
      %v9504 = vadd.f32 0.0, %v9503
      %v9505 = vpop.f32.mrb[0].mxu0
      %9506 = vmatprep.mubr.bf16.mxu0 0
      %9507 = vmatmul.mubr.bf16.gmra.mrb[0].mxu0 %v9392
      %v9508 = vpop.f32.mrb[0].mxu0
      %v9509 = vadd.f32 0.0, %v9508
      %v9510 = vpop.f32.mrb[0].mxu0
      %v9511 = vpop.f32.mrb[0].mxu0
      %v9512 = vadd.f32 0.0, %v9511
      %v9513 = vpop.f32.mrb[0].mxu0
      %9514 = vmatprep.mubr.bf16.mxu0 0
      %9515 = vmatmul.mubr.bf16.gmra.mrb[0].mxu0 %v9395
      %v9516 = vpop.f32.mrb[0].mxu0
      %v9517 = vadd.f32 0.0, %v9516
      %v9518 = vpop.f32.mrb[0].mxu0
      %v9519 = vpop.f32.mrb[0].mxu0
      %v9520 = vadd.f32 0.0, %v9519
      %v9521 = vpop.f32.mrb[0].mxu0
      %9522 = vmatprep.mubr.bf16.mxu0 0
      %9523 = vmatmul.mubr.bf16.gmra.mrb[0].mxu0 %v9398
      %v9524 = vpop.f32.mrb[0].mxu0
      %v9525 = vadd.f32 0.0, %v9524
      %v9526 = vpop.f32.mrb[0].mxu0
      %v9527 = vpop.f32.mrb[0].mxu0
      %v9528 = vadd.f32 0.0, %v9527
      %v9529 = vpop.f32.mrb[0].mxu0
      %9530 = vmatprep.mubr.bf16.mxu0 0
      %9531 = vmatmul.mubr.bf16.gmra.mrb[0].mxu0 %v9401
      %v9532 = vpop.f32.mrb[0].mxu0
      %v9533 = vadd.f32 0.0, %v9532
      %v9534 = vpop.f32.mrb[0].mxu0
      %v9535 = vpop.f32.mrb[0].mxu0
      %v9536 = vadd.f32 0.0, %v9535
      %v9537 = vpop.f32.mrb[0].mxu0
      %9538 = vmatprep.mubr.bf16.mxu0 0
      %9539 = vmatmul.mubr.bf16.gmra.mrb[0].mxu0 %v9404
      %v9540 = vpop.f32.mrb[0].mxu0
      %v9541 = vadd.f32 0.0, %v9540
      %v9542 = vpop.f32.mrb[0].mxu0
      %v9543 = vpop.f32.mrb[0].mxu0
      %v9544 = vadd.f32 0.0, %v9543
      %v9545 = vpop.f32.mrb[0].mxu0
      %9546 = vmatprep.mubr.bf16.mxu0 0
      %9547 = vmatmul.mubr.bf16.gmra.mrb[0].mxu0 %v9407
      %v9548 = vpop.f32.mrb[0].mxu0
      %v9549 = vadd.f32 0.0, %v9548
      %v9550 = vpop.f32.mrb[0].mxu0
      %v9551 = vpop.f32.mrb[0].mxu0
      %v9552 = vadd.f32 0.0, %v9551
      %v9553 = vpop.f32.mrb[0].mxu0
      %9554 = vmatprep.mubr.bf16.mxu0 0
      %9555 = vmatmul.mubr.bf16.gmra.mrb[0].mxu0 %v9410
      %v9556 = vpop.f32.mrb[0].mxu0
      %v9557 = vadd.f32 0.0, %v9556
      %v9558 = vpop.f32.mrb[0].mxu0
      %v9559 = vpop.f32.mrb[0].mxu0
      %v9560 = vadd.f32 0.0, %v9559
      %v9561 = vpop.f32.mrb[0].mxu0
      %9562 = vmatprep.mubr.bf16.mxu0 0
      %9563 = vmatmul.mubr.bf16.gmra.mrb[0].mxu0 %v9413
      %v9564 = vpop.f32.mrb[0].mxu0
      %v9565 = vadd.f32 0.0, %v9564
      %v9566 = vpop.f32.mrb[0].mxu0
      %v9567 = vpop.f32.mrb[0].mxu0
      %v9568 = vadd.f32 0.0, %v9567
      %v9569 = vpop.f32.mrb[0].mxu0
      %9570 = vmatprep.mubr.bf16.mxu0 0
      %9571 = vmatmul.mubr.bf16.gmra.mrb[0].mxu0 %v9416
      %v9572 = vpop.f32.mrb[0].mxu0
      %v9573 = vadd.f32 0.0, %v9572
      %v9574 = vpop.f32.mrb[0].mxu0
      %v9575 = vpop.f32.mrb[0].mxu0
      %v9576 = vadd.f32 0.0, %v9575
      %v9577 = vpop.f32.mrb[0].mxu0
      %9578 = vdwg.mxu0
      %v9579 = vadd.f32 %v9097, %v9453
      %v9580 = vadd.f32 %v9098, %v9456
      %v9581 = vadd.f32 %v9099, %v9461
      %v9582 = vadd.f32 %v9100, %v9464
      %v9583 = vadd.f32 %v9101, %v9469
      %v9584 = vadd.f32 %v9102, %v9472
      %v9585 = vadd.f32 %v9103, %v9477
      %v9586 = vadd.f32 %v9104, %v9480
      %v9587 = vadd.f32 %v9105, %v9485
      %v9588 = vadd.f32 %v9106, %v9488
      %v9589 = vadd.f32 %v9107, %v9493
      %v9590 = vadd.f32 %v9108, %v9496
      %v9591 = vadd.f32 %v9109, %v9501
      %v9592 = vadd.f32 %v9110, %v9504
      %v9593 = vadd.f32 %v9111, %v9509
      %v9594 = vadd.f32 %v9112, %v9512
      %v9595 = vadd.f32 %v9113, %v9517
      %v9596 = vadd.f32 %v9114, %v9520
      %v9597 = vadd.f32 %v9115, %v9525
      %v9598 = vadd.f32 %v9116, %v9528
      %v9599 = vadd.f32 %v9117, %v9533
      %v9600 = vadd.f32 %v9118, %v9536
      %v9601 = vadd.f32 %v9119, %v9541
      %v9602 = vadd.f32 %v9120, %v9544
      %v9603 = vadd.f32 %v9121, %v9549
      %v9604 = vadd.f32 %v9122, %v9552
      %v9605 = vadd.f32 %v9123, %v9557
      %v9606 = vadd.f32 %v9124, %v9560
      %v9607 = vadd.f32 %v9125, %v9565
      %v9608 = vadd.f32 %v9126, %v9568
      %v9609 = vadd.f32 %v9127, %v9573
      %v9610 = vadd.f32 %v9128, %v9576
      %v9611 = vld [vmem:[%s500] sm:$0xfe]
      %v9612 = vld [vmem:[%s500 + $0x10] sm:$0xfe]
      %v9613 = vld [vmem:[%s500 + $0x20] sm:$0xfe]
      %v9614 = vld [vmem:[%s500 + $0x30] sm:$0xfe]
      %v9615 = vld [vmem:[%s500 + $0x40] sm:$0xfe]
      %v9616 = vld [vmem:[%s500 + $0x50] sm:$0xfe]
      %v9617 = vld [vmem:[%s500 + $0x60] sm:$0xfe]
      %v9618 = vld [vmem:[%s500 + $0x70] sm:$0xfe]
      %v9619 = vld [vmem:[%s500 + $0x80] sm:$0xfe]
      %v9620 = vld [vmem:[%s500 + $0x90] sm:$0xfe]
      %v9621 = vld [vmem:[%s500 + $0xa0] sm:$0xfe]
      %v9622 = vld [vmem:[%s500 + $0xb0] sm:$0xfe]
      %v9623 = vld [vmem:[%s500 + $0xc0] sm:$0xfe]
      %v9624 = vld [vmem:[%s500 + $0xd0] sm:$0xfe]
      %v9625 = vld [vmem:[%s500 + $0xe0] sm:$0xfe]
      %v9626 = vld [vmem:[%s500 + $0xf0] sm:$0xfe]
      %v9659 = vrot.slane %v9611, 1
      %v9660 = vrot.slane %v9130, 1
      %v9661 = vsel %vm1578, %v9659, %v9660
      %v9662 = vrot.slane %v9612, 1
      %v9663 = vrot.slane %v9132, 1
      %v9664 = vsel %vm1578, %v9662, %v9663
      %v9665 = vrot.slane %v9613, 1
      %v9666 = vrot.slane %v9134, 1
      %v9667 = vsel %vm1578, %v9665, %v9666
      %v9668 = vrot.slane %v9614, 1
      %v9669 = vrot.slane %v9136, 1
      %v9670 = vsel %vm1578, %v9668, %v9669
      %v9671 = vrot.slane %v9615, 1
      %v9672 = vrot.slane %v9138, 1
      %v9673 = vsel %vm1578, %v9671, %v9672
      %v9674 = vrot.slane %v9616, 1
      %v9675 = vrot.slane %v9140, 1
      %v9676 = vsel %vm1578, %v9674, %v9675
      %v9677 = vrot.slane %v9617, 1
      %v9678 = vrot.slane %v9142, 1
      %v9679 = vsel %vm1578, %v9677, %v9678
      %v9680 = vrot.slane %v9618, 1
      %v9681 = vrot.slane %v9144, 1
      %v9682 = vsel %vm1578, %v9680, %v9681
      %v9683 = vrot.slane %v9619, 1
      %v9684 = vrot.slane %v9146, 1
      %v9685 = vsel %vm1578, %v9683, %v9684
      %v9686 = vrot.slane %v9620, 1
      %v9687 = vrot.slane %v9148, 1
      %v9688 = vsel %vm1578, %v9686, %v9687
      %v9689 = vrot.slane %v9621, 1
      %v9690 = vrot.slane %v9150, 1
      %v9691 = vsel %vm1578, %v9689, %v9690
      %v9692 = vrot.slane %v9622, 1
      %v9693 = vrot.slane %v9152, 1
      %v9694 = vsel %vm1578, %v9692, %v9693
      %v9695 = vrot.slane %v9623, 1
      %v9696 = vrot.slane %v9154, 1
      %v9697 = vsel %vm1578, %v9695, %v9696
      %v9698 = vrot.slane %v9624, 1
      %v9699 = vrot.slane %v9156, 1
      %v9700 = vsel %vm1578, %v9698, %v9699
      %v9701 = vrot.slane %v9625, 1
      %v9702 = vrot.slane %v9158, 1
      %v9703 = vsel %vm1578, %v9701, %v9702
      %v9704 = vrot.slane %v9626, 1
      %v9705 = vrot.slane %v9160, 1
      %v9706 = vsel %vm1578, %v9704, %v9705
      %s9707 = scalar_lea.vmem %s5, 80
      %v9708 = vld [vmem:[%s9707] sm:$0xf]
      %v9709 = vld [vmem:[%s9707 + $0x4] sm:$0xf]
      %v9710 = vld [vmem:[%s9707 + $0x8] sm:$0xf]
      %v9711 = vld [vmem:[%s9707 + $0xc] sm:$0xf]
      %v9716 = vunpack.c.l.b16 %v9708
      %v9717 = vunpack.c.l.b16 %v9709
      %v9718 = vunpack.c.l.b16 %v9710
      %v9719 = vunpack.c.l.b16 %v9711
      %v9720 = vpack.c.b16 %v9717, %v9716
      %v9721 = vpack.c.b16 %v9719, %v9718
      %v9725 = vsel %vm494, %v9661, 0
      %v9728 = vsel %vm494, %v9664, 0
      %v9731 = vsel %vm494, %v9667, 0
      %v9734 = vsel %vm494, %v9670, 0
      %v9737 = vsel %vm494, %v9673, 0
      %v9740 = vsel %vm494, %v9676, 0
      %v9743 = vsel %vm494, %v9679, 0
      %v9746 = vsel %vm494, %v9682, 0
      %v9749 = vsel %vm494, %v9685, 0
      %v9752 = vsel %vm494, %v9688, 0
      %v9755 = vsel %vm494, %v9691, 0
      %v9758 = vsel %vm494, %v9694, 0
      %v9761 = vsel %vm494, %v9697, 0
      %v9764 = vsel %vm494, %v9700, 0
      %v9767 = vsel %vm494, %v9703, 0
      %v9770 = vsel %vm494, %v9706, 0
      %9772 = vmatprep.subr.bf16.mxu0 0
      %9773 = vmatpush1.bf16.msra.mxu0 %v9720
      %9774 = vmatprep.subr.bf16.mxu0 0
      %9775 = vmatpush1.bf16.msra.mxu0 %v9721
      %9776 = vmatprep.subr.bf16.mxu0 0
      %9777 = vmatpush1.bf16.msra.mxu0 0
      %9778 = vmatprep.subr.bf16.mxu0 0
      %9779 = vmatpush1.bf16.msra.mxu0 0
      %9780 = vmatprep.subr.bf16.mxu0 0
      %9781 = vmatpush1.bf16.msra.mxu0 0
      %9782 = vmatprep.subr.bf16.mxu0 0
      %9783 = vmatpush1.bf16.msra.mxu0 0
      %9784 = vmatprep.subr.bf16.mxu0 0
      %9785 = vmatpush1.bf16.msra.mxu0 0
      %9786 = vmatprep.subr.bf16.mxu0 0
      %9787 = vmatpush1.bf16.msra.mxu0 0
      %9788 = vmatprep.subr.bf16.mxu0 0
      %9789 = vmatpush1.bf16.msra.mxu0 0
      %9790 = vmatprep.subr.bf16.mxu0 0
      %9791 = vmatpush1.bf16.msra.mxu0 0
      %9792 = vmatprep.subr.bf16.mxu0 0
      %9793 = vmatpush1.bf16.msra.mxu0 0
      %9794 = vmatprep.subr.bf16.mxu0 0
      %9795 = vmatpush1.bf16.msra.mxu0 0
      %9796 = vmatprep.subr.bf16.mxu0 0
      %9797 = vmatpush1.bf16.msra.mxu0 0
      %9798 = vmatprep.subr.bf16.mxu0 0
      %9799 = vmatpush1.bf16.msra.mxu0 0
      %9800 = vmatprep.subr.bf16.mxu0 0
      %9801 = vmatpush1.bf16.msra.mxu0 0
      %9802 = vmatprep.subr.bf16.mxu0 0
      %9803 = vmatpush1.bf16.msra.mxu0 0
      %9804 = vmatprep.mubr.bf16.mxu0 0
      %9805 = vmatmul.mubr.bf16.gmra.mrb[0].mxu0 %v9725
      %v9806 = vpop.f32.mrb[0].mxu0
      %v9807 = vadd.f32 0.0, %v9806
      %v9808 = vpop.f32.mrb[0].mxu0
      %v9809 = vpop.f32.mrb[0].mxu0
      %v9810 = vadd.f32 0.0, %v9809
      %v9811 = vpop.f32.mrb[0].mxu0
      %9812 = vmatprep.mubr.bf16.mxu0 0
      %9813 = vmatmul.mubr.bf16.gmra.mrb[0].mxu0 %v9728
      %v9814 = vpop.f32.mrb[0].mxu0
      %v9815 = vadd.f32 0.0, %v9814
      %v9816 = vpop.f32.mrb[0].mxu0
      %v9817 = vpop.f32.mrb[0].mxu0
      %v9818 = vadd.f32 0.0, %v9817
      %v9819 = vpop.f32.mrb[0].mxu0
      %9820 = vmatprep.mubr.bf16.mxu0 0
      %9821 = vmatmul.mubr.bf16.gmra.mrb[0].mxu0 %v9731
      %v9822 = vpop.f32.mrb[0].mxu0
      %v9823 = vadd.f32 0.0, %v9822
      %v9824 = vpop.f32.mrb[0].mxu0
      %v9825 = vpop.f32.mrb[0].mxu0
      %v9826 = vadd.f32 0.0, %v9825
      %v9827 = vpop.f32.mrb[0].mxu0
      %9828 = vmatprep.mubr.bf16.mxu0 0
      %9829 = vmatmul.mubr.bf16.gmra.mrb[0].mxu0 %v9734
      %v9830 = vpop.f32.mrb[0].mxu0
      %v9831 = vadd.f32 0.0, %v9830
      %v9832 = vpop.f32.mrb[0].mxu0
      %v9833 = vpop.f32.mrb[0].mxu0
      %v9834 = vadd.f32 0.0, %v9833
      %v9835 = vpop.f32.mrb[0].mxu0
      %9836 = vmatprep.mubr.bf16.mxu0 0
      %9837 = vmatmul.mubr.bf16.gmra.mrb[0].mxu0 %v9737
      %v9838 = vpop.f32.mrb[0].mxu0
      %v9839 = vadd.f32 0.0, %v9838
      %v9840 = vpop.f32.mrb[0].mxu0
      %v9841 = vpop.f32.mrb[0].mxu0
      %v9842 = vadd.f32 0.0, %v9841
      %v9843 = vpop.f32.mrb[0].mxu0
      %9844 = vmatprep.mubr.bf16.mxu0 0
      %9845 = vmatmul.mubr.bf16.gmra.mrb[0].mxu0 %v9740
      %v9846 = vpop.f32.mrb[0].mxu0
      %v9847 = vadd.f32 0.0, %v9846
      %v9848 = vpop.f32.mrb[0].mxu0
      %v9849 = vpop.f32.mrb[0].mxu0
      %v9850 = vadd.f32 0.0, %v9849
      %v9851 = vpop.f32.mrb[0].mxu0
      %9852 = vmatprep.mubr.bf16.mxu0 0
      %9853 = vmatmul.mubr.bf16.gmra.mrb[0].mxu0 %v9743
      %v9854 = vpop.f32.mrb[0].mxu0
      %v9855 = vadd.f32 0.0, %v9854
      %v9856 = vpop.f32.mrb[0].mxu0
      %v9857 = vpop.f32.mrb[0].mxu0
      %v9858 = vadd.f32 0.0, %v9857
      %v9859 = vpop.f32.mrb[0].mxu0
      %9860 = vmatprep.mubr.bf16.mxu0 0
      %9861 = vmatmul.mubr.bf16.gmra.mrb[0].mxu0 %v9746
      %v9862 = vpop.f32.mrb[0].mxu0
      %v9863 = vadd.f32 0.0, %v9862
      %v9864 = vpop.f32.mrb[0].mxu0
      %v9865 = vpop.f32.mrb[0].mxu0
      %v9866 = vadd.f32 0.0, %v9865
      %v9867 = vpop.f32.mrb[0].mxu0
      %9868 = vmatprep.mubr.bf16.mxu0 0
      %9869 = vmatmul.mubr.bf16.gmra.mrb[0].mxu0 %v9749
      %v9870 = vpop.f32.mrb[0].mxu0
      %v9871 = vadd.f32 0.0, %v9870
      %v9872 = vpop.f32.mrb[0].mxu0
      %v9873 = vpop.f32.mrb[0].mxu0
      %v9874 = vadd.f32 0.0, %v9873
      %v9875 = vpop.f32.mrb[0].mxu0
      %9876 = vmatprep.mubr.bf16.mxu0 0
      %9877 = vmatmul.mubr.bf16.gmra.mrb[0].mxu0 %v9752
      %v9878 = vpop.f32.mrb[0].mxu0
      %v9879 = vadd.f32 0.0, %v9878
      %v9880 = vpop.f32.mrb[0].mxu0
      %v9881 = vpop.f32.mrb[0].mxu0
      %v9882 = vadd.f32 0.0, %v9881
      %v9883 = vpop.f32.mrb[0].mxu0
      %9884 = vmatprep.mubr.bf16.mxu0 0
      %9885 = vmatmul.mubr.bf16.gmra.mrb[0].mxu0 %v9755
      %v9886 = vpop.f32.mrb[0].mxu0
      %v9887 = vadd.f32 0.0, %v9886
      %v9888 = vpop.f32.mrb[0].mxu0
      %v9889 = vpop.f32.mrb[0].mxu0
      %v9890 = vadd.f32 0.0, %v9889
      %v9891 = vpop.f32.mrb[0].mxu0
      %9892 = vmatprep.mubr.bf16.mxu0 0
      %9893 = vmatmul.mubr.bf16.gmra.mrb[0].mxu0 %v9758
      %v9894 = vpop.f32.mrb[0].mxu0
      %v9895 = vadd.f32 0.0, %v9894
      %v9896 = vpop.f32.mrb[0].mxu0
      %v9897 = vpop.f32.mrb[0].mxu0
      %v9898 = vadd.f32 0.0, %v9897
      %v9899 = vpop.f32.mrb[0].mxu0
      %9900 = vmatprep.mubr.bf16.mxu0 0
      %9901 = vmatmul.mubr.bf16.gmra.mrb[0].mxu0 %v9761
      %v9902 = vpop.f32.mrb[0].mxu0
      %v9903 = vadd.f32 0.0, %v9902
      %v9904 = vpop.f32.mrb[0].mxu0
      %v9905 = vpop.f32.mrb[0].mxu0
      %v9906 = vadd.f32 0.0, %v9905
      %v9907 = vpop.f32.mrb[0].mxu0
      %9908 = vmatprep.mubr.bf16.mxu0 0
      %9909 = vmatmul.mubr.bf16.gmra.mrb[0].mxu0 %v9764
      %v9910 = vpop.f32.mrb[0].mxu0
      %v9911 = vadd.f32 0.0, %v9910
      %v9912 = vpop.f32.mrb[0].mxu0
      %v9913 = vpop.f32.mrb[0].mxu0
      %v9914 = vadd.f32 0.0, %v9913
      %v9915 = vpop.f32.mrb[0].mxu0
      %9916 = vmatprep.mubr.bf16.mxu0 0
      %9917 = vmatmul.mubr.bf16.gmra.mrb[0].mxu0 %v9767
      %v9918 = vpop.f32.mrb[0].mxu0
      %v9919 = vadd.f32 0.0, %v9918
      %v9920 = vpop.f32.mrb[0].mxu0
      %v9921 = vpop.f32.mrb[0].mxu0
      %v9922 = vadd.f32 0.0, %v9921
      %v9923 = vpop.f32.mrb[0].mxu0
      %9924 = vmatprep.mubr.bf16.mxu0 0
      %9925 = vmatmul.mubr.bf16.gmra.mrb[0].mxu0 %v9770
      %v9926 = vpop.f32.mrb[0].mxu0
      %v9927 = vadd.f32 0.0, %v9926
      %v9928 = vpop.f32.mrb[0].mxu0
      %v9929 = vpop.f32.mrb[0].mxu0
      %v9930 = vadd.f32 0.0, %v9929
      %v9931 = vpop.f32.mrb[0].mxu0
      %9932 = vdwg.mxu0
      %v9933 = vadd.f32 %v9579, %v9807
      %v9934 = vadd.f32 %v9580, %v9810
      %v9935 = vadd.f32 %v9581, %v9815
      %v9936 = vadd.f32 %v9582, %v9818
      %v9937 = vadd.f32 %v9583, %v9823
      %v9938 = vadd.f32 %v9584, %v9826
      %v9939 = vadd.f32 %v9585, %v9831
      %v9940 = vadd.f32 %v9586, %v9834
      %v9941 = vadd.f32 %v9587, %v9839
      %v9942 = vadd.f32 %v9588, %v9842
      %v9943 = vadd.f32 %v9589, %v9847
      %v9944 = vadd.f32 %v9590, %v9850
      %v9945 = vadd.f32 %v9591, %v9855
      %v9946 = vadd.f32 %v9592, %v9858
      %v9947 = vadd.f32 %v9593, %v9863
      %v9948 = vadd.f32 %v9594, %v9866
      %v9949 = vadd.f32 %v9595, %v9871
      %v9950 = vadd.f32 %v9596, %v9874
      %v9951 = vadd.f32 %v9597, %v9879
      %v9952 = vadd.f32 %v9598, %v9882
      %v9953 = vadd.f32 %v9599, %v9887
      %v9954 = vadd.f32 %v9600, %v9890
      %v9955 = vadd.f32 %v9601, %v9895
      %v9956 = vadd.f32 %v9602, %v9898
      %v9957 = vadd.f32 %v9603, %v9903
      %v9958 = vadd.f32 %v9604, %v9906
      %v9959 = vadd.f32 %v9605, %v9911
      %v9960 = vadd.f32 %v9606, %v9914
      %v9961 = vadd.f32 %v9607, %v9919
      %v9962 = vadd.f32 %v9608, %v9922
      %v9963 = vadd.f32 %v9609, %v9927
      %v9964 = vadd.f32 %v9610, %v9930
      %s9965 = scalar_lea.vmem [#allocation4], 32
      %v9966 = vld [vmem:[%s9965] sm:$0xff]
      %v9967 = vld [vmem:[%s9965 + $0x10] sm:$0xff]
      %v9968 = vld [vmem:[%s9965 + $0x20] sm:$0xff]
      %v9969 = vld [vmem:[%s9965 + $0x30] sm:$0xff]
      %v9970 = vld [vmem:[%s9965 + $0x40] sm:$0xff]
      %v9971 = vld [vmem:[%s9965 + $0x50] sm:$0xff]
      %v9972 = vld [vmem:[%s9965 + $0x60] sm:$0xff]
      %v9973 = vld [vmem:[%s9965 + $0x70] sm:$0xff]
      %v9974 = vld [vmem:[%s9965 + $0x80] sm:$0xff]
      %v9975 = vld [vmem:[%s9965 + $0x90] sm:$0xff]
      %v9976 = vld [vmem:[%s9965 + $0xa0] sm:$0xff]
      %v9977 = vld [vmem:[%s9965 + $0xb0] sm:$0xff]
      %v9978 = vld [vmem:[%s9965 + $0xc0] sm:$0xff]
      %v9979 = vld [vmem:[%s9965 + $0xd0] sm:$0xff]
      %v9980 = vld [vmem:[%s9965 + $0xe0] sm:$0xff]
      %v9981 = vld [vmem:[%s9965 + $0xf0] sm:$0xff]
      %s9982 = scalar_lea.vmem %s5, 96
      %v9983 = vld [vmem:[%s9982] sm:$0xf]
      %v9984 = vld [vmem:[%s9982 + $0x4] sm:$0xf]
      %v9985 = vld [vmem:[%s9982 + $0x8] sm:$0xf]
      %v9986 = vld [vmem:[%s9982 + $0xc] sm:$0xf]
      %v9991 = vunpack.c.l.b16 %v9983
      %v9992 = vunpack.c.l.b16 %v9984
      %v9993 = vunpack.c.l.b16 %v9985
      %v9994 = vunpack.c.l.b16 %v9986
      %v9995 = vpack.c.b16 %v9992, %v9991
      %v9996 = vpack.c.b16 %v9994, %v9993
      %v10000 = vsel %vm494, %v9966, 0
      %v10003 = vsel %vm494, %v9967, 0
      %v10006 = vsel %vm494, %v9968, 0
      %v10009 = vsel %vm494, %v9969, 0
      %v10012 = vsel %vm494, %v9970, 0
      %v10015 = vsel %vm494, %v9971, 0
      %v10018 = vsel %vm494, %v9972, 0
      %v10021 = vsel %vm494, %v9973, 0
      %v10024 = vsel %vm494, %v9974, 0
      %v10027 = vsel %vm494, %v9975, 0
      %v10030 = vsel %vm494, %v9976, 0
      %v10033 = vsel %vm494, %v9977, 0
      %v10036 = vsel %vm494, %v9978, 0
      %v10039 = vsel %vm494, %v9979, 0
      %v10042 = vsel %vm494, %v9980, 0
      %v10045 = vsel %vm494, %v9981, 0
      %10047 = vmatprep.subr.bf16.mxu0 0
      %10048 = vmatpush1.bf16.msra.mxu0 %v9995
      %10049 = vmatprep.subr.bf16.mxu0 0
      %10050 = vmatpush1.bf16.msra.mxu0 %v9996
      %10051 = vmatprep.subr.bf16.mxu0 0
      %10052 = vmatpush1.bf16.msra.mxu0 0
      %10053 = vmatprep.subr.bf16.mxu0 0
      %10054 = vmatpush1.bf16.msra.mxu0 0
      %10055 = vmatprep.subr.bf16.mxu0 0
      %10056 = vmatpush1.bf16.msra.mxu0 0
      %10057 = vmatprep.subr.bf16.mxu0 0
      %10058 = vmatpush1.bf16.msra.mxu0 0
      %10059 = vmatprep.subr.bf16.mxu0 0
      %10060 = vmatpush1.bf16.msra.mxu0 0
      %10061 = vmatprep.subr.bf16.mxu0 0
      %10062 = vmatpush1.bf16.msra.mxu0 0
      %10063 = vmatprep.subr.bf16.mxu0 0
      %10064 = vmatpush1.bf16.msra.mxu0 0
      %10065 = vmatprep.subr.bf16.mxu0 0
      %10066 = vmatpush1.bf16.msra.mxu0 0
      %10067 = vmatprep.subr.bf16.mxu0 0
      %10068 = vmatpush1.bf16.msra.mxu0 0
      %10069 = vmatprep.subr.bf16.mxu0 0
      %10070 = vmatpush1.bf16.msra.mxu0 0
      %10071 = vmatprep.subr.bf16.mxu0 0
      %10072 = vmatpush1.bf16.msra.mxu0 0
      %10073 = vmatprep.subr.bf16.mxu0 0
      %10074 = vmatpush1.bf16.msra.mxu0 0
      %10075 = vmatprep.subr.bf16.mxu0 0
      %10076 = vmatpush1.bf16.msra.mxu0 0
      %10077 = vmatprep.subr.bf16.mxu0 0
      %10078 = vmatpush1.bf16.msra.mxu0 0
      %10079 = vmatprep.mubr.bf16.mxu0 0
      %10080 = vmatmul.mubr.bf16.gmra.mrb[0].mxu0 %v10000
      %v10081 = vpop.f32.mrb[0].mxu0
      %v10082 = vadd.f32 0.0, %v10081
      %v10083 = vpop.f32.mrb[0].mxu0
      %v10084 = vpop.f32.mrb[0].mxu0
      %v10085 = vadd.f32 0.0, %v10084
      %v10086 = vpop.f32.mrb[0].mxu0
      %10087 = vmatprep.mubr.bf16.mxu0 0
      %10088 = vmatmul.mubr.bf16.gmra.mrb[0].mxu0 %v10003
      %v10089 = vpop.f32.mrb[0].mxu0
      %v10090 = vadd.f32 0.0, %v10089
      %v10091 = vpop.f32.mrb[0].mxu0
      %v10092 = vpop.f32.mrb[0].mxu0
      %v10093 = vadd.f32 0.0, %v10092
      %v10094 = vpop.f32.mrb[0].mxu0
      %10095 = vmatprep.mubr.bf16.mxu0 0
      %10096 = vmatmul.mubr.bf16.gmra.mrb[0].mxu0 %v10006
      %v10097 = vpop.f32.mrb[0].mxu0
      %v10098 = vadd.f32 0.0, %v10097
      %v10099 = vpop.f32.mrb[0].mxu0
      %v10100 = vpop.f32.mrb[0].mxu0
      %v10101 = vadd.f32 0.0, %v10100
      %v10102 = vpop.f32.mrb[0].mxu0
      %10103 = vmatprep.mubr.bf16.mxu0 0
      %10104 = vmatmul.mubr.bf16.gmra.mrb[0].mxu0 %v10009
      %v10105 = vpop.f32.mrb[0].mxu0
      %v10106 = vadd.f32 0.0, %v10105
      %v10107 = vpop.f32.mrb[0].mxu0
      %v10108 = vpop.f32.mrb[0].mxu0
      %v10109 = vadd.f32 0.0, %v10108
      %v10110 = vpop.f32.mrb[0].mxu0
      %10111 = vmatprep.mubr.bf16.mxu0 0
      %10112 = vmatmul.mubr.bf16.gmra.mrb[0].mxu0 %v10012
      %v10113 = vpop.f32.mrb[0].mxu0
      %v10114 = vadd.f32 0.0, %v10113
      %v10115 = vpop.f32.mrb[0].mxu0
      %v10116 = vpop.f32.mrb[0].mxu0
      %v10117 = vadd.f32 0.0, %v10116
      %v10118 = vpop.f32.mrb[0].mxu0
      %10119 = vmatprep.mubr.bf16.mxu0 0
      %10120 = vmatmul.mubr.bf16.gmra.mrb[0].mxu0 %v10015
      %v10121 = vpop.f32.mrb[0].mxu0
      %v10122 = vadd.f32 0.0, %v10121
      %v10123 = vpop.f32.mrb[0].mxu0
      %v10124 = vpop.f32.mrb[0].mxu0
      %v10125 = vadd.f32 0.0, %v10124
      %v10126 = vpop.f32.mrb[0].mxu0
      %10127 = vmatprep.mubr.bf16.mxu0 0
      %10128 = vmatmul.mubr.bf16.gmra.mrb[0].mxu0 %v10018
      %v10129 = vpop.f32.mrb[0].mxu0
      %v10130 = vadd.f32 0.0, %v10129
      %v10131 = vpop.f32.mrb[0].mxu0
      %v10132 = vpop.f32.mrb[0].mxu0
      %v10133 = vadd.f32 0.0, %v10132
      %v10134 = vpop.f32.mrb[0].mxu0
      %10135 = vmatprep.mubr.bf16.mxu0 0
      %10136 = vmatmul.mubr.bf16.gmra.mrb[0].mxu0 %v10021
      %v10137 = vpop.f32.mrb[0].mxu0
      %v10138 = vadd.f32 0.0, %v10137
      %v10139 = vpop.f32.mrb[0].mxu0
      %v10140 = vpop.f32.mrb[0].mxu0
      %v10141 = vadd.f32 0.0, %v10140
      %v10142 = vpop.f32.mrb[0].mxu0
      %10143 = vmatprep.mubr.bf16.mxu0 0
      %10144 = vmatmul.mubr.bf16.gmra.mrb[0].mxu0 %v10024
      %v10145 = vpop.f32.mrb[0].mxu0
      %v10146 = vadd.f32 0.0, %v10145
      %v10147 = vpop.f32.mrb[0].mxu0
      %v10148 = vpop.f32.mrb[0].mxu0
      %v10149 = vadd.f32 0.0, %v10148
      %v10150 = vpop.f32.mrb[0].mxu0
      %10151 = vmatprep.mubr.bf16.mxu0 0
      %10152 = vmatmul.mubr.bf16.gmra.mrb[0].mxu0 %v10027
      %v10153 = vpop.f32.mrb[0].mxu0
      %v10154 = vadd.f32 0.0, %v10153
      %v10155 = vpop.f32.mrb[0].mxu0
      %v10156 = vpop.f32.mrb[0].mxu0
      %v10157 = vadd.f32 0.0, %v10156
      %v10158 = vpop.f32.mrb[0].mxu0
      %10159 = vmatprep.mubr.bf16.mxu0 0
      %10160 = vmatmul.mubr.bf16.gmra.mrb[0].mxu0 %v10030
      %v10161 = vpop.f32.mrb[0].mxu0
      %v10162 = vadd.f32 0.0, %v10161
      %v10163 = vpop.f32.mrb[0].mxu0
      %v10164 = vpop.f32.mrb[0].mxu0
      %v10165 = vadd.f32 0.0, %v10164
      %v10166 = vpop.f32.mrb[0].mxu0
      %10167 = vmatprep.mubr.bf16.mxu0 0
      %10168 = vmatmul.mubr.bf16.gmra.mrb[0].mxu0 %v10033
      %v10169 = vpop.f32.mrb[0].mxu0
      %v10170 = vadd.f32 0.0, %v10169
      %v10171 = vpop.f32.mrb[0].mxu0
      %v10172 = vpop.f32.mrb[0].mxu0
      %v10173 = vadd.f32 0.0, %v10172
      %v10174 = vpop.f32.mrb[0].mxu0
      %10175 = vmatprep.mubr.bf16.mxu0 0
      %10176 = vmatmul.mubr.bf16.gmra.mrb[0].mxu0 %v10036
      %v10177 = vpop.f32.mrb[0].mxu0
      %v10178 = vadd.f32 0.0, %v10177
      %v10179 = vpop.f32.mrb[0].mxu0
      %v10180 = vpop.f32.mrb[0].mxu0
      %v10181 = vadd.f32 0.0, %v10180
      %v10182 = vpop.f32.mrb[0].mxu0
      %10183 = vmatprep.mubr.bf16.mxu0 0
      %10184 = vmatmul.mubr.bf16.gmra.mrb[0].mxu0 %v10039
      %v10185 = vpop.f32.mrb[0].mxu0
      %v10186 = vadd.f32 0.0, %v10185
      %v10187 = vpop.f32.mrb[0].mxu0
      %v10188 = vpop.f32.mrb[0].mxu0
      %v10189 = vadd.f32 0.0, %v10188
      %v10190 = vpop.f32.mrb[0].mxu0
      %10191 = vmatprep.mubr.bf16.mxu0 0
      %10192 = vmatmul.mubr.bf16.gmra.mrb[0].mxu0 %v10042
      %v10193 = vpop.f32.mrb[0].mxu0
      %v10194 = vadd.f32 0.0, %v10193
      %v10195 = vpop.f32.mrb[0].mxu0
      %v10196 = vpop.f32.mrb[0].mxu0
      %v10197 = vadd.f32 0.0, %v10196
      %v10198 = vpop.f32.mrb[0].mxu0
      %10199 = vmatprep.mubr.bf16.mxu0 0
      %10200 = vmatmul.mubr.bf16.gmra.mrb[0].mxu0 %v10045
      %v10201 = vpop.f32.mrb[0].mxu0
      %v10202 = vadd.f32 0.0, %v10201
      %v10203 = vpop.f32.mrb[0].mxu0
      %v10204 = vpop.f32.mrb[0].mxu0
      %v10205 = vadd.f32 0.0, %v10204
      %v10206 = vpop.f32.mrb[0].mxu0
      %10207 = vdwg.mxu0
      %v10208 = vadd.f32 %v9933, %v10082
      %v10209 = vadd.f32 %v9934, %v10085
      %v10210 = vadd.f32 %v9935, %v10090
      %v10211 = vadd.f32 %v9936, %v10093
      %v10212 = vadd.f32 %v9937, %v10098
      %v10213 = vadd.f32 %v9938, %v10101
      %v10214 = vadd.f32 %v9939, %v10106
      %v10215 = vadd.f32 %v9940, %v10109
      %v10216 = vadd.f32 %v9941, %v10114
      %v10217 = vadd.f32 %v9942, %v10117
      %v10218 = vadd.f32 %v9943, %v10122
      %v10219 = vadd.f32 %v9944, %v10125
      %v10220 = vadd.f32 %v9945, %v10130
      %v10221 = vadd.f32 %v9946, %v10133
      %v10222 = vadd.f32 %v9947, %v10138
      %v10223 = vadd.f32 %v9948, %v10141
      %v10224 = vadd.f32 %v9949, %v10146
      %v10225 = vadd.f32 %v9950, %v10149
      %v10226 = vadd.f32 %v9951, %v10154
      %v10227 = vadd.f32 %v9952, %v10157
      %v10228 = vadd.f32 %v9953, %v10162
      %v10229 = vadd.f32 %v9954, %v10165
      %v10230 = vadd.f32 %v9955, %v10170
      %v10231 = vadd.f32 %v9956, %v10173
      %v10232 = vadd.f32 %v9957, %v10178
      %v10233 = vadd.f32 %v9958, %v10181
      %v10234 = vadd.f32 %v9959, %v10186
      %v10235 = vadd.f32 %v9960, %v10189
      %v10236 = vadd.f32 %v9961, %v10194
      %v10237 = vadd.f32 %v9962, %v10197
      %v10238 = vadd.f32 %v9963, %v10202
      %v10239 = vadd.f32 %v9964, %v10205
      %v10240 = vld [vmem:[%s9965] sm:$0xff]
      %v10241 = vld [vmem:[%s9965 + $0x8] sm:$0x1]
      %v10242 = vld [vmem:[%s9965 + $0x10] sm:$0xff]
      %v10243 = vld [vmem:[%s9965 + $0x18] sm:$0x1]
      %v10244 = vld [vmem:[%s9965 + $0x20] sm:$0xff]
      %v10245 = vld [vmem:[%s9965 + $0x28] sm:$0x1]
      %v10246 = vld [vmem:[%s9965 + $0x30] sm:$0xff]
      %v10247 = vld [vmem:[%s9965 + $0x38] sm:$0x1]
      %v10248 = vld [vmem:[%s9965 + $0x40] sm:$0xff]
      %v10249 = vld [vmem:[%s9965 + $0x48] sm:$0x1]
      %v10250 = vld [vmem:[%s9965 + $0x50] sm:$0xff]
      %v10251 = vld [vmem:[%s9965 + $0x58] sm:$0x1]
      %v10252 = vld [vmem:[%s9965 + $0x60] sm:$0xff]
      %v10253 = vld [vmem:[%s9965 + $0x68] sm:$0x1]
      %v10254 = vld [vmem:[%s9965 + $0x70] sm:$0xff]
      %v10255 = vld [vmem:[%s9965 + $0x78] sm:$0x1]
      %v10256 = vld [vmem:[%s9965 + $0x80] sm:$0xff]
      %v10257 = vld [vmem:[%s9965 + $0x88] sm:$0x1]
      %v10258 = vld [vmem:[%s9965 + $0x90] sm:$0xff]
      %v10259 = vld [vmem:[%s9965 + $0x98] sm:$0x1]
      %v10260 = vld [vmem:[%s9965 + $0xa0] sm:$0xff]
      %v10261 = vld [vmem:[%s9965 + $0xa8] sm:$0x1]
      %v10262 = vld [vmem:[%s9965 + $0xb0] sm:$0xff]
      %v10263 = vld [vmem:[%s9965 + $0xb8] sm:$0x1]
      %v10264 = vld [vmem:[%s9965 + $0xc0] sm:$0xff]
      %v10265 = vld [vmem:[%s9965 + $0xc8] sm:$0x1]
      %v10266 = vld [vmem:[%s9965 + $0xd0] sm:$0xff]
      %v10267 = vld [vmem:[%s9965 + $0xd8] sm:$0x1]
      %v10268 = vld [vmem:[%s9965 + $0xe0] sm:$0xff]
      %v10269 = vld [vmem:[%s9965 + $0xe8] sm:$0x1]
      %v10270 = vld [vmem:[%s9965 + $0xf0] sm:$0xff]
      %v10271 = vld [vmem:[%s9965 + $0xf8] sm:$0x1]
      %v10273 = vshrl.u32 %v10240, 16
      %v10275 = vshll.u32 %v10240, 16
      %v10277 = vrot.slane %v10275, 1
      %v10278 = vor.u32 %v10273, %v10277
      %v10280 = vshll.u32 %v10241, 16
      %v10282 = vrot.slane %v10280, 1
      %v10283 = vsel %vm923, %v10278, %v10282
      %v10285 = vshrl.u32 %v10242, 16
      %v10287 = vshll.u32 %v10242, 16
      %v10289 = vrot.slane %v10287, 1
      %v10290 = vor.u32 %v10285, %v10289
      %v10292 = vshll.u32 %v10243, 16
      %v10294 = vrot.slane %v10292, 1
      %v10295 = vsel %vm923, %v10290, %v10294
      %v10297 = vshrl.u32 %v10244, 16
      %v10299 = vshll.u32 %v10244, 16
      %v10301 = vrot.slane %v10299, 1
      %v10302 = vor.u32 %v10297, %v10301
      %v10304 = vshll.u32 %v10245, 16
      %v10306 = vrot.slane %v10304, 1
      %v10307 = vsel %vm923, %v10302, %v10306
      %v10309 = vshrl.u32 %v10246, 16
      %v10311 = vshll.u32 %v10246, 16
      %v10313 = vrot.slane %v10311, 1
      %v10314 = vor.u32 %v10309, %v10313
      %v10316 = vshll.u32 %v10247, 16
      %v10318 = vrot.slane %v10316, 1
      %v10319 = vsel %vm923, %v10314, %v10318
      %v10321 = vshrl.u32 %v10248, 16
      %v10323 = vshll.u32 %v10248, 16
      %v10325 = vrot.slane %v10323, 1
      %v10326 = vor.u32 %v10321, %v10325
      %v10328 = vshll.u32 %v10249, 16
      %v10330 = vrot.slane %v10328, 1
      %v10331 = vsel %vm923, %v10326, %v10330
      %v10333 = vshrl.u32 %v10250, 16
      %v10335 = vshll.u32 %v10250, 16
      %v10337 = vrot.slane %v10335, 1
      %v10338 = vor.u32 %v10333, %v10337
      %v10340 = vshll.u32 %v10251, 16
      %v10342 = vrot.slane %v10340, 1
      %v10343 = vsel %vm923, %v10338, %v10342
      %v10345 = vshrl.u32 %v10252, 16
      %v10347 = vshll.u32 %v10252, 16
      %v10349 = vrot.slane %v10347, 1
      %v10350 = vor.u32 %v10345, %v10349
      %v10352 = vshll.u32 %v10253, 16
      %v10354 = vrot.slane %v10352, 1
      %v10355 = vsel %vm923, %v10350, %v10354
      %v10357 = vshrl.u32 %v10254, 16
      %v10359 = vshll.u32 %v10254, 16
      %v10361 = vrot.slane %v10359, 1
      %v10362 = vor.u32 %v10357, %v10361
      %v10364 = vshll.u32 %v10255, 16
      %v10366 = vrot.slane %v10364, 1
      %v10367 = vsel %vm923, %v10362, %v10366
      %v10369 = vshrl.u32 %v10256, 16
      %v10371 = vshll.u32 %v10256, 16
      %v10373 = vrot.slane %v10371, 1
      %v10374 = vor.u32 %v10369, %v10373
      %v10376 = vshll.u32 %v10257, 16
      %v10378 = vrot.slane %v10376, 1
      %v10379 = vsel %vm923, %v10374, %v10378
      %v10381 = vshrl.u32 %v10258, 16
      %v10383 = vshll.u32 %v10258, 16
      %v10385 = vrot.slane %v10383, 1
      %v10386 = vor.u32 %v10381, %v10385
      %v10388 = vshll.u32 %v10259, 16
      %v10390 = vrot.slane %v10388, 1
      %v10391 = vsel %vm923, %v10386, %v10390
      %v10393 = vshrl.u32 %v10260, 16
      %v10395 = vshll.u32 %v10260, 16
      %v10397 = vrot.slane %v10395, 1
      %v10398 = vor.u32 %v10393, %v10397
      %v10400 = vshll.u32 %v10261, 16
      %v10402 = vrot.slane %v10400, 1
      %v10403 = vsel %vm923, %v10398, %v10402
      %v10405 = vshrl.u32 %v10262, 16
      %v10407 = vshll.u32 %v10262, 16
      %v10409 = vrot.slane %v10407, 1
      %v10410 = vor.u32 %v10405, %v10409
      %v10412 = vshll.u32 %v10263, 16
      %v10414 = vrot.slane %v10412, 1
      %v10415 = vsel %vm923, %v10410, %v10414
      %v10417 = vshrl.u32 %v10264, 16
      %v10419 = vshll.u32 %v10264, 16
      %v10421 = vrot.slane %v10419, 1
      %v10422 = vor.u32 %v10417, %v10421
      %v10424 = vshll.u32 %v10265, 16
      %v10426 = vrot.slane %v10424, 1
      %v10427 = vsel %vm923, %v10422, %v10426
      %v10429 = vshrl.u32 %v10266, 16
      %v10431 = vshll.u32 %v10266, 16
      %v10433 = vrot.slane %v10431, 1
      %v10434 = vor.u32 %v10429, %v10433
      %v10436 = vshll.u32 %v10267, 16
      %v10438 = vrot.slane %v10436, 1
      %v10439 = vsel %vm923, %v10434, %v10438
      %v10441 = vshrl.u32 %v10268, 16
      %v10443 = vshll.u32 %v10268, 16
      %v10445 = vrot.slane %v10443, 1
      %v10446 = vor.u32 %v10441, %v10445
      %v10448 = vshll.u32 %v10269, 16
      %v10450 = vrot.slane %v10448, 1
      %v10451 = vsel %vm923, %v10446, %v10450
      %v10453 = vshrl.u32 %v10270, 16
      %v10455 = vshll.u32 %v10270, 16
      %v10457 = vrot.slane %v10455, 1
      %v10458 = vor.u32 %v10453, %v10457
      %v10460 = vshll.u32 %v10271, 16
      %v10462 = vrot.slane %v10460, 1
      %v10463 = vsel %vm923, %v10458, %v10462
      %s10464 = scalar_lea.vmem %s5, 112
      %v10465 = vld [vmem:[%s10464] sm:$0xf]
      %v10466 = vld [vmem:[%s10464 + $0x4] sm:$0xf]
      %v10467 = vld [vmem:[%s10464 + $0x8] sm:$0xf]
      %v10468 = vld [vmem:[%s10464 + $0xc] sm:$0xf]
      %v10473 = vunpack.c.l.b16 %v10465
      %v10474 = vunpack.c.l.b16 %v10466
      %v10475 = vunpack.c.l.b16 %v10467
      %v10476 = vunpack.c.l.b16 %v10468
      %v10477 = vpack.c.b16 %v10474, %v10473
      %v10478 = vpack.c.b16 %v10476, %v10475
      %v10482 = vsel %vm494, %v10283, 0
      %v10485 = vsel %vm494, %v10295, 0
      %v10488 = vsel %vm494, %v10307, 0
      %v10491 = vsel %vm494, %v10319, 0
      %v10494 = vsel %vm494, %v10331, 0
      %v10497 = vsel %vm494, %v10343, 0
      %v10500 = vsel %vm494, %v10355, 0
      %v10503 = vsel %vm494, %v10367, 0
      %v10506 = vsel %vm494, %v10379, 0
      %v10509 = vsel %vm494, %v10391, 0
      %v10512 = vsel %vm494, %v10403, 0
      %v10515 = vsel %vm494, %v10415, 0
      %v10518 = vsel %vm494, %v10427, 0
      %v10521 = vsel %vm494, %v10439, 0
      %v10524 = vsel %vm494, %v10451, 0
      %v10527 = vsel %vm494, %v10463, 0
      %10529 = vmatprep.subr.bf16.mxu0 0
      %10530 = vmatpush1.bf16.msra.mxu0 %v10477
      %10531 = vmatprep.subr.bf16.mxu0 0
      %10532 = vmatpush1.bf16.msra.mxu0 %v10478
      %10533 = vmatprep.subr.bf16.mxu0 0
      %10534 = vmatpush1.bf16.msra.mxu0 0
      %10535 = vmatprep.subr.bf16.mxu0 0
      %10536 = vmatpush1.bf16.msra.mxu0 0
      %10537 = vmatprep.subr.bf16.mxu0 0
      %10538 = vmatpush1.bf16.msra.mxu0 0
      %10539 = vmatprep.subr.bf16.mxu0 0
      %10540 = vmatpush1.bf16.msra.mxu0 0
      %10541 = vmatprep.subr.bf16.mxu0 0
      %10542 = vmatpush1.bf16.msra.mxu0 0
      %10543 = vmatprep.subr.bf16.mxu0 0
      %10544 = vmatpush1.bf16.msra.mxu0 0
      %10545 = vmatprep.subr.bf16.mxu0 0
      %10546 = vmatpush1.bf16.msra.mxu0 0
      %10547 = vmatprep.subr.bf16.mxu0 0
      %10548 = vmatpush1.bf16.msra.mxu0 0
      %10549 = vmatprep.subr.bf16.mxu0 0
      %10550 = vmatpush1.bf16.msra.mxu0 0
      %10551 = vmatprep.subr.bf16.mxu0 0
      %10552 = vmatpush1.bf16.msra.mxu0 0
      %10553 = vmatprep.subr.bf16.mxu0 0
      %10554 = vmatpush1.bf16.msra.mxu0 0
      %10555 = vmatprep.subr.bf16.mxu0 0
      %10556 = vmatpush1.bf16.msra.mxu0 0
      %10557 = vmatprep.subr.bf16.mxu0 0
      %10558 = vmatpush1.bf16.msra.mxu0 0
      %10559 = vmatprep.subr.bf16.mxu0 0
      %10560 = vmatpush1.bf16.msra.mxu0 0
      %10561 = vmatprep.mubr.bf16.mxu0 0
      %10562 = vmatmul.mubr.bf16.gmra.mrb[0].mxu0 %v10482
      %v10563 = vpop.f32.mrb[0].mxu0
      %v10564 = vadd.f32 0.0, %v10563
      %v10565 = vpop.f32.mrb[0].mxu0
      %v10566 = vpop.f32.mrb[0].mxu0
      %v10567 = vadd.f32 0.0, %v10566
      %v10568 = vpop.f32.mrb[0].mxu0
      %10569 = vmatprep.mubr.bf16.mxu0 0
      %10570 = vmatmul.mubr.bf16.gmra.mrb[0].mxu0 %v10485
      %v10571 = vpop.f32.mrb[0].mxu0
      %v10572 = vadd.f32 0.0, %v10571
      %v10573 = vpop.f32.mrb[0].mxu0
      %v10574 = vpop.f32.mrb[0].mxu0
      %v10575 = vadd.f32 0.0, %v10574
      %v10576 = vpop.f32.mrb[0].mxu0
      %10577 = vmatprep.mubr.bf16.mxu0 0
      %10578 = vmatmul.mubr.bf16.gmra.mrb[0].mxu0 %v10488
      %v10579 = vpop.f32.mrb[0].mxu0
      %v10580 = vadd.f32 0.0, %v10579
      %v10581 = vpop.f32.mrb[0].mxu0
      %v10582 = vpop.f32.mrb[0].mxu0
      %v10583 = vadd.f32 0.0, %v10582
      %v10584 = vpop.f32.mrb[0].mxu0
      %10585 = vmatprep.mubr.bf16.mxu0 0
      %10586 = vmatmul.mubr.bf16.gmra.mrb[0].mxu0 %v10491
      %v10587 = vpop.f32.mrb[0].mxu0
      %v10588 = vadd.f32 0.0, %v10587
      %v10589 = vpop.f32.mrb[0].mxu0
      %v10590 = vpop.f32.mrb[0].mxu0
      %v10591 = vadd.f32 0.0, %v10590
      %v10592 = vpop.f32.mrb[0].mxu0
      %10593 = vmatprep.mubr.bf16.mxu0 0
      %10594 = vmatmul.mubr.bf16.gmra.mrb[0].mxu0 %v10494
      %v10595 = vpop.f32.mrb[0].mxu0
      %v10596 = vadd.f32 0.0, %v10595
      %v10597 = vpop.f32.mrb[0].mxu0
      %v10598 = vpop.f32.mrb[0].mxu0
      %v10599 = vadd.f32 0.0, %v10598
      %v10600 = vpop.f32.mrb[0].mxu0
      %10601 = vmatprep.mubr.bf16.mxu0 0
      %10602 = vmatmul.mubr.bf16.gmra.mrb[0].mxu0 %v10497
      %v10603 = vpop.f32.mrb[0].mxu0
      %v10604 = vadd.f32 0.0, %v10603
      %v10605 = vpop.f32.mrb[0].mxu0
      %v10606 = vpop.f32.mrb[0].mxu0
      %v10607 = vadd.f32 0.0, %v10606
      %v10608 = vpop.f32.mrb[0].mxu0
      %10609 = vmatprep.mubr.bf16.mxu0 0
      %10610 = vmatmul.mubr.bf16.gmra.mrb[0].mxu0 %v10500
      %v10611 = vpop.f32.mrb[0].mxu0
      %v10612 = vadd.f32 0.0, %v10611
      %v10613 = vpop.f32.mrb[0].mxu0
      %v10614 = vpop.f32.mrb[0].mxu0
      %v10615 = vadd.f32 0.0, %v10614
      %v10616 = vpop.f32.mrb[0].mxu0
      %10617 = vmatprep.mubr.bf16.mxu0 0
      %10618 = vmatmul.mubr.bf16.gmra.mrb[0].mxu0 %v10503
      %v10619 = vpop.f32.mrb[0].mxu0
      %v10620 = vadd.f32 0.0, %v10619
      %v10621 = vpop.f32.mrb[0].mxu0
      %v10622 = vpop.f32.mrb[0].mxu0
      %v10623 = vadd.f32 0.0, %v10622
      %v10624 = vpop.f32.mrb[0].mxu0
      %10625 = vmatprep.mubr.bf16.mxu0 0
      %10626 = vmatmul.mubr.bf16.gmra.mrb[0].mxu0 %v10506
      %v10627 = vpop.f32.mrb[0].mxu0
      %v10628 = vadd.f32 0.0, %v10627
      %v10629 = vpop.f32.mrb[0].mxu0
      %v10630 = vpop.f32.mrb[0].mxu0
      %v10631 = vadd.f32 0.0, %v10630
      %v10632 = vpop.f32.mrb[0].mxu0
      %10633 = vmatprep.mubr.bf16.mxu0 0
      %10634 = vmatmul.mubr.bf16.gmra.mrb[0].mxu0 %v10509
      %v10635 = vpop.f32.mrb[0].mxu0
      %v10636 = vadd.f32 0.0, %v10635
      %v10637 = vpop.f32.mrb[0].mxu0
      %v10638 = vpop.f32.mrb[0].mxu0
      %v10639 = vadd.f32 0.0, %v10638
      %v10640 = vpop.f32.mrb[0].mxu0
      %10641 = vmatprep.mubr.bf16.mxu0 0
      %10642 = vmatmul.mubr.bf16.gmra.mrb[0].mxu0 %v10512
      %v10643 = vpop.f32.mrb[0].mxu0
      %v10644 = vadd.f32 0.0, %v10643
      %v10645 = vpop.f32.mrb[0].mxu0
      %v10646 = vpop.f32.mrb[0].mxu0
      %v10647 = vadd.f32 0.0, %v10646
      %v10648 = vpop.f32.mrb[0].mxu0
      %10649 = vmatprep.mubr.bf16.mxu0 0
      %10650 = vmatmul.mubr.bf16.gmra.mrb[0].mxu0 %v10515
      %v10651 = vpop.f32.mrb[0].mxu0
      %v10652 = vadd.f32 0.0, %v10651
      %v10653 = vpop.f32.mrb[0].mxu0
      %v10654 = vpop.f32.mrb[0].mxu0
      %v10655 = vadd.f32 0.0, %v10654
      %v10656 = vpop.f32.mrb[0].mxu0
      %10657 = vmatprep.mubr.bf16.mxu0 0
      %10658 = vmatmul.mubr.bf16.gmra.mrb[0].mxu0 %v10518
      %v10659 = vpop.f32.mrb[0].mxu0
      %v10660 = vadd.f32 0.0, %v10659
      %v10661 = vpop.f32.mrb[0].mxu0
      %v10662 = vpop.f32.mrb[0].mxu0
      %v10663 = vadd.f32 0.0, %v10662
      %v10664 = vpop.f32.mrb[0].mxu0
      %10665 = vmatprep.mubr.bf16.mxu0 0
      %10666 = vmatmul.mubr.bf16.gmra.mrb[0].mxu0 %v10521
      %v10667 = vpop.f32.mrb[0].mxu0
      %v10668 = vadd.f32 0.0, %v10667
      %v10669 = vpop.f32.mrb[0].mxu0
      %v10670 = vpop.f32.mrb[0].mxu0
      %v10671 = vadd.f32 0.0, %v10670
      %v10672 = vpop.f32.mrb[0].mxu0
      %10673 = vmatprep.mubr.bf16.mxu0 0
      %10674 = vmatmul.mubr.bf16.gmra.mrb[0].mxu0 %v10524
      %v10675 = vpop.f32.mrb[0].mxu0
      %v10676 = vadd.f32 0.0, %v10675
      %v10677 = vpop.f32.mrb[0].mxu0
      %v10678 = vpop.f32.mrb[0].mxu0
      %v10679 = vadd.f32 0.0, %v10678
      %v10680 = vpop.f32.mrb[0].mxu0
      %10681 = vmatprep.mubr.bf16.mxu0 0
      %10682 = vmatmul.mubr.bf16.gmra.mrb[0].mxu0 %v10527
      %v10683 = vpop.f32.mrb[0].mxu0
      %v10684 = vadd.f32 0.0, %v10683
      %v10685 = vpop.f32.mrb[0].mxu0
      %v10686 = vpop.f32.mrb[0].mxu0
      %v10687 = vadd.f32 0.0, %v10686
      %v10688 = vpop.f32.mrb[0].mxu0
      %10689 = vdwg.mxu0
      %v10690 = vadd.f32 %v10208, %v10564
      %v10691 = vadd.f32 %v10209, %v10567
      %v10692 = vadd.f32 %v10210, %v10572
      %v10693 = vadd.f32 %v10211, %v10575
      %v10694 = vadd.f32 %v10212, %v10580
      %v10695 = vadd.f32 %v10213, %v10583
      %v10696 = vadd.f32 %v10214, %v10588
      %v10697 = vadd.f32 %v10215, %v10591
      %v10698 = vadd.f32 %v10216, %v10596
      %v10699 = vadd.f32 %v10217, %v10599
      %v10700 = vadd.f32 %v10218, %v10604
      %v10701 = vadd.f32 %v10219, %v10607
      %v10702 = vadd.f32 %v10220, %v10612
      %v10703 = vadd.f32 %v10221, %v10615
      %v10704 = vadd.f32 %v10222, %v10620
      %v10705 = vadd.f32 %v10223, %v10623
      %v10706 = vadd.f32 %v10224, %v10628
      %v10707 = vadd.f32 %v10225, %v10631
      %v10708 = vadd.f32 %v10226, %v10636
      %v10709 = vadd.f32 %v10227, %v10639
      %v10710 = vadd.f32 %v10228, %v10644
      %v10711 = vadd.f32 %v10229, %v10647
      %v10712 = vadd.f32 %v10230, %v10652
      %v10713 = vadd.f32 %v10231, %v10655
      %v10714 = vadd.f32 %v10232, %v10660
      %v10715 = vadd.f32 %v10233, %v10663
      %v10716 = vadd.f32 %v10234, %v10668
      %v10717 = vadd.f32 %v10235, %v10671
      %v10718 = vadd.f32 %v10236, %v10676
      %v10719 = vadd.f32 %v10237, %v10679
      %v10720 = vadd.f32 %v10238, %v10684
      %v10721 = vadd.f32 %v10239, %v10687
      %v10722 = vld [vmem:[%s9965] sm:$0xfe]
      %v10723 = vld [vmem:[%s9965 + $0x10] sm:$0xfe]
      %v10724 = vld [vmem:[%s9965 + $0x20] sm:$0xfe]
      %v10725 = vld [vmem:[%s9965 + $0x30] sm:$0xfe]
      %v10726 = vld [vmem:[%s9965 + $0x40] sm:$0xfe]
      %v10727 = vld [vmem:[%s9965 + $0x50] sm:$0xfe]
      %v10728 = vld [vmem:[%s9965 + $0x60] sm:$0xfe]
      %v10729 = vld [vmem:[%s9965 + $0x70] sm:$0xfe]
      %v10730 = vld [vmem:[%s9965 + $0x80] sm:$0xfe]
      %v10731 = vld [vmem:[%s9965 + $0x90] sm:$0xfe]
      %v10732 = vld [vmem:[%s9965 + $0xa0] sm:$0xfe]
      %v10733 = vld [vmem:[%s9965 + $0xb0] sm:$0xfe]
      %v10734 = vld [vmem:[%s9965 + $0xc0] sm:$0xfe]
      %v10735 = vld [vmem:[%s9965 + $0xd0] sm:$0xfe]
      %v10736 = vld [vmem:[%s9965 + $0xe0] sm:$0xfe]
      %v10737 = vld [vmem:[%s9965 + $0xf0] sm:$0xfe]
      %v10770 = vrot.slane %v10722, 1
      %v10771 = vrot.slane %v10241, 1
      %v10772 = vsel %vm1578, %v10770, %v10771
      %v10773 = vrot.slane %v10723, 1
      %v10774 = vrot.slane %v10243, 1
      %v10775 = vsel %vm1578, %v10773, %v10774
      %v10776 = vrot.slane %v10724, 1
      %v10777 = vrot.slane %v10245, 1
      %v10778 = vsel %vm1578, %v10776, %v10777
      %v10779 = vrot.slane %v10725, 1
      %v10780 = vrot.slane %v10247, 1
      %v10781 = vsel %vm1578, %v10779, %v10780
      %v10782 = vrot.slane %v10726, 1
      %v10783 = vrot.slane %v10249, 1
      %v10784 = vsel %vm1578, %v10782, %v10783
      %v10785 = vrot.slane %v10727, 1
      %v10786 = vrot.slane %v10251, 1
      %v10787 = vsel %vm1578, %v10785, %v10786
      %v10788 = vrot.slane %v10728, 1
      %v10789 = vrot.slane %v10253, 1
      %v10790 = vsel %vm1578, %v10788, %v10789
      %v10791 = vrot.slane %v10729, 1
      %v10792 = vrot.slane %v10255, 1
      %v10793 = vsel %vm1578, %v10791, %v10792
      %v10794 = vrot.slane %v10730, 1
      %v10795 = vrot.slane %v10257, 1
      %v10796 = vsel %vm1578, %v10794, %v10795
      %v10797 = vrot.slane %v10731, 1
      %v10798 = vrot.slane %v10259, 1
      %v10799 = vsel %vm1578, %v10797, %v10798
      %v10800 = vrot.slane %v10732, 1
      %v10801 = vrot.slane %v10261, 1
      %v10802 = vsel %vm1578, %v10800, %v10801
      %v10803 = vrot.slane %v10733, 1
      %v10804 = vrot.slane %v10263, 1
      %v10805 = vsel %vm1578, %v10803, %v10804
      %v10806 = vrot.slane %v10734, 1
      %v10807 = vrot.slane %v10265, 1
      %v10808 = vsel %vm1578, %v10806, %v10807
      %v10809 = vrot.slane %v10735, 1
      %v10810 = vrot.slane %v10267, 1
      %v10811 = vsel %vm1578, %v10809, %v10810
      %v10812 = vrot.slane %v10736, 1
      %v10813 = vrot.slane %v10269, 1
      %v10814 = vsel %vm1578, %v10812, %v10813
      %v10815 = vrot.slane %v10737, 1
      %v10816 = vrot.slane %v10271, 1
      %v10817 = vsel %vm1578, %v10815, %v10816
      %s10818 = scalar_lea.vmem %s5, 128
      %v10819 = vld [vmem:[%s10818] sm:$0xf]
      %v10820 = vld [vmem:[%s10818 + $0x4] sm:$0xf]
      %v10821 = vld [vmem:[%s10818 + $0x8] sm:$0xf]
      %v10822 = vld [vmem:[%s10818 + $0xc] sm:$0xf]
      %v10827 = vunpack.c.l.b16 %v10819
      %v10828 = vunpack.c.l.b16 %v10820
      %v10829 = vunpack.c.l.b16 %v10821
      %v10830 = vunpack.c.l.b16 %v10822
      %v10831 = vpack.c.b16 %v10828, %v10827
      %v10832 = vpack.c.b16 %v10830, %v10829
      %v10836 = vsel %vm494, %v10772, 0
      %v10839 = vsel %vm494, %v10775, 0
      %v10842 = vsel %vm494, %v10778, 0
      %v10845 = vsel %vm494, %v10781, 0
      %v10848 = vsel %vm494, %v10784, 0
      %v10851 = vsel %vm494, %v10787, 0
      %v10854 = vsel %vm494, %v10790, 0
      %v10857 = vsel %vm494, %v10793, 0
      %v10860 = vsel %vm494, %v10796, 0
      %v10863 = vsel %vm494, %v10799, 0
      %v10866 = vsel %vm494, %v10802, 0
      %v10869 = vsel %vm494, %v10805, 0
      %v10872 = vsel %vm494, %v10808, 0
      %v10875 = vsel %vm494, %v10811, 0
      %v10878 = vsel %vm494, %v10814, 0
      %v10881 = vsel %vm494, %v10817, 0
      %10883 = vmatprep.subr.bf16.mxu0 0
      %10884 = vmatpush1.bf16.msra.mxu0 %v10831
      %10885 = vmatprep.subr.bf16.mxu0 0
      %10886 = vmatpush1.bf16.msra.mxu0 %v10832
      %10887 = vmatprep.subr.bf16.mxu0 0
      %10888 = vmatpush1.bf16.msra.mxu0 0
      %10889 = vmatprep.subr.bf16.mxu0 0
      %10890 = vmatpush1.bf16.msra.mxu0 0
      %10891 = vmatprep.subr.bf16.mxu0 0
      %10892 = vmatpush1.bf16.msra.mxu0 0
      %10893 = vmatprep.subr.bf16.mxu0 0
      %10894 = vmatpush1.bf16.msra.mxu0 0
      %10895 = vmatprep.subr.bf16.mxu0 0
      %10896 = vmatpush1.bf16.msra.mxu0 0
      %10897 = vmatprep.subr.bf16.mxu0 0
      %10898 = vmatpush1.bf16.msra.mxu0 0
      %10899 = vmatprep.subr.bf16.mxu0 0
      %10900 = vmatpush1.bf16.msra.mxu0 0
      %10901 = vmatprep.subr.bf16.mxu0 0
      %10902 = vmatpush1.bf16.msra.mxu0 0
      %10903 = vmatprep.subr.bf16.mxu0 0
      %10904 = vmatpush1.bf16.msra.mxu0 0
      %10905 = vmatprep.subr.bf16.mxu0 0
      %10906 = vmatpush1.bf16.msra.mxu0 0
      %10907 = vmatprep.subr.bf16.mxu0 0
      %10908 = vmatpush1.bf16.msra.mxu0 0
      %10909 = vmatprep.subr.bf16.mxu0 0
      %10910 = vmatpush1.bf16.msra.mxu0 0
      %10911 = vmatprep.subr.bf16.mxu0 0
      %10912 = vmatpush1.bf16.msra.mxu0 0
      %10913 = vmatprep.subr.bf16.mxu0 0
      %10914 = vmatpush1.bf16.msra.mxu0 0
      %10915 = vmatprep.mubr.bf16.mxu0 0
      %10916 = vmatmul.mubr.bf16.gmra.mrb[0].mxu0 %v10836
      %v10917 = vpop.f32.mrb[0].mxu0
      %v10918 = vadd.f32 0.0, %v10917
      %v10919 = vpop.f32.mrb[0].mxu0
      %v10920 = vpop.f32.mrb[0].mxu0
      %v10921 = vadd.f32 0.0, %v10920
      %v10922 = vpop.f32.mrb[0].mxu0
      %10923 = vmatprep.mubr.bf16.mxu0 0
      %10924 = vmatmul.mubr.bf16.gmra.mrb[0].mxu0 %v10839
      %v10925 = vpop.f32.mrb[0].mxu0
      %v10926 = vadd.f32 0.0, %v10925
      %v10927 = vpop.f32.mrb[0].mxu0
      %v10928 = vpop.f32.mrb[0].mxu0
      %v10929 = vadd.f32 0.0, %v10928
      %v10930 = vpop.f32.mrb[0].mxu0
      %10931 = vmatprep.mubr.bf16.mxu0 0
      %10932 = vmatmul.mubr.bf16.gmra.mrb[0].mxu0 %v10842
      %v10933 = vpop.f32.mrb[0].mxu0
      %v10934 = vadd.f32 0.0, %v10933
      %v10935 = vpop.f32.mrb[0].mxu0
      %v10936 = vpop.f32.mrb[0].mxu0
      %v10937 = vadd.f32 0.0, %v10936
      %v10938 = vpop.f32.mrb[0].mxu0
      %10939 = vmatprep.mubr.bf16.mxu0 0
      %10940 = vmatmul.mubr.bf16.gmra.mrb[0].mxu0 %v10845
      %v10941 = vpop.f32.mrb[0].mxu0
      %v10942 = vadd.f32 0.0, %v10941
      %v10943 = vpop.f32.mrb[0].mxu0
      %v10944 = vpop.f32.mrb[0].mxu0
      %v10945 = vadd.f32 0.0, %v10944
      %v10946 = vpop.f32.mrb[0].mxu0
      %10947 = vmatprep.mubr.bf16.mxu0 0
      %10948 = vmatmul.mubr.bf16.gmra.mrb[0].mxu0 %v10848
      %v10949 = vpop.f32.mrb[0].mxu0
      %v10950 = vadd.f32 0.0, %v10949
      %v10951 = vpop.f32.mrb[0].mxu0
      %v10952 = vpop.f32.mrb[0].mxu0
      %v10953 = vadd.f32 0.0, %v10952
      %v10954 = vpop.f32.mrb[0].mxu0
      %10955 = vmatprep.mubr.bf16.mxu0 0
      %10956 = vmatmul.mubr.bf16.gmra.mrb[0].mxu0 %v10851
      %v10957 = vpop.f32.mrb[0].mxu0
      %v10958 = vadd.f32 0.0, %v10957
      %v10959 = vpop.f32.mrb[0].mxu0
      %v10960 = vpop.f32.mrb[0].mxu0
      %v10961 = vadd.f32 0.0, %v10960
      %v10962 = vpop.f32.mrb[0].mxu0
      %10963 = vmatprep.mubr.bf16.mxu0 0
      %10964 = vmatmul.mubr.bf16.gmra.mrb[0].mxu0 %v10854
      %v10965 = vpop.f32.mrb[0].mxu0
      %v10966 = vadd.f32 0.0, %v10965
      %v10967 = vpop.f32.mrb[0].mxu0
      %v10968 = vpop.f32.mrb[0].mxu0
      %v10969 = vadd.f32 0.0, %v10968
      %v10970 = vpop.f32.mrb[0].mxu0
      %10971 = vmatprep.mubr.bf16.mxu0 0
      %10972 = vmatmul.mubr.bf16.gmra.mrb[0].mxu0 %v10857
      %v10973 = vpop.f32.mrb[0].mxu0
      %v10974 = vadd.f32 0.0, %v10973
      %v10975 = vpop.f32.mrb[0].mxu0
      %v10976 = vpop.f32.mrb[0].mxu0
      %v10977 = vadd.f32 0.0, %v10976
      %v10978 = vpop.f32.mrb[0].mxu0
      %10979 = vmatprep.mubr.bf16.mxu0 0
      %10980 = vmatmul.mubr.bf16.gmra.mrb[0].mxu0 %v10860
      %v10981 = vpop.f32.mrb[0].mxu0
      %v10982 = vadd.f32 0.0, %v10981
      %v10983 = vpop.f32.mrb[0].mxu0
      %v10984 = vpop.f32.mrb[0].mxu0
      %v10985 = vadd.f32 0.0, %v10984
      %v10986 = vpop.f32.mrb[0].mxu0
      %10987 = vmatprep.mubr.bf16.mxu0 0
      %10988 = vmatmul.mubr.bf16.gmra.mrb[0].mxu0 %v10863
      %v10989 = vpop.f32.mrb[0].mxu0
      %v10990 = vadd.f32 0.0, %v10989
      %v10991 = vpop.f32.mrb[0].mxu0
      %v10992 = vpop.f32.mrb[0].mxu0
      %v10993 = vadd.f32 0.0, %v10992
      %v10994 = vpop.f32.mrb[0].mxu0
      %10995 = vmatprep.mubr.bf16.mxu0 0
      %10996 = vmatmul.mubr.bf16.gmra.mrb[0].mxu0 %v10866
      %v10997 = vpop.f32.mrb[0].mxu0
      %v10998 = vadd.f32 0.0, %v10997
      %v10999 = vpop.f32.mrb[0].mxu0
      %v11000 = vpop.f32.mrb[0].mxu0
      %v11001 = vadd.f32 0.0, %v11000
      %v11002 = vpop.f32.mrb[0].mxu0
      %11003 = vmatprep.mubr.bf16.mxu0 0
      %11004 = vmatmul.mubr.bf16.gmra.mrb[0].mxu0 %v10869
      %v11005 = vpop.f32.mrb[0].mxu0
      %v11006 = vadd.f32 0.0, %v11005
      %v11007 = vpop.f32.mrb[0].mxu0
      %v11008 = vpop.f32.mrb[0].mxu0
      %v11009 = vadd.f32 0.0, %v11008
      %v11010 = vpop.f32.mrb[0].mxu0
      %11011 = vmatprep.mubr.bf16.mxu0 0
      %11012 = vmatmul.mubr.bf16.gmra.mrb[0].mxu0 %v10872
      %v11013 = vpop.f32.mrb[0].mxu0
      %v11014 = vadd.f32 0.0, %v11013
      %v11015 = vpop.f32.mrb[0].mxu0
      %v11016 = vpop.f32.mrb[0].mxu0
      %v11017 = vadd.f32 0.0, %v11016
      %v11018 = vpop.f32.mrb[0].mxu0
      %11019 = vmatprep.mubr.bf16.mxu0 0
      %11020 = vmatmul.mubr.bf16.gmra.mrb[0].mxu0 %v10875
      %v11021 = vpop.f32.mrb[0].mxu0
      %v11022 = vadd.f32 0.0, %v11021
      %v11023 = vpop.f32.mrb[0].mxu0
      %v11024 = vpop.f32.mrb[0].mxu0
      %v11025 = vadd.f32 0.0, %v11024
      %v11026 = vpop.f32.mrb[0].mxu0
      %11027 = vmatprep.mubr.bf16.mxu0 0
      %11028 = vmatmul.mubr.bf16.gmra.mrb[0].mxu0 %v10878
      %v11029 = vpop.f32.mrb[0].mxu0
      %v11030 = vadd.f32 0.0, %v11029
      %v11031 = vpop.f32.mrb[0].mxu0
      %v11032 = vpop.f32.mrb[0].mxu0
      %v11033 = vadd.f32 0.0, %v11032
      %v11034 = vpop.f32.mrb[0].mxu0
      %11035 = vmatprep.mubr.bf16.mxu0 0
      %11036 = vmatmul.mubr.bf16.gmra.mrb[0].mxu0 %v10881
      %v11037 = vpop.f32.mrb[0].mxu0
      %v11038 = vadd.f32 0.0, %v11037
      %v11039 = vpop.f32.mrb[0].mxu0
      %v11040 = vpop.f32.mrb[0].mxu0
      %v11041 = vadd.f32 0.0, %v11040
      %v11042 = vpop.f32.mrb[0].mxu0
      %11043 = vdwg.mxu0
      %v11044 = vadd.f32 %v10690, %v10918
      %v11045 = vadd.f32 %v10691, %v10921
      %v11046 = vadd.f32 %v10692, %v10926
      %v11047 = vadd.f32 %v10693, %v10929
      %v11048 = vadd.f32 %v10694, %v10934
      %v11049 = vadd.f32 %v10695, %v10937
      %v11050 = vadd.f32 %v10696, %v10942
      %v11051 = vadd.f32 %v10697, %v10945
      %v11052 = vadd.f32 %v10698, %v10950
      %v11053 = vadd.f32 %v10699, %v10953
      %v11054 = vadd.f32 %v10700, %v10958
      %v11055 = vadd.f32 %v10701, %v10961
      %v11056 = vadd.f32 %v10702, %v10966
      %v11057 = vadd.f32 %v10703, %v10969
      %v11058 = vadd.f32 %v10704, %v10974
      %v11059 = vadd.f32 %v10705, %v10977
      %v11060 = vadd.f32 %v10706, %v10982
      %v11061 = vadd.f32 %v10707, %v10985
      %v11062 = vadd.f32 %v10708, %v10990
      %v11063 = vadd.f32 %v10709, %v10993
      %v11064 = vadd.f32 %v10710, %v10998
      %v11065 = vadd.f32 %v10711, %v11001
      %v11066 = vadd.f32 %v10712, %v11006
      %v11067 = vadd.f32 %v10713, %v11009
      %v11068 = vadd.f32 %v10714, %v11014
      %v11069 = vadd.f32 %v10715, %v11017
      %v11070 = vadd.f32 %v10716, %v11022
      %v11071 = vadd.f32 %v10717, %v11025
      %v11072 = vadd.f32 %v10718, %v11030
      %v11073 = vadd.f32 %v10719, %v11033
      %v11074 = vadd.f32 %v10720, %v11038
      %v11075 = vadd.f32 %v10721, %v11041
      %v11076 = vld [vmem:[%s6] sm:$0x1]
      %v11078 = vlaneseq
      %v11079 = vshrl.u32 %v11078, 7
      %v11080 = vsub.s32 0, %v11079
      %v11081 = vrot.slane %v11076, %v11080
      %v11083 = vadd.f32 %v11044, %v11081
      %v11084 = vadd.f32 %v11045, %v11081
      %v11085 = vadd.f32 %v11046, %v11081
      %v11086 = vadd.f32 %v11047, %v11081
      %v11087 = vadd.f32 %v11048, %v11081
      %v11088 = vadd.f32 %v11049, %v11081
      %v11089 = vadd.f32 %v11050, %v11081
      %v11090 = vadd.f32 %v11051, %v11081
      %v11091 = vadd.f32 %v11052, %v11081
      %v11092 = vadd.f32 %v11053, %v11081
      %v11093 = vadd.f32 %v11054, %v11081
      %v11094 = vadd.f32 %v11055, %v11081
      %v11095 = vadd.f32 %v11056, %v11081
      %v11096 = vadd.f32 %v11057, %v11081
      %v11097 = vadd.f32 %v11058, %v11081
      %v11098 = vadd.f32 %v11059, %v11081
      %v11099 = vadd.f32 %v11060, %v11081
      %v11100 = vadd.f32 %v11061, %v11081
      %v11101 = vadd.f32 %v11062, %v11081
      %v11102 = vadd.f32 %v11063, %v11081
      %v11103 = vadd.f32 %v11064, %v11081
      %v11104 = vadd.f32 %v11065, %v11081
      %v11105 = vadd.f32 %v11066, %v11081
      %v11106 = vadd.f32 %v11067, %v11081
      %v11107 = vadd.f32 %v11068, %v11081
      %v11108 = vadd.f32 %v11069, %v11081
      %v11109 = vadd.f32 %v11070, %v11081
      %v11110 = vadd.f32 %v11071, %v11081
      %v11111 = vadd.f32 %v11072, %v11081
      %v11112 = vadd.f32 %v11073, %v11081
      %v11113 = vadd.f32 %v11074, %v11081
      %v11114 = vadd.f32 %v11075, %v11081
      %11115 = vst [vmem:[%s278] sm:$0xff] %v11083
      %11116 = vst [vmem:[%s278 + $0x8] sm:$0xff] %v11084
      %11117 = vst [vmem:[%s278 + $0x10] sm:$0xff] %v11085
      %11118 = vst [vmem:[%s278 + $0x18] sm:$0xff] %v11086
      %11119 = vst [vmem:[%s278 + $0x20] sm:$0xff] %v11087
      %11120 = vst [vmem:[%s278 + $0x28] sm:$0xff] %v11088
      %11121 = vst [vmem:[%s278 + $0x30] sm:$0xff] %v11089
      %11122 = vst [vmem:[%s278 + $0x38] sm:$0xff] %v11090
      %11123 = vst [vmem:[%s278 + $0x40] sm:$0xff] %v11091
      %11124 = vst [vmem:[%s278 + $0x48] sm:$0xff] %v11092
      %11125 = vst [vmem:[%s278 + $0x50] sm:$0xff] %v11093
      %11126 = vst [vmem:[%s278 + $0x58] sm:$0xff] %v11094
      %11127 = vst [vmem:[%s278 + $0x60] sm:$0xff] %v11095
      %11128 = vst [vmem:[%s278 + $0x68] sm:$0xff] %v11096
      %11129 = vst [vmem:[%s278 + $0x70] sm:$0xff] %v11097
      %11130 = vst [vmem:[%s278 + $0x78] sm:$0xff] %v11098
      %11131 = vst [vmem:[%s278 + $0x80] sm:$0xff] %v11099
      %11132 = vst [vmem:[%s278 + $0x88] sm:$0xff] %v11100
      %11133 = vst [vmem:[%s278 + $0x90] sm:$0xff] %v11101
      %11134 = vst [vmem:[%s278 + $0x98] sm:$0xff] %v11102
      %11135 = vst [vmem:[%s278 + $0xa0] sm:$0xff] %v11103
      %11136 = vst [vmem:[%s278 + $0xa8] sm:$0xff] %v11104
      %11137 = vst [vmem:[%s278 + $0xb0] sm:$0xff] %v11105
      %11138 = vst [vmem:[%s278 + $0xb8] sm:$0xff] %v11106
      %11139 = vst [vmem:[%s278 + $0xc0] sm:$0xff] %v11107
      %11140 = vst [vmem:[%s278 + $0xc8] sm:$0xff] %v11108
      %11141 = vst [vmem:[%s278 + $0xd0] sm:$0xff] %v11109
      %11142 = vst [vmem:[%s278 + $0xd8] sm:$0xff] %v11110
      %11143 = vst [vmem:[%s278 + $0xe0] sm:$0xff] %v11111
      %11144 = vst [vmem:[%s278 + $0xe8] sm:$0xff] %v11112
      %11145 = vst [vmem:[%s278 + $0xf0] sm:$0xff] %v11113
      %11146 = vst [vmem:[%s278 + $0xf8] sm:$0xff] %v11114
      %p11147 = scmp.lt.s32.totalorder %s18, 1
      %s11148 = scalar_select %p11147, %s18, 1
      %s11149 = smul.addr %s11148, 32
      %s11150 = smul.addr %s11149, 8
      %s11151 = scalar_lea.vmem %s7, %s11150
      // Predicated region
      $region49: #{single_stage_detector_forward.1} parent=47 // pred_check
        %p11152 = pneg %p188
      $region50: #{single_stage_detector_forward.1} parent=47 // pred_check_branch
        %11154 = sbr.rel (%p11152) target = $region52
      $region51: #{single_stage_detector_forward.1} parent=47 // pred_region
        _
      $region52: #{single_stage_detector_forward.1} parent=47 // pred_fallthru
        _
    $region48: #{single_stage_detector_forward.1} parent=5 // pred_fallthru
      _
    %p11155 = scmp.le.s32.totalorder 2, %s13
    // Predicated region
    $region53: #{single_stage_detector_forward.1} parent=5 // pred_check
      %p11156 = pneg %p11155
    $region54: #{single_stage_detector_forward.1} parent=5 // pred_check_branch
      %11158 = sbr.rel (%p11156) target = $region56
    $region55: #{single_stage_detector_forward.1} parent=5 // pred_region
      %s11159 = ssub.s32 %s13, 2
      // Predicated region
      $region57: #{single_stage_detector_forward.1} parent=55 // pred_check
        %p11160 = pneg %p194
      $region58: #{single_stage_detector_forward.1} parent=55 // pred_check_branch
        %11162 = sbr.rel (%p11160) target = $region60
      $region59: #{single_stage_detector_forward.1} parent=55 // pred_region
        %p11163 = scmp.lt.s32.totalorder %s19, 1
        %s11164 = scalar_select %p11163, %s19, 1
        %s11165 = smul.addr %s11164, 32
        %s11166 = smul.addr %s11165, 8
        %s11167 = scalar_lea.vmem %s7, %s11166
      $region60: #{single_stage_detector_forward.1} parent=55 // pred_fallthru
        _
    $region56: #{single_stage_detector_forward.1} parent=5 // pred_fallthru
      _
  $region6: #{single_stage_detector_forward.1} parent=0 // loop_footer
    %s17 = sadd.s32 1, %s13
  $region7: #{single_stage_detector_forward.1} parent=0 // loop_footer_branch
    %12 = sbr.rel target = $region3
  $region8: #{single_stage_detector_forward.1} parent=0 // loop_exit
    _

</llo_original>
